<compile_context>
chip_gen: v7x
topology: tpu7x:2x2x1
jax: 0.10.0
libtpu: 0.0.40
codegen_flags: <defaults>
</compile_context>

<pallas_src>
import math

import jax
import jax.numpy as jnp
from jax import lax
from jax.experimental import pallas as pl
from jax.experimental.pallas import tpu as pltpu

# ----------------------------- model sizes (small) -----------------------------
HIDDEN = 16          # hidden_dim
EMB = 32             # embedding_dim
VOCAB = 50           # vocab_size
CHAR_VOCAB = 30      # char_vocab_size
WIN = 5              # window_size
CHAR_EMB = 8         # char_embed_dim
WORD_CHAR_EMB = 16   # word_char_embed_dim
EMBED_SIZE = EMB + WORD_CHAR_EMB   # use_char_embed=True
H = HIDDEN
H2 = 2 * HIDDEN
H4 = 4 * HIDDEN      # 2*hidden_dim*2

LQ = 6               # question length
LC = 10              # context length
NCHARS = 7           # chars per word (fixed so conv semantics are exact)
NPOS = NCHARS - WIN + 1   # conv positions per word


# ----------------------------- single fused kernel -----------------------------
def fused_forward_kernel(
    q_ids_ref, c_ids_ref, q_cids_ref, c_cids_ref,
    word_emb_ref, char_emb_ref, w_char_ref, b_char_ref,
    w_ih_ref, w_hh_ref, b_lstm_ref,
    w_end_ref, b_end_ref, w_start_ref, b_start_ref,
    out_ref,
    xp_qf, xp_qr, xp_cf, xp_cr, q_out_ref, c_out_ref,
):
    f32 = jnp.float32

    # ---------- embedding gathers as one-hot matmuls (tables are VMEM-resident) ----------
    word_tab = word_emb_ref[...]            # (VOCAB, EMB)
    char_tab = char_emb_ref[...]            # (CHAR_VOCAB, CHAR_EMB)
    w_char = w_char_ref[...]                # (WIN*CHAR_EMB, WORD_CHAR_EMB)  pre-transposed
    b_char = b_char_ref[...]                # (1, WORD_CHAR_EMB)

    def onehot_gather(ids, table, vocab):
        # ids: (n, 1) int32 -> (n, d)
        n = ids.shape[0]
        oh = (ids == lax.broadcasted_iota(jnp.int32, (n, vocab), 1)).astype(f32)
        return jnp.dot(oh, table, preferred_element_type=f32)

    # TODO(synk): CharEmbed class is not defined in the source file; a standard
    # char-CNN (embed -> conv1d(window) -> ReLU -> max-pool over time) is assumed.
    def char_features(cids, nw):
        # cids: (nw*NCHARS, 1) int32  ->  (nw, WORD_CHAR_EMB)
        e = onehot_gather(cids, char_tab, CHAR_VOCAB)          # (nw*NCHARS, CHAR_EMB)
        ntot = nw * NCHARS
        npv = ntot - WIN + 1                                   # flat conv positions
        acc = jnp.zeros((npv, WORD_CHAR_EMB), f32)
        for j in range(WIN):                                   # WIN shifted matmuls
            wj = w_char[j * CHAR_EMB:(j + 1) * CHAR_EMB, :]    # (CHAR_EMB, D)
            acc = acc + jnp.dot(e[j:j + npv, :], wj, preferred_element_type=f32)
        y = jnp.maximum(acc + b_char, 0.0)                     # (npv, D) ReLU
        rows = []
        for w in range(nw):                                    # per-word max-pool
            s = w * NCHARS
            rows.append(jnp.max(y[s:s + NPOS, :], axis=0, keepdims=True))
        return jnp.concatenate(rows, axis=0)                   # (nw, D)

    q_word = onehot_gather(q_ids_ref[...], word_tab, VOCAB)    # (LQ, EMB)
    c_word = onehot_gather(c_ids_ref[...], word_tab, VOCAB)    # (LC, EMB)
    q_char = char_features(q_cids_ref[...], LQ)                # (LQ, Dc)
    c_char = char_features(c_cids_ref[...], LC)                # (LC, Dc)
    qemb = jnp.concatenate([q_word, q_char], axis=-1)          # (LQ, EMBED_SIZE)
    cemb = jnp.concatenate([c_word, c_char], axis=-1)          # (LC, EMBED_SIZE)

    # ---------- bidirectional LSTM (fwd & rev interleaved in one loop) ----------
    def lstm_cell(gates, c_prev):
        # gates: (1, 4H), PyTorch order i, f, g, o
        s = jax.nn.sigmoid(gates)                  # one EUP pass over the whole 4H vector
        g = jnp.tanh(gates[:, 2 * H:3 * H])        # tanh only on the g slice
        c_new = s[:, H:2 * H] * c_prev + s[:, 0:H] * g
        h_new = s[:, 3 * H:4 * H] * jnp.tanh(c_new)
        return h_new, c_new

    def bilstm(emb, length, xp_f_ref, xp_r_ref, out_ref2, idx_f, idx_r):
        w_ih_f = w_ih_ref[idx_f]                   # (EMBED_SIZE, 4H) pre-transposed
        w_ih_r = w_ih_ref[idx_r]
        w_hh_f = w_hh_ref[idx_f]                   # (H, 4H) pre-transposed
        w_hh_r = w_hh_ref[idx_r]
        b_f = b_lstm_ref[idx_f]                    # (1, 4H)  (= b_ih + b_hh)
        b_r = b_lstm_ref[idx_r]

        # input projections for all timesteps at once (hoisted out of the recurrence)
        xp_f_ref[...] = jnp.dot(emb, w_ih_f, preferred_element_type=f32) + b_f
        xp_r_ref[...] = jnp.dot(emb, w_ih_r, preferred_element_type=f32) + b_r

        def step(t, carry):
            h_f, c_f, h_r, c_r = carry
            tr = length - 1 - t
            # forward direction at time t
            gf = xp_f_ref[pl.ds(t, 1), :] + jnp.dot(h_f, w_hh_f, preferred_element_type=f32)
            h_f, c_f = lstm_cell(gf, c_f)
            out_ref2[pl.ds(t, 1), pl.ds(0, H)] = h_f
            # reverse direction at time length-1-t (independent chain -> fills latency bubbles)
            gr = xp_r_ref[pl.ds(tr, 1), :] + jnp.dot(h_r, w_hh_r, preferred_element_type=f32)
            h_r, c_r = lstm_cell(gr, c_r)
            out_ref2[pl.ds(tr, 1), pl.ds(H, H)] = h_r
            return (h_f, c_f, h_r, c_r)

        z = jnp.zeros((1, H), f32)
        lax.fori_loop(0, length, step, (z, z, z, z), unroll=True)

    bilstm(qemb, LQ, xp_qf, xp_qr, q_out_ref, 0, 1)            # qlstm fwd/rev
    bilstm(cemb, LC, xp_cf, xp_cr, c_out_ref, 2, 3)            # clstm fwd/rev

    q = q_out_ref[...]                                         # (LQ, 2H)
    c = c_out_ref[...]                                         # (LC, 2H)

    # ---------- attention + span head ----------
    scores = lax.dot_general(c, q, (((1,), (1,)), ((), ())),
                             preferred_element_type=f32)       # (LC, LQ)
    scores = scores - jnp.max(scores, axis=-1, keepdims=True)
    e = jnp.exp(scores)
    attn = e * pl.reciprocal(jnp.sum(e, axis=-1, keepdims=True), approx=True)
    attn_vec = jnp.dot(attn, q, preferred_element_type=f32)    # (LC, 2H)
    cat = jnp.concatenate([c, attn_vec], axis=-1)              # (LC, 4H)  clstm_attn_out

    end_space = jnp.dot(cat, w_end_ref[...], preferred_element_type=f32) + b_end_ref[...]
    start_prob = jax.nn.sigmoid(
        jnp.dot(cat, w_start_ref[...], preferred_element_type=f32) + b_start_ref[...])  # (LC, 1)

    end_weight = lax.dot_general(end_space, cat, (((1,), (1,)), ((), ())),
                                 preferred_element_type=f32)   # (LC, LC)
    row = lax.broadcasted_iota(jnp.int32, (LC, LC), 0)
    col = lax.broadcasted_iota(jnp.int32, (LC, LC), 1)
    end_weight = jnp.where(col < row, -1e30, end_weight)       # end_constraint (finite mask)
    end_weight = end_weight - jnp.max(end_weight, axis=-1, keepdims=True)
    ee = jnp.exp(end_weight)
    end_prob = ee * pl.reciprocal(jnp.sum(ee, axis=-1, keepdims=True), approx=True)

    span = end_prob * start_prob                               # (LC, LC)
    norm = jnp.maximum(jnp.sum(jnp.abs(span)), 1e-12)          # F.normalize(p=1), exact divide
    out_ref[...] = span / norm


def fused_forward_pallas(params, q_ids, c_ids, q_cids, c_cids):
    span = pl.pallas_call(
        fused_forward_kernel,
        out_shape=jax.ShapeDtypeStruct((LC, LC), jnp.float32),
        grid=(1,),
        in_specs=[
            pl.BlockSpec((LQ, 1), lambda i: (0, 0)),
            pl.BlockSpec((LC, 1), lambda i: (0, 0)),
            pl.BlockSpec((LQ * NCHARS, 1), lambda i: (0, 0)),
            pl.BlockSpec((LC * NCHARS, 1), lambda i: (0, 0)),
            pl.BlockSpec((VOCAB, EMB), lambda i: (0, 0)),
            pl.BlockSpec((CHAR_VOCAB, CHAR_EMB), lambda i: (0, 0)),
            pl.BlockSpec((WIN * CHAR_EMB, WORD_CHAR_EMB), lambda i: (0, 0)),
            pl.BlockSpec((1, WORD_CHAR_EMB), lambda i: (0, 0)),
            pl.BlockSpec((4, EMBED_SIZE, H4), lambda i: (0, 0, 0)),
            pl.BlockSpec((4, HIDDEN, H4), lambda i: (0, 0, 0)),
            pl.BlockSpec((4, 1, H4), lambda i: (0, 0, 0)),
            pl.BlockSpec((H4, H4), lambda i: (0, 0)),
            pl.BlockSpec((1, H4), lambda i: (0, 0)),
            pl.BlockSpec((H4, 1), lambda i: (0, 0)),
            pl.BlockSpec((1, 1), lambda i: (0, 0)),
        ],
        out_specs=pl.BlockSpec((LC, LC), lambda i: (0, 0)),
        scratch_shapes=[
            pltpu.VMEM((LQ, H4), jnp.float32),   # xp_qf
            pltpu.VMEM((LQ, H4), jnp.float32),   # xp_qr
            pltpu.VMEM((LC, H4), jnp.float32),   # xp_cf
            pltpu.VMEM((LC, H4), jnp.float32),   # xp_cr
            pltpu.VMEM((LQ, H2), jnp.float32),   # q biLSTM output
            pltpu.VMEM((LC, H2), jnp.float32),   # c biLSTM output
        ],
        compiler_params=pltpu.CompilerParams(dimension_semantics=("arbitrary",)),
    )(q_ids, c_ids, q_cids, c_cids,
      params["word_emb"], params["char_emb"], params["w_char_t"], params["b_char"],
      params["w_ih_t"], params["w_hh_t"], params["b_lstm"],
      params["w_end_t"], params["b_end"], params["w_start_t"], params["b_start"])
    return span.reshape(1, LC * LC)                            # .view(batch_size, -1)


# ----------------------------- parameters (pre-transposed) -----------------------------
def _uniform(key, shape, scale):
    return jax.random.uniform(key, shape, jnp.float32, -scale, scale)


def _lstm_dir_params(key, in_dim, hidden):
    k1, k2, k3, k4 = jax.random.split(key, 4)
    s = 1.0 / math.sqrt(hidden)
    w_ih = _uniform(k1, (4 * hidden, in_dim), s)
    w_hh = _uniform(k2, (4 * hidden, hidden), s)
    b = _uniform(k3, (4 * hidden,), s) + _uniform(k4, (4 * hidden,), s)
    return w_ih.T, w_hh.T, b.reshape(1, 4 * hidden)            # pre-transposed for lhs@rhs


def init_params(key):
    keys = jax.random.split(key, 12)
    # word embeddings (module zeros rows then loads pretrained; we use a random
    # table with padding row 0 = 0 for a non-trivial deterministic test)
    word_emb = (jax.random.normal(keys[0], (VOCAB, EMB), jnp.float32) * 0.1).at[0].set(0.0)
    char_emb = (jax.random.normal(keys[1], (CHAR_VOCAB, CHAR_EMB), jnp.float32) * 0.1).at[0].set(0.0)
    s_conv = 1.0 / math.sqrt(CHAR_EMB * WIN)
    w_char = _uniform(keys[2], (WORD_CHAR_EMB, WIN, CHAR_EMB), s_conv)
    w_char_t = w_char.reshape(WORD_CHAR_EMB, WIN * CHAR_EMB).T          # (WIN*CHAR_EMB, D)
    b_char = _uniform(keys[3], (1, WORD_CHAR_EMB), s_conv)
    dirs = [_lstm_dir_params(keys[4 + i], EMBED_SIZE, HIDDEN) for i in range(4)]  # qf, qr, cf, cr
    w_ih_t = jnp.stack([d[0] for d in dirs])                   # (4, EMBED_SIZE, 4H)
    w_hh_t = jnp.stack([d[1] for d in dirs])                   # (4, H, 4H)
    b_lstm = jnp.stack([d[2] for d in dirs])                   # (4, 1, 4H)
    s_lin = 1.0 / math.sqrt(H4)
    w_end = _uniform(keys[8], (H4, H4), s_lin)
    b_end = _uniform(keys[9], (1, H4), s_lin)
    w_start = _uniform(keys[10], (1, H4), s_lin)
    b_start = _uniform(keys[11], (1, 1), s_lin)
    return dict(
        word_emb=word_emb, char_emb=char_emb, w_char_t=w_char_t, b_char=b_char,
        w_ih_t=w_ih_t, w_hh_t=w_hh_t, b_lstm=b_lstm,
        w_end_t=w_end.T, b_end=b_end, w_start_t=w_start.T, b_start=b_start,
    )


# ----------------------------- forward -----------------------------
@jax.jit
def baseline_forward(params, question, context, question_chars, context_chars):
    q_ids = question.reshape(LQ, 1).astype(jnp.int32)
    c_ids = context.reshape(LC, 1).astype(jnp.int32)
    q_cids = question_chars.reshape(LQ * NCHARS, 1).astype(jnp.int32)
    c_cids = context_chars.reshape(LC * NCHARS, 1).astype(jnp.int32)
    return fused_forward_pallas(params, q_ids, c_ids, q_cids, c_cids)   # (1, LC*LC)


# ----------------------------- main -----------------------------
if __name__ == "__main__":
    key = jax.random.PRNGKey(0)
    pkey, k1, k2, k3, k4 = jax.random.split(key, 5)
    params = init_params(pkey)

    question = jax.random.randint(k1, (LQ,), 1, VOCAB, dtype=jnp.int32)
    context = jax.random.randint(k2, (LC,), 1, VOCAB, dtype=jnp.int32)
    question_chars = jax.random.randint(k3, (LQ, NCHARS), 1, CHAR_VOCAB, dtype=jnp.int32)
    context_chars = jax.random.randint(k4, (LC, NCHARS), 1, CHAR_VOCAB, dtype=jnp.int32)

    out = baseline_forward(params, question, context, question_chars, context_chars)
    out = jax.block_until_ready(out)

    assert out.shape == (1, LC * LC), out.shape
    assert bool(jnp.all(jnp.isfinite(out)))
    total = float(jnp.sum(out))
    assert abs(total - 1.0) < 1e-3, total   # L1-normalized non-negative span probs sum to 1
    print("KERNEL_OK")
</pallas_src>

<mosaic_0001>
module attributes {stable_mosaic.version = 11 : i64} {
  func.func @fused_forward_kernel(%arg0: i32, %arg1: memref<6x1xi32, #tpu.memory_space<vmem>>, %arg2: memref<10x1xi32, #tpu.memory_space<vmem>>, %arg3: memref<42x1xi32, #tpu.memory_space<vmem>>, %arg4: memref<70x1xi32, #tpu.memory_space<vmem>>, %arg5: memref<50x32xf32, #tpu.memory_space<vmem>>, %arg6: memref<30x8xf32, #tpu.memory_space<vmem>>, %arg7: memref<40x16xf32, #tpu.memory_space<vmem>>, %arg8: memref<1x16xf32, #tpu.memory_space<vmem>>, %arg9: memref<4x48x64xf32, #tpu.memory_space<vmem>>, %arg10: memref<4x16x64xf32, #tpu.memory_space<vmem>>, %arg11: memref<4x1x64xf32, #tpu.memory_space<vmem>>, %arg12: memref<64x64xf32, #tpu.memory_space<vmem>>, %arg13: memref<1x64xf32, #tpu.memory_space<vmem>>, %arg14: memref<64x1xf32, #tpu.memory_space<vmem>>, %arg15: memref<1x1xf32, #tpu.memory_space<vmem>>, %arg16: memref<10x10xf32, #tpu.memory_space<vmem>>, %arg17: memref<6x64xf32, #tpu.memory_space<vmem>>, %arg18: memref<6x64xf32, #tpu.memory_space<vmem>>, %arg19: memref<10x64xf32, #tpu.memory_space<vmem>>, %arg20: memref<10x64xf32, #tpu.memory_space<vmem>>, %arg21: memref<6x32xf32, #tpu.memory_space<vmem>>, %arg22: memref<10x32xf32, #tpu.memory_space<vmem>>) attributes {dimension_semantics = [#tpu.dimension_semantics<arbitrary>], iteration_bounds = array<i64: 1>, scalar_prefetch = 0 : i64, scratch_operands = 6 : i64, tpu.core_type = #tpu.core_type<tc>, window_params = [{pipeline_mode = #tpu.pipeline_mode<synchronous>, transform_indices = @transform_0, window_bounds = array<i64: 6, 1>}, {pipeline_mode = #tpu.pipeline_mode<synchronous>, transform_indices = @transform_1, window_bounds = array<i64: 10, 1>}, {pipeline_mode = #tpu.pipeline_mode<synchronous>, transform_indices = @transform_2, window_bounds = array<i64: 42, 1>}, {pipeline_mode = #tpu.pipeline_mode<synchronous>, transform_indices = @transform_3, window_bounds = array<i64: 70, 1>}, {pipeline_mode = #tpu.pipeline_mode<synchronous>, transform_indices = @transform_4, window_bounds = array<i64: 50, 32>}, {pipeline_mode = #tpu.pipeline_mode<synchronous>, transform_indices = @transform_5, window_bounds = array<i64: 30, 8>}, {pipeline_mode = #tpu.pipeline_mode<synchronous>, transform_indices = @transform_6, window_bounds = array<i64: 40, 16>}, {pipeline_mode = #tpu.pipeline_mode<synchronous>, transform_indices = @transform_7, window_bounds = array<i64: 1, 16>}, {pipeline_mode = #tpu.pipeline_mode<synchronous>, transform_indices = @transform_8, window_bounds = array<i64: 4, 48, 64>}, {pipeline_mode = #tpu.pipeline_mode<synchronous>, transform_indices = @transform_9, window_bounds = array<i64: 4, 16, 64>}, {pipeline_mode = #tpu.pipeline_mode<synchronous>, transform_indices = @transform_10, window_bounds = array<i64: 4, 1, 64>}, {pipeline_mode = #tpu.pipeline_mode<synchronous>, transform_indices = @transform_11, window_bounds = array<i64: 64, 64>}, {pipeline_mode = #tpu.pipeline_mode<synchronous>, transform_indices = @transform_12, window_bounds = array<i64: 1, 64>}, {pipeline_mode = #tpu.pipeline_mode<synchronous>, transform_indices = @transform_13, window_bounds = array<i64: 64, 1>}, {pipeline_mode = #tpu.pipeline_mode<synchronous>, transform_indices = @transform_14, window_bounds = array<i64: 1, 1>}, {pipeline_mode = #tpu.pipeline_mode<synchronous>, transform_indices = @transform_15, window_bounds = array<i64: 10, 10>}]} {
    %c0 = arith.constant 0 : index
    %c0_0 = arith.constant 0 : index
    %0 = vector.load %arg5[%c0, %c0_0] : memref<50x32xf32, #tpu.memory_space<vmem>>, vector<50x32xf32>
    %c0_1 = arith.constant 0 : index
    %c0_2 = arith.constant 0 : index
    %1 = vector.load %arg6[%c0_1, %c0_2] : memref<30x8xf32, #tpu.memory_space<vmem>>, vector<30x8xf32>
    %c0_3 = arith.constant 0 : index
    %c0_4 = arith.constant 0 : index
    %2 = vector.load %arg7[%c0_3, %c0_4] : memref<40x16xf32, #tpu.memory_space<vmem>>, vector<40x16xf32>
    %c0_5 = arith.constant 0 : index
    %c0_6 = arith.constant 0 : index
    %3 = vector.load %arg8[%c0_5, %c0_6] : memref<1x16xf32, #tpu.memory_space<vmem>>, vector<1x16xf32>
    %c0_7 = arith.constant 0 : index
    %c0_8 = arith.constant 0 : index
    %4 = vector.load %arg1[%c0_7, %c0_8] : memref<6x1xi32, #tpu.memory_space<vmem>>, vector<6x1xi32>
    %5 = tpu.iota {dimensions = array<i32: 1>} : vector<6x50xi32>
    %6 = vector.broadcast %4 : vector<6x1xi32> to vector<6x50xi32>
    %7 = arith.cmpi eq, %6, %5 : vector<6x50xi32>
    %8 = arith.extui %7 : vector<6x50xi1> to vector<6x50xi32>
    %9 = arith.sitofp %8 : vector<6x50xi32> to vector<6x50xf32>
    %cst = arith.constant dense<0.000000e+00> : vector<6x32xf32>
    %10 = tpu.matmul %9, %0, %cst {dimension_numbers = #tpu.dot_dimension_numbers<[1], [0], [0], [1], [0, 0, 1, 1], [], []>} : vector<6x50xf32>, vector<50x32xf32>, vector<6x32xf32> -> vector<6x32xf32>
    %c0_9 = arith.constant 0 : index
    %c0_10 = arith.constant 0 : index
    %11 = vector.load %arg2[%c0_9, %c0_10] : memref<10x1xi32, #tpu.memory_space<vmem>>, vector<10x1xi32>
    %12 = tpu.iota {dimensions = array<i32: 1>} : vector<10x50xi32>
    %13 = vector.broadcast %11 : vector<10x1xi32> to vector<10x50xi32>
    %14 = arith.cmpi eq, %13, %12 : vector<10x50xi32>
    %15 = arith.extui %14 : vector<10x50xi1> to vector<10x50xi32>
    %16 = arith.sitofp %15 : vector<10x50xi32> to vector<10x50xf32>
    %cst_11 = arith.constant dense<0.000000e+00> : vector<10x32xf32>
    %17 = tpu.matmul %16, %0, %cst_11 {dimension_numbers = #tpu.dot_dimension_numbers<[1], [0], [0], [1], [0, 0, 1, 1], [], []>} : vector<10x50xf32>, vector<50x32xf32>, vector<10x32xf32> -> vector<10x32xf32>
    %c0_12 = arith.constant 0 : index
    %c0_13 = arith.constant 0 : index
    %18 = vector.load %arg3[%c0_12, %c0_13] : memref<42x1xi32, #tpu.memory_space<vmem>>, vector<42x1xi32>
    %19 = tpu.iota {dimensions = array<i32: 1>} : vector<42x30xi32>
    %20 = vector.broadcast %18 : vector<42x1xi32> to vector<42x30xi32>
    %21 = arith.cmpi eq, %20, %19 : vector<42x30xi32>
    %22 = arith.extui %21 : vector<42x30xi1> to vector<42x30xi32>
    %23 = arith.sitofp %22 : vector<42x30xi32> to vector<42x30xf32>
    %cst_14 = arith.constant dense<0.000000e+00> : vector<42x8xf32>
    %24 = tpu.matmul %23, %1, %cst_14 {dimension_numbers = #tpu.dot_dimension_numbers<[1], [0], [0], [1], [0, 0, 1, 1], [], []>} : vector<42x30xf32>, vector<30x8xf32>, vector<42x8xf32> -> vector<42x8xf32>
    %cst_15 = arith.constant 0.000000e+00 : f32
    %25 = vector.broadcast %cst_15 : f32 to vector<38x16xf32>
    %26 = vector.extract_strided_slice %2 {offsets = [0, 0], sizes = [8, 16], strides = [1, 1]} : vector<40x16xf32> to vector<8x16xf32>
    %27 = vector.extract_strided_slice %24 {offsets = [0, 0], sizes = [38, 8], strides = [1, 1]} : vector<42x8xf32> to vector<38x8xf32>
    %cst_16 = arith.constant dense<0.000000e+00> : vector<38x16xf32>
    %28 = tpu.matmul %27, %26, %cst_16 {dimension_numbers = #tpu.dot_dimension_numbers<[1], [0], [0], [1], [0, 0, 1, 1], [], []>} : vector<38x8xf32>, vector<8x16xf32>, vector<38x16xf32> -> vector<38x16xf32>
    %29 = arith.addf %25, %28 : vector<38x16xf32>
    %30 = vector.extract_strided_slice %2 {offsets = [8, 0], sizes = [8, 16], strides = [1, 1]} : vector<40x16xf32> to vector<8x16xf32>
    %31 = vector.extract_strided_slice %24 {offsets = [1, 0], sizes = [38, 8], strides = [1, 1]} : vector<42x8xf32> to vector<38x8xf32>
    %cst_17 = arith.constant dense<0.000000e+00> : vector<38x16xf32>
    %32 = tpu.matmul %31, %30, %cst_17 {dimension_numbers = #tpu.dot_dimension_numbers<[1], [0], [0], [1], [0, 0, 1, 1], [], []>} : vector<38x8xf32>, vector<8x16xf32>, vector<38x16xf32> -> vector<38x16xf32>
    %33 = arith.addf %29, %32 : vector<38x16xf32>
    %34 = vector.extract_strided_slice %2 {offsets = [16, 0], sizes = [8, 16], strides = [1, 1]} : vector<40x16xf32> to vector<8x16xf32>
    %35 = vector.extract_strided_slice %24 {offsets = [2, 0], sizes = [38, 8], strides = [1, 1]} : vector<42x8xf32> to vector<38x8xf32>
    %cst_18 = arith.constant dense<0.000000e+00> : vector<38x16xf32>
    %36 = tpu.matmul %35, %34, %cst_18 {dimension_numbers = #tpu.dot_dimension_numbers<[1], [0], [0], [1], [0, 0, 1, 1], [], []>} : vector<38x8xf32>, vector<8x16xf32>, vector<38x16xf32> -> vector<38x16xf32>
    %37 = arith.addf %33, %36 : vector<38x16xf32>
    %38 = vector.extract_strided_slice %2 {offsets = [24, 0], sizes = [8, 16], strides = [1, 1]} : vector<40x16xf32> to vector<8x16xf32>
    %39 = vector.extract_strided_slice %24 {offsets = [3, 0], sizes = [38, 8], strides = [1, 1]} : vector<42x8xf32> to vector<38x8xf32>
    %cst_19 = arith.constant dense<0.000000e+00> : vector<38x16xf32>
    %40 = tpu.matmul %39, %38, %cst_19 {dimension_numbers = #tpu.dot_dimension_numbers<[1], [0], [0], [1], [0, 0, 1, 1], [], []>} : vector<38x8xf32>, vector<8x16xf32>, vector<38x16xf32> -> vector<38x16xf32>
    %41 = arith.addf %37, %40 : vector<38x16xf32>
    %42 = vector.extract_strided_slice %2 {offsets = [32, 0], sizes = [8, 16], strides = [1, 1]} : vector<40x16xf32> to vector<8x16xf32>
    %43 = vector.extract_strided_slice %24 {offsets = [4, 0], sizes = [38, 8], strides = [1, 1]} : vector<42x8xf32> to vector<38x8xf32>
    %cst_20 = arith.constant dense<0.000000e+00> : vector<38x16xf32>
    %44 = tpu.matmul %43, %42, %cst_20 {dimension_numbers = #tpu.dot_dimension_numbers<[1], [0], [0], [1], [0, 0, 1, 1], [], []>} : vector<38x8xf32>, vector<8x16xf32>, vector<38x16xf32> -> vector<38x16xf32>
    %45 = arith.addf %41, %44 : vector<38x16xf32>
    %46 = vector.broadcast %3 : vector<1x16xf32> to vector<38x16xf32>
    %47 = arith.addf %45, %46 : vector<38x16xf32>
    %cst_21 = arith.constant 0.000000e+00 : f32
    %48 = vector.broadcast %cst_21 : f32 to vector<38x16xf32>
    %49 = arith.maximumf %47, %48 : vector<38x16xf32>
    %50 = vector.extract_strided_slice %49 {offsets = [0, 0], sizes = [3, 16], strides = [1, 1]} : vector<38x16xf32> to vector<3x16xf32>
    %cst_22 = arith.constant dense<0xFF800000> : vector<16xf32>
    %51 = vector.multi_reduction <maximumf>, %50, %cst_22 [0] : vector<3x16xf32> to vector<16xf32>
    %52 = vector.shape_cast %51 : vector<16xf32> to vector<1x16xf32>
    %53 = vector.extract_strided_slice %49 {offsets = [7, 0], sizes = [3, 16], strides = [1, 1]} : vector<38x16xf32> to vector<3x16xf32>
    %cst_23 = arith.constant dense<0xFF800000> : vector<16xf32>
    %54 = vector.multi_reduction <maximumf>, %53, %cst_23 [0] : vector<3x16xf32> to vector<16xf32>
    %55 = vector.shape_cast %54 : vector<16xf32> to vector<1x16xf32>
    %56 = vector.extract_strided_slice %49 {offsets = [14, 0], sizes = [3, 16], strides = [1, 1]} : vector<38x16xf32> to vector<3x16xf32>
    %cst_24 = arith.constant dense<0xFF800000> : vector<16xf32>
    %57 = vector.multi_reduction <maximumf>, %56, %cst_24 [0] : vector<3x16xf32> to vector<16xf32>
    %58 = vector.shape_cast %57 : vector<16xf32> to vector<1x16xf32>
    %59 = vector.extract_strided_slice %49 {offsets = [21, 0], sizes = [3, 16], strides = [1, 1]} : vector<38x16xf32> to vector<3x16xf32>
    %cst_25 = arith.constant dense<0xFF800000> : vector<16xf32>
    %60 = vector.multi_reduction <maximumf>, %59, %cst_25 [0] : vector<3x16xf32> to vector<16xf32>
    %61 = vector.shape_cast %60 : vector<16xf32> to vector<1x16xf32>
    %62 = vector.extract_strided_slice %49 {offsets = [28, 0], sizes = [3, 16], strides = [1, 1]} : vector<38x16xf32> to vector<3x16xf32>
    %cst_26 = arith.constant dense<0xFF800000> : vector<16xf32>
    %63 = vector.multi_reduction <maximumf>, %62, %cst_26 [0] : vector<3x16xf32> to vector<16xf32>
    %64 = vector.shape_cast %63 : vector<16xf32> to vector<1x16xf32>
    %65 = vector.extract_strided_slice %49 {offsets = [35, 0], sizes = [3, 16], strides = [1, 1]} : vector<38x16xf32> to vector<3x16xf32>
    %cst_27 = arith.constant dense<0xFF800000> : vector<16xf32>
    %66 = vector.multi_reduction <maximumf>, %65, %cst_27 [0] : vector<3x16xf32> to vector<16xf32>
    %67 = vector.shape_cast %66 : vector<16xf32> to vector<1x16xf32>
    %68 = tpu.concatenate %52, %55, %58, %61, %64, %67 in 0 : vector<1x16xf32>, vector<1x16xf32>, vector<1x16xf32>, vector<1x16xf32>, vector<1x16xf32>, vector<1x16xf32> -> vector<6x16xf32>
    %c0_28 = arith.constant 0 : index
    %c0_29 = arith.constant 0 : index
    %69 = vector.load %arg4[%c0_28, %c0_29] : memref<70x1xi32, #tpu.memory_space<vmem>>, vector<70x1xi32>
    %70 = tpu.iota {dimensions = array<i32: 1>} : vector<70x30xi32>
    %71 = vector.broadcast %69 : vector<70x1xi32> to vector<70x30xi32>
    %72 = arith.cmpi eq, %71, %70 : vector<70x30xi32>
    %73 = arith.extui %72 : vector<70x30xi1> to vector<70x30xi32>
    %74 = arith.sitofp %73 : vector<70x30xi32> to vector<70x30xf32>
    %cst_30 = arith.constant dense<0.000000e+00> : vector<70x8xf32>
    %75 = tpu.matmul %74, %1, %cst_30 {dimension_numbers = #tpu.dot_dimension_numbers<[1], [0], [0], [1], [0, 0, 1, 1], [], []>} : vector<70x30xf32>, vector<30x8xf32>, vector<70x8xf32> -> vector<70x8xf32>
    %cst_31 = arith.constant 0.000000e+00 : f32
    %76 = vector.broadcast %cst_31 : f32 to vector<66x16xf32>
    %77 = vector.extract_strided_slice %2 {offsets = [0, 0], sizes = [8, 16], strides = [1, 1]} : vector<40x16xf32> to vector<8x16xf32>
    %78 = vector.extract_strided_slice %75 {offsets = [0, 0], sizes = [66, 8], strides = [1, 1]} : vector<70x8xf32> to vector<66x8xf32>
    %cst_32 = arith.constant dense<0.000000e+00> : vector<66x16xf32>
    %79 = tpu.matmul %78, %77, %cst_32 {dimension_numbers = #tpu.dot_dimension_numbers<[1], [0], [0], [1], [0, 0, 1, 1], [], []>} : vector<66x8xf32>, vector<8x16xf32>, vector<66x16xf32> -> vector<66x16xf32>
    %80 = arith.addf %76, %79 : vector<66x16xf32>
    %81 = vector.extract_strided_slice %2 {offsets = [8, 0], sizes = [8, 16], strides = [1, 1]} : vector<40x16xf32> to vector<8x16xf32>
    %82 = vector.extract_strided_slice %75 {offsets = [1, 0], sizes = [66, 8], strides = [1, 1]} : vector<70x8xf32> to vector<66x8xf32>
    %cst_33 = arith.constant dense<0.000000e+00> : vector<66x16xf32>
    %83 = tpu.matmul %82, %81, %cst_33 {dimension_numbers = #tpu.dot_dimension_numbers<[1], [0], [0], [1], [0, 0, 1, 1], [], []>} : vector<66x8xf32>, vector<8x16xf32>, vector<66x16xf32> -> vector<66x16xf32>
    %84 = arith.addf %80, %83 : vector<66x16xf32>
    %85 = vector.extract_strided_slice %2 {offsets = [16, 0], sizes = [8, 16], strides = [1, 1]} : vector<40x16xf32> to vector<8x16xf32>
    %86 = vector.extract_strided_slice %75 {offsets = [2, 0], sizes = [66, 8], strides = [1, 1]} : vector<70x8xf32> to vector<66x8xf32>
    %cst_34 = arith.constant dense<0.000000e+00> : vector<66x16xf32>
    %87 = tpu.matmul %86, %85, %cst_34 {dimension_numbers = #tpu.dot_dimension_numbers<[1], [0], [0], [1], [0, 0, 1, 1], [], []>} : vector<66x8xf32>, vector<8x16xf32>, vector<66x16xf32> -> vector<66x16xf32>
    %88 = arith.addf %84, %87 : vector<66x16xf32>
    %89 = vector.extract_strided_slice %2 {offsets = [24, 0], sizes = [8, 16], strides = [1, 1]} : vector<40x16xf32> to vector<8x16xf32>
    %90 = vector.extract_strided_slice %75 {offsets = [3, 0], sizes = [66, 8], strides = [1, 1]} : vector<70x8xf32> to vector<66x8xf32>
    %cst_35 = arith.constant dense<0.000000e+00> : vector<66x16xf32>
    %91 = tpu.matmul %90, %89, %cst_35 {dimension_numbers = #tpu.dot_dimension_numbers<[1], [0], [0], [1], [0, 0, 1, 1], [], []>} : vector<66x8xf32>, vector<8x16xf32>, vector<66x16xf32> -> vector<66x16xf32>
    %92 = arith.addf %88, %91 : vector<66x16xf32>
    %93 = vector.extract_strided_slice %2 {offsets = [32, 0], sizes = [8, 16], strides = [1, 1]} : vector<40x16xf32> to vector<8x16xf32>
    %94 = vector.extract_strided_slice %75 {offsets = [4, 0], sizes = [66, 8], strides = [1, 1]} : vector<70x8xf32> to vector<66x8xf32>
    %cst_36 = arith.constant dense<0.000000e+00> : vector<66x16xf32>
    %95 = tpu.matmul %94, %93, %cst_36 {dimension_numbers = #tpu.dot_dimension_numbers<[1], [0], [0], [1], [0, 0, 1, 1], [], []>} : vector<66x8xf32>, vector<8x16xf32>, vector<66x16xf32> -> vector<66x16xf32>
    %96 = arith.addf %92, %95 : vector<66x16xf32>
    %97 = vector.broadcast %3 : vector<1x16xf32> to vector<66x16xf32>
    %98 = arith.addf %96, %97 : vector<66x16xf32>
    %cst_37 = arith.constant 0.000000e+00 : f32
    %99 = vector.broadcast %cst_37 : f32 to vector<66x16xf32>
    %100 = arith.maximumf %98, %99 : vector<66x16xf32>
    %101 = vector.extract_strided_slice %100 {offsets = [0, 0], sizes = [3, 16], strides = [1, 1]} : vector<66x16xf32> to vector<3x16xf32>
    %cst_38 = arith.constant dense<0xFF800000> : vector<16xf32>
    %102 = vector.multi_reduction <maximumf>, %101, %cst_38 [0] : vector<3x16xf32> to vector<16xf32>
    %103 = vector.shape_cast %102 : vector<16xf32> to vector<1x16xf32>
    %104 = vector.extract_strided_slice %100 {offsets = [7, 0], sizes = [3, 16], strides = [1, 1]} : vector<66x16xf32> to vector<3x16xf32>
    %cst_39 = arith.constant dense<0xFF800000> : vector<16xf32>
    %105 = vector.multi_reduction <maximumf>, %104, %cst_39 [0] : vector<3x16xf32> to vector<16xf32>
    %106 = vector.shape_cast %105 : vector<16xf32> to vector<1x16xf32>
    %107 = vector.extract_strided_slice %100 {offsets = [14, 0], sizes = [3, 16], strides = [1, 1]} : vector<66x16xf32> to vector<3x16xf32>
    %cst_40 = arith.constant dense<0xFF800000> : vector<16xf32>
    %108 = vector.multi_reduction <maximumf>, %107, %cst_40 [0] : vector<3x16xf32> to vector<16xf32>
    %109 = vector.shape_cast %108 : vector<16xf32> to vector<1x16xf32>
    %110 = vector.extract_strided_slice %100 {offsets = [21, 0], sizes = [3, 16], strides = [1, 1]} : vector<66x16xf32> to vector<3x16xf32>
    %cst_41 = arith.constant dense<0xFF800000> : vector<16xf32>
    %111 = vector.multi_reduction <maximumf>, %110, %cst_41 [0] : vector<3x16xf32> to vector<16xf32>
    %112 = vector.shape_cast %111 : vector<16xf32> to vector<1x16xf32>
    %113 = vector.extract_strided_slice %100 {offsets = [28, 0], sizes = [3, 16], strides = [1, 1]} : vector<66x16xf32> to vector<3x16xf32>
    %cst_42 = arith.constant dense<0xFF800000> : vector<16xf32>
    %114 = vector.multi_reduction <maximumf>, %113, %cst_42 [0] : vector<3x16xf32> to vector<16xf32>
    %115 = vector.shape_cast %114 : vector<16xf32> to vector<1x16xf32>
    %116 = vector.extract_strided_slice %100 {offsets = [35, 0], sizes = [3, 16], strides = [1, 1]} : vector<66x16xf32> to vector<3x16xf32>
    %cst_43 = arith.constant dense<0xFF800000> : vector<16xf32>
    %117 = vector.multi_reduction <maximumf>, %116, %cst_43 [0] : vector<3x16xf32> to vector<16xf32>
    %118 = vector.shape_cast %117 : vector<16xf32> to vector<1x16xf32>
    %119 = vector.extract_strided_slice %100 {offsets = [42, 0], sizes = [3, 16], strides = [1, 1]} : vector<66x16xf32> to vector<3x16xf32>
    %cst_44 = arith.constant dense<0xFF800000> : vector<16xf32>
    %120 = vector.multi_reduction <maximumf>, %119, %cst_44 [0] : vector<3x16xf32> to vector<16xf32>
    %121 = vector.shape_cast %120 : vector<16xf32> to vector<1x16xf32>
    %122 = vector.extract_strided_slice %100 {offsets = [49, 0], sizes = [3, 16], strides = [1, 1]} : vector<66x16xf32> to vector<3x16xf32>
    %cst_45 = arith.constant dense<0xFF800000> : vector<16xf32>
    %123 = vector.multi_reduction <maximumf>, %122, %cst_45 [0] : vector<3x16xf32> to vector<16xf32>
    %124 = vector.shape_cast %123 : vector<16xf32> to vector<1x16xf32>
    %125 = vector.extract_strided_slice %100 {offsets = [56, 0], sizes = [3, 16], strides = [1, 1]} : vector<66x16xf32> to vector<3x16xf32>
    %cst_46 = arith.constant dense<0xFF800000> : vector<16xf32>
    %126 = vector.multi_reduction <maximumf>, %125, %cst_46 [0] : vector<3x16xf32> to vector<16xf32>
    %127 = vector.shape_cast %126 : vector<16xf32> to vector<1x16xf32>
    %128 = vector.extract_strided_slice %100 {offsets = [63, 0], sizes = [3, 16], strides = [1, 1]} : vector<66x16xf32> to vector<3x16xf32>
    %cst_47 = arith.constant dense<0xFF800000> : vector<16xf32>
    %129 = vector.multi_reduction <maximumf>, %128, %cst_47 [0] : vector<3x16xf32> to vector<16xf32>
    %130 = vector.shape_cast %129 : vector<16xf32> to vector<1x16xf32>
    %131 = tpu.concatenate %103, %106, %109, %112, %115, %118, %121, %124, %127, %130 in 0 : vector<1x16xf32>, vector<1x16xf32>, vector<1x16xf32>, vector<1x16xf32>, vector<1x16xf32>, vector<1x16xf32>, vector<1x16xf32>, vector<1x16xf32>, vector<1x16xf32>, vector<1x16xf32> -> vector<10x16xf32>
    %132 = tpu.concatenate %10, %68 in 1 : vector<6x32xf32>, vector<6x16xf32> -> vector<6x48xf32>
    %133 = tpu.concatenate %17, %131 in 1 : vector<10x32xf32>, vector<10x16xf32> -> vector<10x48xf32>
    %c0_48 = arith.constant 0 : index
    %c0_49 = arith.constant 0 : index
    %c0_50 = arith.constant 0 : index
    %134 = vector.load %arg9[%c0_48, %c0_49, %c0_50] : memref<4x48x64xf32, #tpu.memory_space<vmem>>, vector<1x48x64xf32>
    %135 = vector.shape_cast %134 : vector<1x48x64xf32> to vector<48x64xf32>
    %c1 = arith.constant 1 : index
    %c0_51 = arith.constant 0 : index
    %c0_52 = arith.constant 0 : index
    %136 = vector.load %arg9[%c1, %c0_51, %c0_52] : memref<4x48x64xf32, #tpu.memory_space<vmem>>, vector<1x48x64xf32>
    %137 = vector.shape_cast %136 : vector<1x48x64xf32> to vector<48x64xf32>
    %c0_53 = arith.constant 0 : index
    %c0_54 = arith.constant 0 : index
    %c0_55 = arith.constant 0 : index
    %138 = vector.load %arg10[%c0_53, %c0_54, %c0_55] : memref<4x16x64xf32, #tpu.memory_space<vmem>>, vector<1x16x64xf32>
    %139 = vector.shape_cast %138 : vector<1x16x64xf32> to vector<16x64xf32>
    %c1_56 = arith.constant 1 : index
    %c0_57 = arith.constant 0 : index
    %c0_58 = arith.constant 0 : index
    %140 = vector.load %arg10[%c1_56, %c0_57, %c0_58] : memref<4x16x64xf32, #tpu.memory_space<vmem>>, vector<1x16x64xf32>
    %141 = vector.shape_cast %140 : vector<1x16x64xf32> to vector<16x64xf32>
    %c0_59 = arith.constant 0 : index
    %c0_60 = arith.constant 0 : index
    %c0_61 = arith.constant 0 : index
    %142 = vector.load %arg11[%c0_59, %c0_60, %c0_61] : memref<4x1x64xf32, #tpu.memory_space<vmem>>, vector<1x1x64xf32>
    %143 = vector.shape_cast %142 : vector<1x1x64xf32> to vector<1x64xf32>
    %c1_62 = arith.constant 1 : index
    %c0_63 = arith.constant 0 : index
    %c0_64 = arith.constant 0 : index
    %144 = vector.load %arg11[%c1_62, %c0_63, %c0_64] : memref<4x1x64xf32, #tpu.memory_space<vmem>>, vector<1x1x64xf32>
    %145 = vector.shape_cast %144 : vector<1x1x64xf32> to vector<1x64xf32>
    %cst_65 = arith.constant dense<0.000000e+00> : vector<6x64xf32>
    %146 = tpu.matmul %132, %135, %cst_65 {dimension_numbers = #tpu.dot_dimension_numbers<[1], [0], [0], [1], [0, 0, 1, 1], [], []>} : vector<6x48xf32>, vector<48x64xf32>, vector<6x64xf32> -> vector<6x64xf32>
    %147 = vector.broadcast %143 : vector<1x64xf32> to vector<6x64xf32>
    %148 = arith.addf %146, %147 : vector<6x64xf32>
    %c0_66 = arith.constant 0 : index
    %c0_67 = arith.constant 0 : index
    %149 = vector.load %arg17[%c0_66, %c0_67] : memref<6x64xf32, #tpu.memory_space<vmem>>, vector<6x64xf32>
    tpu.vector_store %arg17[%c0_66, %c0_67], %148 {strides = array<i32>} : memref<6x64xf32, #tpu.memory_space<vmem>>, vector<6x64xf32>,
    %cst_68 = arith.constant dense<0.000000e+00> : vector<6x64xf32>
    %150 = tpu.matmul %132, %137, %cst_68 {dimension_numbers = #tpu.dot_dimension_numbers<[1], [0], [0], [1], [0, 0, 1, 1], [], []>} : vector<6x48xf32>, vector<48x64xf32>, vector<6x64xf32> -> vector<6x64xf32>
    %151 = vector.broadcast %145 : vector<1x64xf32> to vector<6x64xf32>
    %152 = arith.addf %150, %151 : vector<6x64xf32>
    %c0_69 = arith.constant 0 : index
    %c0_70 = arith.constant 0 : index
    %153 = vector.load %arg18[%c0_69, %c0_70] : memref<6x64xf32, #tpu.memory_space<vmem>>, vector<6x64xf32>
    tpu.vector_store %arg18[%c0_69, %c0_70], %152 {strides = array<i32>} : memref<6x64xf32, #tpu.memory_space<vmem>>, vector<6x64xf32>,
    %cst_71 = arith.constant 0.000000e+00 : f32
    %154 = vector.broadcast %cst_71 : f32 to vector<1x16xf32>
    %c0_i32 = arith.constant 0 : i32
    %c5_i32 = arith.constant 5 : i32
    %155 = arith.subi %c5_i32, %c0_i32 : i32
    %156 = arith.index_cast %c0_i32 : i32 to index
    %c0_72 = arith.constant 0 : index
    %157 = vector.load %arg17[%156, %c0_72] : memref<6x64xf32, #tpu.memory_space<vmem>>, vector<1x64xf32>
    %cst_73 = arith.constant dense<0.000000e+00> : vector<1x64xf32>
    %158 = tpu.matmul %154, %139, %cst_73 {dimension_numbers = #tpu.dot_dimension_numbers<[1], [0], [0], [1], [0, 0, 1, 1], [], []>} : vector<1x16xf32>, vector<16x64xf32>, vector<1x64xf32> -> vector<1x64xf32>
    %159 = arith.addf %157, %158 : vector<1x64xf32>
    %160 = arith.negf %159 : vector<1x64xf32>
    %161 = math.exp %160 : vector<1x64xf32>
    %cst_74 = arith.constant 1.000000e+00 : f32
    %162 = vector.broadcast %cst_74 : f32 to vector<1x64xf32>
    %163 = arith.addf %162, %161 : vector<1x64xf32>
    %164 = arith.divf %162, %163 : vector<1x64xf32>
    %165 = vector.extract_strided_slice %159 {offsets = [0, 32], sizes = [1, 16], strides = [1, 1]} : vector<1x64xf32> to vector<1x16xf32>
    %166 = math.tanh %165 : vector<1x16xf32>
    %167 = vector.extract_strided_slice %164 {offsets = [0, 16], sizes = [1, 16], strides = [1, 1]} : vector<1x64xf32> to vector<1x16xf32>
    %168 = arith.mulf %167, %154 : vector<1x16xf32>
    %169 = vector.extract_strided_slice %164 {offsets = [0, 0], sizes = [1, 16], strides = [1, 1]} : vector<1x64xf32> to vector<1x16xf32>
    %170 = arith.mulf %169, %166 : vector<1x16xf32>
    %171 = arith.addf %168, %170 : vector<1x16xf32>
    %172 = vector.extract_strided_slice %164 {offsets = [0, 48], sizes = [1, 16], strides = [1, 1]} : vector<1x64xf32> to vector<1x16xf32>
    %173 = math.tanh %171 : vector<1x16xf32>
    %174 = arith.mulf %172, %173 : vector<1x16xf32>
    %175 = arith.index_cast %c0_i32 : i32 to index
    %c0_75 = arith.constant 0 : index
    %176 = vector.load %arg21[%175, %c0_75] : memref<6x32xf32, #tpu.memory_space<vmem>>, vector<1x16xf32>
    tpu.vector_store %arg21[%175, %c0_75], %174 {strides = array<i32>} : memref<6x32xf32, #tpu.memory_space<vmem>>, vector<1x16xf32>,
    %177 = arith.index_cast %155 : i32 to index
    %c0_76 = arith.constant 0 : index
    %178 = vector.load %arg18[%177, %c0_76] : memref<6x64xf32, #tpu.memory_space<vmem>>, vector<1x64xf32>
    %cst_77 = arith.constant dense<0.000000e+00> : vector<1x64xf32>
    %179 = tpu.matmul %154, %141, %cst_77 {dimension_numbers = #tpu.dot_dimension_numbers<[1], [0], [0], [1], [0, 0, 1, 1], [], []>} : vector<1x16xf32>, vector<16x64xf32>, vector<1x64xf32> -> vector<1x64xf32>
    %180 = arith.addf %178, %179 : vector<1x64xf32>
    %181 = arith.negf %180 : vector<1x64xf32>
    %182 = math.exp %181 : vector<1x64xf32>
    %cst_78 = arith.constant 1.000000e+00 : f32
    %183 = vector.broadcast %cst_78 : f32 to vector<1x64xf32>
    %184 = arith.addf %183, %182 : vector<1x64xf32>
    %185 = arith.divf %183, %184 : vector<1x64xf32>
    %186 = vector.extract_strided_slice %180 {offsets = [0, 32], sizes = [1, 16], strides = [1, 1]} : vector<1x64xf32> to vector<1x16xf32>
    %187 = math.tanh %186 : vector<1x16xf32>
    %188 = vector.extract_strided_slice %185 {offsets = [0, 16], sizes = [1, 16], strides = [1, 1]} : vector<1x64xf32> to vector<1x16xf32>
    %189 = arith.mulf %188, %154 : vector<1x16xf32>
    %190 = vector.extract_strided_slice %185 {offsets = [0, 0], sizes = [1, 16], strides = [1, 1]} : vector<1x64xf32> to vector<1x16xf32>
    %191 = arith.mulf %190, %187 : vector<1x16xf32>
    %192 = arith.addf %189, %191 : vector<1x16xf32>
    %193 = vector.extract_strided_slice %185 {offsets = [0, 48], sizes = [1, 16], strides = [1, 1]} : vector<1x64xf32> to vector<1x16xf32>
    %194 = math.tanh %192 : vector<1x16xf32>
    %195 = arith.mulf %193, %194 : vector<1x16xf32>
    %196 = arith.index_cast %155 : i32 to index
    %c16 = arith.constant 16 : index
    %197 = vector.load %arg21[%196, %c16] : memref<6x32xf32, #tpu.memory_space<vmem>>, vector<1x16xf32>
    tpu.vector_store %arg21[%196, %c16], %195 {strides = array<i32>} : memref<6x32xf32, #tpu.memory_space<vmem>>, vector<1x16xf32>,
    %c1_i32 = arith.constant 1 : i32
    %c5_i32_79 = arith.constant 5 : i32
    %198 = arith.subi %c5_i32_79, %c1_i32 : i32
    %199 = arith.index_cast %c1_i32 : i32 to index
    %c0_80 = arith.constant 0 : index
    %200 = vector.load %arg17[%199, %c0_80] : memref<6x64xf32, #tpu.memory_space<vmem>>, vector<1x64xf32>
    %cst_81 = arith.constant dense<0.000000e+00> : vector<1x64xf32>
    %201 = tpu.matmul %174, %139, %cst_81 {dimension_numbers = #tpu.dot_dimension_numbers<[1], [0], [0], [1], [0, 0, 1, 1], [], []>} : vector<1x16xf32>, vector<16x64xf32>, vector<1x64xf32> -> vector<1x64xf32>
    %202 = arith.addf %200, %201 : vector<1x64xf32>
    %203 = arith.negf %202 : vector<1x64xf32>
    %204 = math.exp %203 : vector<1x64xf32>
    %cst_82 = arith.constant 1.000000e+00 : f32
    %205 = vector.broadcast %cst_82 : f32 to vector<1x64xf32>
    %206 = arith.addf %205, %204 : vector<1x64xf32>
    %207 = arith.divf %205, %206 : vector<1x64xf32>
    %208 = vector.extract_strided_slice %202 {offsets = [0, 32], sizes = [1, 16], strides = [1, 1]} : vector<1x64xf32> to vector<1x16xf32>
    %209 = math.tanh %208 : vector<1x16xf32>
    %210 = vector.extract_strided_slice %207 {offsets = [0, 16], sizes = [1, 16], strides = [1, 1]} : vector<1x64xf32> to vector<1x16xf32>
    %211 = arith.mulf %210, %171 : vector<1x16xf32>
    %212 = vector.extract_strided_slice %207 {offsets = [0, 0], sizes = [1, 16], strides = [1, 1]} : vector<1x64xf32> to vector<1x16xf32>
    %213 = arith.mulf %212, %209 : vector<1x16xf32>
    %214 = arith.addf %211, %213 : vector<1x16xf32>
    %215 = vector.extract_strided_slice %207 {offsets = [0, 48], sizes = [1, 16], strides = [1, 1]} : vector<1x64xf32> to vector<1x16xf32>
    %216 = math.tanh %214 : vector<1x16xf32>
    %217 = arith.mulf %215, %216 : vector<1x16xf32>
    %218 = arith.index_cast %c1_i32 : i32 to index
    %c0_83 = arith.constant 0 : index
    %219 = vector.load %arg21[%218, %c0_83] : memref<6x32xf32, #tpu.memory_space<vmem>>, vector<1x16xf32>
    tpu.vector_store %arg21[%218, %c0_83], %217 {strides = array<i32>} : memref<6x32xf32, #tpu.memory_space<vmem>>, vector<1x16xf32>,
    %220 = arith.index_cast %198 : i32 to index
    %c0_84 = arith.constant 0 : index
    %221 = vector.load %arg18[%220, %c0_84] : memref<6x64xf32, #tpu.memory_space<vmem>>, vector<1x64xf32>
    %cst_85 = arith.constant dense<0.000000e+00> : vector<1x64xf32>
    %222 = tpu.matmul %195, %141, %cst_85 {dimension_numbers = #tpu.dot_dimension_numbers<[1], [0], [0], [1], [0, 0, 1, 1], [], []>} : vector<1x16xf32>, vector<16x64xf32>, vector<1x64xf32> -> vector<1x64xf32>
    %223 = arith.addf %221, %222 : vector<1x64xf32>
    %224 = arith.negf %223 : vector<1x64xf32>
    %225 = math.exp %224 : vector<1x64xf32>
    %cst_86 = arith.constant 1.000000e+00 : f32
    %226 = vector.broadcast %cst_86 : f32 to vector<1x64xf32>
    %227 = arith.addf %226, %225 : vector<1x64xf32>
    %228 = arith.divf %226, %227 : vector<1x64xf32>
    %229 = vector.extract_strided_slice %223 {offsets = [0, 32], sizes = [1, 16], strides = [1, 1]} : vector<1x64xf32> to vector<1x16xf32>
    %230 = math.tanh %229 : vector<1x16xf32>
    %231 = vector.extract_strided_slice %228 {offsets = [0, 16], sizes = [1, 16], strides = [1, 1]} : vector<1x64xf32> to vector<1x16xf32>
    %232 = arith.mulf %231, %192 : vector<1x16xf32>
    %233 = vector.extract_strided_slice %228 {offsets = [0, 0], sizes = [1, 16], strides = [1, 1]} : vector<1x64xf32> to vector<1x16xf32>
    %234 = arith.mulf %233, %230 : vector<1x16xf32>
    %235 = arith.addf %232, %234 : vector<1x16xf32>
    %236 = vector.extract_strided_slice %228 {offsets = [0, 48], sizes = [1, 16], strides = [1, 1]} : vector<1x64xf32> to vector<1x16xf32>
    %237 = math.tanh %235 : vector<1x16xf32>
    %238 = arith.mulf %236, %237 : vector<1x16xf32>
    %239 = arith.index_cast %198 : i32 to index
    %c16_87 = arith.constant 16 : index
    %240 = vector.load %arg21[%239, %c16_87] : memref<6x32xf32, #tpu.memory_space<vmem>>, vector<1x16xf32>
    tpu.vector_store %arg21[%239, %c16_87], %238 {strides = array<i32>} : memref<6x32xf32, #tpu.memory_space<vmem>>, vector<1x16xf32>,
    %c2_i32 = arith.constant 2 : i32
    %c5_i32_88 = arith.constant 5 : i32
    %241 = arith.subi %c5_i32_88, %c2_i32 : i32
    %242 = arith.index_cast %c2_i32 : i32 to index
    %c0_89 = arith.constant 0 : index
    %243 = vector.load %arg17[%242, %c0_89] : memref<6x64xf32, #tpu.memory_space<vmem>>, vector<1x64xf32>
    %cst_90 = arith.constant dense<0.000000e+00> : vector<1x64xf32>
    %244 = tpu.matmul %217, %139, %cst_90 {dimension_numbers = #tpu.dot_dimension_numbers<[1], [0], [0], [1], [0, 0, 1, 1], [], []>} : vector<1x16xf32>, vector<16x64xf32>, vector<1x64xf32> -> vector<1x64xf32>
    %245 = arith.addf %243, %244 : vector<1x64xf32>
    %246 = arith.negf %245 : vector<1x64xf32>
    %247 = math.exp %246 : vector<1x64xf32>
    %cst_91 = arith.constant 1.000000e+00 : f32
    %248 = vector.broadcast %cst_91 : f32 to vector<1x64xf32>
    %249 = arith.addf %248, %247 : vector<1x64xf32>
    %250 = arith.divf %248, %249 : vector<1x64xf32>
    %251 = vector.extract_strided_slice %245 {offsets = [0, 32], sizes = [1, 16], strides = [1, 1]} : vector<1x64xf32> to vector<1x16xf32>
    %252 = math.tanh %251 : vector<1x16xf32>
    %253 = vector.extract_strided_slice %250 {offsets = [0, 16], sizes = [1, 16], strides = [1, 1]} : vector<1x64xf32> to vector<1x16xf32>
    %254 = arith.mulf %253, %214 : vector<1x16xf32>
    %255 = vector.extract_strided_slice %250 {offsets = [0, 0], sizes = [1, 16], strides = [1, 1]} : vector<1x64xf32> to vector<1x16xf32>
    %256 = arith.mulf %255, %252 : vector<1x16xf32>
    %257 = arith.addf %254, %256 : vector<1x16xf32>
    %258 = vector.extract_strided_slice %250 {offsets = [0, 48], sizes = [1, 16], strides = [1, 1]} : vector<1x64xf32> to vector<1x16xf32>
    %259 = math.tanh %257 : vector<1x16xf32>
    %260 = arith.mulf %258, %259 : vector<1x16xf32>
    %261 = arith.index_cast %c2_i32 : i32 to index
    %c0_92 = arith.constant 0 : index
    %262 = vector.load %arg21[%261, %c0_92] : memref<6x32xf32, #tpu.memory_space<vmem>>, vector<1x16xf32>
    tpu.vector_store %arg21[%261, %c0_92], %260 {strides = array<i32>} : memref<6x32xf32, #tpu.memory_space<vmem>>, vector<1x16xf32>,
    %263 = arith.index_cast %241 : i32 to index
    %c0_93 = arith.constant 0 : index
    %264 = vector.load %arg18[%263, %c0_93] : memref<6x64xf32, #tpu.memory_space<vmem>>, vector<1x64xf32>
    %cst_94 = arith.constant dense<0.000000e+00> : vector<1x64xf32>
    %265 = tpu.matmul %238, %141, %cst_94 {dimension_numbers = #tpu.dot_dimension_numbers<[1], [0], [0], [1], [0, 0, 1, 1], [], []>} : vector<1x16xf32>, vector<16x64xf32>, vector<1x64xf32> -> vector<1x64xf32>
    %266 = arith.addf %264, %265 : vector<1x64xf32>
    %267 = arith.negf %266 : vector<1x64xf32>
    %268 = math.exp %267 : vector<1x64xf32>
    %cst_95 = arith.constant 1.000000e+00 : f32
    %269 = vector.broadcast %cst_95 : f32 to vector<1x64xf32>
    %270 = arith.addf %269, %268 : vector<1x64xf32>
    %271 = arith.divf %269, %270 : vector<1x64xf32>
    %272 = vector.extract_strided_slice %266 {offsets = [0, 32], sizes = [1, 16], strides = [1, 1]} : vector<1x64xf32> to vector<1x16xf32>
    %273 = math.tanh %272 : vector<1x16xf32>
    %274 = vector.extract_strided_slice %271 {offsets = [0, 16], sizes = [1, 16], strides = [1, 1]} : vector<1x64xf32> to vector<1x16xf32>
    %275 = arith.mulf %274, %235 : vector<1x16xf32>
    %276 = vector.extract_strided_slice %271 {offsets = [0, 0], sizes = [1, 16], strides = [1, 1]} : vector<1x64xf32> to vector<1x16xf32>
    %277 = arith.mulf %276, %273 : vector<1x16xf32>
    %278 = arith.addf %275, %277 : vector<1x16xf32>
    %279 = vector.extract_strided_slice %271 {offsets = [0, 48], sizes = [1, 16], strides = [1, 1]} : vector<1x64xf32> to vector<1x16xf32>
    %280 = math.tanh %278 : vector<1x16xf32>
    %281 = arith.mulf %279, %280 : vector<1x16xf32>
    %282 = arith.index_cast %241 : i32 to index
    %c16_96 = arith.constant 16 : index
    %283 = vector.load %arg21[%282, %c16_96] : memref<6x32xf32, #tpu.memory_space<vmem>>, vector<1x16xf32>
    tpu.vector_store %arg21[%282, %c16_96], %281 {strides = array<i32>} : memref<6x32xf32, #tpu.memory_space<vmem>>, vector<1x16xf32>,
    %c3_i32 = arith.constant 3 : i32
    %c5_i32_97 = arith.constant 5 : i32
    %284 = arith.subi %c5_i32_97, %c3_i32 : i32
    %285 = arith.index_cast %c3_i32 : i32 to index
    %c0_98 = arith.constant 0 : index
    %286 = vector.load %arg17[%285, %c0_98] : memref<6x64xf32, #tpu.memory_space<vmem>>, vector<1x64xf32>
    %cst_99 = arith.constant dense<0.000000e+00> : vector<1x64xf32>
    %287 = tpu.matmul %260, %139, %cst_99 {dimension_numbers = #tpu.dot_dimension_numbers<[1], [0], [0], [1], [0, 0, 1, 1], [], []>} : vector<1x16xf32>, vector<16x64xf32>, vector<1x64xf32> -> vector<1x64xf32>
    %288 = arith.addf %286, %287 : vector<1x64xf32>
    %289 = arith.negf %288 : vector<1x64xf32>
    %290 = math.exp %289 : vector<1x64xf32>
    %cst_100 = arith.constant 1.000000e+00 : f32
    %291 = vector.broadcast %cst_100 : f32 to vector<1x64xf32>
    %292 = arith.addf %291, %290 : vector<1x64xf32>
    %293 = arith.divf %291, %292 : vector<1x64xf32>
    %294 = vector.extract_strided_slice %288 {offsets = [0, 32], sizes = [1, 16], strides = [1, 1]} : vector<1x64xf32> to vector<1x16xf32>
    %295 = math.tanh %294 : vector<1x16xf32>
    %296 = vector.extract_strided_slice %293 {offsets = [0, 16], sizes = [1, 16], strides = [1, 1]} : vector<1x64xf32> to vector<1x16xf32>
    %297 = arith.mulf %296, %257 : vector<1x16xf32>
    %298 = vector.extract_strided_slice %293 {offsets = [0, 0], sizes = [1, 16], strides = [1, 1]} : vector<1x64xf32> to vector<1x16xf32>
    %299 = arith.mulf %298, %295 : vector<1x16xf32>
    %300 = arith.addf %297, %299 : vector<1x16xf32>
    %301 = vector.extract_strided_slice %293 {offsets = [0, 48], sizes = [1, 16], strides = [1, 1]} : vector<1x64xf32> to vector<1x16xf32>
    %302 = math.tanh %300 : vector<1x16xf32>
    %303 = arith.mulf %301, %302 : vector<1x16xf32>
    %304 = arith.index_cast %c3_i32 : i32 to index
    %c0_101 = arith.constant 0 : index
    %305 = vector.load %arg21[%304, %c0_101] : memref<6x32xf32, #tpu.memory_space<vmem>>, vector<1x16xf32>
    tpu.vector_store %arg21[%304, %c0_101], %303 {strides = array<i32>} : memref<6x32xf32, #tpu.memory_space<vmem>>, vector<1x16xf32>,
    %306 = arith.index_cast %284 : i32 to index
    %c0_102 = arith.constant 0 : index
    %307 = vector.load %arg18[%306, %c0_102] : memref<6x64xf32, #tpu.memory_space<vmem>>, vector<1x64xf32>
    %cst_103 = arith.constant dense<0.000000e+00> : vector<1x64xf32>
    %308 = tpu.matmul %281, %141, %cst_103 {dimension_numbers = #tpu.dot_dimension_numbers<[1], [0], [0], [1], [0, 0, 1, 1], [], []>} : vector<1x16xf32>, vector<16x64xf32>, vector<1x64xf32> -> vector<1x64xf32>
    %309 = arith.addf %307, %308 : vector<1x64xf32>
    %310 = arith.negf %309 : vector<1x64xf32>
    %311 = math.exp %310 : vector<1x64xf32>
    %cst_104 = arith.constant 1.000000e+00 : f32
    %312 = vector.broadcast %cst_104 : f32 to vector<1x64xf32>
    %313 = arith.addf %312, %311 : vector<1x64xf32>
    %314 = arith.divf %312, %313 : vector<1x64xf32>
    %315 = vector.extract_strided_slice %309 {offsets = [0, 32], sizes = [1, 16], strides = [1, 1]} : vector<1x64xf32> to vector<1x16xf32>
    %316 = math.tanh %315 : vector<1x16xf32>
    %317 = vector.extract_strided_slice %314 {offsets = [0, 16], sizes = [1, 16], strides = [1, 1]} : vector<1x64xf32> to vector<1x16xf32>
    %318 = arith.mulf %317, %278 : vector<1x16xf32>
    %319 = vector.extract_strided_slice %314 {offsets = [0, 0], sizes = [1, 16], strides = [1, 1]} : vector<1x64xf32> to vector<1x16xf32>
    %320 = arith.mulf %319, %316 : vector<1x16xf32>
    %321 = arith.addf %318, %320 : vector<1x16xf32>
    %322 = vector.extract_strided_slice %314 {offsets = [0, 48], sizes = [1, 16], strides = [1, 1]} : vector<1x64xf32> to vector<1x16xf32>
    %323 = math.tanh %321 : vector<1x16xf32>
    %324 = arith.mulf %322, %323 : vector<1x16xf32>
    %325 = arith.index_cast %284 : i32 to index
    %c16_105 = arith.constant 16 : index
    %326 = vector.load %arg21[%325, %c16_105] : memref<6x32xf32, #tpu.memory_space<vmem>>, vector<1x16xf32>
    tpu.vector_store %arg21[%325, %c16_105], %324 {strides = array<i32>} : memref<6x32xf32, #tpu.memory_space<vmem>>, vector<1x16xf32>,
    %c4_i32 = arith.constant 4 : i32
    %c5_i32_106 = arith.constant 5 : i32
    %327 = arith.subi %c5_i32_106, %c4_i32 : i32
    %328 = arith.index_cast %c4_i32 : i32 to index
    %c0_107 = arith.constant 0 : index
    %329 = vector.load %arg17[%328, %c0_107] : memref<6x64xf32, #tpu.memory_space<vmem>>, vector<1x64xf32>
    %cst_108 = arith.constant dense<0.000000e+00> : vector<1x64xf32>
    %330 = tpu.matmul %303, %139, %cst_108 {dimension_numbers = #tpu.dot_dimension_numbers<[1], [0], [0], [1], [0, 0, 1, 1], [], []>} : vector<1x16xf32>, vector<16x64xf32>, vector<1x64xf32> -> vector<1x64xf32>
    %331 = arith.addf %329, %330 : vector<1x64xf32>
    %332 = arith.negf %331 : vector<1x64xf32>
    %333 = math.exp %332 : vector<1x64xf32>
    %cst_109 = arith.constant 1.000000e+00 : f32
    %334 = vector.broadcast %cst_109 : f32 to vector<1x64xf32>
    %335 = arith.addf %334, %333 : vector<1x64xf32>
    %336 = arith.divf %334, %335 : vector<1x64xf32>
    %337 = vector.extract_strided_slice %331 {offsets = [0, 32], sizes = [1, 16], strides = [1, 1]} : vector<1x64xf32> to vector<1x16xf32>
    %338 = math.tanh %337 : vector<1x16xf32>
    %339 = vector.extract_strided_slice %336 {offsets = [0, 16], sizes = [1, 16], strides = [1, 1]} : vector<1x64xf32> to vector<1x16xf32>
    %340 = arith.mulf %339, %300 : vector<1x16xf32>
    %341 = vector.extract_strided_slice %336 {offsets = [0, 0], sizes = [1, 16], strides = [1, 1]} : vector<1x64xf32> to vector<1x16xf32>
    %342 = arith.mulf %341, %338 : vector<1x16xf32>
    %343 = arith.addf %340, %342 : vector<1x16xf32>
    %344 = vector.extract_strided_slice %336 {offsets = [0, 48], sizes = [1, 16], strides = [1, 1]} : vector<1x64xf32> to vector<1x16xf32>
    %345 = math.tanh %343 : vector<1x16xf32>
    %346 = arith.mulf %344, %345 : vector<1x16xf32>
    %347 = arith.index_cast %c4_i32 : i32 to index
    %c0_110 = arith.constant 0 : index
    %348 = vector.load %arg21[%347, %c0_110] : memref<6x32xf32, #tpu.memory_space<vmem>>, vector<1x16xf32>
    tpu.vector_store %arg21[%347, %c0_110], %346 {strides = array<i32>} : memref<6x32xf32, #tpu.memory_space<vmem>>, vector<1x16xf32>,
    %349 = arith.index_cast %327 : i32 to index
    %c0_111 = arith.constant 0 : index
    %350 = vector.load %arg18[%349, %c0_111] : memref<6x64xf32, #tpu.memory_space<vmem>>, vector<1x64xf32>
    %cst_112 = arith.constant dense<0.000000e+00> : vector<1x64xf32>
    %351 = tpu.matmul %324, %141, %cst_112 {dimension_numbers = #tpu.dot_dimension_numbers<[1], [0], [0], [1], [0, 0, 1, 1], [], []>} : vector<1x16xf32>, vector<16x64xf32>, vector<1x64xf32> -> vector<1x64xf32>
    %352 = arith.addf %350, %351 : vector<1x64xf32>
    %353 = arith.negf %352 : vector<1x64xf32>
    %354 = math.exp %353 : vector<1x64xf32>
    %cst_113 = arith.constant 1.000000e+00 : f32
    %355 = vector.broadcast %cst_113 : f32 to vector<1x64xf32>
    %356 = arith.addf %355, %354 : vector<1x64xf32>
    %357 = arith.divf %355, %356 : vector<1x64xf32>
    %358 = vector.extract_strided_slice %352 {offsets = [0, 32], sizes = [1, 16], strides = [1, 1]} : vector<1x64xf32> to vector<1x16xf32>
    %359 = math.tanh %358 : vector<1x16xf32>
    %360 = vector.extract_strided_slice %357 {offsets = [0, 16], sizes = [1, 16], strides = [1, 1]} : vector<1x64xf32> to vector<1x16xf32>
    %361 = arith.mulf %360, %321 : vector<1x16xf32>
    %362 = vector.extract_strided_slice %357 {offsets = [0, 0], sizes = [1, 16], strides = [1, 1]} : vector<1x64xf32> to vector<1x16xf32>
    %363 = arith.mulf %362, %359 : vector<1x16xf32>
    %364 = arith.addf %361, %363 : vector<1x16xf32>
    %365 = vector.extract_strided_slice %357 {offsets = [0, 48], sizes = [1, 16], strides = [1, 1]} : vector<1x64xf32> to vector<1x16xf32>
    %366 = math.tanh %364 : vector<1x16xf32>
    %367 = arith.mulf %365, %366 : vector<1x16xf32>
    %368 = arith.index_cast %327 : i32 to index
    %c16_114 = arith.constant 16 : index
    %369 = vector.load %arg21[%368, %c16_114] : memref<6x32xf32, #tpu.memory_space<vmem>>, vector<1x16xf32>
    tpu.vector_store %arg21[%368, %c16_114], %367 {strides = array<i32>} : memref<6x32xf32, #tpu.memory_space<vmem>>, vector<1x16xf32>,
    %c5_i32_115 = arith.constant 5 : i32
    %c5_i32_116 = arith.constant 5 : i32
    %370 = arith.subi %c5_i32_116, %c5_i32_115 : i32
    %371 = arith.index_cast %c5_i32_115 : i32 to index
    %c0_117 = arith.constant 0 : index
    %372 = vector.load %arg17[%371, %c0_117] : memref<6x64xf32, #tpu.memory_space<vmem>>, vector<1x64xf32>
    %cst_118 = arith.constant dense<0.000000e+00> : vector<1x64xf32>
    %373 = tpu.matmul %346, %139, %cst_118 {dimension_numbers = #tpu.dot_dimension_numbers<[1], [0], [0], [1], [0, 0, 1, 1], [], []>} : vector<1x16xf32>, vector<16x64xf32>, vector<1x64xf32> -> vector<1x64xf32>
    %374 = arith.addf %372, %373 : vector<1x64xf32>
    %375 = arith.negf %374 : vector<1x64xf32>
    %376 = math.exp %375 : vector<1x64xf32>
    %cst_119 = arith.constant 1.000000e+00 : f32
    %377 = vector.broadcast %cst_119 : f32 to vector<1x64xf32>
    %378 = arith.addf %377, %376 : vector<1x64xf32>
    %379 = arith.divf %377, %378 : vector<1x64xf32>
    %380 = vector.extract_strided_slice %374 {offsets = [0, 32], sizes = [1, 16], strides = [1, 1]} : vector<1x64xf32> to vector<1x16xf32>
    %381 = math.tanh %380 : vector<1x16xf32>
    %382 = vector.extract_strided_slice %379 {offsets = [0, 16], sizes = [1, 16], strides = [1, 1]} : vector<1x64xf32> to vector<1x16xf32>
    %383 = arith.mulf %382, %343 : vector<1x16xf32>
    %384 = vector.extract_strided_slice %379 {offsets = [0, 0], sizes = [1, 16], strides = [1, 1]} : vector<1x64xf32> to vector<1x16xf32>
    %385 = arith.mulf %384, %381 : vector<1x16xf32>
    %386 = arith.addf %383, %385 : vector<1x16xf32>
    %387 = vector.extract_strided_slice %379 {offsets = [0, 48], sizes = [1, 16], strides = [1, 1]} : vector<1x64xf32> to vector<1x16xf32>
    %388 = math.tanh %386 : vector<1x16xf32>
    %389 = arith.mulf %387, %388 : vector<1x16xf32>
    %390 = arith.index_cast %c5_i32_115 : i32 to index
    %c0_120 = arith.constant 0 : index
    %391 = vector.load %arg21[%390, %c0_120] : memref<6x32xf32, #tpu.memory_space<vmem>>, vector<1x16xf32>
    tpu.vector_store %arg21[%390, %c0_120], %389 {strides = array<i32>} : memref<6x32xf32, #tpu.memory_space<vmem>>, vector<1x16xf32>,
    %392 = arith.index_cast %370 : i32 to index
    %c0_121 = arith.constant 0 : index
    %393 = vector.load %arg18[%392, %c0_121] : memref<6x64xf32, #tpu.memory_space<vmem>>, vector<1x64xf32>
    %cst_122 = arith.constant dense<0.000000e+00> : vector<1x64xf32>
    %394 = tpu.matmul %367, %141, %cst_122 {dimension_numbers = #tpu.dot_dimension_numbers<[1], [0], [0], [1], [0, 0, 1, 1], [], []>} : vector<1x16xf32>, vector<16x64xf32>, vector<1x64xf32> -> vector<1x64xf32>
    %395 = arith.addf %393, %394 : vector<1x64xf32>
    %396 = arith.negf %395 : vector<1x64xf32>
    %397 = math.exp %396 : vector<1x64xf32>
    %cst_123 = arith.constant 1.000000e+00 : f32
    %398 = vector.broadcast %cst_123 : f32 to vector<1x64xf32>
    %399 = arith.addf %398, %397 : vector<1x64xf32>
    %400 = arith.divf %398, %399 : vector<1x64xf32>
    %401 = vector.extract_strided_slice %395 {offsets = [0, 32], sizes = [1, 16], strides = [1, 1]} : vector<1x64xf32> to vector<1x16xf32>
    %402 = math.tanh %401 : vector<1x16xf32>
    %403 = vector.extract_strided_slice %400 {offsets = [0, 16], sizes = [1, 16], strides = [1, 1]} : vector<1x64xf32> to vector<1x16xf32>
    %404 = arith.mulf %403, %364 : vector<1x16xf32>
    %405 = vector.extract_strided_slice %400 {offsets = [0, 0], sizes = [1, 16], strides = [1, 1]} : vector<1x64xf32> to vector<1x16xf32>
    %406 = arith.mulf %405, %402 : vector<1x16xf32>
    %407 = arith.addf %404, %406 : vector<1x16xf32>
    %408 = vector.extract_strided_slice %400 {offsets = [0, 48], sizes = [1, 16], strides = [1, 1]} : vector<1x64xf32> to vector<1x16xf32>
    %409 = math.tanh %407 : vector<1x16xf32>
    %410 = arith.mulf %408, %409 : vector<1x16xf32>
    %411 = arith.index_cast %370 : i32 to index
    %c16_124 = arith.constant 16 : index
    %412 = vector.load %arg21[%411, %c16_124] : memref<6x32xf32, #tpu.memory_space<vmem>>, vector<1x16xf32>
    tpu.vector_store %arg21[%411, %c16_124], %410 {strides = array<i32>} : memref<6x32xf32, #tpu.memory_space<vmem>>, vector<1x16xf32>,
    %c6_i32 = arith.constant 6 : i32
    %c2 = arith.constant 2 : index
    %c0_125 = arith.constant 0 : index
    %c0_126 = arith.constant 0 : index
    %413 = vector.load %arg9[%c2, %c0_125, %c0_126] : memref<4x48x64xf32, #tpu.memory_space<vmem>>, vector<1x48x64xf32>
    %414 = vector.shape_cast %413 : vector<1x48x64xf32> to vector<48x64xf32>
    %c3 = arith.constant 3 : index
    %c0_127 = arith.constant 0 : index
    %c0_128 = arith.constant 0 : index
    %415 = vector.load %arg9[%c3, %c0_127, %c0_128] : memref<4x48x64xf32, #tpu.memory_space<vmem>>, vector<1x48x64xf32>
    %416 = vector.shape_cast %415 : vector<1x48x64xf32> to vector<48x64xf32>
    %c2_129 = arith.constant 2 : index
    %c0_130 = arith.constant 0 : index
    %c0_131 = arith.constant 0 : index
    %417 = vector.load %arg10[%c2_129, %c0_130, %c0_131] : memref<4x16x64xf32, #tpu.memory_space<vmem>>, vector<1x16x64xf32>
    %418 = vector.shape_cast %417 : vector<1x16x64xf32> to vector<16x64xf32>
    %c3_132 = arith.constant 3 : index
    %c0_133 = arith.constant 0 : index
    %c0_134 = arith.constant 0 : index
    %419 = vector.load %arg10[%c3_132, %c0_133, %c0_134] : memref<4x16x64xf32, #tpu.memory_space<vmem>>, vector<1x16x64xf32>
    %420 = vector.shape_cast %419 : vector<1x16x64xf32> to vector<16x64xf32>
    %c2_135 = arith.constant 2 : index
    %c0_136 = arith.constant 0 : index
    %c0_137 = arith.constant 0 : index
    %421 = vector.load %arg11[%c2_135, %c0_136, %c0_137] : memref<4x1x64xf32, #tpu.memory_space<vmem>>, vector<1x1x64xf32>
    %422 = vector.shape_cast %421 : vector<1x1x64xf32> to vector<1x64xf32>
    %c3_138 = arith.constant 3 : index
    %c0_139 = arith.constant 0 : index
    %c0_140 = arith.constant 0 : index
    %423 = vector.load %arg11[%c3_138, %c0_139, %c0_140] : memref<4x1x64xf32, #tpu.memory_space<vmem>>, vector<1x1x64xf32>
    %424 = vector.shape_cast %423 : vector<1x1x64xf32> to vector<1x64xf32>
    %cst_141 = arith.constant dense<0.000000e+00> : vector<10x64xf32>
    %425 = tpu.matmul %133, %414, %cst_141 {dimension_numbers = #tpu.dot_dimension_numbers<[1], [0], [0], [1], [0, 0, 1, 1], [], []>} : vector<10x48xf32>, vector<48x64xf32>, vector<10x64xf32> -> vector<10x64xf32>
    %426 = vector.broadcast %422 : vector<1x64xf32> to vector<10x64xf32>
    %427 = arith.addf %425, %426 : vector<10x64xf32>
    %c0_142 = arith.constant 0 : index
    %c0_143 = arith.constant 0 : index
    %428 = vector.load %arg19[%c0_142, %c0_143] : memref<10x64xf32, #tpu.memory_space<vmem>>, vector<10x64xf32>
    tpu.vector_store %arg19[%c0_142, %c0_143], %427 {strides = array<i32>} : memref<10x64xf32, #tpu.memory_space<vmem>>, vector<10x64xf32>,
    %cst_144 = arith.constant dense<0.000000e+00> : vector<10x64xf32>
    %429 = tpu.matmul %133, %416, %cst_144 {dimension_numbers = #tpu.dot_dimension_numbers<[1], [0], [0], [1], [0, 0, 1, 1], [], []>} : vector<10x48xf32>, vector<48x64xf32>, vector<10x64xf32> -> vector<10x64xf32>
    %430 = vector.broadcast %424 : vector<1x64xf32> to vector<10x64xf32>
    %431 = arith.addf %429, %430 : vector<10x64xf32>
    %c0_145 = arith.constant 0 : index
    %c0_146 = arith.constant 0 : index
    %432 = vector.load %arg20[%c0_145, %c0_146] : memref<10x64xf32, #tpu.memory_space<vmem>>, vector<10x64xf32>
    tpu.vector_store %arg20[%c0_145, %c0_146], %431 {strides = array<i32>} : memref<10x64xf32, #tpu.memory_space<vmem>>, vector<10x64xf32>,
    %cst_147 = arith.constant 0.000000e+00 : f32
    %433 = vector.broadcast %cst_147 : f32 to vector<1x16xf32>
    %c0_i32_148 = arith.constant 0 : i32
    %c9_i32 = arith.constant 9 : i32
    %434 = arith.subi %c9_i32, %c0_i32_148 : i32
    %435 = arith.index_cast %c0_i32_148 : i32 to index
    %c0_149 = arith.constant 0 : index
    %436 = vector.load %arg19[%435, %c0_149] : memref<10x64xf32, #tpu.memory_space<vmem>>, vector<1x64xf32>
    %cst_150 = arith.constant dense<0.000000e+00> : vector<1x64xf32>
    %437 = tpu.matmul %433, %418, %cst_150 {dimension_numbers = #tpu.dot_dimension_numbers<[1], [0], [0], [1], [0, 0, 1, 1], [], []>} : vector<1x16xf32>, vector<16x64xf32>, vector<1x64xf32> -> vector<1x64xf32>
    %438 = arith.addf %436, %437 : vector<1x64xf32>
    %439 = arith.negf %438 : vector<1x64xf32>
    %440 = math.exp %439 : vector<1x64xf32>
    %cst_151 = arith.constant 1.000000e+00 : f32
    %441 = vector.broadcast %cst_151 : f32 to vector<1x64xf32>
    %442 = arith.addf %441, %440 : vector<1x64xf32>
    %443 = arith.divf %441, %442 : vector<1x64xf32>
    %444 = vector.extract_strided_slice %438 {offsets = [0, 32], sizes = [1, 16], strides = [1, 1]} : vector<1x64xf32> to vector<1x16xf32>
    %445 = math.tanh %444 : vector<1x16xf32>
    %446 = vector.extract_strided_slice %443 {offsets = [0, 16], sizes = [1, 16], strides = [1, 1]} : vector<1x64xf32> to vector<1x16xf32>
    %447 = arith.mulf %446, %433 : vector<1x16xf32>
    %448 = vector.extract_strided_slice %443 {offsets = [0, 0], sizes = [1, 16], strides = [1, 1]} : vector<1x64xf32> to vector<1x16xf32>
    %449 = arith.mulf %448, %445 : vector<1x16xf32>
    %450 = arith.addf %447, %449 : vector<1x16xf32>
    %451 = vector.extract_strided_slice %443 {offsets = [0, 48], sizes = [1, 16], strides = [1, 1]} : vector<1x64xf32> to vector<1x16xf32>
    %452 = math.tanh %450 : vector<1x16xf32>
    %453 = arith.mulf %451, %452 : vector<1x16xf32>
    %454 = arith.index_cast %c0_i32_148 : i32 to index
    %c0_152 = arith.constant 0 : index
    %455 = vector.load %arg22[%454, %c0_152] : memref<10x32xf32, #tpu.memory_space<vmem>>, vector<1x16xf32>
    tpu.vector_store %arg22[%454, %c0_152], %453 {strides = array<i32>} : memref<10x32xf32, #tpu.memory_space<vmem>>, vector<1x16xf32>,
    %456 = arith.index_cast %434 : i32 to index
    %c0_153 = arith.constant 0 : index
    %457 = vector.load %arg20[%456, %c0_153] : memref<10x64xf32, #tpu.memory_space<vmem>>, vector<1x64xf32>
    %cst_154 = arith.constant dense<0.000000e+00> : vector<1x64xf32>
    %458 = tpu.matmul %433, %420, %cst_154 {dimension_numbers = #tpu.dot_dimension_numbers<[1], [0], [0], [1], [0, 0, 1, 1], [], []>} : vector<1x16xf32>, vector<16x64xf32>, vector<1x64xf32> -> vector<1x64xf32>
    %459 = arith.addf %457, %458 : vector<1x64xf32>
    %460 = arith.negf %459 : vector<1x64xf32>
    %461 = math.exp %460 : vector<1x64xf32>
    %cst_155 = arith.constant 1.000000e+00 : f32
    %462 = vector.broadcast %cst_155 : f32 to vector<1x64xf32>
    %463 = arith.addf %462, %461 : vector<1x64xf32>
    %464 = arith.divf %462, %463 : vector<1x64xf32>
    %465 = vector.extract_strided_slice %459 {offsets = [0, 32], sizes = [1, 16], strides = [1, 1]} : vector<1x64xf32> to vector<1x16xf32>
    %466 = math.tanh %465 : vector<1x16xf32>
    %467 = vector.extract_strided_slice %464 {offsets = [0, 16], sizes = [1, 16], strides = [1, 1]} : vector<1x64xf32> to vector<1x16xf32>
    %468 = arith.mulf %467, %433 : vector<1x16xf32>
    %469 = vector.extract_strided_slice %464 {offsets = [0, 0], sizes = [1, 16], strides = [1, 1]} : vector<1x64xf32> to vector<1x16xf32>
    %470 = arith.mulf %469, %466 : vector<1x16xf32>
    %471 = arith.addf %468, %470 : vector<1x16xf32>
    %472 = vector.extract_strided_slice %464 {offsets = [0, 48], sizes = [1, 16], strides = [1, 1]} : vector<1x64xf32> to vector<1x16xf32>
    %473 = math.tanh %471 : vector<1x16xf32>
    %474 = arith.mulf %472, %473 : vector<1x16xf32>
    %475 = arith.index_cast %434 : i32 to index
    %c16_156 = arith.constant 16 : index
    %476 = vector.load %arg22[%475, %c16_156] : memref<10x32xf32, #tpu.memory_space<vmem>>, vector<1x16xf32>
    tpu.vector_store %arg22[%475, %c16_156], %474 {strides = array<i32>} : memref<10x32xf32, #tpu.memory_space<vmem>>, vector<1x16xf32>,
    %c1_i32_157 = arith.constant 1 : i32
    %c9_i32_158 = arith.constant 9 : i32
    %477 = arith.subi %c9_i32_158, %c1_i32_157 : i32
    %478 = arith.index_cast %c1_i32_157 : i32 to index
    %c0_159 = arith.constant 0 : index
    %479 = vector.load %arg19[%478, %c0_159] : memref<10x64xf32, #tpu.memory_space<vmem>>, vector<1x64xf32>
    %cst_160 = arith.constant dense<0.000000e+00> : vector<1x64xf32>
    %480 = tpu.matmul %453, %418, %cst_160 {dimension_numbers = #tpu.dot_dimension_numbers<[1], [0], [0], [1], [0, 0, 1, 1], [], []>} : vector<1x16xf32>, vector<16x64xf32>, vector<1x64xf32> -> vector<1x64xf32>
    %481 = arith.addf %479, %480 : vector<1x64xf32>
    %482 = arith.negf %481 : vector<1x64xf32>
    %483 = math.exp %482 : vector<1x64xf32>
    %cst_161 = arith.constant 1.000000e+00 : f32
    %484 = vector.broadcast %cst_161 : f32 to vector<1x64xf32>
    %485 = arith.addf %484, %483 : vector<1x64xf32>
    %486 = arith.divf %484, %485 : vector<1x64xf32>
    %487 = vector.extract_strided_slice %481 {offsets = [0, 32], sizes = [1, 16], strides = [1, 1]} : vector<1x64xf32> to vector<1x16xf32>
    %488 = math.tanh %487 : vector<1x16xf32>
    %489 = vector.extract_strided_slice %486 {offsets = [0, 16], sizes = [1, 16], strides = [1, 1]} : vector<1x64xf32> to vector<1x16xf32>
    %490 = arith.mulf %489, %450 : vector<1x16xf32>
    %491 = vector.extract_strided_slice %486 {offsets = [0, 0], sizes = [1, 16], strides = [1, 1]} : vector<1x64xf32> to vector<1x16xf32>
    %492 = arith.mulf %491, %488 : vector<1x16xf32>
    %493 = arith.addf %490, %492 : vector<1x16xf32>
    %494 = vector.extract_strided_slice %486 {offsets = [0, 48], sizes = [1, 16], strides = [1, 1]} : vector<1x64xf32> to vector<1x16xf32>
    %495 = math.tanh %493 : vector<1x16xf32>
    %496 = arith.mulf %494, %495 : vector<1x16xf32>
    %497 = arith.index_cast %c1_i32_157 : i32 to index
    %c0_162 = arith.constant 0 : index
    %498 = vector.load %arg22[%497, %c0_162] : memref<10x32xf32, #tpu.memory_space<vmem>>, vector<1x16xf32>
    tpu.vector_store %arg22[%497, %c0_162], %496 {strides = array<i32>} : memref<10x32xf32, #tpu.memory_space<vmem>>, vector<1x16xf32>,
    %499 = arith.index_cast %477 : i32 to index
    %c0_163 = arith.constant 0 : index
    %500 = vector.load %arg20[%499, %c0_163] : memref<10x64xf32, #tpu.memory_space<vmem>>, vector<1x64xf32>
    %cst_164 = arith.constant dense<0.000000e+00> : vector<1x64xf32>
    %501 = tpu.matmul %474, %420, %cst_164 {dimension_numbers = #tpu.dot_dimension_numbers<[1], [0], [0], [1], [0, 0, 1, 1], [], []>} : vector<1x16xf32>, vector<16x64xf32>, vector<1x64xf32> -> vector<1x64xf32>
    %502 = arith.addf %500, %501 : vector<1x64xf32>
    %503 = arith.negf %502 : vector<1x64xf32>
    %504 = math.exp %503 : vector<1x64xf32>
    %cst_165 = arith.constant 1.000000e+00 : f32
    %505 = vector.broadcast %cst_165 : f32 to vector<1x64xf32>
    %506 = arith.addf %505, %504 : vector<1x64xf32>
    %507 = arith.divf %505, %506 : vector<1x64xf32>
    %508 = vector.extract_strided_slice %502 {offsets = [0, 32], sizes = [1, 16], strides = [1, 1]} : vector<1x64xf32> to vector<1x16xf32>
    %509 = math.tanh %508 : vector<1x16xf32>
    %510 = vector.extract_strided_slice %507 {offsets = [0, 16], sizes = [1, 16], strides = [1, 1]} : vector<1x64xf32> to vector<1x16xf32>
    %511 = arith.mulf %510, %471 : vector<1x16xf32>
    %512 = vector.extract_strided_slice %507 {offsets = [0, 0], sizes = [1, 16], strides = [1, 1]} : vector<1x64xf32> to vector<1x16xf32>
    %513 = arith.mulf %512, %509 : vector<1x16xf32>
    %514 = arith.addf %511, %513 : vector<1x16xf32>
    %515 = vector.extract_strided_slice %507 {offsets = [0, 48], sizes = [1, 16], strides = [1, 1]} : vector<1x64xf32> to vector<1x16xf32>
    %516 = math.tanh %514 : vector<1x16xf32>
    %517 = arith.mulf %515, %516 : vector<1x16xf32>
    %518 = arith.index_cast %477 : i32 to index
    %c16_166 = arith.constant 16 : index
    %519 = vector.load %arg22[%518, %c16_166] : memref<10x32xf32, #tpu.memory_space<vmem>>, vector<1x16xf32>
    tpu.vector_store %arg22[%518, %c16_166], %517 {strides = array<i32>} : memref<10x32xf32, #tpu.memory_space<vmem>>, vector<1x16xf32>,
    %c2_i32_167 = arith.constant 2 : i32
    %c9_i32_168 = arith.constant 9 : i32
    %520 = arith.subi %c9_i32_168, %c2_i32_167 : i32
    %521 = arith.index_cast %c2_i32_167 : i32 to index
    %c0_169 = arith.constant 0 : index
    %522 = vector.load %arg19[%521, %c0_169] : memref<10x64xf32, #tpu.memory_space<vmem>>, vector<1x64xf32>
    %cst_170 = arith.constant dense<0.000000e+00> : vector<1x64xf32>
    %523 = tpu.matmul %496, %418, %cst_170 {dimension_numbers = #tpu.dot_dimension_numbers<[1], [0], [0], [1], [0, 0, 1, 1], [], []>} : vector<1x16xf32>, vector<16x64xf32>, vector<1x64xf32> -> vector<1x64xf32>
    %524 = arith.addf %522, %523 : vector<1x64xf32>
    %525 = arith.negf %524 : vector<1x64xf32>
    %526 = math.exp %525 : vector<1x64xf32>
    %cst_171 = arith.constant 1.000000e+00 : f32
    %527 = vector.broadcast %cst_171 : f32 to vector<1x64xf32>
    %528 = arith.addf %527, %526 : vector<1x64xf32>
    %529 = arith.divf %527, %528 : vector<1x64xf32>
    %530 = vector.extract_strided_slice %524 {offsets = [0, 32], sizes = [1, 16], strides = [1, 1]} : vector<1x64xf32> to vector<1x16xf32>
    %531 = math.tanh %530 : vector<1x16xf32>
    %532 = vector.extract_strided_slice %529 {offsets = [0, 16], sizes = [1, 16], strides = [1, 1]} : vector<1x64xf32> to vector<1x16xf32>
    %533 = arith.mulf %532, %493 : vector<1x16xf32>
    %534 = vector.extract_strided_slice %529 {offsets = [0, 0], sizes = [1, 16], strides = [1, 1]} : vector<1x64xf32> to vector<1x16xf32>
    %535 = arith.mulf %534, %531 : vector<1x16xf32>
    %536 = arith.addf %533, %535 : vector<1x16xf32>
    %537 = vector.extract_strided_slice %529 {offsets = [0, 48], sizes = [1, 16], strides = [1, 1]} : vector<1x64xf32> to vector<1x16xf32>
    %538 = math.tanh %536 : vector<1x16xf32>
    %539 = arith.mulf %537, %538 : vector<1x16xf32>
    %540 = arith.index_cast %c2_i32_167 : i32 to index
    %c0_172 = arith.constant 0 : index
    %541 = vector.load %arg22[%540, %c0_172] : memref<10x32xf32, #tpu.memory_space<vmem>>, vector<1x16xf32>
    tpu.vector_store %arg22[%540, %c0_172], %539 {strides = array<i32>} : memref<10x32xf32, #tpu.memory_space<vmem>>, vector<1x16xf32>,
    %542 = arith.index_cast %520 : i32 to index
    %c0_173 = arith.constant 0 : index
    %543 = vector.load %arg20[%542, %c0_173] : memref<10x64xf32, #tpu.memory_space<vmem>>, vector<1x64xf32>
    %cst_174 = arith.constant dense<0.000000e+00> : vector<1x64xf32>
    %544 = tpu.matmul %517, %420, %cst_174 {dimension_numbers = #tpu.dot_dimension_numbers<[1], [0], [0], [1], [0, 0, 1, 1], [], []>} : vector<1x16xf32>, vector<16x64xf32>, vector<1x64xf32> -> vector<1x64xf32>
    %545 = arith.addf %543, %544 : vector<1x64xf32>
    %546 = arith.negf %545 : vector<1x64xf32>
    %547 = math.exp %546 : vector<1x64xf32>
    %cst_175 = arith.constant 1.000000e+00 : f32
    %548 = vector.broadcast %cst_175 : f32 to vector<1x64xf32>
    %549 = arith.addf %548, %547 : vector<1x64xf32>
    %550 = arith.divf %548, %549 : vector<1x64xf32>
    %551 = vector.extract_strided_slice %545 {offsets = [0, 32], sizes = [1, 16], strides = [1, 1]} : vector<1x64xf32> to vector<1x16xf32>
    %552 = math.tanh %551 : vector<1x16xf32>
    %553 = vector.extract_strided_slice %550 {offsets = [0, 16], sizes = [1, 16], strides = [1, 1]} : vector<1x64xf32> to vector<1x16xf32>
    %554 = arith.mulf %553, %514 : vector<1x16xf32>
    %555 = vector.extract_strided_slice %550 {offsets = [0, 0], sizes = [1, 16], strides = [1, 1]} : vector<1x64xf32> to vector<1x16xf32>
    %556 = arith.mulf %555, %552 : vector<1x16xf32>
    %557 = arith.addf %554, %556 : vector<1x16xf32>
    %558 = vector.extract_strided_slice %550 {offsets = [0, 48], sizes = [1, 16], strides = [1, 1]} : vector<1x64xf32> to vector<1x16xf32>
    %559 = math.tanh %557 : vector<1x16xf32>
    %560 = arith.mulf %558, %559 : vector<1x16xf32>
    %561 = arith.index_cast %520 : i32 to index
    %c16_176 = arith.constant 16 : index
    %562 = vector.load %arg22[%561, %c16_176] : memref<10x32xf32, #tpu.memory_space<vmem>>, vector<1x16xf32>
    tpu.vector_store %arg22[%561, %c16_176], %560 {strides = array<i32>} : memref<10x32xf32, #tpu.memory_space<vmem>>, vector<1x16xf32>,
    %c3_i32_177 = arith.constant 3 : i32
    %c9_i32_178 = arith.constant 9 : i32
    %563 = arith.subi %c9_i32_178, %c3_i32_177 : i32
    %564 = arith.index_cast %c3_i32_177 : i32 to index
    %c0_179 = arith.constant 0 : index
    %565 = vector.load %arg19[%564, %c0_179] : memref<10x64xf32, #tpu.memory_space<vmem>>, vector<1x64xf32>
    %cst_180 = arith.constant dense<0.000000e+00> : vector<1x64xf32>
    %566 = tpu.matmul %539, %418, %cst_180 {dimension_numbers = #tpu.dot_dimension_numbers<[1], [0], [0], [1], [0, 0, 1, 1], [], []>} : vector<1x16xf32>, vector<16x64xf32>, vector<1x64xf32> -> vector<1x64xf32>
    %567 = arith.addf %565, %566 : vector<1x64xf32>
    %568 = arith.negf %567 : vector<1x64xf32>
    %569 = math.exp %568 : vector<1x64xf32>
    %cst_181 = arith.constant 1.000000e+00 : f32
    %570 = vector.broadcast %cst_181 : f32 to vector<1x64xf32>
    %571 = arith.addf %570, %569 : vector<1x64xf32>
    %572 = arith.divf %570, %571 : vector<1x64xf32>
    %573 = vector.extract_strided_slice %567 {offsets = [0, 32], sizes = [1, 16], strides = [1, 1]} : vector<1x64xf32> to vector<1x16xf32>
    %574 = math.tanh %573 : vector<1x16xf32>
    %575 = vector.extract_strided_slice %572 {offsets = [0, 16], sizes = [1, 16], strides = [1, 1]} : vector<1x64xf32> to vector<1x16xf32>
    %576 = arith.mulf %575, %536 : vector<1x16xf32>
    %577 = vector.extract_strided_slice %572 {offsets = [0, 0], sizes = [1, 16], strides = [1, 1]} : vector<1x64xf32> to vector<1x16xf32>
    %578 = arith.mulf %577, %574 : vector<1x16xf32>
    %579 = arith.addf %576, %578 : vector<1x16xf32>
    %580 = vector.extract_strided_slice %572 {offsets = [0, 48], sizes = [1, 16], strides = [1, 1]} : vector<1x64xf32> to vector<1x16xf32>
    %581 = math.tanh %579 : vector<1x16xf32>
    %582 = arith.mulf %580, %581 : vector<1x16xf32>
    %583 = arith.index_cast %c3_i32_177 : i32 to index
    %c0_182 = arith.constant 0 : index
    %584 = vector.load %arg22[%583, %c0_182] : memref<10x32xf32, #tpu.memory_space<vmem>>, vector<1x16xf32>
    tpu.vector_store %arg22[%583, %c0_182], %582 {strides = array<i32>} : memref<10x32xf32, #tpu.memory_space<vmem>>, vector<1x16xf32>,
    %585 = arith.index_cast %563 : i32 to index
    %c0_183 = arith.constant 0 : index
    %586 = vector.load %arg20[%585, %c0_183] : memref<10x64xf32, #tpu.memory_space<vmem>>, vector<1x64xf32>
    %cst_184 = arith.constant dense<0.000000e+00> : vector<1x64xf32>
    %587 = tpu.matmul %560, %420, %cst_184 {dimension_numbers = #tpu.dot_dimension_numbers<[1], [0], [0], [1], [0, 0, 1, 1], [], []>} : vector<1x16xf32>, vector<16x64xf32>, vector<1x64xf32> -> vector<1x64xf32>
    %588 = arith.addf %586, %587 : vector<1x64xf32>
    %589 = arith.negf %588 : vector<1x64xf32>
    %590 = math.exp %589 : vector<1x64xf32>
    %cst_185 = arith.constant 1.000000e+00 : f32
    %591 = vector.broadcast %cst_185 : f32 to vector<1x64xf32>
    %592 = arith.addf %591, %590 : vector<1x64xf32>
    %593 = arith.divf %591, %592 : vector<1x64xf32>
    %594 = vector.extract_strided_slice %588 {offsets = [0, 32], sizes = [1, 16], strides = [1, 1]} : vector<1x64xf32> to vector<1x16xf32>
    %595 = math.tanh %594 : vector<1x16xf32>
    %596 = vector.extract_strided_slice %593 {offsets = [0, 16], sizes = [1, 16], strides = [1, 1]} : vector<1x64xf32> to vector<1x16xf32>
    %597 = arith.mulf %596, %557 : vector<1x16xf32>
    %598 = vector.extract_strided_slice %593 {offsets = [0, 0], sizes = [1, 16], strides = [1, 1]} : vector<1x64xf32> to vector<1x16xf32>
    %599 = arith.mulf %598, %595 : vector<1x16xf32>
    %600 = arith.addf %597, %599 : vector<1x16xf32>
    %601 = vector.extract_strided_slice %593 {offsets = [0, 48], sizes = [1, 16], strides = [1, 1]} : vector<1x64xf32> to vector<1x16xf32>
    %602 = math.tanh %600 : vector<1x16xf32>
    %603 = arith.mulf %601, %602 : vector<1x16xf32>
    %604 = arith.index_cast %563 : i32 to index
    %c16_186 = arith.constant 16 : index
    %605 = vector.load %arg22[%604, %c16_186] : memref<10x32xf32, #tpu.memory_space<vmem>>, vector<1x16xf32>
    tpu.vector_store %arg22[%604, %c16_186], %603 {strides = array<i32>} : memref<10x32xf32, #tpu.memory_space<vmem>>, vector<1x16xf32>,
    %c4_i32_187 = arith.constant 4 : i32
    %c9_i32_188 = arith.constant 9 : i32
    %606 = arith.subi %c9_i32_188, %c4_i32_187 : i32
    %607 = arith.index_cast %c4_i32_187 : i32 to index
    %c0_189 = arith.constant 0 : index
    %608 = vector.load %arg19[%607, %c0_189] : memref<10x64xf32, #tpu.memory_space<vmem>>, vector<1x64xf32>
    %cst_190 = arith.constant dense<0.000000e+00> : vector<1x64xf32>
    %609 = tpu.matmul %582, %418, %cst_190 {dimension_numbers = #tpu.dot_dimension_numbers<[1], [0], [0], [1], [0, 0, 1, 1], [], []>} : vector<1x16xf32>, vector<16x64xf32>, vector<1x64xf32> -> vector<1x64xf32>
    %610 = arith.addf %608, %609 : vector<1x64xf32>
    %611 = arith.negf %610 : vector<1x64xf32>
    %612 = math.exp %611 : vector<1x64xf32>
    %cst_191 = arith.constant 1.000000e+00 : f32
    %613 = vector.broadcast %cst_191 : f32 to vector<1x64xf32>
    %614 = arith.addf %613, %612 : vector<1x64xf32>
    %615 = arith.divf %613, %614 : vector<1x64xf32>
    %616 = vector.extract_strided_slice %610 {offsets = [0, 32], sizes = [1, 16], strides = [1, 1]} : vector<1x64xf32> to vector<1x16xf32>
    %617 = math.tanh %616 : vector<1x16xf32>
    %618 = vector.extract_strided_slice %615 {offsets = [0, 16], sizes = [1, 16], strides = [1, 1]} : vector<1x64xf32> to vector<1x16xf32>
    %619 = arith.mulf %618, %579 : vector<1x16xf32>
    %620 = vector.extract_strided_slice %615 {offsets = [0, 0], sizes = [1, 16], strides = [1, 1]} : vector<1x64xf32> to vector<1x16xf32>
    %621 = arith.mulf %620, %617 : vector<1x16xf32>
    %622 = arith.addf %619, %621 : vector<1x16xf32>
    %623 = vector.extract_strided_slice %615 {offsets = [0, 48], sizes = [1, 16], strides = [1, 1]} : vector<1x64xf32> to vector<1x16xf32>
    %624 = math.tanh %622 : vector<1x16xf32>
    %625 = arith.mulf %623, %624 : vector<1x16xf32>
    %626 = arith.index_cast %c4_i32_187 : i32 to index
    %c0_192 = arith.constant 0 : index
    %627 = vector.load %arg22[%626, %c0_192] : memref<10x32xf32, #tpu.memory_space<vmem>>, vector<1x16xf32>
    tpu.vector_store %arg22[%626, %c0_192], %625 {strides = array<i32>} : memref<10x32xf32, #tpu.memory_space<vmem>>, vector<1x16xf32>,
    %628 = arith.index_cast %606 : i32 to index
    %c0_193 = arith.constant 0 : index
    %629 = vector.load %arg20[%628, %c0_193] : memref<10x64xf32, #tpu.memory_space<vmem>>, vector<1x64xf32>
    %cst_194 = arith.constant dense<0.000000e+00> : vector<1x64xf32>
    %630 = tpu.matmul %603, %420, %cst_194 {dimension_numbers = #tpu.dot_dimension_numbers<[1], [0], [0], [1], [0, 0, 1, 1], [], []>} : vector<1x16xf32>, vector<16x64xf32>, vector<1x64xf32> -> vector<1x64xf32>
    %631 = arith.addf %629, %630 : vector<1x64xf32>
    %632 = arith.negf %631 : vector<1x64xf32>
    %633 = math.exp %632 : vector<1x64xf32>
    %cst_195 = arith.constant 1.000000e+00 : f32
    %634 = vector.broadcast %cst_195 : f32 to vector<1x64xf32>
    %635 = arith.addf %634, %633 : vector<1x64xf32>
    %636 = arith.divf %634, %635 : vector<1x64xf32>
    %637 = vector.extract_strided_slice %631 {offsets = [0, 32], sizes = [1, 16], strides = [1, 1]} : vector<1x64xf32> to vector<1x16xf32>
    %638 = math.tanh %637 : vector<1x16xf32>
    %639 = vector.extract_strided_slice %636 {offsets = [0, 16], sizes = [1, 16], strides = [1, 1]} : vector<1x64xf32> to vector<1x16xf32>
    %640 = arith.mulf %639, %600 : vector<1x16xf32>
    %641 = vector.extract_strided_slice %636 {offsets = [0, 0], sizes = [1, 16], strides = [1, 1]} : vector<1x64xf32> to vector<1x16xf32>
    %642 = arith.mulf %641, %638 : vector<1x16xf32>
    %643 = arith.addf %640, %642 : vector<1x16xf32>
    %644 = vector.extract_strided_slice %636 {offsets = [0, 48], sizes = [1, 16], strides = [1, 1]} : vector<1x64xf32> to vector<1x16xf32>
    %645 = math.tanh %643 : vector<1x16xf32>
    %646 = arith.mulf %644, %645 : vector<1x16xf32>
    %647 = arith.index_cast %606 : i32 to index
    %c16_196 = arith.constant 16 : index
    %648 = vector.load %arg22[%647, %c16_196] : memref<10x32xf32, #tpu.memory_space<vmem>>, vector<1x16xf32>
    tpu.vector_store %arg22[%647, %c16_196], %646 {strides = array<i32>} : memref<10x32xf32, #tpu.memory_space<vmem>>, vector<1x16xf32>,
    %c5_i32_197 = arith.constant 5 : i32
    %c9_i32_198 = arith.constant 9 : i32
    %649 = arith.subi %c9_i32_198, %c5_i32_197 : i32
    %650 = arith.index_cast %c5_i32_197 : i32 to index
    %c0_199 = arith.constant 0 : index
    %651 = vector.load %arg19[%650, %c0_199] : memref<10x64xf32, #tpu.memory_space<vmem>>, vector<1x64xf32>
    %cst_200 = arith.constant dense<0.000000e+00> : vector<1x64xf32>
    %652 = tpu.matmul %625, %418, %cst_200 {dimension_numbers = #tpu.dot_dimension_numbers<[1], [0], [0], [1], [0, 0, 1, 1], [], []>} : vector<1x16xf32>, vector<16x64xf32>, vector<1x64xf32> -> vector<1x64xf32>
    %653 = arith.addf %651, %652 : vector<1x64xf32>
    %654 = arith.negf %653 : vector<1x64xf32>
    %655 = math.exp %654 : vector<1x64xf32>
    %cst_201 = arith.constant 1.000000e+00 : f32
    %656 = vector.broadcast %cst_201 : f32 to vector<1x64xf32>
    %657 = arith.addf %656, %655 : vector<1x64xf32>
    %658 = arith.divf %656, %657 : vector<1x64xf32>
    %659 = vector.extract_strided_slice %653 {offsets = [0, 32], sizes = [1, 16], strides = [1, 1]} : vector<1x64xf32> to vector<1x16xf32>
    %660 = math.tanh %659 : vector<1x16xf32>
    %661 = vector.extract_strided_slice %658 {offsets = [0, 16], sizes = [1, 16], strides = [1, 1]} : vector<1x64xf32> to vector<1x16xf32>
    %662 = arith.mulf %661, %622 : vector<1x16xf32>
    %663 = vector.extract_strided_slice %658 {offsets = [0, 0], sizes = [1, 16], strides = [1, 1]} : vector<1x64xf32> to vector<1x16xf32>
    %664 = arith.mulf %663, %660 : vector<1x16xf32>
    %665 = arith.addf %662, %664 : vector<1x16xf32>
    %666 = vector.extract_strided_slice %658 {offsets = [0, 48], sizes = [1, 16], strides = [1, 1]} : vector<1x64xf32> to vector<1x16xf32>
    %667 = math.tanh %665 : vector<1x16xf32>
    %668 = arith.mulf %666, %667 : vector<1x16xf32>
    %669 = arith.index_cast %c5_i32_197 : i32 to index
    %c0_202 = arith.constant 0 : index
    %670 = vector.load %arg22[%669, %c0_202] : memref<10x32xf32, #tpu.memory_space<vmem>>, vector<1x16xf32>
    tpu.vector_store %arg22[%669, %c0_202], %668 {strides = array<i32>} : memref<10x32xf32, #tpu.memory_space<vmem>>, vector<1x16xf32>,
    %671 = arith.index_cast %649 : i32 to index
    %c0_203 = arith.constant 0 : index
    %672 = vector.load %arg20[%671, %c0_203] : memref<10x64xf32, #tpu.memory_space<vmem>>, vector<1x64xf32>
    %cst_204 = arith.constant dense<0.000000e+00> : vector<1x64xf32>
    %673 = tpu.matmul %646, %420, %cst_204 {dimension_numbers = #tpu.dot_dimension_numbers<[1], [0], [0], [1], [0, 0, 1, 1], [], []>} : vector<1x16xf32>, vector<16x64xf32>, vector<1x64xf32> -> vector<1x64xf32>
    %674 = arith.addf %672, %673 : vector<1x64xf32>
    %675 = arith.negf %674 : vector<1x64xf32>
    %676 = math.exp %675 : vector<1x64xf32>
    %cst_205 = arith.constant 1.000000e+00 : f32
    %677 = vector.broadcast %cst_205 : f32 to vector<1x64xf32>
    %678 = arith.addf %677, %676 : vector<1x64xf32>
    %679 = arith.divf %677, %678 : vector<1x64xf32>
    %680 = vector.extract_strided_slice %674 {offsets = [0, 32], sizes = [1, 16], strides = [1, 1]} : vector<1x64xf32> to vector<1x16xf32>
    %681 = math.tanh %680 : vector<1x16xf32>
    %682 = vector.extract_strided_slice %679 {offsets = [0, 16], sizes = [1, 16], strides = [1, 1]} : vector<1x64xf32> to vector<1x16xf32>
    %683 = arith.mulf %682, %643 : vector<1x16xf32>
    %684 = vector.extract_strided_slice %679 {offsets = [0, 0], sizes = [1, 16], strides = [1, 1]} : vector<1x64xf32> to vector<1x16xf32>
    %685 = arith.mulf %684, %681 : vector<1x16xf32>
    %686 = arith.addf %683, %685 : vector<1x16xf32>
    %687 = vector.extract_strided_slice %679 {offsets = [0, 48], sizes = [1, 16], strides = [1, 1]} : vector<1x64xf32> to vector<1x16xf32>
    %688 = math.tanh %686 : vector<1x16xf32>
    %689 = arith.mulf %687, %688 : vector<1x16xf32>
    %690 = arith.index_cast %649 : i32 to index
    %c16_206 = arith.constant 16 : index
    %691 = vector.load %arg22[%690, %c16_206] : memref<10x32xf32, #tpu.memory_space<vmem>>, vector<1x16xf32>
    tpu.vector_store %arg22[%690, %c16_206], %689 {strides = array<i32>} : memref<10x32xf32, #tpu.memory_space<vmem>>, vector<1x16xf32>,
    %c6_i32_207 = arith.constant 6 : i32
    %c9_i32_208 = arith.constant 9 : i32
    %692 = arith.subi %c9_i32_208, %c6_i32_207 : i32
    %693 = arith.index_cast %c6_i32_207 : i32 to index
    %c0_209 = arith.constant 0 : index
    %694 = vector.load %arg19[%693, %c0_209] : memref<10x64xf32, #tpu.memory_space<vmem>>, vector<1x64xf32>
    %cst_210 = arith.constant dense<0.000000e+00> : vector<1x64xf32>
    %695 = tpu.matmul %668, %418, %cst_210 {dimension_numbers = #tpu.dot_dimension_numbers<[1], [0], [0], [1], [0, 0, 1, 1], [], []>} : vector<1x16xf32>, vector<16x64xf32>, vector<1x64xf32> -> vector<1x64xf32>
    %696 = arith.addf %694, %695 : vector<1x64xf32>
    %697 = arith.negf %696 : vector<1x64xf32>
    %698 = math.exp %697 : vector<1x64xf32>
    %cst_211 = arith.constant 1.000000e+00 : f32
    %699 = vector.broadcast %cst_211 : f32 to vector<1x64xf32>
    %700 = arith.addf %699, %698 : vector<1x64xf32>
    %701 = arith.divf %699, %700 : vector<1x64xf32>
    %702 = vector.extract_strided_slice %696 {offsets = [0, 32], sizes = [1, 16], strides = [1, 1]} : vector<1x64xf32> to vector<1x16xf32>
    %703 = math.tanh %702 : vector<1x16xf32>
    %704 = vector.extract_strided_slice %701 {offsets = [0, 16], sizes = [1, 16], strides = [1, 1]} : vector<1x64xf32> to vector<1x16xf32>
    %705 = arith.mulf %704, %665 : vector<1x16xf32>
    %706 = vector.extract_strided_slice %701 {offsets = [0, 0], sizes = [1, 16], strides = [1, 1]} : vector<1x64xf32> to vector<1x16xf32>
    %707 = arith.mulf %706, %703 : vector<1x16xf32>
    %708 = arith.addf %705, %707 : vector<1x16xf32>
    %709 = vector.extract_strided_slice %701 {offsets = [0, 48], sizes = [1, 16], strides = [1, 1]} : vector<1x64xf32> to vector<1x16xf32>
    %710 = math.tanh %708 : vector<1x16xf32>
    %711 = arith.mulf %709, %710 : vector<1x16xf32>
    %712 = arith.index_cast %c6_i32_207 : i32 to index
    %c0_212 = arith.constant 0 : index
    %713 = vector.load %arg22[%712, %c0_212] : memref<10x32xf32, #tpu.memory_space<vmem>>, vector<1x16xf32>
    tpu.vector_store %arg22[%712, %c0_212], %711 {strides = array<i32>} : memref<10x32xf32, #tpu.memory_space<vmem>>, vector<1x16xf32>,
    %714 = arith.index_cast %692 : i32 to index
    %c0_213 = arith.constant 0 : index
    %715 = vector.load %arg20[%714, %c0_213] : memref<10x64xf32, #tpu.memory_space<vmem>>, vector<1x64xf32>
    %cst_214 = arith.constant dense<0.000000e+00> : vector<1x64xf32>
    %716 = tpu.matmul %689, %420, %cst_214 {dimension_numbers = #tpu.dot_dimension_numbers<[1], [0], [0], [1], [0, 0, 1, 1], [], []>} : vector<1x16xf32>, vector<16x64xf32>, vector<1x64xf32> -> vector<1x64xf32>
    %717 = arith.addf %715, %716 : vector<1x64xf32>
    %718 = arith.negf %717 : vector<1x64xf32>
    %719 = math.exp %718 : vector<1x64xf32>
    %cst_215 = arith.constant 1.000000e+00 : f32
    %720 = vector.broadcast %cst_215 : f32 to vector<1x64xf32>
    %721 = arith.addf %720, %719 : vector<1x64xf32>
    %722 = arith.divf %720, %721 : vector<1x64xf32>
    %723 = vector.extract_strided_slice %717 {offsets = [0, 32], sizes = [1, 16], strides = [1, 1]} : vector<1x64xf32> to vector<1x16xf32>
    %724 = math.tanh %723 : vector<1x16xf32>
    %725 = vector.extract_strided_slice %722 {offsets = [0, 16], sizes = [1, 16], strides = [1, 1]} : vector<1x64xf32> to vector<1x16xf32>
    %726 = arith.mulf %725, %686 : vector<1x16xf32>
    %727 = vector.extract_strided_slice %722 {offsets = [0, 0], sizes = [1, 16], strides = [1, 1]} : vector<1x64xf32> to vector<1x16xf32>
    %728 = arith.mulf %727, %724 : vector<1x16xf32>
    %729 = arith.addf %726, %728 : vector<1x16xf32>
    %730 = vector.extract_strided_slice %722 {offsets = [0, 48], sizes = [1, 16], strides = [1, 1]} : vector<1x64xf32> to vector<1x16xf32>
    %731 = math.tanh %729 : vector<1x16xf32>
    %732 = arith.mulf %730, %731 : vector<1x16xf32>
    %733 = arith.index_cast %692 : i32 to index
    %c16_216 = arith.constant 16 : index
    %734 = vector.load %arg22[%733, %c16_216] : memref<10x32xf32, #tpu.memory_space<vmem>>, vector<1x16xf32>
    tpu.vector_store %arg22[%733, %c16_216], %732 {strides = array<i32>} : memref<10x32xf32, #tpu.memory_space<vmem>>, vector<1x16xf32>,
    %c7_i32 = arith.constant 7 : i32
    %c9_i32_217 = arith.constant 9 : i32
    %735 = arith.subi %c9_i32_217, %c7_i32 : i32
    %736 = arith.index_cast %c7_i32 : i32 to index
    %c0_218 = arith.constant 0 : index
    %737 = vector.load %arg19[%736, %c0_218] : memref<10x64xf32, #tpu.memory_space<vmem>>, vector<1x64xf32>
    %cst_219 = arith.constant dense<0.000000e+00> : vector<1x64xf32>
    %738 = tpu.matmul %711, %418, %cst_219 {dimension_numbers = #tpu.dot_dimension_numbers<[1], [0], [0], [1], [0, 0, 1, 1], [], []>} : vector<1x16xf32>, vector<16x64xf32>, vector<1x64xf32> -> vector<1x64xf32>
    %739 = arith.addf %737, %738 : vector<1x64xf32>
    %740 = arith.negf %739 : vector<1x64xf32>
    %741 = math.exp %740 : vector<1x64xf32>
    %cst_220 = arith.constant 1.000000e+00 : f32
    %742 = vector.broadcast %cst_220 : f32 to vector<1x64xf32>
    %743 = arith.addf %742, %741 : vector<1x64xf32>
    %744 = arith.divf %742, %743 : vector<1x64xf32>
    %745 = vector.extract_strided_slice %739 {offsets = [0, 32], sizes = [1, 16], strides = [1, 1]} : vector<1x64xf32> to vector<1x16xf32>
    %746 = math.tanh %745 : vector<1x16xf32>
    %747 = vector.extract_strided_slice %744 {offsets = [0, 16], sizes = [1, 16], strides = [1, 1]} : vector<1x64xf32> to vector<1x16xf32>
    %748 = arith.mulf %747, %708 : vector<1x16xf32>
    %749 = vector.extract_strided_slice %744 {offsets = [0, 0], sizes = [1, 16], strides = [1, 1]} : vector<1x64xf32> to vector<1x16xf32>
    %750 = arith.mulf %749, %746 : vector<1x16xf32>
    %751 = arith.addf %748, %750 : vector<1x16xf32>
    %752 = vector.extract_strided_slice %744 {offsets = [0, 48], sizes = [1, 16], strides = [1, 1]} : vector<1x64xf32> to vector<1x16xf32>
    %753 = math.tanh %751 : vector<1x16xf32>
    %754 = arith.mulf %752, %753 : vector<1x16xf32>
    %755 = arith.index_cast %c7_i32 : i32 to index
    %c0_221 = arith.constant 0 : index
    %756 = vector.load %arg22[%755, %c0_221] : memref<10x32xf32, #tpu.memory_space<vmem>>, vector<1x16xf32>
    tpu.vector_store %arg22[%755, %c0_221], %754 {strides = array<i32>} : memref<10x32xf32, #tpu.memory_space<vmem>>, vector<1x16xf32>,
    %757 = arith.index_cast %735 : i32 to index
    %c0_222 = arith.constant 0 : index
    %758 = vector.load %arg20[%757, %c0_222] : memref<10x64xf32, #tpu.memory_space<vmem>>, vector<1x64xf32>
    %cst_223 = arith.constant dense<0.000000e+00> : vector<1x64xf32>
    %759 = tpu.matmul %732, %420, %cst_223 {dimension_numbers = #tpu.dot_dimension_numbers<[1], [0], [0], [1], [0, 0, 1, 1], [], []>} : vector<1x16xf32>, vector<16x64xf32>, vector<1x64xf32> -> vector<1x64xf32>
    %760 = arith.addf %758, %759 : vector<1x64xf32>
    %761 = arith.negf %760 : vector<1x64xf32>
    %762 = math.exp %761 : vector<1x64xf32>
    %cst_224 = arith.constant 1.000000e+00 : f32
    %763 = vector.broadcast %cst_224 : f32 to vector<1x64xf32>
    %764 = arith.addf %763, %762 : vector<1x64xf32>
    %765 = arith.divf %763, %764 : vector<1x64xf32>
    %766 = vector.extract_strided_slice %760 {offsets = [0, 32], sizes = [1, 16], strides = [1, 1]} : vector<1x64xf32> to vector<1x16xf32>
    %767 = math.tanh %766 : vector<1x16xf32>
    %768 = vector.extract_strided_slice %765 {offsets = [0, 16], sizes = [1, 16], strides = [1, 1]} : vector<1x64xf32> to vector<1x16xf32>
    %769 = arith.mulf %768, %729 : vector<1x16xf32>
    %770 = vector.extract_strided_slice %765 {offsets = [0, 0], sizes = [1, 16], strides = [1, 1]} : vector<1x64xf32> to vector<1x16xf32>
    %771 = arith.mulf %770, %767 : vector<1x16xf32>
    %772 = arith.addf %769, %771 : vector<1x16xf32>
    %773 = vector.extract_strided_slice %765 {offsets = [0, 48], sizes = [1, 16], strides = [1, 1]} : vector<1x64xf32> to vector<1x16xf32>
    %774 = math.tanh %772 : vector<1x16xf32>
    %775 = arith.mulf %773, %774 : vector<1x16xf32>
    %776 = arith.index_cast %735 : i32 to index
    %c16_225 = arith.constant 16 : index
    %777 = vector.load %arg22[%776, %c16_225] : memref<10x32xf32, #tpu.memory_space<vmem>>, vector<1x16xf32>
    tpu.vector_store %arg22[%776, %c16_225], %775 {strides = array<i32>} : memref<10x32xf32, #tpu.memory_space<vmem>>, vector<1x16xf32>,
    %c8_i32 = arith.constant 8 : i32
    %c9_i32_226 = arith.constant 9 : i32
    %778 = arith.subi %c9_i32_226, %c8_i32 : i32
    %779 = arith.index_cast %c8_i32 : i32 to index
    %c0_227 = arith.constant 0 : index
    %780 = vector.load %arg19[%779, %c0_227] : memref<10x64xf32, #tpu.memory_space<vmem>>, vector<1x64xf32>
    %cst_228 = arith.constant dense<0.000000e+00> : vector<1x64xf32>
    %781 = tpu.matmul %754, %418, %cst_228 {dimension_numbers = #tpu.dot_dimension_numbers<[1], [0], [0], [1], [0, 0, 1, 1], [], []>} : vector<1x16xf32>, vector<16x64xf32>, vector<1x64xf32> -> vector<1x64xf32>
    %782 = arith.addf %780, %781 : vector<1x64xf32>
    %783 = arith.negf %782 : vector<1x64xf32>
    %784 = math.exp %783 : vector<1x64xf32>
    %cst_229 = arith.constant 1.000000e+00 : f32
    %785 = vector.broadcast %cst_229 : f32 to vector<1x64xf32>
    %786 = arith.addf %785, %784 : vector<1x64xf32>
    %787 = arith.divf %785, %786 : vector<1x64xf32>
    %788 = vector.extract_strided_slice %782 {offsets = [0, 32], sizes = [1, 16], strides = [1, 1]} : vector<1x64xf32> to vector<1x16xf32>
    %789 = math.tanh %788 : vector<1x16xf32>
    %790 = vector.extract_strided_slice %787 {offsets = [0, 16], sizes = [1, 16], strides = [1, 1]} : vector<1x64xf32> to vector<1x16xf32>
    %791 = arith.mulf %790, %751 : vector<1x16xf32>
    %792 = vector.extract_strided_slice %787 {offsets = [0, 0], sizes = [1, 16], strides = [1, 1]} : vector<1x64xf32> to vector<1x16xf32>
    %793 = arith.mulf %792, %789 : vector<1x16xf32>
    %794 = arith.addf %791, %793 : vector<1x16xf32>
    %795 = vector.extract_strided_slice %787 {offsets = [0, 48], sizes = [1, 16], strides = [1, 1]} : vector<1x64xf32> to vector<1x16xf32>
    %796 = math.tanh %794 : vector<1x16xf32>
    %797 = arith.mulf %795, %796 : vector<1x16xf32>
    %798 = arith.index_cast %c8_i32 : i32 to index
    %c0_230 = arith.constant 0 : index
    %799 = vector.load %arg22[%798, %c0_230] : memref<10x32xf32, #tpu.memory_space<vmem>>, vector<1x16xf32>
    tpu.vector_store %arg22[%798, %c0_230], %797 {strides = array<i32>} : memref<10x32xf32, #tpu.memory_space<vmem>>, vector<1x16xf32>,
    %800 = arith.index_cast %778 : i32 to index
    %c0_231 = arith.constant 0 : index
    %801 = vector.load %arg20[%800, %c0_231] : memref<10x64xf32, #tpu.memory_space<vmem>>, vector<1x64xf32>
    %cst_232 = arith.constant dense<0.000000e+00> : vector<1x64xf32>
    %802 = tpu.matmul %775, %420, %cst_232 {dimension_numbers = #tpu.dot_dimension_numbers<[1], [0], [0], [1], [0, 0, 1, 1], [], []>} : vector<1x16xf32>, vector<16x64xf32>, vector<1x64xf32> -> vector<1x64xf32>
    %803 = arith.addf %801, %802 : vector<1x64xf32>
    %804 = arith.negf %803 : vector<1x64xf32>
    %805 = math.exp %804 : vector<1x64xf32>
    %cst_233 = arith.constant 1.000000e+00 : f32
    %806 = vector.broadcast %cst_233 : f32 to vector<1x64xf32>
    %807 = arith.addf %806, %805 : vector<1x64xf32>
    %808 = arith.divf %806, %807 : vector<1x64xf32>
    %809 = vector.extract_strided_slice %803 {offsets = [0, 32], sizes = [1, 16], strides = [1, 1]} : vector<1x64xf32> to vector<1x16xf32>
    %810 = math.tanh %809 : vector<1x16xf32>
    %811 = vector.extract_strided_slice %808 {offsets = [0, 16], sizes = [1, 16], strides = [1, 1]} : vector<1x64xf32> to vector<1x16xf32>
    %812 = arith.mulf %811, %772 : vector<1x16xf32>
    %813 = vector.extract_strided_slice %808 {offsets = [0, 0], sizes = [1, 16], strides = [1, 1]} : vector<1x64xf32> to vector<1x16xf32>
    %814 = arith.mulf %813, %810 : vector<1x16xf32>
    %815 = arith.addf %812, %814 : vector<1x16xf32>
    %816 = vector.extract_strided_slice %808 {offsets = [0, 48], sizes = [1, 16], strides = [1, 1]} : vector<1x64xf32> to vector<1x16xf32>
    %817 = math.tanh %815 : vector<1x16xf32>
    %818 = arith.mulf %816, %817 : vector<1x16xf32>
    %819 = arith.index_cast %778 : i32 to index
    %c16_234 = arith.constant 16 : index
    %820 = vector.load %arg22[%819, %c16_234] : memref<10x32xf32, #tpu.memory_space<vmem>>, vector<1x16xf32>
    tpu.vector_store %arg22[%819, %c16_234], %818 {strides = array<i32>} : memref<10x32xf32, #tpu.memory_space<vmem>>, vector<1x16xf32>,
    %c9_i32_235 = arith.constant 9 : i32
    %c9_i32_236 = arith.constant 9 : i32
    %821 = arith.subi %c9_i32_236, %c9_i32_235 : i32
    %822 = arith.index_cast %c9_i32_235 : i32 to index
    %c0_237 = arith.constant 0 : index
    %823 = vector.load %arg19[%822, %c0_237] : memref<10x64xf32, #tpu.memory_space<vmem>>, vector<1x64xf32>
    %cst_238 = arith.constant dense<0.000000e+00> : vector<1x64xf32>
    %824 = tpu.matmul %797, %418, %cst_238 {dimension_numbers = #tpu.dot_dimension_numbers<[1], [0], [0], [1], [0, 0, 1, 1], [], []>} : vector<1x16xf32>, vector<16x64xf32>, vector<1x64xf32> -> vector<1x64xf32>
    %825 = arith.addf %823, %824 : vector<1x64xf32>
    %826 = arith.negf %825 : vector<1x64xf32>
    %827 = math.exp %826 : vector<1x64xf32>
    %cst_239 = arith.constant 1.000000e+00 : f32
    %828 = vector.broadcast %cst_239 : f32 to vector<1x64xf32>
    %829 = arith.addf %828, %827 : vector<1x64xf32>
    %830 = arith.divf %828, %829 : vector<1x64xf32>
    %831 = vector.extract_strided_slice %825 {offsets = [0, 32], sizes = [1, 16], strides = [1, 1]} : vector<1x64xf32> to vector<1x16xf32>
    %832 = math.tanh %831 : vector<1x16xf32>
    %833 = vector.extract_strided_slice %830 {offsets = [0, 16], sizes = [1, 16], strides = [1, 1]} : vector<1x64xf32> to vector<1x16xf32>
    %834 = arith.mulf %833, %794 : vector<1x16xf32>
    %835 = vector.extract_strided_slice %830 {offsets = [0, 0], sizes = [1, 16], strides = [1, 1]} : vector<1x64xf32> to vector<1x16xf32>
    %836 = arith.mulf %835, %832 : vector<1x16xf32>
    %837 = arith.addf %834, %836 : vector<1x16xf32>
    %838 = vector.extract_strided_slice %830 {offsets = [0, 48], sizes = [1, 16], strides = [1, 1]} : vector<1x64xf32> to vector<1x16xf32>
    %839 = math.tanh %837 : vector<1x16xf32>
    %840 = arith.mulf %838, %839 : vector<1x16xf32>
    %841 = arith.index_cast %c9_i32_235 : i32 to index
    %c0_240 = arith.constant 0 : index
    %842 = vector.load %arg22[%841, %c0_240] : memref<10x32xf32, #tpu.memory_space<vmem>>, vector<1x16xf32>
    tpu.vector_store %arg22[%841, %c0_240], %840 {strides = array<i32>} : memref<10x32xf32, #tpu.memory_space<vmem>>, vector<1x16xf32>,
    %843 = arith.index_cast %821 : i32 to index
    %c0_241 = arith.constant 0 : index
    %844 = vector.load %arg20[%843, %c0_241] : memref<10x64xf32, #tpu.memory_space<vmem>>, vector<1x64xf32>
    %cst_242 = arith.constant dense<0.000000e+00> : vector<1x64xf32>
    %845 = tpu.matmul %818, %420, %cst_242 {dimension_numbers = #tpu.dot_dimension_numbers<[1], [0], [0], [1], [0, 0, 1, 1], [], []>} : vector<1x16xf32>, vector<16x64xf32>, vector<1x64xf32> -> vector<1x64xf32>
    %846 = arith.addf %844, %845 : vector<1x64xf32>
    %847 = arith.negf %846 : vector<1x64xf32>
    %848 = math.exp %847 : vector<1x64xf32>
    %cst_243 = arith.constant 1.000000e+00 : f32
    %849 = vector.broadcast %cst_243 : f32 to vector<1x64xf32>
    %850 = arith.addf %849, %848 : vector<1x64xf32>
    %851 = arith.divf %849, %850 : vector<1x64xf32>
    %852 = vector.extract_strided_slice %846 {offsets = [0, 32], sizes = [1, 16], strides = [1, 1]} : vector<1x64xf32> to vector<1x16xf32>
    %853 = math.tanh %852 : vector<1x16xf32>
    %854 = vector.extract_strided_slice %851 {offsets = [0, 16], sizes = [1, 16], strides = [1, 1]} : vector<1x64xf32> to vector<1x16xf32>
    %855 = arith.mulf %854, %815 : vector<1x16xf32>
    %856 = vector.extract_strided_slice %851 {offsets = [0, 0], sizes = [1, 16], strides = [1, 1]} : vector<1x64xf32> to vector<1x16xf32>
    %857 = arith.mulf %856, %853 : vector<1x16xf32>
    %858 = arith.addf %855, %857 : vector<1x16xf32>
    %859 = vector.extract_strided_slice %851 {offsets = [0, 48], sizes = [1, 16], strides = [1, 1]} : vector<1x64xf32> to vector<1x16xf32>
    %860 = math.tanh %858 : vector<1x16xf32>
    %861 = arith.mulf %859, %860 : vector<1x16xf32>
    %862 = arith.index_cast %821 : i32 to index
    %c16_244 = arith.constant 16 : index
    %863 = vector.load %arg22[%862, %c16_244] : memref<10x32xf32, #tpu.memory_space<vmem>>, vector<1x16xf32>
    tpu.vector_store %arg22[%862, %c16_244], %861 {strides = array<i32>} : memref<10x32xf32, #tpu.memory_space<vmem>>, vector<1x16xf32>,
    %c10_i32 = arith.constant 10 : i32
    %c0_245 = arith.constant 0 : index
    %c0_246 = arith.constant 0 : index
    %864 = vector.load %arg21[%c0_245, %c0_246] : memref<6x32xf32, #tpu.memory_space<vmem>>, vector<6x32xf32>
    %c0_247 = arith.constant 0 : index
    %c0_248 = arith.constant 0 : index
    %865 = vector.load %arg22[%c0_247, %c0_248] : memref<10x32xf32, #tpu.memory_space<vmem>>, vector<10x32xf32>
    %cst_249 = arith.constant dense<0.000000e+00> : vector<10x6xf32>
    %866 = tpu.matmul %865, %864, %cst_249 {dimension_numbers = #tpu.dot_dimension_numbers<[1], [1], [0], [0], [0, 0, 1, 0], [], []>} : vector<10x32xf32>, vector<6x32xf32>, vector<10x6xf32> -> vector<10x6xf32>
    %cst_250 = arith.constant dense<0xFF800000> : vector<10xf32>
    %867 = vector.multi_reduction <maximumf>, %866, %cst_250 [1] : vector<10x6xf32> to vector<10xf32>
    %868 = vector.shape_cast %867 : vector<10xf32> to vector<10x1xf32>
    %869 = vector.broadcast %868 : vector<10x1xf32> to vector<10x6xf32>
    %870 = arith.subf %866, %869 : vector<10x6xf32>
    %871 = math.exp %870 : vector<10x6xf32>
    %cst_251 = arith.constant dense<0.000000e+00> : vector<10xf32>
    %872 = vector.multi_reduction <add>, %871, %cst_251 [1] : vector<10x6xf32> to vector<10xf32>
    %873 = vector.shape_cast %872 : vector<10xf32> to vector<10x1xf32>
    %874 = tpu.reciprocal %873 {approx = true} : vector<10x1xf32> -> vector<10x1xf32>
    %875 = vector.broadcast %874 : vector<10x1xf32> to vector<10x6xf32>
    %876 = arith.mulf %871, %875 : vector<10x6xf32>
    %cst_252 = arith.constant dense<0.000000e+00> : vector<10x32xf32>
    %877 = tpu.matmul %876, %864, %cst_252 {dimension_numbers = #tpu.dot_dimension_numbers<[1], [0], [0], [1], [0, 0, 1, 1], [], []>} : vector<10x6xf32>, vector<6x32xf32>, vector<10x32xf32> -> vector<10x32xf32>
    %878 = tpu.concatenate %865, %877 in 1 : vector<10x32xf32>, vector<10x32xf32> -> vector<10x64xf32>
    %c0_253 = arith.constant 0 : index
    %c0_254 = arith.constant 0 : index
    %879 = vector.load %arg12[%c0_253, %c0_254] : memref<64x64xf32, #tpu.memory_space<vmem>>, vector<64x64xf32>
    %cst_255 = arith.constant dense<0.000000e+00> : vector<10x64xf32>
    %880 = tpu.matmul %878, %879, %cst_255 {dimension_numbers = #tpu.dot_dimension_numbers<[1], [0], [0], [1], [0, 0, 1, 1], [], []>} : vector<10x64xf32>, vector<64x64xf32>, vector<10x64xf32> -> vector<10x64xf32>
    %c0_256 = arith.constant 0 : index
    %c0_257 = arith.constant 0 : index
    %881 = vector.load %arg13[%c0_256, %c0_257] : memref<1x64xf32, #tpu.memory_space<vmem>>, vector<1x64xf32>
    %882 = vector.broadcast %881 : vector<1x64xf32> to vector<10x64xf32>
    %883 = arith.addf %880, %882 : vector<10x64xf32>
    %c0_258 = arith.constant 0 : index
    %c0_259 = arith.constant 0 : index
    %884 = vector.load %arg14[%c0_258, %c0_259] : memref<64x1xf32, #tpu.memory_space<vmem>>, vector<64x1xf32>
    %cst_260 = arith.constant dense<0.000000e+00> : vector<10x1xf32>
    %885 = tpu.matmul %878, %884, %cst_260 {dimension_numbers = #tpu.dot_dimension_numbers<[1], [0], [0], [1], [0, 0, 1, 1], [], []>} : vector<10x64xf32>, vector<64x1xf32>, vector<10x1xf32> -> vector<10x1xf32>
    %c0_261 = arith.constant 0 : index
    %c0_262 = arith.constant 0 : index
    %886 = vector.load %arg15[%c0_261, %c0_262] : memref<1x1xf32, #tpu.memory_space<vmem>>, vector<1x1xf32>
    %887 = vector.broadcast %886 : vector<1x1xf32> to vector<10x1xf32>
    %888 = arith.addf %885, %887 : vector<10x1xf32>
    %889 = arith.negf %888 : vector<10x1xf32>
    %890 = math.exp %889 : vector<10x1xf32>
    %cst_263 = arith.constant 1.000000e+00 : f32
    %891 = vector.broadcast %cst_263 : f32 to vector<10x1xf32>
    %892 = arith.addf %891, %890 : vector<10x1xf32>
    %893 = arith.divf %891, %892 : vector<10x1xf32>
    %cst_264 = arith.constant dense<0.000000e+00> : vector<10x10xf32>
    %894 = tpu.matmul %883, %878, %cst_264 {dimension_numbers = #tpu.dot_dimension_numbers<[1], [1], [0], [0], [0, 0, 1, 0], [], []>} : vector<10x64xf32>, vector<10x64xf32>, vector<10x10xf32> -> vector<10x10xf32>
    %895 = tpu.iota {dimensions = array<i32: 0>} : vector<10x10xi32>
    %896 = tpu.iota {dimensions = array<i32: 1>} : vector<10x10xi32>
    %897 = arith.cmpi slt, %896, %895 : vector<10x10xi32>
    %cst_265 = arith.constant -1.000000e+30 : f32
    %898 = vector.broadcast %cst_265 : f32 to vector<10x10xf32>
    %899 = arith.select %897, %898, %894 : vector<10x10xi1>, vector<10x10xf32>
    %cst_266 = arith.constant dense<0xFF800000> : vector<10xf32>
    %900 = vector.multi_reduction <maximumf>, %899, %cst_266 [1] : vector<10x10xf32> to vector<10xf32>
    %901 = vector.shape_cast %900 : vector<10xf32> to vector<10x1xf32>
    %902 = vector.broadcast %901 : vector<10x1xf32> to vector<10x10xf32>
    %903 = arith.subf %899, %902 : vector<10x10xf32>
    %904 = math.exp %903 : vector<10x10xf32>
    %cst_267 = arith.constant dense<0.000000e+00> : vector<10xf32>
    %905 = vector.multi_reduction <add>, %904, %cst_267 [1] : vector<10x10xf32> to vector<10xf32>
    %906 = vector.shape_cast %905 : vector<10xf32> to vector<10x1xf32>
    %907 = tpu.reciprocal %906 {approx = true} : vector<10x1xf32> -> vector<10x1xf32>
    %908 = vector.broadcast %907 : vector<10x1xf32> to vector<10x10xf32>
    %909 = arith.mulf %904, %908 : vector<10x10xf32>
    %910 = vector.broadcast %893 : vector<10x1xf32> to vector<10x10xf32>
    %911 = arith.mulf %909, %910 : vector<10x10xf32>
    %912 = math.absf %911 : vector<10x10xf32>
    %913 = vector.shape_cast %912 : vector<10x10xf32> to vector<1x10x10xf32>
    %cst_268 = arith.constant dense<0.000000e+00> : vector<1xf32>
    %914 = vector.multi_reduction <add>, %913, %cst_268 [1, 2] : vector<1x10x10xf32> to vector<1xf32>
    %915 = vector.shape_cast %914 : vector<1xf32> to vector<1x1x1xf32>
    %916 = vector.extract %915[0, 0, 0] : f32 from vector<1x1x1xf32>
    %cst_269 = arith.constant 9.99999996E-13 : f32
    %917 = arith.maximumf %916, %cst_269 : f32
    %918 = vector.broadcast %917 : f32 to vector<10x10xf32>
    %919 = arith.divf %911, %918 : vector<10x10xf32>
    %c0_270 = arith.constant 0 : index
    %c0_271 = arith.constant 0 : index
    %920 = vector.load %arg16[%c0_270, %c0_271] : memref<10x10xf32, #tpu.memory_space<vmem>>, vector<10x10xf32>
    tpu.vector_store %arg16[%c0_270, %c0_271], %919 {strides = array<i32>} : memref<10x10xf32, #tpu.memory_space<vmem>>, vector<10x10xf32>,
    return
  }
  func.func @transform_0(%arg0: i32) -> (i32, i32) {
    %c0_i32 = arith.constant 0 : i32
    %c0_i32_0 = arith.constant 0 : i32
    %c0_i32_1 = arith.constant 0 : i32
    return %c0_i32, %c0_i32_0 : i32, i32
  }
  func.func @transform_1(%arg0: i32) -> (i32, i32) {
    %c0_i32 = arith.constant 0 : i32
    %c0_i32_0 = arith.constant 0 : i32
    %c0_i32_1 = arith.constant 0 : i32
    return %c0_i32, %c0_i32_0 : i32, i32
  }
  func.func @transform_2(%arg0: i32) -> (i32, i32) {
    %c0_i32 = arith.constant 0 : i32
    %c0_i32_0 = arith.constant 0 : i32
    %c0_i32_1 = arith.constant 0 : i32
    return %c0_i32, %c0_i32_0 : i32, i32
  }
  func.func @transform_3(%arg0: i32) -> (i32, i32) {
    %c0_i32 = arith.constant 0 : i32
    %c0_i32_0 = arith.constant 0 : i32
    %c0_i32_1 = arith.constant 0 : i32
    return %c0_i32, %c0_i32_0 : i32, i32
  }
  func.func @transform_4(%arg0: i32) -> (i32, i32) {
    %c0_i32 = arith.constant 0 : i32
    %c0_i32_0 = arith.constant 0 : i32
    %c0_i32_1 = arith.constant 0 : i32
    return %c0_i32, %c0_i32_0 : i32, i32
  }
  func.func @transform_5(%arg0: i32) -> (i32, i32) {
    %c0_i32 = arith.constant 0 : i32
    %c0_i32_0 = arith.constant 0 : i32
    %c0_i32_1 = arith.constant 0 : i32
    return %c0_i32, %c0_i32_0 : i32, i32
  }
  func.func @transform_6(%arg0: i32) -> (i32, i32) {
    %c0_i32 = arith.constant 0 : i32
    %c0_i32_0 = arith.constant 0 : i32
    %c0_i32_1 = arith.constant 0 : i32
    return %c0_i32, %c0_i32_0 : i32, i32
  }
  func.func @transform_7(%arg0: i32) -> (i32, i32) {
    %c0_i32 = arith.constant 0 : i32
    %c0_i32_0 = arith.constant 0 : i32
    %c0_i32_1 = arith.constant 0 : i32
    return %c0_i32, %c0_i32_0 : i32, i32
  }
  func.func @transform_8(%arg0: i32) -> (i32, i32, i32) {
    %c0_i32 = arith.constant 0 : i32
    %c0_i32_0 = arith.constant 0 : i32
    %c0_i32_1 = arith.constant 0 : i32
    %c0_i32_2 = arith.constant 0 : i32
    return %c0_i32, %c0_i32_0, %c0_i32_1 : i32, i32, i32
  }
  func.func @transform_9(%arg0: i32) -> (i32, i32, i32) {
    %c0_i32 = arith.constant 0 : i32
    %c0_i32_0 = arith.constant 0 : i32
    %c0_i32_1 = arith.constant 0 : i32
    %c0_i32_2 = arith.constant 0 : i32
    return %c0_i32, %c0_i32_0, %c0_i32_1 : i32, i32, i32
  }
  func.func @transform_10(%arg0: i32) -> (i32, i32, i32) {
    %c0_i32 = arith.constant 0 : i32
    %c0_i32_0 = arith.constant 0 : i32
    %c0_i32_1 = arith.constant 0 : i32
    %c0_i32_2 = arith.constant 0 : i32
    return %c0_i32, %c0_i32_0, %c0_i32_1 : i32, i32, i32
  }
  func.func @transform_11(%arg0: i32) -> (i32, i32) {
    %c0_i32 = arith.constant 0 : i32
    %c0_i32_0 = arith.constant 0 : i32
    %c0_i32_1 = arith.constant 0 : i32
    return %c0_i32, %c0_i32_0 : i32, i32
  }
  func.func @transform_12(%arg0: i32) -> (i32, i32) {
    %c0_i32 = arith.constant 0 : i32
    %c0_i32_0 = arith.constant 0 : i32
    %c0_i32_1 = arith.constant 0 : i32
    return %c0_i32, %c0_i32_0 : i32, i32
  }
  func.func @transform_13(%arg0: i32) -> (i32, i32) {
    %c0_i32 = arith.constant 0 : i32
    %c0_i32_0 = arith.constant 0 : i32
    %c0_i32_1 = arith.constant 0 : i32
    return %c0_i32, %c0_i32_0 : i32, i32
  }
  func.func @transform_14(%arg0: i32) -> (i32, i32) {
    %c0_i32 = arith.constant 0 : i32
    %c0_i32_0 = arith.constant 0 : i32
    %c0_i32_1 = arith.constant 0 : i32
    return %c0_i32, %c0_i32_0 : i32, i32
  }
  func.func @transform_15(%arg0: i32) -> (i32, i32) {
    %c0_i32 = arith.constant 0 : i32
    %c0_i32_0 = arith.constant 0 : i32
    %c0_i32_1 = arith.constant 0 : i32
    return %c0_i32, %c0_i32_0 : i32, i32
  }
}

</mosaic_0001>

<llo_original>
// kernel: baseline_forward.1
$region0: #{baseline_forward.1}
  #allocation0 [shape = 'u32[]', space=smem, size = 0x4, offset = 0x4, fixed_abs, tag = 'smem constant byte address 0x4 - core index']
  #allocation1 [shape = 'u32[144,128]{1,0:T(1,128)}', space=vmem, size = 0x12000, scoped, tag = 'internal scratch']
  #allocation2 [shape = 'f32[6,64]{1,0:T(8,128)}', space=vmem, size = 0x1000, scoped, tag = 'scratch operand']
  #allocation3 [shape = 'f32[6,64]{1,0:T(8,128)}', space=vmem, size = 0x1000, scoped, tag = 'scratch operand']
  #allocation4 [shape = 'f32[10,64]{1,0:T(8,128)}', space=vmem, size = 0x2000, scoped, tag = 'scratch operand']
  #allocation5 [shape = 'f32[10,64]{1,0:T(8,128)}', space=vmem, size = 0x2000, scoped, tag = 'scratch operand']
  #allocation6 [shape = 'f32[6,32]{1,0:T(8,128)}', space=vmem, size = 0x1000, scoped, tag = 'scratch operand']
  #allocation7 [shape = 'f32[10,32]{1,0:T(8,128)}', space=vmem, size = 0x2000, scoped, tag = 'scratch operand']
  #allocation8 [shape = 'f32[1,1]{1,0:T(1,128)S(1)}', space=vmem, size = 0x200, scoped, tag = 'scoped memory for baseline_forward.1']
  %s0 = inlined_call_operand.vmem [shape: s32[6,1], index: 0, kind: input, shape index: {}]
  %s1 = inlined_call_operand.vmem [shape: s32[10,1], index: 1, kind: input, shape index: {}]
  %s2 = inlined_call_operand.vmem [shape: s32[42,1], index: 2, kind: input, shape index: {}]
  %s3 = inlined_call_operand.vmem [shape: s32[70,1], index: 3, kind: input, shape index: {}]
  %s4 = inlined_call_operand.vmem [shape: f32[50,32], index: 4, kind: input, shape index: {}]
  %s5 = inlined_call_operand.vmem [shape: f32[30,8], index: 5, kind: input, shape index: {}]
  %s6 = inlined_call_operand.vmem [shape: f32[40,16], index: 6, kind: input, shape index: {}]
  %s7 = inlined_call_operand.vmem [shape: f32[1,16], index: 7, kind: input, shape index: {}]
  %s8 = inlined_call_operand.vmem [shape: f32[4,48,64], index: 8, kind: input, shape index: {}]
  %s9 = inlined_call_operand.vmem [shape: f32[4,16,64], index: 9, kind: input, shape index: {}]
  %s10 = inlined_call_operand.vmem [shape: f32[4,1,64], index: 10, kind: input, shape index: {}]
  %s11 = inlined_call_operand.vmem [shape: f32[64,64], index: 11, kind: input, shape index: {}]
  %s12 = inlined_call_operand.vmem [shape: f32[1,64], index: 12, kind: input, shape index: {}]
  %s13 = inlined_call_operand.vmem [shape: f32[64,1], index: 13, kind: input, shape index: {}]
  %s14 = inlined_call_operand.<no memory space> [shape: f32[1,1], index: 14, kind: input, shape index: {}]
  %s15 = inlined_call_operand.vmem [shape: f32[10,10], index: 15, kind: output, shape index: {}]
  %s16 = sld [smem:[#allocation0]]
  $region70: #{baseline_forward.1} parent=0
    _
  %s18 = ssub.s32 1, %s16
  %s19 = scalar_select 0, %s18, %s16
  %v20 = vstv %s14
  %21 = vst [vmem:[#allocation8] sm:$0x1] %v20
  // Predicated region
  $region2: #{baseline_forward.1} parent=0 // pred_check
    _
  $region3: #{baseline_forward.1} parent=0 // pred_check_branch
    %23 = sbr.rel (0) target = $region5
  $region4: #{baseline_forward.1} parent=0 // pred_region
    _
  $region5: #{baseline_forward.1} parent=0 // pred_fallthru
    _
  // Predicated region
  $region6: #{baseline_forward.1} parent=0 // pred_check
    _
  $region7: #{baseline_forward.1} parent=0 // pred_check_branch
    %25 = sbr.rel (0) target = $region9
  $region8: #{baseline_forward.1} parent=0 // pred_region
    _
  $region9: #{baseline_forward.1} parent=0 // pred_fallthru
    _
  // Predicated region
  $region10: #{baseline_forward.1} parent=0 // pred_check
    _
  $region11: #{baseline_forward.1} parent=0 // pred_check_branch
    %27 = sbr.rel (0) target = $region13
  $region12: #{baseline_forward.1} parent=0 // pred_region
    _
  $region13: #{baseline_forward.1} parent=0 // pred_fallthru
    _
  // Predicated region
  $region14: #{baseline_forward.1} parent=0 // pred_check
    _
  $region15: #{baseline_forward.1} parent=0 // pred_check_branch
    %29 = sbr.rel (0) target = $region17
  $region16: #{baseline_forward.1} parent=0 // pred_region
    _
  $region17: #{baseline_forward.1} parent=0 // pred_fallthru
    _
  // Predicated region
  $region18: #{baseline_forward.1} parent=0 // pred_check
    _
  $region19: #{baseline_forward.1} parent=0 // pred_check_branch
    %31 = sbr.rel (0) target = $region21
  $region20: #{baseline_forward.1} parent=0 // pred_region
    _
  $region21: #{baseline_forward.1} parent=0 // pred_fallthru
    _
  // Predicated region
  $region22: #{baseline_forward.1} parent=0 // pred_check
    _
  $region23: #{baseline_forward.1} parent=0 // pred_check_branch
    %33 = sbr.rel (0) target = $region25
  $region24: #{baseline_forward.1} parent=0 // pred_region
    _
  $region25: #{baseline_forward.1} parent=0 // pred_fallthru
    _
  // Predicated region
  $region26: #{baseline_forward.1} parent=0 // pred_check
    _
  $region27: #{baseline_forward.1} parent=0 // pred_check_branch
    %35 = sbr.rel (0) target = $region29
  $region28: #{baseline_forward.1} parent=0 // pred_region
    _
  $region29: #{baseline_forward.1} parent=0 // pred_fallthru
    _
  // Predicated region
  $region30: #{baseline_forward.1} parent=0 // pred_check
    _
  $region31: #{baseline_forward.1} parent=0 // pred_check_branch
    %37 = sbr.rel (0) target = $region33
  $region32: #{baseline_forward.1} parent=0 // pred_region
    _
  $region33: #{baseline_forward.1} parent=0 // pred_fallthru
    _
  // Predicated region
  $region34: #{baseline_forward.1} parent=0 // pred_check
    _
  $region35: #{baseline_forward.1} parent=0 // pred_check_branch
    %39 = sbr.rel (0) target = $region37
  $region36: #{baseline_forward.1} parent=0 // pred_region
    _
  $region37: #{baseline_forward.1} parent=0 // pred_fallthru
    _
  // Predicated region
  $region38: #{baseline_forward.1} parent=0 // pred_check
    _
  $region39: #{baseline_forward.1} parent=0 // pred_check_branch
    %41 = sbr.rel (0) target = $region41
  $region40: #{baseline_forward.1} parent=0 // pred_region
    _
  $region41: #{baseline_forward.1} parent=0 // pred_fallthru
    _
  // Predicated region
  $region42: #{baseline_forward.1} parent=0 // pred_check
    _
  $region43: #{baseline_forward.1} parent=0 // pred_check_branch
    %43 = sbr.rel (0) target = $region45
  $region44: #{baseline_forward.1} parent=0 // pred_region
    _
  $region45: #{baseline_forward.1} parent=0 // pred_fallthru
    _
  // Predicated region
  $region46: #{baseline_forward.1} parent=0 // pred_check
    _
  $region47: #{baseline_forward.1} parent=0 // pred_check_branch
    %45 = sbr.rel (0) target = $region49
  $region48: #{baseline_forward.1} parent=0 // pred_region
    _
  $region49: #{baseline_forward.1} parent=0 // pred_fallthru
    _
  // Predicated region
  $region50: #{baseline_forward.1} parent=0 // pred_check
    _
  $region51: #{baseline_forward.1} parent=0 // pred_check_branch
    %47 = sbr.rel (0) target = $region53
  $region52: #{baseline_forward.1} parent=0 // pred_region
    _
  $region53: #{baseline_forward.1} parent=0 // pred_fallthru
    _
  // Predicated region
  $region54: #{baseline_forward.1} parent=0 // pred_check
    _
  $region55: #{baseline_forward.1} parent=0 // pred_check_branch
    %49 = sbr.rel (0) target = $region57
  $region56: #{baseline_forward.1} parent=0 // pred_region
    _
  $region57: #{baseline_forward.1} parent=0 // pred_fallthru
    _
  // Predicated region
  $region58: #{baseline_forward.1} parent=0 // pred_check
    _
  $region59: #{baseline_forward.1} parent=0 // pred_check_branch
    %51 = sbr.rel (0) target = $region61
  $region60: #{baseline_forward.1} parent=0 // pred_region
    _
  $region61: #{baseline_forward.1} parent=0 // pred_fallthru
    _
  %v52 = vld [vmem:[%s4] sm:$0xff]
  %v53 = vld [vmem:[%s4 + $0x8] sm:$0xff]
  %v54 = vld [vmem:[%s4 + $0x10] sm:$0xff]
  %v55 = vld [vmem:[%s4 + $0x18] sm:$0xff]
  %v56 = vld [vmem:[%s4 + $0x20] sm:$0xff]
  %v57 = vld [vmem:[%s4 + $0x28] sm:$0xff]
  %v58 = vld [vmem:[%s4 + $0x30] sm:$0x3]
  %v59 = vld [vmem:[%s5] sm:$0xff]
  %v60 = vld [vmem:[%s5 + $0x8] sm:$0xff]
  %v61 = vld [vmem:[%s5 + $0x10] sm:$0xff]
  %v62 = vld [vmem:[%s5 + $0x18] sm:$0x3f]
  %v63 = vld [vmem:[%s6] sm:$0xff]
  %v64 = vld [vmem:[%s6 + $0x8] sm:$0xff]
  %v65 = vld [vmem:[%s6 + $0x10] sm:$0xff]
  %v66 = vld [vmem:[%s6 + $0x18] sm:$0xff]
  %v67 = vld [vmem:[%s6 + $0x20] sm:$0xff]
  %v68 = vld [vmem:[%s7] sm:$0x1]
  %v69 = vld [vmem:[%s0] sm:$0x3f]
  %v70 = vlaneseq
  %v71 = vand.u32 %v70, 127
  %72 = vset.pattern.permute.xlu0 0
  %73 = vperm.xlu0 %72, %v69
  %v74 = vpop.permute.xlu0 %73
  %vm75 = vcmp.eq.s32.totalorder %v74, %v71
  %v76 = vsel %vm75, 1, 0
  %v77 = vcvt.s32.f32 %v76
  %vm78 = vcmask 408576
  %v80 = vsel %vm78, %v77, 0
  %vm82 = vcmask 1041408
  %v84 = vsel %vm82, %v58, 0
  %86 = vmatprep.subr.mxu0 0.0
  %87 = vmatpush1.msra.mxu0 %v52
  %88 = vmatprep.subr.mxu0 0.0
  %89 = vmatpush1.msra.mxu0 %v53
  %90 = vmatprep.subr.mxu0 0.0
  %91 = vmatpush1.msra.mxu0 %v54
  %92 = vmatprep.subr.mxu0 0.0
  %93 = vmatpush1.msra.mxu0 %v55
  %94 = vmatprep.subr.mxu0 0.0
  %95 = vmatpush1.msra.mxu0 %v56
  %96 = vmatprep.subr.mxu0 0.0
  %97 = vmatpush1.msra.mxu0 %v57
  %98 = vmatprep.subr.mxu0 0.0
  %99 = vmatpush1.msra.mxu0 %v84
  %100 = vmatprep.subr.mxu0 0.0
  %101 = vmatpush1.msra.mxu0 0.0
  %102 = vmatprep.subr.mxu0 0.0
  %103 = vmatpush1.msra.mxu0 0.0
  %104 = vmatprep.subr.mxu0 0.0
  %105 = vmatpush1.msra.mxu0 0.0
  %106 = vmatprep.subr.mxu0 0.0
  %107 = vmatpush1.msra.mxu0 0.0
  %108 = vmatprep.subr.mxu0 0.0
  %109 = vmatpush1.msra.mxu0 0.0
  %110 = vmatprep.subr.mxu0 0.0
  %111 = vmatpush1.msra.mxu0 0.0
  %112 = vmatprep.subr.mxu0 0.0
  %113 = vmatpush1.msra.mxu0 0.0
  %114 = vmatprep.subr.mxu0 0.0
  %115 = vmatpush1.msra.mxu0 0.0
  %116 = vmatprep.subr.mxu0 0.0
  %117 = vmatpush1.msra.mxu0 0.0
  %118 = vmatprep.subr.mxu0 0.0
  %119 = vmatpush1.msra.mxu0 0.0
  %120 = vmatprep.subr.mxu0 0.0
  %121 = vmatpush1.msra.mxu0 0.0
  %122 = vmatprep.subr.mxu0 0.0
  %123 = vmatpush1.msra.mxu0 0.0
  %124 = vmatprep.subr.mxu0 0.0
  %125 = vmatpush1.msra.mxu0 0.0
  %126 = vmatprep.subr.mxu0 0.0
  %127 = vmatpush1.msra.mxu0 0.0
  %128 = vmatprep.subr.mxu0 0.0
  %129 = vmatpush1.msra.mxu0 0.0
  %130 = vmatprep.subr.mxu0 0.0
  %131 = vmatpush1.msra.mxu0 0.0
  %132 = vmatprep.subr.mxu0 0.0
  %133 = vmatpush1.msra.mxu0 0.0
  %134 = vmatprep.subr.mxu0 0.0
  %135 = vmatpush1.msra.mxu0 0.0
  %136 = vmatprep.subr.mxu0 0.0
  %137 = vmatpush1.msra.mxu0 0.0
  %138 = vmatprep.subr.mxu0 0.0
  %139 = vmatpush1.msra.mxu0 0.0
  %140 = vmatprep.subr.mxu0 0.0
  %141 = vmatpush1.msra.mxu0 0.0
  %142 = vmatprep.subr.mxu0 0.0
  %143 = vmatpush1.msra.mxu0 0.0
  %144 = vmatprep.subr.mxu0 0.0
  %145 = vmatpush1.msra.mxu0 0.0
  %146 = vmatprep.subr.mxu0 0.0
  %147 = vmatpush1.msra.mxu0 0.0
  %148 = vmatprep.subr.mxu0 0.0
  %149 = vmatpush1.msra.mxu0 0.0
  %150 = vmatprep.mubr.f32.mxu0 0.0
  %151 = vmatmul.mubr.f32.gmra.mrb[0].mxu0 %v80
  %v152 = vpop.f32.mrb[0].mxu0
  %v153 = vadd.f32 0.0, %v152
  %v154 = vpop.f32.mrb[0].mxu0
  %155 = vdwg.mxu0
  %v156 = vld [vmem:[%s1] sm:$0xff]
  %v157 = vld [vmem:[%s1 + $0x8] sm:$0x3]
  %158 = vset.pattern.permute.xlu0 0
  %159 = vperm.xlu0 %158, %v156
  %v160 = vpop.permute.xlu0 %159
  %161 = vset.pattern.permute.xlu0 0
  %162 = vperm.xlu0 %161, %v157
  %v163 = vpop.permute.xlu0 %162
  %vm164 = vcmp.eq.s32.totalorder %v160, %v71
  %vm165 = vcmp.eq.s32.totalorder %v163, %v71
  %v166 = vsel %vm164, 1, 0
  %v167 = vsel %vm165, 1, 0
  %v168 = vcvt.s32.f32 %v166
  %v169 = vcvt.s32.f32 %v167
  %v171 = vsel %vm78, %v168, 0
  %v174 = vsel %vm78, %v169, 0
  %176 = vmatprep.subr.mxu0 0.0
  %177 = vmatpush1.msra.mxu0 %v52
  %178 = vmatprep.subr.mxu0 0.0
  %179 = vmatpush1.msra.mxu0 %v53
  %180 = vmatprep.subr.mxu0 0.0
  %181 = vmatpush1.msra.mxu0 %v54
  %182 = vmatprep.subr.mxu0 0.0
  %183 = vmatpush1.msra.mxu0 %v55
  %184 = vmatprep.subr.mxu0 0.0
  %185 = vmatpush1.msra.mxu0 %v56
  %186 = vmatprep.subr.mxu0 0.0
  %187 = vmatpush1.msra.mxu0 %v57
  %188 = vmatprep.subr.mxu0 0.0
  %189 = vmatpush1.msra.mxu0 %v84
  %190 = vmatprep.subr.mxu0 0.0
  %191 = vmatpush1.msra.mxu0 0.0
  %192 = vmatprep.subr.mxu0 0.0
  %193 = vmatpush1.msra.mxu0 0.0
  %194 = vmatprep.subr.mxu0 0.0
  %195 = vmatpush1.msra.mxu0 0.0
  %196 = vmatprep.subr.mxu0 0.0
  %197 = vmatpush1.msra.mxu0 0.0
  %198 = vmatprep.subr.mxu0 0.0
  %199 = vmatpush1.msra.mxu0 0.0
  %200 = vmatprep.subr.mxu0 0.0
  %201 = vmatpush1.msra.mxu0 0.0
  %202 = vmatprep.subr.mxu0 0.0
  %203 = vmatpush1.msra.mxu0 0.0
  %204 = vmatprep.subr.mxu0 0.0
  %205 = vmatpush1.msra.mxu0 0.0
  %206 = vmatprep.subr.mxu0 0.0
  %207 = vmatpush1.msra.mxu0 0.0
  %208 = vmatprep.subr.mxu0 0.0
  %209 = vmatpush1.msra.mxu0 0.0
  %210 = vmatprep.subr.mxu0 0.0
  %211 = vmatpush1.msra.mxu0 0.0
  %212 = vmatprep.subr.mxu0 0.0
  %213 = vmatpush1.msra.mxu0 0.0
  %214 = vmatprep.subr.mxu0 0.0
  %215 = vmatpush1.msra.mxu0 0.0
  %216 = vmatprep.subr.mxu0 0.0
  %217 = vmatpush1.msra.mxu0 0.0
  %218 = vmatprep.subr.mxu0 0.0
  %219 = vmatpush1.msra.mxu0 0.0
  %220 = vmatprep.subr.mxu0 0.0
  %221 = vmatpush1.msra.mxu0 0.0
  %222 = vmatprep.subr.mxu0 0.0
  %223 = vmatpush1.msra.mxu0 0.0
  %224 = vmatprep.subr.mxu0 0.0
  %225 = vmatpush1.msra.mxu0 0.0
  %226 = vmatprep.subr.mxu0 0.0
  %227 = vmatpush1.msra.mxu0 0.0
  %228 = vmatprep.subr.mxu0 0.0
  %229 = vmatpush1.msra.mxu0 0.0
  %230 = vmatprep.subr.mxu0 0.0
  %231 = vmatpush1.msra.mxu0 0.0
  %232 = vmatprep.subr.mxu0 0.0
  %233 = vmatpush1.msra.mxu0 0.0
  %234 = vmatprep.subr.mxu0 0.0
  %235 = vmatpush1.msra.mxu0 0.0
  %236 = vmatprep.subr.mxu0 0.0
  %237 = vmatpush1.msra.mxu0 0.0
  %238 = vmatprep.subr.mxu0 0.0
  %239 = vmatpush1.msra.mxu0 0.0
  %240 = vmatprep.mubr.f32.mxu0 0.0
  %241 = vmatmul.mubr.f32.gmra.mrb[0].mxu0 %v171
  %v242 = vpop.f32.mrb[0].mxu0
  %v243 = vadd.f32 0.0, %v242
  %v244 = vpop.f32.mrb[0].mxu0
  %245 = vmatprep.mubr.f32.mxu0 0.0
  %246 = vmatmul.mubr.f32.gmra.mrb[0].mxu0 %v174
  %v247 = vpop.f32.mrb[0].mxu0
  %v248 = vadd.f32 0.0, %v247
  %v249 = vpop.f32.mrb[0].mxu0
  %250 = vdwg.mxu0
  %v251 = vld [vmem:[%s2] sm:$0xff]
  %v252 = vld [vmem:[%s2 + $0x8] sm:$0xff]
  %v253 = vld [vmem:[%s2 + $0x10] sm:$0xff]
  %v254 = vld [vmem:[%s2 + $0x18] sm:$0xff]
  %v255 = vld [vmem:[%s2 + $0x20] sm:$0xff]
  %v256 = vld [vmem:[%s2 + $0x28] sm:$0x3]
  %257 = vset.pattern.permute.xlu0 0
  %258 = vperm.xlu0 %257, %v251
  %v259 = vpop.permute.xlu0 %258
  %260 = vset.pattern.permute.xlu0 0
  %261 = vperm.xlu0 %260, %v252
  %v262 = vpop.permute.xlu0 %261
  %263 = vset.pattern.permute.xlu0 0
  %264 = vperm.xlu0 %263, %v253
  %v265 = vpop.permute.xlu0 %264
  %266 = vset.pattern.permute.xlu0 0
  %267 = vperm.xlu0 %266, %v254
  %v268 = vpop.permute.xlu0 %267
  %269 = vset.pattern.permute.xlu0 0
  %270 = vperm.xlu0 %269, %v255
  %v271 = vpop.permute.xlu0 %270
  %272 = vset.pattern.permute.xlu0 0
  %273 = vperm.xlu0 %272, %v256
  %v274 = vpop.permute.xlu0 %273
  %vm275 = vcmp.eq.s32.totalorder %v259, %v71
  %vm276 = vcmp.eq.s32.totalorder %v262, %v71
  %vm277 = vcmp.eq.s32.totalorder %v265, %v71
  %vm278 = vcmp.eq.s32.totalorder %v268, %v71
  %vm279 = vcmp.eq.s32.totalorder %v271, %v71
  %vm280 = vcmp.eq.s32.totalorder %v274, %v71
  %v281 = vsel %vm275, 1, 0
  %v282 = vsel %vm276, 1, 0
  %v283 = vsel %vm277, 1, 0
  %v284 = vsel %vm278, 1, 0
  %v285 = vsel %vm279, 1, 0
  %v286 = vsel %vm280, 1, 0
  %v287 = vcvt.s32.f32 %v281
  %v288 = vcvt.s32.f32 %v282
  %v289 = vcvt.s32.f32 %v283
  %v290 = vcvt.s32.f32 %v284
  %v291 = vcvt.s32.f32 %v285
  %v292 = vcvt.s32.f32 %v286
  %vm293 = vcmask 244736
  %v295 = vsel %vm293, %v287, 0
  %v298 = vsel %vm293, %v288, 0
  %v301 = vsel %vm293, %v289, 0
  %v304 = vsel %vm293, %v290, 0
  %v307 = vsel %vm293, %v291, 0
  %v310 = vsel %vm293, %v292, 0
  %vm312 = vcmask 1045504
  %v314 = vsel %vm312, %v62, 0
  %316 = vmatprep.subr.mxu0 0.0
  %317 = vmatpush1.msra.mxu0 %v59
  %318 = vmatprep.subr.mxu0 0.0
  %319 = vmatpush1.msra.mxu0 %v60
  %320 = vmatprep.subr.mxu0 0.0
  %321 = vmatpush1.msra.mxu0 %v61
  %322 = vmatprep.subr.mxu0 0.0
  %323 = vmatpush1.msra.mxu0 %v314
  %324 = vmatprep.subr.mxu0 0.0
  %325 = vmatpush1.msra.mxu0 0.0
  %326 = vmatprep.subr.mxu0 0.0
  %327 = vmatpush1.msra.mxu0 0.0
  %328 = vmatprep.subr.mxu0 0.0
  %329 = vmatpush1.msra.mxu0 0.0
  %330 = vmatprep.subr.mxu0 0.0
  %331 = vmatpush1.msra.mxu0 0.0
  %332 = vmatprep.subr.mxu0 0.0
  %333 = vmatpush1.msra.mxu0 0.0
  %334 = vmatprep.subr.mxu0 0.0
  %335 = vmatpush1.msra.mxu0 0.0
  %336 = vmatprep.subr.mxu0 0.0
  %337 = vmatpush1.msra.mxu0 0.0
  %338 = vmatprep.subr.mxu0 0.0
  %339 = vmatpush1.msra.mxu0 0.0
  %340 = vmatprep.subr.mxu0 0.0
  %341 = vmatpush1.msra.mxu0 0.0
  %342 = vmatprep.subr.mxu0 0.0
  %343 = vmatpush1.msra.mxu0 0.0
  %344 = vmatprep.subr.mxu0 0.0
  %345 = vmatpush1.msra.mxu0 0.0
  %346 = vmatprep.subr.mxu0 0.0
  %347 = vmatpush1.msra.mxu0 0.0
  %348 = vmatprep.subr.mxu0 0.0
  %349 = vmatpush1.msra.mxu0 0.0
  %350 = vmatprep.subr.mxu0 0.0
  %351 = vmatpush1.msra.mxu0 0.0
  %352 = vmatprep.subr.mxu0 0.0
  %353 = vmatpush1.msra.mxu0 0.0
  %354 = vmatprep.subr.mxu0 0.0
  %355 = vmatpush1.msra.mxu0 0.0
  %356 = vmatprep.subr.mxu0 0.0
  %357 = vmatpush1.msra.mxu0 0.0
  %358 = vmatprep.subr.mxu0 0.0
  %359 = vmatpush1.msra.mxu0 0.0
  %360 = vmatprep.subr.mxu0 0.0
  %361 = vmatpush1.msra.mxu0 0.0
  %362 = vmatprep.subr.mxu0 0.0
  %363 = vmatpush1.msra.mxu0 0.0
  %364 = vmatprep.subr.mxu0 0.0
  %365 = vmatpush1.msra.mxu0 0.0
  %366 = vmatprep.subr.mxu0 0.0
  %367 = vmatpush1.msra.mxu0 0.0
  %368 = vmatprep.subr.mxu0 0.0
  %369 = vmatpush1.msra.mxu0 0.0
  %370 = vmatprep.subr.mxu0 0.0
  %371 = vmatpush1.msra.mxu0 0.0
  %372 = vmatprep.subr.mxu0 0.0
  %373 = vmatpush1.msra.mxu0 0.0
  %374 = vmatprep.subr.mxu0 0.0
  %375 = vmatpush1.msra.mxu0 0.0
  %376 = vmatprep.subr.mxu0 0.0
  %377 = vmatpush1.msra.mxu0 0.0
  %378 = vmatprep.subr.mxu0 0.0
  %379 = vmatpush1.msra.mxu0 0.0
  %380 = vmatprep.mubr.f32.mxu0 0.0
  %381 = vmatmul.mubr.f32.gmra.mrb[0].mxu0 %v295
  %v382 = vpop.f32.mrb[0].mxu0
  %v383 = vadd.f32 0.0, %v382
  %v384 = vpop.f32.mrb[0].mxu0
  %385 = vmatprep.mubr.f32.mxu0 0.0
  %386 = vmatmul.mubr.f32.gmra.mrb[0].mxu0 %v298
  %v387 = vpop.f32.mrb[0].mxu0
  %v388 = vadd.f32 0.0, %v387
  %v389 = vpop.f32.mrb[0].mxu0
  %390 = vmatprep.mubr.f32.mxu0 0.0
  %391 = vmatmul.mubr.f32.gmra.mrb[0].mxu0 %v301
  %v392 = vpop.f32.mrb[0].mxu0
  %v393 = vadd.f32 0.0, %v392
  %v394 = vpop.f32.mrb[0].mxu0
  %395 = vmatprep.mubr.f32.mxu0 0.0
  %396 = vmatmul.mubr.f32.gmra.mrb[0].mxu0 %v304
  %v397 = vpop.f32.mrb[0].mxu0
  %v398 = vadd.f32 0.0, %v397
  %v399 = vpop.f32.mrb[0].mxu0
  %400 = vmatprep.mubr.f32.mxu0 0.0
  %401 = vmatmul.mubr.f32.gmra.mrb[0].mxu0 %v307
  %v402 = vpop.f32.mrb[0].mxu0
  %v403 = vadd.f32 0.0, %v402
  %v404 = vpop.f32.mrb[0].mxu0
  %405 = vmatprep.mubr.f32.mxu0 0.0
  %406 = vmatmul.mubr.f32.gmra.mrb[0].mxu0 %v310
  %v407 = vpop.f32.mrb[0].mxu0
  %v408 = vadd.f32 0.0, %v407
  %v409 = vpop.f32.mrb[0].mxu0
  %410 = vdwg.mxu0
  %vm416 = vcmask 1046528
  %v417 = vrot.slane %v383, 1
  %v418 = vrot.slane %v388, 1
  %v419 = vsel %vm416, %v417, %v418
  %v420 = vrot.slane %v393, 1
  %v421 = vsel %vm416, %v418, %v420
  %v422 = vrot.slane %v398, 1
  %v423 = vsel %vm416, %v420, %v422
  %v424 = vrot.slane %v403, 1
  %v425 = vsel %vm416, %v422, %v424
  %vm426 = vcmask 64512
  %v427 = vsel %vm426, %v419, 0
  %v429 = vsel %vm426, %v421, 0
  %v431 = vsel %vm426, %v423, 0
  %v433 = vsel %vm426, %v425, 0
  %v435 = vsel %vm426, %v424, 0
  %437 = vmatprep.subr.mxu0 0.0
  %438 = vmatpush1.msra.mxu0 %v64
  %439 = vmatprep.subr.mxu0 0.0
  %440 = vmatpush1.msra.mxu0 0.0
  %441 = vmatprep.subr.mxu0 0.0
  %442 = vmatpush1.msra.mxu0 0.0
  %443 = vmatprep.subr.mxu0 0.0
  %444 = vmatpush1.msra.mxu0 0.0
  %445 = vmatprep.subr.mxu0 0.0
  %446 = vmatpush1.msra.mxu0 0.0
  %447 = vmatprep.subr.mxu0 0.0
  %448 = vmatpush1.msra.mxu0 0.0
  %449 = vmatprep.subr.mxu0 0.0
  %450 = vmatpush1.msra.mxu0 0.0
  %451 = vmatprep.subr.mxu0 0.0
  %452 = vmatpush1.msra.mxu0 0.0
  %453 = vmatprep.subr.mxu0 0.0
  %454 = vmatpush1.msra.mxu0 0.0
  %455 = vmatprep.subr.mxu0 0.0
  %456 = vmatpush1.msra.mxu0 0.0
  %457 = vmatprep.subr.mxu0 0.0
  %458 = vmatpush1.msra.mxu0 0.0
  %459 = vmatprep.subr.mxu0 0.0
  %460 = vmatpush1.msra.mxu0 0.0
  %461 = vmatprep.subr.mxu0 0.0
  %462 = vmatpush1.msra.mxu0 0.0
  %463 = vmatprep.subr.mxu0 0.0
  %464 = vmatpush1.msra.mxu0 0.0
  %465 = vmatprep.subr.mxu0 0.0
  %466 = vmatpush1.msra.mxu0 0.0
  %467 = vmatprep.subr.mxu0 0.0
  %468 = vmatpush1.msra.mxu0 0.0
  %469 = vmatprep.subr.mxu0 0.0
  %470 = vmatpush1.msra.mxu0 0.0
  %471 = vmatprep.subr.mxu0 0.0
  %472 = vmatpush1.msra.mxu0 0.0
  %473 = vmatprep.subr.mxu0 0.0
  %474 = vmatpush1.msra.mxu0 0.0
  %475 = vmatprep.subr.mxu0 0.0
  %476 = vmatpush1.msra.mxu0 0.0
  %477 = vmatprep.subr.mxu0 0.0
  %478 = vmatpush1.msra.mxu0 0.0
  %479 = vmatprep.subr.mxu0 0.0
  %480 = vmatpush1.msra.mxu0 0.0
  %481 = vmatprep.subr.mxu0 0.0
  %482 = vmatpush1.msra.mxu0 0.0
  %483 = vmatprep.subr.mxu0 0.0
  %484 = vmatpush1.msra.mxu0 0.0
  %485 = vmatprep.subr.mxu0 0.0
  %486 = vmatpush1.msra.mxu0 0.0
  %487 = vmatprep.subr.mxu0 0.0
  %488 = vmatpush1.msra.mxu0 0.0
  %489 = vmatprep.subr.mxu0 0.0
  %490 = vmatpush1.msra.mxu0 0.0
  %491 = vmatprep.subr.mxu0 0.0
  %492 = vmatpush1.msra.mxu0 0.0
  %493 = vmatprep.subr.mxu0 0.0
  %494 = vmatpush1.msra.mxu0 0.0
  %495 = vmatprep.subr.mxu0 0.0
  %496 = vmatpush1.msra.mxu0 0.0
  %497 = vmatprep.subr.mxu0 0.0
  %498 = vmatpush1.msra.mxu0 0.0
  %499 = vmatprep.subr.mxu0 0.0
  %500 = vmatpush1.msra.mxu0 0.0
  %501 = vmatprep.mubr.f32.mxu0 0.0
  %502 = vmatmul.mubr.f32.gmra.mrb[0].mxu0 %v427
  %v503 = vpop.f32.mrb[0].mxu0
  %v504 = vadd.f32 0.0, %v503
  %v505 = vpop.f32.mrb[0].mxu0
  %506 = vmatprep.mubr.f32.mxu0 0.0
  %507 = vmatmul.mubr.f32.gmra.mrb[0].mxu0 %v429
  %v508 = vpop.f32.mrb[0].mxu0
  %v509 = vadd.f32 0.0, %v508
  %v510 = vpop.f32.mrb[0].mxu0
  %511 = vmatprep.mubr.f32.mxu0 0.0
  %512 = vmatmul.mubr.f32.gmra.mrb[0].mxu0 %v431
  %v513 = vpop.f32.mrb[0].mxu0
  %v514 = vadd.f32 0.0, %v513
  %v515 = vpop.f32.mrb[0].mxu0
  %516 = vmatprep.mubr.f32.mxu0 0.0
  %517 = vmatmul.mubr.f32.gmra.mrb[0].mxu0 %v433
  %v518 = vpop.f32.mrb[0].mxu0
  %v519 = vadd.f32 0.0, %v518
  %v520 = vpop.f32.mrb[0].mxu0
  %521 = vmatprep.mubr.f32.mxu0 0.0
  %522 = vmatmul.mubr.f32.gmra.mrb[0].mxu0 %v435
  %v523 = vpop.f32.mrb[0].mxu0
  %v524 = vadd.f32 0.0, %v523
  %v525 = vpop.f32.mrb[0].mxu0
  %526 = vdwg.mxu0
  %v527 = vsel %vm426, %v383, 0
  %v529 = vsel %vm426, %v388, 0
  %v531 = vsel %vm426, %v393, 0
  %v533 = vsel %vm426, %v398, 0
  %v535 = vsel %vm426, %v403, 0
  %537 = vmatprep.subr.mxu0 0.0
  %538 = vmatpush1.msra.mxu0 %v63
  %539 = vmatprep.subr.mxu0 0.0
  %540 = vmatpush1.msra.mxu0 0.0
  %541 = vmatprep.subr.mxu0 0.0
  %542 = vmatpush1.msra.mxu0 0.0
  %543 = vmatprep.subr.mxu0 0.0
  %544 = vmatpush1.msra.mxu0 0.0
  %545 = vmatprep.subr.mxu0 0.0
  %546 = vmatpush1.msra.mxu0 0.0
  %547 = vmatprep.subr.mxu0 0.0
  %548 = vmatpush1.msra.mxu0 0.0
  %549 = vmatprep.subr.mxu0 0.0
  %550 = vmatpush1.msra.mxu0 0.0
  %551 = vmatprep.subr.mxu0 0.0
  %552 = vmatpush1.msra.mxu0 0.0
  %553 = vmatprep.subr.mxu0 0.0
  %554 = vmatpush1.msra.mxu0 0.0
  %555 = vmatprep.subr.mxu0 0.0
  %556 = vmatpush1.msra.mxu0 0.0
  %557 = vmatprep.subr.mxu0 0.0
  %558 = vmatpush1.msra.mxu0 0.0
  %559 = vmatprep.subr.mxu0 0.0
  %560 = vmatpush1.msra.mxu0 0.0
  %561 = vmatprep.subr.mxu0 0.0
  %562 = vmatpush1.msra.mxu0 0.0
  %563 = vmatprep.subr.mxu0 0.0
  %564 = vmatpush1.msra.mxu0 0.0
  %565 = vmatprep.subr.mxu0 0.0
  %566 = vmatpush1.msra.mxu0 0.0
  %567 = vmatprep.subr.mxu0 0.0
  %568 = vmatpush1.msra.mxu0 0.0
  %569 = vmatprep.subr.mxu0 0.0
  %570 = vmatpush1.msra.mxu0 0.0
  %571 = vmatprep.subr.mxu0 0.0
  %572 = vmatpush1.msra.mxu0 0.0
  %573 = vmatprep.subr.mxu0 0.0
  %574 = vmatpush1.msra.mxu0 0.0
  %575 = vmatprep.subr.mxu0 0.0
  %576 = vmatpush1.msra.mxu0 0.0
  %577 = vmatprep.subr.mxu0 0.0
  %578 = vmatpush1.msra.mxu0 0.0
  %579 = vmatprep.subr.mxu0 0.0
  %580 = vmatpush1.msra.mxu0 0.0
  %581 = vmatprep.subr.mxu0 0.0
  %582 = vmatpush1.msra.mxu0 0.0
  %583 = vmatprep.subr.mxu0 0.0
  %584 = vmatpush1.msra.mxu0 0.0
  %585 = vmatprep.subr.mxu0 0.0
  %586 = vmatpush1.msra.mxu0 0.0
  %587 = vmatprep.subr.mxu0 0.0
  %588 = vmatpush1.msra.mxu0 0.0
  %589 = vmatprep.subr.mxu0 0.0
  %590 = vmatpush1.msra.mxu0 0.0
  %591 = vmatprep.subr.mxu0 0.0
  %592 = vmatpush1.msra.mxu0 0.0
  %593 = vmatprep.subr.mxu0 0.0
  %594 = vmatpush1.msra.mxu0 0.0
  %595 = vmatprep.subr.mxu0 0.0
  %596 = vmatpush1.msra.mxu0 0.0
  %597 = vmatprep.subr.mxu0 0.0
  %598 = vmatpush1.msra.mxu0 0.0
  %599 = vmatprep.subr.mxu0 0.0
  %600 = vmatpush1.msra.mxu0 0.0
  %601 = vmatprep.mubr.f32.mxu0 0.0
  %602 = vmatmul.mubr.f32.gmra.mrb[0].mxu0 %v527
  %v603 = vpop.f32.mrb[0].mxu0
  %v604 = vadd.f32 %v504, %v603
  %v605 = vpop.f32.mrb[0].mxu0
  %606 = vmatprep.mubr.f32.mxu0 0.0
  %607 = vmatmul.mubr.f32.gmra.mrb[0].mxu0 %v529
  %v608 = vpop.f32.mrb[0].mxu0
  %v609 = vadd.f32 %v509, %v608
  %v610 = vpop.f32.mrb[0].mxu0
  %611 = vmatprep.mubr.f32.mxu0 0.0
  %612 = vmatmul.mubr.f32.gmra.mrb[0].mxu0 %v531
  %v613 = vpop.f32.mrb[0].mxu0
  %v614 = vadd.f32 %v514, %v613
  %v615 = vpop.f32.mrb[0].mxu0
  %616 = vmatprep.mubr.f32.mxu0 0.0
  %617 = vmatmul.mubr.f32.gmra.mrb[0].mxu0 %v533
  %v618 = vpop.f32.mrb[0].mxu0
  %v619 = vadd.f32 %v519, %v618
  %v620 = vpop.f32.mrb[0].mxu0
  %621 = vmatprep.mubr.f32.mxu0 0.0
  %622 = vmatmul.mubr.f32.gmra.mrb[0].mxu0 %v535
  %v623 = vpop.f32.mrb[0].mxu0
  %v624 = vadd.f32 %v524, %v623
  %v625 = vpop.f32.mrb[0].mxu0
  %626 = vdwg.mxu0
  %v627 = vrot.slane %v383, 2
  %v628 = vrot.slane %v388, 2
  %v629 = vsel %vm312, %v627, %v628
  %v630 = vrot.slane %v393, 2
  %v631 = vsel %vm312, %v628, %v630
  %v632 = vrot.slane %v398, 2
  %v633 = vsel %vm312, %v630, %v632
  %v634 = vrot.slane %v403, 2
  %v635 = vsel %vm312, %v632, %v634
  %v636 = vsel %vm426, %v629, 0
  %v638 = vsel %vm426, %v631, 0
  %v640 = vsel %vm426, %v633, 0
  %v642 = vsel %vm426, %v635, 0
  %v644 = vsel %vm426, %v634, 0
  %646 = vmatprep.subr.mxu0 0.0
  %647 = vmatpush1.msra.mxu0 %v65
  %648 = vmatprep.subr.mxu0 0.0
  %649 = vmatpush1.msra.mxu0 0.0
  %650 = vmatprep.subr.mxu0 0.0
  %651 = vmatpush1.msra.mxu0 0.0
  %652 = vmatprep.subr.mxu0 0.0
  %653 = vmatpush1.msra.mxu0 0.0
  %654 = vmatprep.subr.mxu0 0.0
  %655 = vmatpush1.msra.mxu0 0.0
  %656 = vmatprep.subr.mxu0 0.0
  %657 = vmatpush1.msra.mxu0 0.0
  %658 = vmatprep.subr.mxu0 0.0
  %659 = vmatpush1.msra.mxu0 0.0
  %660 = vmatprep.subr.mxu0 0.0
  %661 = vmatpush1.msra.mxu0 0.0
  %662 = vmatprep.subr.mxu0 0.0
  %663 = vmatpush1.msra.mxu0 0.0
  %664 = vmatprep.subr.mxu0 0.0
  %665 = vmatpush1.msra.mxu0 0.0
  %666 = vmatprep.subr.mxu0 0.0
  %667 = vmatpush1.msra.mxu0 0.0
  %668 = vmatprep.subr.mxu0 0.0
  %669 = vmatpush1.msra.mxu0 0.0
  %670 = vmatprep.subr.mxu0 0.0
  %671 = vmatpush1.msra.mxu0 0.0
  %672 = vmatprep.subr.mxu0 0.0
  %673 = vmatpush1.msra.mxu0 0.0
  %674 = vmatprep.subr.mxu0 0.0
  %675 = vmatpush1.msra.mxu0 0.0
  %676 = vmatprep.subr.mxu0 0.0
  %677 = vmatpush1.msra.mxu0 0.0
  %678 = vmatprep.subr.mxu0 0.0
  %679 = vmatpush1.msra.mxu0 0.0
  %680 = vmatprep.subr.mxu0 0.0
  %681 = vmatpush1.msra.mxu0 0.0
  %682 = vmatprep.subr.mxu0 0.0
  %683 = vmatpush1.msra.mxu0 0.0
  %684 = vmatprep.subr.mxu0 0.0
  %685 = vmatpush1.msra.mxu0 0.0
  %686 = vmatprep.subr.mxu0 0.0
  %687 = vmatpush1.msra.mxu0 0.0
  %688 = vmatprep.subr.mxu0 0.0
  %689 = vmatpush1.msra.mxu0 0.0
  %690 = vmatprep.subr.mxu0 0.0
  %691 = vmatpush1.msra.mxu0 0.0
  %692 = vmatprep.subr.mxu0 0.0
  %693 = vmatpush1.msra.mxu0 0.0
  %694 = vmatprep.subr.mxu0 0.0
  %695 = vmatpush1.msra.mxu0 0.0
  %696 = vmatprep.subr.mxu0 0.0
  %697 = vmatpush1.msra.mxu0 0.0
  %698 = vmatprep.subr.mxu0 0.0
  %699 = vmatpush1.msra.mxu0 0.0
  %700 = vmatprep.subr.mxu0 0.0
  %701 = vmatpush1.msra.mxu0 0.0
  %702 = vmatprep.subr.mxu0 0.0
  %703 = vmatpush1.msra.mxu0 0.0
  %704 = vmatprep.subr.mxu0 0.0
  %705 = vmatpush1.msra.mxu0 0.0
  %706 = vmatprep.subr.mxu0 0.0
  %707 = vmatpush1.msra.mxu0 0.0
  %708 = vmatprep.subr.mxu0 0.0
  %709 = vmatpush1.msra.mxu0 0.0
  %710 = vmatprep.mubr.f32.mxu0 0.0
  %711 = vmatmul.mubr.f32.gmra.mrb[0].mxu0 %v636
  %v712 = vpop.f32.mrb[0].mxu0
  %v713 = vadd.f32 0.0, %v712
  %v714 = vpop.f32.mrb[0].mxu0
  %715 = vmatprep.mubr.f32.mxu0 0.0
  %716 = vmatmul.mubr.f32.gmra.mrb[0].mxu0 %v638
  %v717 = vpop.f32.mrb[0].mxu0
  %v718 = vadd.f32 0.0, %v717
  %v719 = vpop.f32.mrb[0].mxu0
  %720 = vmatprep.mubr.f32.mxu0 0.0
  %721 = vmatmul.mubr.f32.gmra.mrb[0].mxu0 %v640
  %v722 = vpop.f32.mrb[0].mxu0
  %v723 = vadd.f32 0.0, %v722
  %v724 = vpop.f32.mrb[0].mxu0
  %725 = vmatprep.mubr.f32.mxu0 0.0
  %726 = vmatmul.mubr.f32.gmra.mrb[0].mxu0 %v642
  %v727 = vpop.f32.mrb[0].mxu0
  %v728 = vadd.f32 0.0, %v727
  %v729 = vpop.f32.mrb[0].mxu0
  %730 = vmatprep.mubr.f32.mxu0 0.0
  %731 = vmatmul.mubr.f32.gmra.mrb[0].mxu0 %v644
  %v732 = vpop.f32.mrb[0].mxu0
  %v733 = vadd.f32 0.0, %v732
  %v734 = vpop.f32.mrb[0].mxu0
  %735 = vdwg.mxu0
  %v736 = vadd.f32 %v604, %v713
  %v737 = vadd.f32 %v609, %v718
  %v738 = vadd.f32 %v614, %v723
  %v739 = vadd.f32 %v619, %v728
  %v740 = vadd.f32 %v624, %v733
  %vm742 = vcmask 1044480
  %v743 = vrot.slane %v383, 3
  %v744 = vrot.slane %v388, 3
  %v745 = vsel %vm742, %v743, %v744
  %v746 = vrot.slane %v393, 3
  %v747 = vsel %vm742, %v744, %v746
  %v748 = vrot.slane %v398, 3
  %v749 = vsel %vm742, %v746, %v748
  %v750 = vrot.slane %v403, 3
  %v751 = vsel %vm742, %v748, %v750
  %v752 = vrot.slane %v408, 3
  %v753 = vsel %vm742, %v750, %v752
  %v754 = vsel %vm426, %v745, 0
  %v756 = vsel %vm426, %v747, 0
  %v758 = vsel %vm426, %v749, 0
  %v760 = vsel %vm426, %v751, 0
  %v762 = vsel %vm426, %v753, 0
  %764 = vmatprep.subr.mxu0 0.0
  %765 = vmatpush1.msra.mxu0 %v66
  %766 = vmatprep.subr.mxu0 0.0
  %767 = vmatpush1.msra.mxu0 0.0
  %768 = vmatprep.subr.mxu0 0.0
  %769 = vmatpush1.msra.mxu0 0.0
  %770 = vmatprep.subr.mxu0 0.0
  %771 = vmatpush1.msra.mxu0 0.0
  %772 = vmatprep.subr.mxu0 0.0
  %773 = vmatpush1.msra.mxu0 0.0
  %774 = vmatprep.subr.mxu0 0.0
  %775 = vmatpush1.msra.mxu0 0.0
  %776 = vmatprep.subr.mxu0 0.0
  %777 = vmatpush1.msra.mxu0 0.0
  %778 = vmatprep.subr.mxu0 0.0
  %779 = vmatpush1.msra.mxu0 0.0
  %780 = vmatprep.subr.mxu0 0.0
  %781 = vmatpush1.msra.mxu0 0.0
  %782 = vmatprep.subr.mxu0 0.0
  %783 = vmatpush1.msra.mxu0 0.0
  %784 = vmatprep.subr.mxu0 0.0
  %785 = vmatpush1.msra.mxu0 0.0
  %786 = vmatprep.subr.mxu0 0.0
  %787 = vmatpush1.msra.mxu0 0.0
  %788 = vmatprep.subr.mxu0 0.0
  %789 = vmatpush1.msra.mxu0 0.0
  %790 = vmatprep.subr.mxu0 0.0
  %791 = vmatpush1.msra.mxu0 0.0
  %792 = vmatprep.subr.mxu0 0.0
  %793 = vmatpush1.msra.mxu0 0.0
  %794 = vmatprep.subr.mxu0 0.0
  %795 = vmatpush1.msra.mxu0 0.0
  %796 = vmatprep.subr.mxu0 0.0
  %797 = vmatpush1.msra.mxu0 0.0
  %798 = vmatprep.subr.mxu0 0.0
  %799 = vmatpush1.msra.mxu0 0.0
  %800 = vmatprep.subr.mxu0 0.0
  %801 = vmatpush1.msra.mxu0 0.0
  %802 = vmatprep.subr.mxu0 0.0
  %803 = vmatpush1.msra.mxu0 0.0
  %804 = vmatprep.subr.mxu0 0.0
  %805 = vmatpush1.msra.mxu0 0.0
  %806 = vmatprep.subr.mxu0 0.0
  %807 = vmatpush1.msra.mxu0 0.0
  %808 = vmatprep.subr.mxu0 0.0
  %809 = vmatpush1.msra.mxu0 0.0
  %810 = vmatprep.subr.mxu0 0.0
  %811 = vmatpush1.msra.mxu0 0.0
  %812 = vmatprep.subr.mxu0 0.0
  %813 = vmatpush1.msra.mxu0 0.0
  %814 = vmatprep.subr.mxu0 0.0
  %815 = vmatpush1.msra.mxu0 0.0
  %816 = vmatprep.subr.mxu0 0.0
  %817 = vmatpush1.msra.mxu0 0.0
  %818 = vmatprep.subr.mxu0 0.0
  %819 = vmatpush1.msra.mxu0 0.0
  %820 = vmatprep.subr.mxu0 0.0
  %821 = vmatpush1.msra.mxu0 0.0
  %822 = vmatprep.subr.mxu0 0.0
  %823 = vmatpush1.msra.mxu0 0.0
  %824 = vmatprep.subr.mxu0 0.0
  %825 = vmatpush1.msra.mxu0 0.0
  %826 = vmatprep.subr.mxu0 0.0
  %827 = vmatpush1.msra.mxu0 0.0
  %828 = vmatprep.mubr.f32.mxu0 0.0
  %829 = vmatmul.mubr.f32.gmra.mrb[0].mxu0 %v754
  %v830 = vpop.f32.mrb[0].mxu0
  %v831 = vadd.f32 0.0, %v830
  %v832 = vpop.f32.mrb[0].mxu0
  %833 = vmatprep.mubr.f32.mxu0 0.0
  %834 = vmatmul.mubr.f32.gmra.mrb[0].mxu0 %v756
  %v835 = vpop.f32.mrb[0].mxu0
  %v836 = vadd.f32 0.0, %v835
  %v837 = vpop.f32.mrb[0].mxu0
  %838 = vmatprep.mubr.f32.mxu0 0.0
  %839 = vmatmul.mubr.f32.gmra.mrb[0].mxu0 %v758
  %v840 = vpop.f32.mrb[0].mxu0
  %v841 = vadd.f32 0.0, %v840
  %v842 = vpop.f32.mrb[0].mxu0
  %843 = vmatprep.mubr.f32.mxu0 0.0
  %844 = vmatmul.mubr.f32.gmra.mrb[0].mxu0 %v760
  %v845 = vpop.f32.mrb[0].mxu0
  %v846 = vadd.f32 0.0, %v845
  %v847 = vpop.f32.mrb[0].mxu0
  %848 = vmatprep.mubr.f32.mxu0 0.0
  %849 = vmatmul.mubr.f32.gmra.mrb[0].mxu0 %v762
  %v850 = vpop.f32.mrb[0].mxu0
  %v851 = vadd.f32 0.0, %v850
  %v852 = vpop.f32.mrb[0].mxu0
  %853 = vdwg.mxu0
  %v854 = vadd.f32 %v736, %v831
  %v855 = vadd.f32 %v737, %v836
  %v856 = vadd.f32 %v738, %v841
  %v857 = vadd.f32 %v739, %v846
  %v858 = vadd.f32 %v740, %v851
  %vm859 = vcmask 1043456
  %v860 = vrot.slane %v383, 4
  %v861 = vrot.slane %v388, 4
  %v862 = vsel %vm859, %v860, %v861
  %v863 = vrot.slane %v393, 4
  %v864 = vsel %vm859, %v861, %v863
  %v865 = vrot.slane %v398, 4
  %v866 = vsel %vm859, %v863, %v865
  %v867 = vrot.slane %v403, 4
  %v868 = vsel %vm859, %v865, %v867
  %v869 = vrot.slane %v408, 4
  %v870 = vsel %vm859, %v867, %v869
  %v871 = vsel %vm426, %v862, 0
  %v873 = vsel %vm426, %v864, 0
  %v875 = vsel %vm426, %v866, 0
  %v877 = vsel %vm426, %v868, 0
  %v879 = vsel %vm426, %v870, 0
  %881 = vmatprep.subr.mxu0 0.0
  %882 = vmatpush1.msra.mxu0 %v67
  %883 = vmatprep.subr.mxu0 0.0
  %884 = vmatpush1.msra.mxu0 0.0
  %885 = vmatprep.subr.mxu0 0.0
  %886 = vmatpush1.msra.mxu0 0.0
  %887 = vmatprep.subr.mxu0 0.0
  %888 = vmatpush1.msra.mxu0 0.0
  %889 = vmatprep.subr.mxu0 0.0
  %890 = vmatpush1.msra.mxu0 0.0
  %891 = vmatprep.subr.mxu0 0.0
  %892 = vmatpush1.msra.mxu0 0.0
  %893 = vmatprep.subr.mxu0 0.0
  %894 = vmatpush1.msra.mxu0 0.0
  %895 = vmatprep.subr.mxu0 0.0
  %896 = vmatpush1.msra.mxu0 0.0
  %897 = vmatprep.subr.mxu0 0.0
  %898 = vmatpush1.msra.mxu0 0.0
  %899 = vmatprep.subr.mxu0 0.0
  %900 = vmatpush1.msra.mxu0 0.0
  %901 = vmatprep.subr.mxu0 0.0
  %902 = vmatpush1.msra.mxu0 0.0
  %903 = vmatprep.subr.mxu0 0.0
  %904 = vmatpush1.msra.mxu0 0.0
  %905 = vmatprep.subr.mxu0 0.0
  %906 = vmatpush1.msra.mxu0 0.0
  %907 = vmatprep.subr.mxu0 0.0
  %908 = vmatpush1.msra.mxu0 0.0
  %909 = vmatprep.subr.mxu0 0.0
  %910 = vmatpush1.msra.mxu0 0.0
  %911 = vmatprep.subr.mxu0 0.0
  %912 = vmatpush1.msra.mxu0 0.0
  %913 = vmatprep.subr.mxu0 0.0
  %914 = vmatpush1.msra.mxu0 0.0
  %915 = vmatprep.subr.mxu0 0.0
  %916 = vmatpush1.msra.mxu0 0.0
  %917 = vmatprep.subr.mxu0 0.0
  %918 = vmatpush1.msra.mxu0 0.0
  %919 = vmatprep.subr.mxu0 0.0
  %920 = vmatpush1.msra.mxu0 0.0
  %921 = vmatprep.subr.mxu0 0.0
  %922 = vmatpush1.msra.mxu0 0.0
  %923 = vmatprep.subr.mxu0 0.0
  %924 = vmatpush1.msra.mxu0 0.0
  %925 = vmatprep.subr.mxu0 0.0
  %926 = vmatpush1.msra.mxu0 0.0
  %927 = vmatprep.subr.mxu0 0.0
  %928 = vmatpush1.msra.mxu0 0.0
  %929 = vmatprep.subr.mxu0 0.0
  %930 = vmatpush1.msra.mxu0 0.0
  %931 = vmatprep.subr.mxu0 0.0
  %932 = vmatpush1.msra.mxu0 0.0
  %933 = vmatprep.subr.mxu0 0.0
  %934 = vmatpush1.msra.mxu0 0.0
  %935 = vmatprep.subr.mxu0 0.0
  %936 = vmatpush1.msra.mxu0 0.0
  %937 = vmatprep.subr.mxu0 0.0
  %938 = vmatpush1.msra.mxu0 0.0
  %939 = vmatprep.subr.mxu0 0.0
  %940 = vmatpush1.msra.mxu0 0.0
  %941 = vmatprep.subr.mxu0 0.0
  %942 = vmatpush1.msra.mxu0 0.0
  %943 = vmatprep.subr.mxu0 0.0
  %944 = vmatpush1.msra.mxu0 0.0
  %945 = vmatprep.mubr.f32.mxu0 0.0
  %946 = vmatmul.mubr.f32.gmra.mrb[0].mxu0 %v871
  %v947 = vpop.f32.mrb[0].mxu0
  %v948 = vadd.f32 0.0, %v947
  %v949 = vpop.f32.mrb[0].mxu0
  %950 = vmatprep.mubr.f32.mxu0 0.0
  %951 = vmatmul.mubr.f32.gmra.mrb[0].mxu0 %v873
  %v952 = vpop.f32.mrb[0].mxu0
  %v953 = vadd.f32 0.0, %v952
  %v954 = vpop.f32.mrb[0].mxu0
  %955 = vmatprep.mubr.f32.mxu0 0.0
  %956 = vmatmul.mubr.f32.gmra.mrb[0].mxu0 %v875
  %v957 = vpop.f32.mrb[0].mxu0
  %v958 = vadd.f32 0.0, %v957
  %v959 = vpop.f32.mrb[0].mxu0
  %960 = vmatprep.mubr.f32.mxu0 0.0
  %961 = vmatmul.mubr.f32.gmra.mrb[0].mxu0 %v877
  %v962 = vpop.f32.mrb[0].mxu0
  %v963 = vadd.f32 0.0, %v962
  %v964 = vpop.f32.mrb[0].mxu0
  %965 = vmatprep.mubr.f32.mxu0 0.0
  %966 = vmatmul.mubr.f32.gmra.mrb[0].mxu0 %v879
  %v967 = vpop.f32.mrb[0].mxu0
  %v968 = vadd.f32 0.0, %v967
  %v969 = vpop.f32.mrb[0].mxu0
  %970 = vdwg.mxu0
  %v971 = vadd.f32 %v854, %v948
  %v972 = vadd.f32 %v855, %v953
  %v973 = vadd.f32 %v856, %v958
  %v974 = vadd.f32 %v857, %v963
  %v975 = vadd.f32 %v858, %v968
  %v977 = vlaneseq
  %v978 = vshrl.u32 %v977, 7
  %v979 = vsub.s32 0, %v978
  %v980 = vrot.slane %v68, %v979
  %v982 = vadd.f32 %v971, %v980
  %v983 = vadd.f32 %v972, %v980
  %v984 = vadd.f32 %v973, %v980
  %v985 = vadd.f32 %v974, %v980
  %v986 = vadd.f32 %v975, %v980
  %v987 = vmax.f32 %v982, 0.0
  %v988 = vmax.f32 %v983, 0.0
  %v989 = vmax.f32 %v984, 0.0
  %v990 = vmax.f32 %v985, 0.0
  %v991 = vmax.f32 %v986, 0.0
  %vm992 = vcmask 124928
  %v993 = vsel %vm992, %v987, -inf
  %v994 = vrot.slane %v993, 4
  %v995 = vmax.f32 %v993, %v994
  %v996 = vrot.slane %v995, 2
  %v997 = vmax.f32 %v995, %v996
  %v998 = vrot.slane %v997, 1
  %v999 = vmax.f32 %v997, %v998
  %vm1000 = vcmask 130055
  %v1001 = vsel %vm1000, %v987, -inf
  %vm1002 = vcmask 123904
  %v1003 = vsel %vm1002, %v988, -inf
  %v1004 = vmax.f32 %v1001, %v1003
  %v1005 = vrot.slane %v1004, 4
  %v1006 = vmax.f32 %v1004, %v1005
  %v1007 = vrot.slane %v1006, 2
  %v1008 = vmax.f32 %v1006, %v1007
  %v1009 = vrot.slane %v1008, 1
  %v1010 = vmax.f32 %v1008, %v1009
  %vm1011 = vcmask 130054
  %v1012 = vsel %vm1011, %v988, -inf
  %vm1013 = vcmask 122880
  %v1014 = vsel %vm1013, %v989, -inf
  %v1015 = vmax.f32 %v1012, %v1014
  %v1016 = vrot.slane %v1015, 4
  %v1017 = vmax.f32 %v1015, %v1016
  %v1018 = vrot.slane %v1017, 2
  %v1019 = vmax.f32 %v1017, %v1018
  %v1020 = vrot.slane %v1019, 1
  %v1021 = vmax.f32 %v1019, %v1020
  %vm1022 = vcmask 130053
  %v1023 = vsel %vm1022, %v989, -inf
  %v1024 = vrot.slane %v1023, 4
  %v1025 = vmax.f32 %v1023, %v1024
  %v1026 = vrot.slane %v1025, 2
  %v1027 = vmax.f32 %v1025, %v1026
  %v1028 = vrot.slane %v1027, 1
  %v1029 = vmax.f32 %v1027, %v1028
  %vm1030 = vcmask 129028
  %v1031 = vsel %vm1030, %v990, -inf
  %v1032 = vrot.slane %v1031, 4
  %v1033 = vmax.f32 %v1031, %v1032
  %v1034 = vrot.slane %v1033, 2
  %v1035 = vmax.f32 %v1033, %v1034
  %v1036 = vrot.slane %v1035, 1
  %v1037 = vmax.f32 %v1035, %v1036
  %vm1038 = vcmask 128003
  %v1039 = vsel %vm1038, %v991, -inf
  %v1040 = vrot.slane %v1039, 4
  %v1041 = vmax.f32 %v1039, %v1040
  %v1042 = vrot.slane %v1041, 2
  %v1043 = vmax.f32 %v1041, %v1042
  %v1044 = vrot.slane %v1043, 1
  %v1045 = vmax.f32 %v1043, %v1044
  %vm1046 = vcmask 1040384
  %v1047 = vsel %vm1046, %v999, %v1010
  %v1048 = vsel %vm82, %v1047, %v1021
  %vm1049 = vcmask 1042432
  %v1050 = vsel %vm1049, %v1048, %v1029
  %v1051 = vsel %vm859, %v1050, %v1037
  %v1052 = vsel %vm742, %v1051, %v1045
  %v1053 = vld [vmem:[%s3] sm:$0xff]
  %v1054 = vld [vmem:[%s3 + $0x8] sm:$0xff]
  %v1055 = vld [vmem:[%s3 + $0x10] sm:$0xff]
  %v1056 = vld [vmem:[%s3 + $0x18] sm:$0xff]
  %v1057 = vld [vmem:[%s3 + $0x20] sm:$0xff]
  %v1058 = vld [vmem:[%s3 + $0x28] sm:$0xff]
  %v1059 = vld [vmem:[%s3 + $0x30] sm:$0xff]
  %v1060 = vld [vmem:[%s3 + $0x38] sm:$0xff]
  %v1061 = vld [vmem:[%s3 + $0x40] sm:$0x3f]
  %1062 = vset.pattern.permute.xlu0 0
  %1063 = vperm.xlu0 %1062, %v1053
  %v1064 = vpop.permute.xlu0 %1063
  %1065 = vset.pattern.permute.xlu0 0
  %1066 = vperm.xlu0 %1065, %v1054
  %v1067 = vpop.permute.xlu0 %1066
  %1068 = vset.pattern.permute.xlu0 0
  %1069 = vperm.xlu0 %1068, %v1055
  %v1070 = vpop.permute.xlu0 %1069
  %1071 = vset.pattern.permute.xlu0 0
  %1072 = vperm.xlu0 %1071, %v1056
  %v1073 = vpop.permute.xlu0 %1072
  %1074 = vset.pattern.permute.xlu0 0
  %1075 = vperm.xlu0 %1074, %v1057
  %v1076 = vpop.permute.xlu0 %1075
  %1077 = vset.pattern.permute.xlu0 0
  %1078 = vperm.xlu0 %1077, %v1058
  %v1079 = vpop.permute.xlu0 %1078
  %1080 = vset.pattern.permute.xlu0 0
  %1081 = vperm.xlu0 %1080, %v1059
  %v1082 = vpop.permute.xlu0 %1081
  %1083 = vset.pattern.permute.xlu0 0
  %1084 = vperm.xlu0 %1083, %v1060
  %v1085 = vpop.permute.xlu0 %1084
  %1086 = vset.pattern.permute.xlu0 0
  %1087 = vperm.xlu0 %1086, %v1061
  %v1088 = vpop.permute.xlu0 %1087
  %vm1089 = vcmp.eq.s32.totalorder %v1064, %v71
  %vm1090 = vcmp.eq.s32.totalorder %v1067, %v71
  %vm1091 = vcmp.eq.s32.totalorder %v1070, %v71
  %vm1092 = vcmp.eq.s32.totalorder %v1073, %v71
  %vm1093 = vcmp.eq.s32.totalorder %v1076, %v71
  %vm1094 = vcmp.eq.s32.totalorder %v1079, %v71
  %vm1095 = vcmp.eq.s32.totalorder %v1082, %v71
  %vm1096 = vcmp.eq.s32.totalorder %v1085, %v71
  %vm1097 = vcmp.eq.s32.totalorder %v1088, %v71
  %v1098 = vsel %vm1089, 1, 0
  %v1099 = vsel %vm1090, 1, 0
  %v1100 = vsel %vm1091, 1, 0
  %v1101 = vsel %vm1092, 1, 0
  %v1102 = vsel %vm1093, 1, 0
  %v1103 = vsel %vm1094, 1, 0
  %v1104 = vsel %vm1095, 1, 0
  %v1105 = vsel %vm1096, 1, 0
  %v1106 = vsel %vm1097, 1, 0
  %v1107 = vcvt.s32.f32 %v1098
  %v1108 = vcvt.s32.f32 %v1099
  %v1109 = vcvt.s32.f32 %v1100
  %v1110 = vcvt.s32.f32 %v1101
  %v1111 = vcvt.s32.f32 %v1102
  %v1112 = vcvt.s32.f32 %v1103
  %v1113 = vcvt.s32.f32 %v1104
  %v1114 = vcvt.s32.f32 %v1105
  %v1115 = vcvt.s32.f32 %v1106
  %v1117 = vsel %vm293, %v1107, 0
  %v1120 = vsel %vm293, %v1108, 0
  %v1123 = vsel %vm293, %v1109, 0
  %v1126 = vsel %vm293, %v1110, 0
  %v1129 = vsel %vm293, %v1111, 0
  %v1132 = vsel %vm293, %v1112, 0
  %v1135 = vsel %vm293, %v1113, 0
  %v1138 = vsel %vm293, %v1114, 0
  %v1141 = vsel %vm293, %v1115, 0
  %1143 = vmatprep.subr.mxu0 0.0
  %1144 = vmatpush1.msra.mxu0 %v59
  %1145 = vmatprep.subr.mxu0 0.0
  %1146 = vmatpush1.msra.mxu0 %v60
  %1147 = vmatprep.subr.mxu0 0.0
  %1148 = vmatpush1.msra.mxu0 %v61
  %1149 = vmatprep.subr.mxu0 0.0
  %1150 = vmatpush1.msra.mxu0 %v314
  %1151 = vmatprep.subr.mxu0 0.0
  %1152 = vmatpush1.msra.mxu0 0.0
  %1153 = vmatprep.subr.mxu0 0.0
  %1154 = vmatpush1.msra.mxu0 0.0
  %1155 = vmatprep.subr.mxu0 0.0
  %1156 = vmatpush1.msra.mxu0 0.0
  %1157 = vmatprep.subr.mxu0 0.0
  %1158 = vmatpush1.msra.mxu0 0.0
  %1159 = vmatprep.subr.mxu0 0.0
  %1160 = vmatpush1.msra.mxu0 0.0
  %1161 = vmatprep.subr.mxu0 0.0
  %1162 = vmatpush1.msra.mxu0 0.0
  %1163 = vmatprep.subr.mxu0 0.0
  %1164 = vmatpush1.msra.mxu0 0.0
  %1165 = vmatprep.subr.mxu0 0.0
  %1166 = vmatpush1.msra.mxu0 0.0
  %1167 = vmatprep.subr.mxu0 0.0
  %1168 = vmatpush1.msra.mxu0 0.0
  %1169 = vmatprep.subr.mxu0 0.0
  %1170 = vmatpush1.msra.mxu0 0.0
  %1171 = vmatprep.subr.mxu0 0.0
  %1172 = vmatpush1.msra.mxu0 0.0
  %1173 = vmatprep.subr.mxu0 0.0
  %1174 = vmatpush1.msra.mxu0 0.0
  %1175 = vmatprep.subr.mxu0 0.0
  %1176 = vmatpush1.msra.mxu0 0.0
  %1177 = vmatprep.subr.mxu0 0.0
  %1178 = vmatpush1.msra.mxu0 0.0
  %1179 = vmatprep.subr.mxu0 0.0
  %1180 = vmatpush1.msra.mxu0 0.0
  %1181 = vmatprep.subr.mxu0 0.0
  %1182 = vmatpush1.msra.mxu0 0.0
  %1183 = vmatprep.subr.mxu0 0.0
  %1184 = vmatpush1.msra.mxu0 0.0
  %1185 = vmatprep.subr.mxu0 0.0
  %1186 = vmatpush1.msra.mxu0 0.0
  %1187 = vmatprep.subr.mxu0 0.0
  %1188 = vmatpush1.msra.mxu0 0.0
  %1189 = vmatprep.subr.mxu0 0.0
  %1190 = vmatpush1.msra.mxu0 0.0
  %1191 = vmatprep.subr.mxu0 0.0
  %1192 = vmatpush1.msra.mxu0 0.0
  %1193 = vmatprep.subr.mxu0 0.0
  %1194 = vmatpush1.msra.mxu0 0.0
  %1195 = vmatprep.subr.mxu0 0.0
  %1196 = vmatpush1.msra.mxu0 0.0
  %1197 = vmatprep.subr.mxu0 0.0
  %1198 = vmatpush1.msra.mxu0 0.0
  %1199 = vmatprep.subr.mxu0 0.0
  %1200 = vmatpush1.msra.mxu0 0.0
  %1201 = vmatprep.subr.mxu0 0.0
  %1202 = vmatpush1.msra.mxu0 0.0
  %1203 = vmatprep.subr.mxu0 0.0
  %1204 = vmatpush1.msra.mxu0 0.0
  %1205 = vmatprep.subr.mxu0 0.0
  %1206 = vmatpush1.msra.mxu0 0.0
  %1207 = vmatprep.mubr.f32.mxu0 0.0
  %1208 = vmatmul.mubr.f32.gmra.mrb[0].mxu0 %v1117
  %v1209 = vpop.f32.mrb[0].mxu0
  %v1210 = vadd.f32 0.0, %v1209
  %v1211 = vpop.f32.mrb[0].mxu0
  %1212 = vmatprep.mubr.f32.mxu0 0.0
  %1213 = vmatmul.mubr.f32.gmra.mrb[0].mxu0 %v1120
  %v1214 = vpop.f32.mrb[0].mxu0
  %v1215 = vadd.f32 0.0, %v1214
  %v1216 = vpop.f32.mrb[0].mxu0
  %1217 = vmatprep.mubr.f32.mxu0 0.0
  %1218 = vmatmul.mubr.f32.gmra.mrb[0].mxu0 %v1123
  %v1219 = vpop.f32.mrb[0].mxu0
  %v1220 = vadd.f32 0.0, %v1219
  %v1221 = vpop.f32.mrb[0].mxu0
  %1222 = vmatprep.mubr.f32.mxu0 0.0
  %1223 = vmatmul.mubr.f32.gmra.mrb[0].mxu0 %v1126
  %v1224 = vpop.f32.mrb[0].mxu0
  %v1225 = vadd.f32 0.0, %v1224
  %v1226 = vpop.f32.mrb[0].mxu0
  %1227 = vmatprep.mubr.f32.mxu0 0.0
  %1228 = vmatmul.mubr.f32.gmra.mrb[0].mxu0 %v1129
  %v1229 = vpop.f32.mrb[0].mxu0
  %v1230 = vadd.f32 0.0, %v1229
  %v1231 = vpop.f32.mrb[0].mxu0
  %1232 = vmatprep.mubr.f32.mxu0 0.0
  %1233 = vmatmul.mubr.f32.gmra.mrb[0].mxu0 %v1132
  %v1234 = vpop.f32.mrb[0].mxu0
  %v1235 = vadd.f32 0.0, %v1234
  %v1236 = vpop.f32.mrb[0].mxu0
  %1237 = vmatprep.mubr.f32.mxu0 0.0
  %1238 = vmatmul.mubr.f32.gmra.mrb[0].mxu0 %v1135
  %v1239 = vpop.f32.mrb[0].mxu0
  %v1240 = vadd.f32 0.0, %v1239
  %v1241 = vpop.f32.mrb[0].mxu0
  %1242 = vmatprep.mubr.f32.mxu0 0.0
  %1243 = vmatmul.mubr.f32.gmra.mrb[0].mxu0 %v1138
  %v1244 = vpop.f32.mrb[0].mxu0
  %v1245 = vadd.f32 0.0, %v1244
  %v1246 = vpop.f32.mrb[0].mxu0
  %1247 = vmatprep.mubr.f32.mxu0 0.0
  %1248 = vmatmul.mubr.f32.gmra.mrb[0].mxu0 %v1141
  %v1249 = vpop.f32.mrb[0].mxu0
  %v1250 = vadd.f32 0.0, %v1249
  %v1251 = vpop.f32.mrb[0].mxu0
  %1252 = vdwg.mxu0
  %v1262 = vrot.slane %v1210, 1
  %v1263 = vrot.slane %v1215, 1
  %v1264 = vsel %vm416, %v1262, %v1263
  %v1265 = vrot.slane %v1220, 1
  %v1266 = vsel %vm416, %v1263, %v1265
  %v1267 = vrot.slane %v1225, 1
  %v1268 = vsel %vm416, %v1265, %v1267
  %v1269 = vrot.slane %v1230, 1
  %v1270 = vsel %vm416, %v1267, %v1269
  %v1271 = vrot.slane %v1235, 1
  %v1272 = vsel %vm416, %v1269, %v1271
  %v1273 = vrot.slane %v1240, 1
  %v1274 = vsel %vm416, %v1271, %v1273
  %v1275 = vrot.slane %v1245, 1
  %v1276 = vsel %vm416, %v1273, %v1275
  %v1277 = vrot.slane %v1250, 1
  %v1278 = vsel %vm416, %v1275, %v1277
  %v1279 = vsel %vm426, %v1264, 0
  %v1281 = vsel %vm426, %v1266, 0
  %v1283 = vsel %vm426, %v1268, 0
  %v1285 = vsel %vm426, %v1270, 0
  %v1287 = vsel %vm426, %v1272, 0
  %v1289 = vsel %vm426, %v1274, 0
  %v1291 = vsel %vm426, %v1276, 0
  %v1293 = vsel %vm426, %v1278, 0
  %v1295 = vsel %vm426, %v1277, 0
  %1297 = vmatprep.subr.mxu0 0.0
  %1298 = vmatpush1.msra.mxu0 %v64
  %1299 = vmatprep.subr.mxu0 0.0
  %1300 = vmatpush1.msra.mxu0 0.0
  %1301 = vmatprep.subr.mxu0 0.0
  %1302 = vmatpush1.msra.mxu0 0.0
  %1303 = vmatprep.subr.mxu0 0.0
  %1304 = vmatpush1.msra.mxu0 0.0
  %1305 = vmatprep.subr.mxu0 0.0
  %1306 = vmatpush1.msra.mxu0 0.0
  %1307 = vmatprep.subr.mxu0 0.0
  %1308 = vmatpush1.msra.mxu0 0.0
  %1309 = vmatprep.subr.mxu0 0.0
  %1310 = vmatpush1.msra.mxu0 0.0
  %1311 = vmatprep.subr.mxu0 0.0
  %1312 = vmatpush1.msra.mxu0 0.0
  %1313 = vmatprep.subr.mxu0 0.0
  %1314 = vmatpush1.msra.mxu0 0.0
  %1315 = vmatprep.subr.mxu0 0.0
  %1316 = vmatpush1.msra.mxu0 0.0
  %1317 = vmatprep.subr.mxu0 0.0
  %1318 = vmatpush1.msra.mxu0 0.0
  %1319 = vmatprep.subr.mxu0 0.0
  %1320 = vmatpush1.msra.mxu0 0.0
  %1321 = vmatprep.subr.mxu0 0.0
  %1322 = vmatpush1.msra.mxu0 0.0
  %1323 = vmatprep.subr.mxu0 0.0
  %1324 = vmatpush1.msra.mxu0 0.0
  %1325 = vmatprep.subr.mxu0 0.0
  %1326 = vmatpush1.msra.mxu0 0.0
  %1327 = vmatprep.subr.mxu0 0.0
  %1328 = vmatpush1.msra.mxu0 0.0
  %1329 = vmatprep.subr.mxu0 0.0
  %1330 = vmatpush1.msra.mxu0 0.0
  %1331 = vmatprep.subr.mxu0 0.0
  %1332 = vmatpush1.msra.mxu0 0.0
  %1333 = vmatprep.subr.mxu0 0.0
  %1334 = vmatpush1.msra.mxu0 0.0
  %1335 = vmatprep.subr.mxu0 0.0
  %1336 = vmatpush1.msra.mxu0 0.0
  %1337 = vmatprep.subr.mxu0 0.0
  %1338 = vmatpush1.msra.mxu0 0.0
  %1339 = vmatprep.subr.mxu0 0.0
  %1340 = vmatpush1.msra.mxu0 0.0
  %1341 = vmatprep.subr.mxu0 0.0
  %1342 = vmatpush1.msra.mxu0 0.0
  %1343 = vmatprep.subr.mxu0 0.0
  %1344 = vmatpush1.msra.mxu0 0.0
  %1345 = vmatprep.subr.mxu0 0.0
  %1346 = vmatpush1.msra.mxu0 0.0
  %1347 = vmatprep.subr.mxu0 0.0
  %1348 = vmatpush1.msra.mxu0 0.0
  %1349 = vmatprep.subr.mxu0 0.0
  %1350 = vmatpush1.msra.mxu0 0.0
  %1351 = vmatprep.subr.mxu0 0.0
  %1352 = vmatpush1.msra.mxu0 0.0
  %1353 = vmatprep.subr.mxu0 0.0
  %1354 = vmatpush1.msra.mxu0 0.0
  %1355 = vmatprep.subr.mxu0 0.0
  %1356 = vmatpush1.msra.mxu0 0.0
  %1357 = vmatprep.subr.mxu0 0.0
  %1358 = vmatpush1.msra.mxu0 0.0
  %1359 = vmatprep.subr.mxu0 0.0
  %1360 = vmatpush1.msra.mxu0 0.0
  %1361 = vmatprep.mubr.f32.mxu0 0.0
  %1362 = vmatmul.mubr.f32.gmra.mrb[0].mxu0 %v1279
  %v1363 = vpop.f32.mrb[0].mxu0
  %v1364 = vadd.f32 0.0, %v1363
  %v1365 = vpop.f32.mrb[0].mxu0
  %1366 = vmatprep.mubr.f32.mxu0 0.0
  %1367 = vmatmul.mubr.f32.gmra.mrb[0].mxu0 %v1281
  %v1368 = vpop.f32.mrb[0].mxu0
  %v1369 = vadd.f32 0.0, %v1368
  %v1370 = vpop.f32.mrb[0].mxu0
  %1371 = vmatprep.mubr.f32.mxu0 0.0
  %1372 = vmatmul.mubr.f32.gmra.mrb[0].mxu0 %v1283
  %v1373 = vpop.f32.mrb[0].mxu0
  %v1374 = vadd.f32 0.0, %v1373
  %v1375 = vpop.f32.mrb[0].mxu0
  %1376 = vmatprep.mubr.f32.mxu0 0.0
  %1377 = vmatmul.mubr.f32.gmra.mrb[0].mxu0 %v1285
  %v1378 = vpop.f32.mrb[0].mxu0
  %v1379 = vadd.f32 0.0, %v1378
  %v1380 = vpop.f32.mrb[0].mxu0
  %1381 = vmatprep.mubr.f32.mxu0 0.0
  %1382 = vmatmul.mubr.f32.gmra.mrb[0].mxu0 %v1287
  %v1383 = vpop.f32.mrb[0].mxu0
  %v1384 = vadd.f32 0.0, %v1383
  %v1385 = vpop.f32.mrb[0].mxu0
  %1386 = vmatprep.mubr.f32.mxu0 0.0
  %1387 = vmatmul.mubr.f32.gmra.mrb[0].mxu0 %v1289
  %v1388 = vpop.f32.mrb[0].mxu0
  %v1389 = vadd.f32 0.0, %v1388
  %v1390 = vpop.f32.mrb[0].mxu0
  %1391 = vmatprep.mubr.f32.mxu0 0.0
  %1392 = vmatmul.mubr.f32.gmra.mrb[0].mxu0 %v1291
  %v1393 = vpop.f32.mrb[0].mxu0
  %v1394 = vadd.f32 0.0, %v1393
  %v1395 = vpop.f32.mrb[0].mxu0
  %1396 = vmatprep.mubr.f32.mxu0 0.0
  %1397 = vmatmul.mubr.f32.gmra.mrb[0].mxu0 %v1293
  %v1398 = vpop.f32.mrb[0].mxu0
  %v1399 = vadd.f32 0.0, %v1398
  %v1400 = vpop.f32.mrb[0].mxu0
  %1401 = vmatprep.mubr.f32.mxu0 0.0
  %1402 = vmatmul.mubr.f32.gmra.mrb[0].mxu0 %v1295
  %v1403 = vpop.f32.mrb[0].mxu0
  %v1404 = vadd.f32 0.0, %v1403
  %v1405 = vpop.f32.mrb[0].mxu0
  %1406 = vdwg.mxu0
  %v1407 = vsel %vm426, %v1210, 0
  %v1409 = vsel %vm426, %v1215, 0
  %v1411 = vsel %vm426, %v1220, 0
  %v1413 = vsel %vm426, %v1225, 0
  %v1415 = vsel %vm426, %v1230, 0
  %v1417 = vsel %vm426, %v1235, 0
  %v1419 = vsel %vm426, %v1240, 0
  %v1421 = vsel %vm426, %v1245, 0
  %v1423 = vsel %vm426, %v1250, 0
  %1425 = vmatprep.subr.mxu0 0.0
  %1426 = vmatpush1.msra.mxu0 %v63
  %1427 = vmatprep.subr.mxu0 0.0
  %1428 = vmatpush1.msra.mxu0 0.0
  %1429 = vmatprep.subr.mxu0 0.0
  %1430 = vmatpush1.msra.mxu0 0.0
  %1431 = vmatprep.subr.mxu0 0.0
  %1432 = vmatpush1.msra.mxu0 0.0
  %1433 = vmatprep.subr.mxu0 0.0
  %1434 = vmatpush1.msra.mxu0 0.0
  %1435 = vmatprep.subr.mxu0 0.0
  %1436 = vmatpush1.msra.mxu0 0.0
  %1437 = vmatprep.subr.mxu0 0.0
  %1438 = vmatpush1.msra.mxu0 0.0
  %1439 = vmatprep.subr.mxu0 0.0
  %1440 = vmatpush1.msra.mxu0 0.0
  %1441 = vmatprep.subr.mxu0 0.0
  %1442 = vmatpush1.msra.mxu0 0.0
  %1443 = vmatprep.subr.mxu0 0.0
  %1444 = vmatpush1.msra.mxu0 0.0
  %1445 = vmatprep.subr.mxu0 0.0
  %1446 = vmatpush1.msra.mxu0 0.0
  %1447 = vmatprep.subr.mxu0 0.0
  %1448 = vmatpush1.msra.mxu0 0.0
  %1449 = vmatprep.subr.mxu0 0.0
  %1450 = vmatpush1.msra.mxu0 0.0
  %1451 = vmatprep.subr.mxu0 0.0
  %1452 = vmatpush1.msra.mxu0 0.0
  %1453 = vmatprep.subr.mxu0 0.0
  %1454 = vmatpush1.msra.mxu0 0.0
  %1455 = vmatprep.subr.mxu0 0.0
  %1456 = vmatpush1.msra.mxu0 0.0
  %1457 = vmatprep.subr.mxu0 0.0
  %1458 = vmatpush1.msra.mxu0 0.0
  %1459 = vmatprep.subr.mxu0 0.0
  %1460 = vmatpush1.msra.mxu0 0.0
  %1461 = vmatprep.subr.mxu0 0.0
  %1462 = vmatpush1.msra.mxu0 0.0
  %1463 = vmatprep.subr.mxu0 0.0
  %1464 = vmatpush1.msra.mxu0 0.0
  %1465 = vmatprep.subr.mxu0 0.0
  %1466 = vmatpush1.msra.mxu0 0.0
  %1467 = vmatprep.subr.mxu0 0.0
  %1468 = vmatpush1.msra.mxu0 0.0
  %1469 = vmatprep.subr.mxu0 0.0
  %1470 = vmatpush1.msra.mxu0 0.0
  %1471 = vmatprep.subr.mxu0 0.0
  %1472 = vmatpush1.msra.mxu0 0.0
  %1473 = vmatprep.subr.mxu0 0.0
  %1474 = vmatpush1.msra.mxu0 0.0
  %1475 = vmatprep.subr.mxu0 0.0
  %1476 = vmatpush1.msra.mxu0 0.0
  %1477 = vmatprep.subr.mxu0 0.0
  %1478 = vmatpush1.msra.mxu0 0.0
  %1479 = vmatprep.subr.mxu0 0.0
  %1480 = vmatpush1.msra.mxu0 0.0
  %1481 = vmatprep.subr.mxu0 0.0
  %1482 = vmatpush1.msra.mxu0 0.0
  %1483 = vmatprep.subr.mxu0 0.0
  %1484 = vmatpush1.msra.mxu0 0.0
  %1485 = vmatprep.subr.mxu0 0.0
  %1486 = vmatpush1.msra.mxu0 0.0
  %1487 = vmatprep.subr.mxu0 0.0
  %1488 = vmatpush1.msra.mxu0 0.0
  %1489 = vmatprep.mubr.f32.mxu0 0.0
  %1490 = vmatmul.mubr.f32.gmra.mrb[0].mxu0 %v1407
  %v1491 = vpop.f32.mrb[0].mxu0
  %v1492 = vadd.f32 %v1364, %v1491
  %v1493 = vpop.f32.mrb[0].mxu0
  %1494 = vmatprep.mubr.f32.mxu0 0.0
  %1495 = vmatmul.mubr.f32.gmra.mrb[0].mxu0 %v1409
  %v1496 = vpop.f32.mrb[0].mxu0
  %v1497 = vadd.f32 %v1369, %v1496
  %v1498 = vpop.f32.mrb[0].mxu0
  %1499 = vmatprep.mubr.f32.mxu0 0.0
  %1500 = vmatmul.mubr.f32.gmra.mrb[0].mxu0 %v1411
  %v1501 = vpop.f32.mrb[0].mxu0
  %v1502 = vadd.f32 %v1374, %v1501
  %v1503 = vpop.f32.mrb[0].mxu0
  %1504 = vmatprep.mubr.f32.mxu0 0.0
  %1505 = vmatmul.mubr.f32.gmra.mrb[0].mxu0 %v1413
  %v1506 = vpop.f32.mrb[0].mxu0
  %v1507 = vadd.f32 %v1379, %v1506
  %v1508 = vpop.f32.mrb[0].mxu0
  %1509 = vmatprep.mubr.f32.mxu0 0.0
  %1510 = vmatmul.mubr.f32.gmra.mrb[0].mxu0 %v1415
  %v1511 = vpop.f32.mrb[0].mxu0
  %v1512 = vadd.f32 %v1384, %v1511
  %v1513 = vpop.f32.mrb[0].mxu0
  %1514 = vmatprep.mubr.f32.mxu0 0.0
  %1515 = vmatmul.mubr.f32.gmra.mrb[0].mxu0 %v1417
  %v1516 = vpop.f32.mrb[0].mxu0
  %v1517 = vadd.f32 %v1389, %v1516
  %v1518 = vpop.f32.mrb[0].mxu0
  %1519 = vmatprep.mubr.f32.mxu0 0.0
  %1520 = vmatmul.mubr.f32.gmra.mrb[0].mxu0 %v1419
  %v1521 = vpop.f32.mrb[0].mxu0
  %v1522 = vadd.f32 %v1394, %v1521
  %v1523 = vpop.f32.mrb[0].mxu0
  %1524 = vmatprep.mubr.f32.mxu0 0.0
  %1525 = vmatmul.mubr.f32.gmra.mrb[0].mxu0 %v1421
  %v1526 = vpop.f32.mrb[0].mxu0
  %v1527 = vadd.f32 %v1399, %v1526
  %v1528 = vpop.f32.mrb[0].mxu0
  %1529 = vmatprep.mubr.f32.mxu0 0.0
  %1530 = vmatmul.mubr.f32.gmra.mrb[0].mxu0 %v1423
  %v1531 = vpop.f32.mrb[0].mxu0
  %v1532 = vadd.f32 %v1404, %v1531
  %v1533 = vpop.f32.mrb[0].mxu0
  %1534 = vdwg.mxu0
  %v1535 = vrot.slane %v1210, 2
  %v1536 = vrot.slane %v1215, 2
  %v1537 = vsel %vm312, %v1535, %v1536
  %v1538 = vrot.slane %v1220, 2
  %v1539 = vsel %vm312, %v1536, %v1538
  %v1540 = vrot.slane %v1225, 2
  %v1541 = vsel %vm312, %v1538, %v1540
  %v1542 = vrot.slane %v1230, 2
  %v1543 = vsel %vm312, %v1540, %v1542
  %v1544 = vrot.slane %v1235, 2
  %v1545 = vsel %vm312, %v1542, %v1544
  %v1546 = vrot.slane %v1240, 2
  %v1547 = vsel %vm312, %v1544, %v1546
  %v1548 = vrot.slane %v1245, 2
  %v1549 = vsel %vm312, %v1546, %v1548
  %v1550 = vrot.slane %v1250, 2
  %v1551 = vsel %vm312, %v1548, %v1550
  %v1552 = vsel %vm426, %v1537, 0
  %v1554 = vsel %vm426, %v1539, 0
  %v1556 = vsel %vm426, %v1541, 0
  %v1558 = vsel %vm426, %v1543, 0
  %v1560 = vsel %vm426, %v1545, 0
  %v1562 = vsel %vm426, %v1547, 0
  %v1564 = vsel %vm426, %v1549, 0
  %v1566 = vsel %vm426, %v1551, 0
  %v1568 = vsel %vm426, %v1550, 0
  %1570 = vmatprep.subr.mxu0 0.0
  %1571 = vmatpush1.msra.mxu0 %v65
  %1572 = vmatprep.subr.mxu0 0.0
  %1573 = vmatpush1.msra.mxu0 0.0
  %1574 = vmatprep.subr.mxu0 0.0
  %1575 = vmatpush1.msra.mxu0 0.0
  %1576 = vmatprep.subr.mxu0 0.0
  %1577 = vmatpush1.msra.mxu0 0.0
  %1578 = vmatprep.subr.mxu0 0.0
  %1579 = vmatpush1.msra.mxu0 0.0
  %1580 = vmatprep.subr.mxu0 0.0
  %1581 = vmatpush1.msra.mxu0 0.0
  %1582 = vmatprep.subr.mxu0 0.0
  %1583 = vmatpush1.msra.mxu0 0.0
  %1584 = vmatprep.subr.mxu0 0.0
  %1585 = vmatpush1.msra.mxu0 0.0
  %1586 = vmatprep.subr.mxu0 0.0
  %1587 = vmatpush1.msra.mxu0 0.0
  %1588 = vmatprep.subr.mxu0 0.0
  %1589 = vmatpush1.msra.mxu0 0.0
  %1590 = vmatprep.subr.mxu0 0.0
  %1591 = vmatpush1.msra.mxu0 0.0
  %1592 = vmatprep.subr.mxu0 0.0
  %1593 = vmatpush1.msra.mxu0 0.0
  %1594 = vmatprep.subr.mxu0 0.0
  %1595 = vmatpush1.msra.mxu0 0.0
  %1596 = vmatprep.subr.mxu0 0.0
  %1597 = vmatpush1.msra.mxu0 0.0
  %1598 = vmatprep.subr.mxu0 0.0
  %1599 = vmatpush1.msra.mxu0 0.0
  %1600 = vmatprep.subr.mxu0 0.0
  %1601 = vmatpush1.msra.mxu0 0.0
  %1602 = vmatprep.subr.mxu0 0.0
  %1603 = vmatpush1.msra.mxu0 0.0
  %1604 = vmatprep.subr.mxu0 0.0
  %1605 = vmatpush1.msra.mxu0 0.0
  %1606 = vmatprep.subr.mxu0 0.0
  %1607 = vmatpush1.msra.mxu0 0.0
  %1608 = vmatprep.subr.mxu0 0.0
  %1609 = vmatpush1.msra.mxu0 0.0
  %1610 = vmatprep.subr.mxu0 0.0
  %1611 = vmatpush1.msra.mxu0 0.0
  %1612 = vmatprep.subr.mxu0 0.0
  %1613 = vmatpush1.msra.mxu0 0.0
  %1614 = vmatprep.subr.mxu0 0.0
  %1615 = vmatpush1.msra.mxu0 0.0
  %1616 = vmatprep.subr.mxu0 0.0
  %1617 = vmatpush1.msra.mxu0 0.0
  %1618 = vmatprep.subr.mxu0 0.0
  %1619 = vmatpush1.msra.mxu0 0.0
  %1620 = vmatprep.subr.mxu0 0.0
  %1621 = vmatpush1.msra.mxu0 0.0
  %1622 = vmatprep.subr.mxu0 0.0
  %1623 = vmatpush1.msra.mxu0 0.0
  %1624 = vmatprep.subr.mxu0 0.0
  %1625 = vmatpush1.msra.mxu0 0.0
  %1626 = vmatprep.subr.mxu0 0.0
  %1627 = vmatpush1.msra.mxu0 0.0
  %1628 = vmatprep.subr.mxu0 0.0
  %1629 = vmatpush1.msra.mxu0 0.0
  %1630 = vmatprep.subr.mxu0 0.0
  %1631 = vmatpush1.msra.mxu0 0.0
  %1632 = vmatprep.subr.mxu0 0.0
  %1633 = vmatpush1.msra.mxu0 0.0
  %1634 = vmatprep.mubr.f32.mxu0 0.0
  %1635 = vmatmul.mubr.f32.gmra.mrb[0].mxu0 %v1552
  %v1636 = vpop.f32.mrb[0].mxu0
  %v1637 = vadd.f32 0.0, %v1636
  %v1638 = vpop.f32.mrb[0].mxu0
  %1639 = vmatprep.mubr.f32.mxu0 0.0
  %1640 = vmatmul.mubr.f32.gmra.mrb[0].mxu0 %v1554
  %v1641 = vpop.f32.mrb[0].mxu0
  %v1642 = vadd.f32 0.0, %v1641
  %v1643 = vpop.f32.mrb[0].mxu0
  %1644 = vmatprep.mubr.f32.mxu0 0.0
  %1645 = vmatmul.mubr.f32.gmra.mrb[0].mxu0 %v1556
  %v1646 = vpop.f32.mrb[0].mxu0
  %v1647 = vadd.f32 0.0, %v1646
  %v1648 = vpop.f32.mrb[0].mxu0
  %1649 = vmatprep.mubr.f32.mxu0 0.0
  %1650 = vmatmul.mubr.f32.gmra.mrb[0].mxu0 %v1558
  %v1651 = vpop.f32.mrb[0].mxu0
  %v1652 = vadd.f32 0.0, %v1651
  %v1653 = vpop.f32.mrb[0].mxu0
  %1654 = vmatprep.mubr.f32.mxu0 0.0
  %1655 = vmatmul.mubr.f32.gmra.mrb[0].mxu0 %v1560
  %v1656 = vpop.f32.mrb[0].mxu0
  %v1657 = vadd.f32 0.0, %v1656
  %v1658 = vpop.f32.mrb[0].mxu0
  %1659 = vmatprep.mubr.f32.mxu0 0.0
  %1660 = vmatmul.mubr.f32.gmra.mrb[0].mxu0 %v1562
  %v1661 = vpop.f32.mrb[0].mxu0
  %v1662 = vadd.f32 0.0, %v1661
  %v1663 = vpop.f32.mrb[0].mxu0
  %1664 = vmatprep.mubr.f32.mxu0 0.0
  %1665 = vmatmul.mubr.f32.gmra.mrb[0].mxu0 %v1564
  %v1666 = vpop.f32.mrb[0].mxu0
  %v1667 = vadd.f32 0.0, %v1666
  %v1668 = vpop.f32.mrb[0].mxu0
  %1669 = vmatprep.mubr.f32.mxu0 0.0
  %1670 = vmatmul.mubr.f32.gmra.mrb[0].mxu0 %v1566
  %v1671 = vpop.f32.mrb[0].mxu0
  %v1672 = vadd.f32 0.0, %v1671
  %v1673 = vpop.f32.mrb[0].mxu0
  %1674 = vmatprep.mubr.f32.mxu0 0.0
  %1675 = vmatmul.mubr.f32.gmra.mrb[0].mxu0 %v1568
  %v1676 = vpop.f32.mrb[0].mxu0
  %v1677 = vadd.f32 0.0, %v1676
  %v1678 = vpop.f32.mrb[0].mxu0
  %1679 = vdwg.mxu0
  %v1680 = vadd.f32 %v1492, %v1637
  %v1681 = vadd.f32 %v1497, %v1642
  %v1682 = vadd.f32 %v1502, %v1647
  %v1683 = vadd.f32 %v1507, %v1652
  %v1684 = vadd.f32 %v1512, %v1657
  %v1685 = vadd.f32 %v1517, %v1662
  %v1686 = vadd.f32 %v1522, %v1667
  %v1687 = vadd.f32 %v1527, %v1672
  %v1688 = vadd.f32 %v1532, %v1677
  %v1689 = vrot.slane %v1210, 3
  %v1690 = vrot.slane %v1215, 3
  %v1691 = vsel %vm742, %v1689, %v1690
  %v1692 = vrot.slane %v1220, 3
  %v1693 = vsel %vm742, %v1690, %v1692
  %v1694 = vrot.slane %v1225, 3
  %v1695 = vsel %vm742, %v1692, %v1694
  %v1696 = vrot.slane %v1230, 3
  %v1697 = vsel %vm742, %v1694, %v1696
  %v1698 = vrot.slane %v1235, 3
  %v1699 = vsel %vm742, %v1696, %v1698
  %v1700 = vrot.slane %v1240, 3
  %v1701 = vsel %vm742, %v1698, %v1700
  %v1702 = vrot.slane %v1245, 3
  %v1703 = vsel %vm742, %v1700, %v1702
  %v1704 = vrot.slane %v1250, 3
  %v1705 = vsel %vm742, %v1702, %v1704
  %v1706 = vsel %vm426, %v1691, 0
  %v1708 = vsel %vm426, %v1693, 0
  %v1710 = vsel %vm426, %v1695, 0
  %v1712 = vsel %vm426, %v1697, 0
  %v1714 = vsel %vm426, %v1699, 0
  %v1716 = vsel %vm426, %v1701, 0
  %v1718 = vsel %vm426, %v1703, 0
  %v1720 = vsel %vm426, %v1705, 0
  %v1722 = vsel %vm426, %v1704, 0
  %1724 = vmatprep.subr.mxu0 0.0
  %1725 = vmatpush1.msra.mxu0 %v66
  %1726 = vmatprep.subr.mxu0 0.0
  %1727 = vmatpush1.msra.mxu0 0.0
  %1728 = vmatprep.subr.mxu0 0.0
  %1729 = vmatpush1.msra.mxu0 0.0
  %1730 = vmatprep.subr.mxu0 0.0
  %1731 = vmatpush1.msra.mxu0 0.0
  %1732 = vmatprep.subr.mxu0 0.0
  %1733 = vmatpush1.msra.mxu0 0.0
  %1734 = vmatprep.subr.mxu0 0.0
  %1735 = vmatpush1.msra.mxu0 0.0
  %1736 = vmatprep.subr.mxu0 0.0
  %1737 = vmatpush1.msra.mxu0 0.0
  %1738 = vmatprep.subr.mxu0 0.0
  %1739 = vmatpush1.msra.mxu0 0.0
  %1740 = vmatprep.subr.mxu0 0.0
  %1741 = vmatpush1.msra.mxu0 0.0
  %1742 = vmatprep.subr.mxu0 0.0
  %1743 = vmatpush1.msra.mxu0 0.0
  %1744 = vmatprep.subr.mxu0 0.0
  %1745 = vmatpush1.msra.mxu0 0.0
  %1746 = vmatprep.subr.mxu0 0.0
  %1747 = vmatpush1.msra.mxu0 0.0
  %1748 = vmatprep.subr.mxu0 0.0
  %1749 = vmatpush1.msra.mxu0 0.0
  %1750 = vmatprep.subr.mxu0 0.0
  %1751 = vmatpush1.msra.mxu0 0.0
  %1752 = vmatprep.subr.mxu0 0.0
  %1753 = vmatpush1.msra.mxu0 0.0
  %1754 = vmatprep.subr.mxu0 0.0
  %1755 = vmatpush1.msra.mxu0 0.0
  %1756 = vmatprep.subr.mxu0 0.0
  %1757 = vmatpush1.msra.mxu0 0.0
  %1758 = vmatprep.subr.mxu0 0.0
  %1759 = vmatpush1.msra.mxu0 0.0
  %1760 = vmatprep.subr.mxu0 0.0
  %1761 = vmatpush1.msra.mxu0 0.0
  %1762 = vmatprep.subr.mxu0 0.0
  %1763 = vmatpush1.msra.mxu0 0.0
  %1764 = vmatprep.subr.mxu0 0.0
  %1765 = vmatpush1.msra.mxu0 0.0
  %1766 = vmatprep.subr.mxu0 0.0
  %1767 = vmatpush1.msra.mxu0 0.0
  %1768 = vmatprep.subr.mxu0 0.0
  %1769 = vmatpush1.msra.mxu0 0.0
  %1770 = vmatprep.subr.mxu0 0.0
  %1771 = vmatpush1.msra.mxu0 0.0
  %1772 = vmatprep.subr.mxu0 0.0
  %1773 = vmatpush1.msra.mxu0 0.0
  %1774 = vmatprep.subr.mxu0 0.0
  %1775 = vmatpush1.msra.mxu0 0.0
  %1776 = vmatprep.subr.mxu0 0.0
  %1777 = vmatpush1.msra.mxu0 0.0
  %1778 = vmatprep.subr.mxu0 0.0
  %1779 = vmatpush1.msra.mxu0 0.0
  %1780 = vmatprep.subr.mxu0 0.0
  %1781 = vmatpush1.msra.mxu0 0.0
  %1782 = vmatprep.subr.mxu0 0.0
  %1783 = vmatpush1.msra.mxu0 0.0
  %1784 = vmatprep.subr.mxu0 0.0
  %1785 = vmatpush1.msra.mxu0 0.0
  %1786 = vmatprep.subr.mxu0 0.0
  %1787 = vmatpush1.msra.mxu0 0.0
  %1788 = vmatprep.mubr.f32.mxu0 0.0
  %1789 = vmatmul.mubr.f32.gmra.mrb[0].mxu0 %v1706
  %v1790 = vpop.f32.mrb[0].mxu0
  %v1791 = vadd.f32 0.0, %v1790
  %v1792 = vpop.f32.mrb[0].mxu0
  %1793 = vmatprep.mubr.f32.mxu0 0.0
  %1794 = vmatmul.mubr.f32.gmra.mrb[0].mxu0 %v1708
  %v1795 = vpop.f32.mrb[0].mxu0
  %v1796 = vadd.f32 0.0, %v1795
  %v1797 = vpop.f32.mrb[0].mxu0
  %1798 = vmatprep.mubr.f32.mxu0 0.0
  %1799 = vmatmul.mubr.f32.gmra.mrb[0].mxu0 %v1710
  %v1800 = vpop.f32.mrb[0].mxu0
  %v1801 = vadd.f32 0.0, %v1800
  %v1802 = vpop.f32.mrb[0].mxu0
  %1803 = vmatprep.mubr.f32.mxu0 0.0
  %1804 = vmatmul.mubr.f32.gmra.mrb[0].mxu0 %v1712
  %v1805 = vpop.f32.mrb[0].mxu0
  %v1806 = vadd.f32 0.0, %v1805
  %v1807 = vpop.f32.mrb[0].mxu0
  %1808 = vmatprep.mubr.f32.mxu0 0.0
  %1809 = vmatmul.mubr.f32.gmra.mrb[0].mxu0 %v1714
  %v1810 = vpop.f32.mrb[0].mxu0
  %v1811 = vadd.f32 0.0, %v1810
  %v1812 = vpop.f32.mrb[0].mxu0
  %1813 = vmatprep.mubr.f32.mxu0 0.0
  %1814 = vmatmul.mubr.f32.gmra.mrb[0].mxu0 %v1716
  %v1815 = vpop.f32.mrb[0].mxu0
  %v1816 = vadd.f32 0.0, %v1815
  %v1817 = vpop.f32.mrb[0].mxu0
  %1818 = vmatprep.mubr.f32.mxu0 0.0
  %1819 = vmatmul.mubr.f32.gmra.mrb[0].mxu0 %v1718
  %v1820 = vpop.f32.mrb[0].mxu0
  %v1821 = vadd.f32 0.0, %v1820
  %v1822 = vpop.f32.mrb[0].mxu0
  %1823 = vmatprep.mubr.f32.mxu0 0.0
  %1824 = vmatmul.mubr.f32.gmra.mrb[0].mxu0 %v1720
  %v1825 = vpop.f32.mrb[0].mxu0
  %v1826 = vadd.f32 0.0, %v1825
  %v1827 = vpop.f32.mrb[0].mxu0
  %1828 = vmatprep.mubr.f32.mxu0 0.0
  %1829 = vmatmul.mubr.f32.gmra.mrb[0].mxu0 %v1722
  %v1830 = vpop.f32.mrb[0].mxu0
  %v1831 = vadd.f32 0.0, %v1830
  %v1832 = vpop.f32.mrb[0].mxu0
  %1833 = vdwg.mxu0
  %v1834 = vadd.f32 %v1680, %v1791
  %v1835 = vadd.f32 %v1681, %v1796
  %v1836 = vadd.f32 %v1682, %v1801
  %v1837 = vadd.f32 %v1683, %v1806
  %v1838 = vadd.f32 %v1684, %v1811
  %v1839 = vadd.f32 %v1685, %v1816
  %v1840 = vadd.f32 %v1686, %v1821
  %v1841 = vadd.f32 %v1687, %v1826
  %v1842 = vadd.f32 %v1688, %v1831
  %v1843 = vrot.slane %v1210, 4
  %v1844 = vrot.slane %v1215, 4
  %v1845 = vsel %vm859, %v1843, %v1844
  %v1846 = vrot.slane %v1220, 4
  %v1847 = vsel %vm859, %v1844, %v1846
  %v1848 = vrot.slane %v1225, 4
  %v1849 = vsel %vm859, %v1846, %v1848
  %v1850 = vrot.slane %v1230, 4
  %v1851 = vsel %vm859, %v1848, %v1850
  %v1852 = vrot.slane %v1235, 4
  %v1853 = vsel %vm859, %v1850, %v1852
  %v1854 = vrot.slane %v1240, 4
  %v1855 = vsel %vm859, %v1852, %v1854
  %v1856 = vrot.slane %v1245, 4
  %v1857 = vsel %vm859, %v1854, %v1856
  %v1858 = vrot.slane %v1250, 4
  %v1859 = vsel %vm859, %v1856, %v1858
  %v1860 = vsel %vm426, %v1845, 0
  %v1862 = vsel %vm426, %v1847, 0
  %v1864 = vsel %vm426, %v1849, 0
  %v1866 = vsel %vm426, %v1851, 0
  %v1868 = vsel %vm426, %v1853, 0
  %v1870 = vsel %vm426, %v1855, 0
  %v1872 = vsel %vm426, %v1857, 0
  %v1874 = vsel %vm426, %v1859, 0
  %v1876 = vsel %vm426, %v1858, 0
  %1878 = vmatprep.subr.mxu0 0.0
  %1879 = vmatpush1.msra.mxu0 %v67
  %1880 = vmatprep.subr.mxu0 0.0
  %1881 = vmatpush1.msra.mxu0 0.0
  %1882 = vmatprep.subr.mxu0 0.0
  %1883 = vmatpush1.msra.mxu0 0.0
  %1884 = vmatprep.subr.mxu0 0.0
  %1885 = vmatpush1.msra.mxu0 0.0
  %1886 = vmatprep.subr.mxu0 0.0
  %1887 = vmatpush1.msra.mxu0 0.0
  %1888 = vmatprep.subr.mxu0 0.0
  %1889 = vmatpush1.msra.mxu0 0.0
  %1890 = vmatprep.subr.mxu0 0.0
  %1891 = vmatpush1.msra.mxu0 0.0
  %1892 = vmatprep.subr.mxu0 0.0
  %1893 = vmatpush1.msra.mxu0 0.0
  %1894 = vmatprep.subr.mxu0 0.0
  %1895 = vmatpush1.msra.mxu0 0.0
  %1896 = vmatprep.subr.mxu0 0.0
  %1897 = vmatpush1.msra.mxu0 0.0
  %1898 = vmatprep.subr.mxu0 0.0
  %1899 = vmatpush1.msra.mxu0 0.0
  %1900 = vmatprep.subr.mxu0 0.0
  %1901 = vmatpush1.msra.mxu0 0.0
  %1902 = vmatprep.subr.mxu0 0.0
  %1903 = vmatpush1.msra.mxu0 0.0
  %1904 = vmatprep.subr.mxu0 0.0
  %1905 = vmatpush1.msra.mxu0 0.0
  %1906 = vmatprep.subr.mxu0 0.0
  %1907 = vmatpush1.msra.mxu0 0.0
  %1908 = vmatprep.subr.mxu0 0.0
  %1909 = vmatpush1.msra.mxu0 0.0
  %1910 = vmatprep.subr.mxu0 0.0
  %1911 = vmatpush1.msra.mxu0 0.0
  %1912 = vmatprep.subr.mxu0 0.0
  %1913 = vmatpush1.msra.mxu0 0.0
  %1914 = vmatprep.subr.mxu0 0.0
  %1915 = vmatpush1.msra.mxu0 0.0
  %1916 = vmatprep.subr.mxu0 0.0
  %1917 = vmatpush1.msra.mxu0 0.0
  %1918 = vmatprep.subr.mxu0 0.0
  %1919 = vmatpush1.msra.mxu0 0.0
  %1920 = vmatprep.subr.mxu0 0.0
  %1921 = vmatpush1.msra.mxu0 0.0
  %1922 = vmatprep.subr.mxu0 0.0
  %1923 = vmatpush1.msra.mxu0 0.0
  %1924 = vmatprep.subr.mxu0 0.0
  %1925 = vmatpush1.msra.mxu0 0.0
  %1926 = vmatprep.subr.mxu0 0.0
  %1927 = vmatpush1.msra.mxu0 0.0
  %1928 = vmatprep.subr.mxu0 0.0
  %1929 = vmatpush1.msra.mxu0 0.0
  %1930 = vmatprep.subr.mxu0 0.0
  %1931 = vmatpush1.msra.mxu0 0.0
  %1932 = vmatprep.subr.mxu0 0.0
  %1933 = vmatpush1.msra.mxu0 0.0
  %1934 = vmatprep.subr.mxu0 0.0
  %1935 = vmatpush1.msra.mxu0 0.0
  %1936 = vmatprep.subr.mxu0 0.0
  %1937 = vmatpush1.msra.mxu0 0.0
  %1938 = vmatprep.subr.mxu0 0.0
  %1939 = vmatpush1.msra.mxu0 0.0
  %1940 = vmatprep.subr.mxu0 0.0
  %1941 = vmatpush1.msra.mxu0 0.0
  %1942 = vmatprep.mubr.f32.mxu0 0.0
  %1943 = vmatmul.mubr.f32.gmra.mrb[0].mxu0 %v1860
  %v1944 = vpop.f32.mrb[0].mxu0
  %v1945 = vadd.f32 0.0, %v1944
  %v1946 = vpop.f32.mrb[0].mxu0
  %1947 = vmatprep.mubr.f32.mxu0 0.0
  %1948 = vmatmul.mubr.f32.gmra.mrb[0].mxu0 %v1862
  %v1949 = vpop.f32.mrb[0].mxu0
  %v1950 = vadd.f32 0.0, %v1949
  %v1951 = vpop.f32.mrb[0].mxu0
  %1952 = vmatprep.mubr.f32.mxu0 0.0
  %1953 = vmatmul.mubr.f32.gmra.mrb[0].mxu0 %v1864
  %v1954 = vpop.f32.mrb[0].mxu0
  %v1955 = vadd.f32 0.0, %v1954
  %v1956 = vpop.f32.mrb[0].mxu0
  %1957 = vmatprep.mubr.f32.mxu0 0.0
  %1958 = vmatmul.mubr.f32.gmra.mrb[0].mxu0 %v1866
  %v1959 = vpop.f32.mrb[0].mxu0
  %v1960 = vadd.f32 0.0, %v1959
  %v1961 = vpop.f32.mrb[0].mxu0
  %1962 = vmatprep.mubr.f32.mxu0 0.0
  %1963 = vmatmul.mubr.f32.gmra.mrb[0].mxu0 %v1868
  %v1964 = vpop.f32.mrb[0].mxu0
  %v1965 = vadd.f32 0.0, %v1964
  %v1966 = vpop.f32.mrb[0].mxu0
  %1967 = vmatprep.mubr.f32.mxu0 0.0
  %1968 = vmatmul.mubr.f32.gmra.mrb[0].mxu0 %v1870
  %v1969 = vpop.f32.mrb[0].mxu0
  %v1970 = vadd.f32 0.0, %v1969
  %v1971 = vpop.f32.mrb[0].mxu0
  %1972 = vmatprep.mubr.f32.mxu0 0.0
  %1973 = vmatmul.mubr.f32.gmra.mrb[0].mxu0 %v1872
  %v1974 = vpop.f32.mrb[0].mxu0
  %v1975 = vadd.f32 0.0, %v1974
  %v1976 = vpop.f32.mrb[0].mxu0
  %1977 = vmatprep.mubr.f32.mxu0 0.0
  %1978 = vmatmul.mubr.f32.gmra.mrb[0].mxu0 %v1874
  %v1979 = vpop.f32.mrb[0].mxu0
  %v1980 = vadd.f32 0.0, %v1979
  %v1981 = vpop.f32.mrb[0].mxu0
  %1982 = vmatprep.mubr.f32.mxu0 0.0
  %1983 = vmatmul.mubr.f32.gmra.mrb[0].mxu0 %v1876
  %v1984 = vpop.f32.mrb[0].mxu0
  %v1985 = vadd.f32 0.0, %v1984
  %v1986 = vpop.f32.mrb[0].mxu0
  %1987 = vdwg.mxu0
  %v1988 = vadd.f32 %v1834, %v1945
  %v1989 = vadd.f32 %v1835, %v1950
  %v1990 = vadd.f32 %v1836, %v1955
  %v1991 = vadd.f32 %v1837, %v1960
  %v1992 = vadd.f32 %v1838, %v1965
  %v1993 = vadd.f32 %v1839, %v1970
  %v1994 = vadd.f32 %v1840, %v1975
  %v1995 = vadd.f32 %v1841, %v1980
  %v1996 = vadd.f32 %v1842, %v1985
  %v1997 = vadd.f32 %v1988, %v980
  %v1998 = vadd.f32 %v1989, %v980
  %v1999 = vadd.f32 %v1990, %v980
  %v2000 = vadd.f32 %v1991, %v980
  %v2001 = vadd.f32 %v1992, %v980
  %v2002 = vadd.f32 %v1993, %v980
  %v2003 = vadd.f32 %v1994, %v980
  %v2004 = vadd.f32 %v1995, %v980
  %v2005 = vadd.f32 %v1996, %v980
  %v2006 = vmax.f32 %v1997, 0.0
  %v2007 = vmax.f32 %v1998, 0.0
  %v2008 = vmax.f32 %v1999, 0.0
  %v2009 = vmax.f32 %v2000, 0.0
  %v2010 = vmax.f32 %v2001, 0.0
  %v2011 = vmax.f32 %v2002, 0.0
  %v2012 = vmax.f32 %v2003, 0.0
  %v2013 = vmax.f32 %v2004, 0.0
  %v2014 = vmax.f32 %v2005, 0.0
  %v2015 = vsel %vm992, %v2006, -inf
  %v2016 = vrot.slane %v2015, 4
  %v2017 = vmax.f32 %v2015, %v2016
  %v2018 = vrot.slane %v2017, 2
  %v2019 = vmax.f32 %v2017, %v2018
  %v2020 = vrot.slane %v2019, 1
  %v2021 = vmax.f32 %v2019, %v2020
  %v2022 = vsel %vm1000, %v2006, -inf
  %v2023 = vsel %vm1002, %v2007, -inf
  %v2024 = vmax.f32 %v2022, %v2023
  %v2025 = vrot.slane %v2024, 4
  %v2026 = vmax.f32 %v2024, %v2025
  %v2027 = vrot.slane %v2026, 2
  %v2028 = vmax.f32 %v2026, %v2027
  %v2029 = vrot.slane %v2028, 1
  %v2030 = vmax.f32 %v2028, %v2029
  %v2031 = vsel %vm1011, %v2007, -inf
  %v2032 = vsel %vm1013, %v2008, -inf
  %v2033 = vmax.f32 %v2031, %v2032
  %v2034 = vrot.slane %v2033, 4
  %v2035 = vmax.f32 %v2033, %v2034
  %v2036 = vrot.slane %v2035, 2
  %v2037 = vmax.f32 %v2035, %v2036
  %v2038 = vrot.slane %v2037, 1
  %v2039 = vmax.f32 %v2037, %v2038
  %v2040 = vsel %vm1022, %v2008, -inf
  %v2041 = vrot.slane %v2040, 4
  %v2042 = vmax.f32 %v2040, %v2041
  %v2043 = vrot.slane %v2042, 2
  %v2044 = vmax.f32 %v2042, %v2043
  %v2045 = vrot.slane %v2044, 1
  %v2046 = vmax.f32 %v2044, %v2045
  %v2047 = vsel %vm1030, %v2009, -inf
  %v2048 = vrot.slane %v2047, 4
  %v2049 = vmax.f32 %v2047, %v2048
  %v2050 = vrot.slane %v2049, 2
  %v2051 = vmax.f32 %v2049, %v2050
  %v2052 = vrot.slane %v2051, 1
  %v2053 = vmax.f32 %v2051, %v2052
  %v2054 = vsel %vm1038, %v2010, -inf
  %v2055 = vrot.slane %v2054, 4
  %v2056 = vmax.f32 %v2054, %v2055
  %v2057 = vrot.slane %v2056, 2
  %v2058 = vmax.f32 %v2056, %v2057
  %v2059 = vrot.slane %v2058, 1
  %v2060 = vmax.f32 %v2058, %v2059
  %vm2061 = vcmask 126978
  %v2062 = vsel %vm2061, %v2011, -inf
  %v2063 = vrot.slane %v2062, 4
  %v2064 = vmax.f32 %v2062, %v2063
  %v2065 = vrot.slane %v2064, 2
  %v2066 = vmax.f32 %v2064, %v2065
  %v2067 = vrot.slane %v2066, 1
  %v2068 = vmax.f32 %v2066, %v2067
  %vm2069 = vcmask 125953
  %v2070 = vsel %vm2069, %v2012, -inf
  %v2071 = vrot.slane %v2070, 4
  %v2072 = vmax.f32 %v2070, %v2071
  %v2073 = vrot.slane %v2072, 2
  %v2074 = vmax.f32 %v2072, %v2073
  %v2075 = vrot.slane %v2074, 1
  %v2076 = vmax.f32 %v2074, %v2075
  %v2077 = vsel %vm992, %v2013, -inf
  %v2078 = vrot.slane %v2077, 4
  %v2079 = vmax.f32 %v2077, %v2078
  %v2080 = vrot.slane %v2079, 2
  %v2081 = vmax.f32 %v2079, %v2080
  %v2082 = vrot.slane %v2081, 1
  %v2083 = vmax.f32 %v2081, %v2082
  %v2084 = vsel %vm1000, %v2013, -inf
  %v2085 = vsel %vm1002, %v2014, -inf
  %v2086 = vmax.f32 %v2084, %v2085
  %v2087 = vrot.slane %v2086, 4
  %v2088 = vmax.f32 %v2086, %v2087
  %v2089 = vrot.slane %v2088, 2
  %v2090 = vmax.f32 %v2088, %v2089
  %v2091 = vrot.slane %v2090, 1
  %v2092 = vmax.f32 %v2090, %v2091
  %v2093 = vsel %vm1046, %v2021, %v2030
  %v2094 = vsel %vm82, %v2093, %v2039
  %v2095 = vsel %vm1049, %v2094, %v2046
  %v2096 = vsel %vm859, %v2095, %v2053
  %v2097 = vsel %vm742, %v2096, %v2060
  %v2098 = vsel %vm312, %v2097, %v2068
  %v2099 = vsel %vm416, %v2098, %v2076
  %v2100 = vsel %vm1046, %v2083, %v2092
  %2102 = vrot.lane.b32.xlu0 %v1052, 32
  %v2103 = vpop.permute.xlu0 %2102
  %vm2105 = vcmask 261120
  %v2106 = vsel %vm2105, %v153, %v2103
  %2109 = vrot.lane.b32.xlu0 %v2099, 32
  %v2110 = vpop.permute.xlu0 %2109
  %2111 = vrot.lane.b32.xlu0 %v2100, 32
  %v2112 = vpop.permute.xlu0 %2111
  %v2115 = vsel %vm2105, %v243, %v2110
  %v2116 = vsel %vm2105, %v248, %v2112
  %v2117 = vld [vmem:[%s8] sm:$0xff]
  %v2118 = vld [vmem:[%s8 + $0x8] sm:$0xff]
  %v2119 = vld [vmem:[%s8 + $0x10] sm:$0xff]
  %v2120 = vld [vmem:[%s8 + $0x18] sm:$0xff]
  %v2121 = vld [vmem:[%s8 + $0x20] sm:$0xff]
  %v2122 = vld [vmem:[%s8 + $0x28] sm:$0xff]
  %s2123 = scalar_lea.vmem %s8, 48
  %v2124 = vld [vmem:[%s2123] sm:$0xff]
  %v2125 = vld [vmem:[%s2123 + $0x8] sm:$0xff]
  %v2126 = vld [vmem:[%s2123 + $0x10] sm:$0xff]
  %v2127 = vld [vmem:[%s2123 + $0x18] sm:$0xff]
  %v2128 = vld [vmem:[%s2123 + $0x20] sm:$0xff]
  %v2129 = vld [vmem:[%s2123 + $0x28] sm:$0xff]
  %v2130 = vld [vmem:[%s9] sm:$0xff]
  %v2131 = vld [vmem:[%s9 + $0x8] sm:$0xff]
  %s2132 = scalar_lea.vmem %s9, 16
  %v2133 = vld [vmem:[%s2132] sm:$0xff]
  %v2134 = vld [vmem:[%s2132 + $0x8] sm:$0xff]
  %v2135 = vld [vmem:[%s10] sm:$0x1]
  %s2136 = scalar_lea.vmem %s10, 1
  %v2137 = vld [vmem:[%s2136] sm:$0x1]
  %v2139 = vlaneseq
  %v2140 = vshrl.u32 %v2139, 7
  %v2141 = vsub.s32 0, %v2140
  %v2142 = vrot.slane %v2135, %v2141
  %vm2144 = vcmask 392192
  %v2146 = vsel %vm2144, %v2106, 0
  %2148 = vmatprep.subr.mxu0 0.0
  %2149 = vmatpush1.msra.mxu0 %v2117
  %2150 = vmatprep.subr.mxu0 0.0
  %2151 = vmatpush1.msra.mxu0 %v2118
  %2152 = vmatprep.subr.mxu0 0.0
  %2153 = vmatpush1.msra.mxu0 %v2119
  %2154 = vmatprep.subr.mxu0 0.0
  %2155 = vmatpush1.msra.mxu0 %v2120
  %2156 = vmatprep.subr.mxu0 0.0
  %2157 = vmatpush1.msra.mxu0 %v2121
  %2158 = vmatprep.subr.mxu0 0.0
  %2159 = vmatpush1.msra.mxu0 %v2122
  %2160 = vmatprep.subr.mxu0 0.0
  %2161 = vmatpush1.msra.mxu0 0.0
  %2162 = vmatprep.subr.mxu0 0.0
  %2163 = vmatpush1.msra.mxu0 0.0
  %2164 = vmatprep.subr.mxu0 0.0
  %2165 = vmatpush1.msra.mxu0 0.0
  %2166 = vmatprep.subr.mxu0 0.0
  %2167 = vmatpush1.msra.mxu0 0.0
  %2168 = vmatprep.subr.mxu0 0.0
  %2169 = vmatpush1.msra.mxu0 0.0
  %2170 = vmatprep.subr.mxu0 0.0
  %2171 = vmatpush1.msra.mxu0 0.0
  %2172 = vmatprep.subr.mxu0 0.0
  %2173 = vmatpush1.msra.mxu0 0.0
  %2174 = vmatprep.subr.mxu0 0.0
  %2175 = vmatpush1.msra.mxu0 0.0
  %2176 = vmatprep.subr.mxu0 0.0
  %2177 = vmatpush1.msra.mxu0 0.0
  %2178 = vmatprep.subr.mxu0 0.0
  %2179 = vmatpush1.msra.mxu0 0.0
  %2180 = vmatprep.subr.mxu0 0.0
  %2181 = vmatpush1.msra.mxu0 0.0
  %2182 = vmatprep.subr.mxu0 0.0
  %2183 = vmatpush1.msra.mxu0 0.0
  %2184 = vmatprep.subr.mxu0 0.0
  %2185 = vmatpush1.msra.mxu0 0.0
  %2186 = vmatprep.subr.mxu0 0.0
  %2187 = vmatpush1.msra.mxu0 0.0
  %2188 = vmatprep.subr.mxu0 0.0
  %2189 = vmatpush1.msra.mxu0 0.0
  %2190 = vmatprep.subr.mxu0 0.0
  %2191 = vmatpush1.msra.mxu0 0.0
  %2192 = vmatprep.subr.mxu0 0.0
  %2193 = vmatpush1.msra.mxu0 0.0
  %2194 = vmatprep.subr.mxu0 0.0
  %2195 = vmatpush1.msra.mxu0 0.0
  %2196 = vmatprep.subr.mxu0 0.0
  %2197 = vmatpush1.msra.mxu0 0.0
  %2198 = vmatprep.subr.mxu0 0.0
  %2199 = vmatpush1.msra.mxu0 0.0
  %2200 = vmatprep.subr.mxu0 0.0
  %2201 = vmatpush1.msra.mxu0 0.0
  %2202 = vmatprep.subr.mxu0 0.0
  %2203 = vmatpush1.msra.mxu0 0.0
  %2204 = vmatprep.subr.mxu0 0.0
  %2205 = vmatpush1.msra.mxu0 0.0
  %2206 = vmatprep.subr.mxu0 0.0
  %2207 = vmatpush1.msra.mxu0 0.0
  %2208 = vmatprep.subr.mxu0 0.0
  %2209 = vmatpush1.msra.mxu0 0.0
  %2210 = vmatprep.subr.mxu0 0.0
  %2211 = vmatpush1.msra.mxu0 0.0
  %2212 = vmatprep.mubr.f32.mxu0 0.0
  %2213 = vmatmul.mubr.f32.gmra.mrb[0].mxu0 %v2146
  %v2214 = vpop.f32.mrb[0].mxu0
  %v2215 = vadd.f32 %v2142, %v2214
  %v2216 = vpop.f32.mrb[0].mxu0
  %2217 = vdwg.mxu0
  %vm2218 = vcmask 521216
  %2219 = vst.msk [vmem:[#allocation2] sm:$0x3f] %vm2218, %v2215
  %v2221 = vlaneseq
  %v2222 = vshrl.u32 %v2221, 7
  %v2223 = vsub.s32 0, %v2222
  %v2224 = vrot.slane %v2137, %v2223
  %2226 = vmatprep.subr.mxu0 0.0
  %2227 = vmatpush1.msra.mxu0 %v2124
  %2228 = vmatprep.subr.mxu0 0.0
  %2229 = vmatpush1.msra.mxu0 %v2125
  %2230 = vmatprep.subr.mxu0 0.0
  %2231 = vmatpush1.msra.mxu0 %v2126
  %2232 = vmatprep.subr.mxu0 0.0
  %2233 = vmatpush1.msra.mxu0 %v2127
  %2234 = vmatprep.subr.mxu0 0.0
  %2235 = vmatpush1.msra.mxu0 %v2128
  %2236 = vmatprep.subr.mxu0 0.0
  %2237 = vmatpush1.msra.mxu0 %v2129
  %2238 = vmatprep.subr.mxu0 0.0
  %2239 = vmatpush1.msra.mxu0 0.0
  %2240 = vmatprep.subr.mxu0 0.0
  %2241 = vmatpush1.msra.mxu0 0.0
  %2242 = vmatprep.subr.mxu0 0.0
  %2243 = vmatpush1.msra.mxu0 0.0
  %2244 = vmatprep.subr.mxu0 0.0
  %2245 = vmatpush1.msra.mxu0 0.0
  %2246 = vmatprep.subr.mxu0 0.0
  %2247 = vmatpush1.msra.mxu0 0.0
  %2248 = vmatprep.subr.mxu0 0.0
  %2249 = vmatpush1.msra.mxu0 0.0
  %2250 = vmatprep.subr.mxu0 0.0
  %2251 = vmatpush1.msra.mxu0 0.0
  %2252 = vmatprep.subr.mxu0 0.0
  %2253 = vmatpush1.msra.mxu0 0.0
  %2254 = vmatprep.subr.mxu0 0.0
  %2255 = vmatpush1.msra.mxu0 0.0
  %2256 = vmatprep.subr.mxu0 0.0
  %2257 = vmatpush1.msra.mxu0 0.0
  %2258 = vmatprep.subr.mxu0 0.0
  %2259 = vmatpush1.msra.mxu0 0.0
  %2260 = vmatprep.subr.mxu0 0.0
  %2261 = vmatpush1.msra.mxu0 0.0
  %2262 = vmatprep.subr.mxu0 0.0
  %2263 = vmatpush1.msra.mxu0 0.0
  %2264 = vmatprep.subr.mxu0 0.0
  %2265 = vmatpush1.msra.mxu0 0.0
  %2266 = vmatprep.subr.mxu0 0.0
  %2267 = vmatpush1.msra.mxu0 0.0
  %2268 = vmatprep.subr.mxu0 0.0
  %2269 = vmatpush1.msra.mxu0 0.0
  %2270 = vmatprep.subr.mxu0 0.0
  %2271 = vmatpush1.msra.mxu0 0.0
  %2272 = vmatprep.subr.mxu0 0.0
  %2273 = vmatpush1.msra.mxu0 0.0
  %2274 = vmatprep.subr.mxu0 0.0
  %2275 = vmatpush1.msra.mxu0 0.0
  %2276 = vmatprep.subr.mxu0 0.0
  %2277 = vmatpush1.msra.mxu0 0.0
  %2278 = vmatprep.subr.mxu0 0.0
  %2279 = vmatpush1.msra.mxu0 0.0
  %2280 = vmatprep.subr.mxu0 0.0
  %2281 = vmatpush1.msra.mxu0 0.0
  %2282 = vmatprep.subr.mxu0 0.0
  %2283 = vmatpush1.msra.mxu0 0.0
  %2284 = vmatprep.subr.mxu0 0.0
  %2285 = vmatpush1.msra.mxu0 0.0
  %2286 = vmatprep.subr.mxu0 0.0
  %2287 = vmatpush1.msra.mxu0 0.0
  %2288 = vmatprep.subr.mxu0 0.0
  %2289 = vmatpush1.msra.mxu0 0.0
  %2290 = vmatprep.mubr.f32.mxu0 0.0
  %2291 = vmatmul.mubr.f32.gmra.mrb[0].mxu0 %v2146
  %v2292 = vpop.f32.mrb[0].mxu0
  %v2293 = vadd.f32 %v2224, %v2292
  %v2294 = vpop.f32.mrb[0].mxu0
  %2295 = vdwg.mxu0
  %2296 = vst.msk [vmem:[#allocation3] sm:$0x3f] %vm2218, %v2293
  %v2297 = vld [vmem:[#allocation2] sm:$0x1]
  %vm2298 = vcmask 130048
  %v2300 = vsel %vm2298, 0.0, 0
  %2302 = vmatprep.subr.mxu0 0.0
  %2303 = vmatpush1.msra.mxu0 %v2130
  %2304 = vmatprep.subr.mxu0 0.0
  %2305 = vmatpush1.msra.mxu0 %v2131
  %2306 = vmatprep.subr.mxu0 0.0
  %2307 = vmatpush1.msra.mxu0 0.0
  %2308 = vmatprep.subr.mxu0 0.0
  %2309 = vmatpush1.msra.mxu0 0.0
  %2310 = vmatprep.subr.mxu0 0.0
  %2311 = vmatpush1.msra.mxu0 0.0
  %2312 = vmatprep.subr.mxu0 0.0
  %2313 = vmatpush1.msra.mxu0 0.0
  %2314 = vmatprep.subr.mxu0 0.0
  %2315 = vmatpush1.msra.mxu0 0.0
  %2316 = vmatprep.subr.mxu0 0.0
  %2317 = vmatpush1.msra.mxu0 0.0
  %2318 = vmatprep.subr.mxu0 0.0
  %2319 = vmatpush1.msra.mxu0 0.0
  %2320 = vmatprep.subr.mxu0 0.0
  %2321 = vmatpush1.msra.mxu0 0.0
  %2322 = vmatprep.subr.mxu0 0.0
  %2323 = vmatpush1.msra.mxu0 0.0
  %2324 = vmatprep.subr.mxu0 0.0
  %2325 = vmatpush1.msra.mxu0 0.0
  %2326 = vmatprep.subr.mxu0 0.0
  %2327 = vmatpush1.msra.mxu0 0.0
  %2328 = vmatprep.subr.mxu0 0.0
  %2329 = vmatpush1.msra.mxu0 0.0
  %2330 = vmatprep.subr.mxu0 0.0
  %2331 = vmatpush1.msra.mxu0 0.0
  %2332 = vmatprep.subr.mxu0 0.0
  %2333 = vmatpush1.msra.mxu0 0.0
  %2334 = vmatprep.subr.mxu0 0.0
  %2335 = vmatpush1.msra.mxu0 0.0
  %2336 = vmatprep.subr.mxu0 0.0
  %2337 = vmatpush1.msra.mxu0 0.0
  %2338 = vmatprep.subr.mxu0 0.0
  %2339 = vmatpush1.msra.mxu0 0.0
  %2340 = vmatprep.subr.mxu0 0.0
  %2341 = vmatpush1.msra.mxu0 0.0
  %2342 = vmatprep.subr.mxu0 0.0
  %2343 = vmatpush1.msra.mxu0 0.0
  %2344 = vmatprep.subr.mxu0 0.0
  %2345 = vmatpush1.msra.mxu0 0.0
  %2346 = vmatprep.subr.mxu0 0.0
  %2347 = vmatpush1.msra.mxu0 0.0
  %2348 = vmatprep.subr.mxu0 0.0
  %2349 = vmatpush1.msra.mxu0 0.0
  %2350 = vmatprep.subr.mxu0 0.0
  %2351 = vmatpush1.msra.mxu0 0.0
  %2352 = vmatprep.subr.mxu0 0.0
  %2353 = vmatpush1.msra.mxu0 0.0
  %2354 = vmatprep.subr.mxu0 0.0
  %2355 = vmatpush1.msra.mxu0 0.0
  %2356 = vmatprep.subr.mxu0 0.0
  %2357 = vmatpush1.msra.mxu0 0.0
  %2358 = vmatprep.subr.mxu0 0.0
  %2359 = vmatpush1.msra.mxu0 0.0
  %2360 = vmatprep.subr.mxu0 0.0
  %2361 = vmatpush1.msra.mxu0 0.0
  %2362 = vmatprep.subr.mxu0 0.0
  %2363 = vmatpush1.msra.mxu0 0.0
  %2364 = vmatprep.subr.mxu0 0.0
  %2365 = vmatpush1.msra.mxu0 0.0
  %2366 = vmatprep.mubr.f32.mxu0 0.0
  %2367 = vmatmul.mubr.f32.gmra.mrb[0].mxu0 %v2300
  %v2368 = vpop.f32.mrb[0].mxu0
  %v2369 = vadd.f32 0.0, %v2368
  %v2370 = vpop.f32.mrb[0].mxu0
  %2371 = vdwg.mxu0
  %v2372 = vadd.f32 %v2297, %v2369
  %v2373 = vxor.u32 %v2372, 2147483648
  %v2374 = vmul.f32 %v2373, 1.442695
  %v2375 = vpow.pop %v2374
  %v2376 = vadd.f32 %v2375, 1.0
  %v2377 = vrcp.pop %v2376
  %v2378 = vmul.f32 1.0, %v2377
  %v2379 = vtanh.pop %v2372
  %v2380 = vmul.f32 %v2378, 0.0
  %2382 = vrot.lane.b32.xlu0 %v2379, 96
  %v2383 = vpop.permute.xlu0 %2382
  %v2385 = vmul.f32 %v2378, %v2383
  %2387 = vrot.lane.b32.xlu0 %v2385, 16
  %v2388 = vpop.permute.xlu0 %2387
  %v2390 = vadd.f32 %v2380, %v2388
  %v2391 = vtanh.pop %v2390
  %2393 = vrot.lane.b32.xlu0 %v2391, 32
  %v2394 = vpop.permute.xlu0 %2393
  %v2396 = vmul.f32 %v2378, %v2394
  %2398 = vrot.lane.b32.xlu0 %v2396, 80
  %v2399 = vpop.permute.xlu0 %2398
  %2401 = vst.msk [vmem:[#allocation6] sm:$0x1] %vm1013, %v2399
  %v2402 = vld [vmem:[#allocation3 + $0x5] sm:$0x1]
  %2403 = vmatprep.subr.mxu0 0.0
  %2404 = vmatpush1.msra.mxu0 %v2133
  %2405 = vmatprep.subr.mxu0 0.0
  %2406 = vmatpush1.msra.mxu0 %v2134
  %2407 = vmatprep.subr.mxu0 0.0
  %2408 = vmatpush1.msra.mxu0 0.0
  %2409 = vmatprep.subr.mxu0 0.0
  %2410 = vmatpush1.msra.mxu0 0.0
  %2411 = vmatprep.subr.mxu0 0.0
  %2412 = vmatpush1.msra.mxu0 0.0
  %2413 = vmatprep.subr.mxu0 0.0
  %2414 = vmatpush1.msra.mxu0 0.0
  %2415 = vmatprep.subr.mxu0 0.0
  %2416 = vmatpush1.msra.mxu0 0.0
  %2417 = vmatprep.subr.mxu0 0.0
  %2418 = vmatpush1.msra.mxu0 0.0
  %2419 = vmatprep.subr.mxu0 0.0
  %2420 = vmatpush1.msra.mxu0 0.0
  %2421 = vmatprep.subr.mxu0 0.0
  %2422 = vmatpush1.msra.mxu0 0.0
  %2423 = vmatprep.subr.mxu0 0.0
  %2424 = vmatpush1.msra.mxu0 0.0
  %2425 = vmatprep.subr.mxu0 0.0
  %2426 = vmatpush1.msra.mxu0 0.0
  %2427 = vmatprep.subr.mxu0 0.0
  %2428 = vmatpush1.msra.mxu0 0.0
  %2429 = vmatprep.subr.mxu0 0.0
  %2430 = vmatpush1.msra.mxu0 0.0
  %2431 = vmatprep.subr.mxu0 0.0
  %2432 = vmatpush1.msra.mxu0 0.0
  %2433 = vmatprep.subr.mxu0 0.0
  %2434 = vmatpush1.msra.mxu0 0.0
  %2435 = vmatprep.subr.mxu0 0.0
  %2436 = vmatpush1.msra.mxu0 0.0
  %2437 = vmatprep.subr.mxu0 0.0
  %2438 = vmatpush1.msra.mxu0 0.0
  %2439 = vmatprep.subr.mxu0 0.0
  %2440 = vmatpush1.msra.mxu0 0.0
  %2441 = vmatprep.subr.mxu0 0.0
  %2442 = vmatpush1.msra.mxu0 0.0
  %2443 = vmatprep.subr.mxu0 0.0
  %2444 = vmatpush1.msra.mxu0 0.0
  %2445 = vmatprep.subr.mxu0 0.0
  %2446 = vmatpush1.msra.mxu0 0.0
  %2447 = vmatprep.subr.mxu0 0.0
  %2448 = vmatpush1.msra.mxu0 0.0
  %2449 = vmatprep.subr.mxu0 0.0
  %2450 = vmatpush1.msra.mxu0 0.0
  %2451 = vmatprep.subr.mxu0 0.0
  %2452 = vmatpush1.msra.mxu0 0.0
  %2453 = vmatprep.subr.mxu0 0.0
  %2454 = vmatpush1.msra.mxu0 0.0
  %2455 = vmatprep.subr.mxu0 0.0
  %2456 = vmatpush1.msra.mxu0 0.0
  %2457 = vmatprep.subr.mxu0 0.0
  %2458 = vmatpush1.msra.mxu0 0.0
  %2459 = vmatprep.subr.mxu0 0.0
  %2460 = vmatpush1.msra.mxu0 0.0
  %2461 = vmatprep.subr.mxu0 0.0
  %2462 = vmatpush1.msra.mxu0 0.0
  %2463 = vmatprep.subr.mxu0 0.0
  %2464 = vmatpush1.msra.mxu0 0.0
  %2465 = vmatprep.subr.mxu0 0.0
  %2466 = vmatpush1.msra.mxu0 0.0
  %2467 = vmatprep.mubr.f32.mxu0 0.0
  %2468 = vmatmul.mubr.f32.gmra.mrb[0].mxu0 %v2300
  %v2469 = vpop.f32.mrb[0].mxu0
  %v2470 = vadd.f32 0.0, %v2469
  %v2471 = vpop.f32.mrb[0].mxu0
  %2472 = vdwg.mxu0
  %v2473 = vadd.f32 %v2402, %v2470
  %v2474 = vxor.u32 %v2473, 2147483648
  %v2475 = vmul.f32 %v2474, 1.442695
  %v2476 = vpow.pop %v2475
  %v2477 = vadd.f32 %v2476, 1.0
  %v2478 = vrcp.pop %v2477
  %v2479 = vmul.f32 1.0, %v2478
  %v2480 = vtanh.pop %v2473
  %v2481 = vmul.f32 %v2479, 0.0
  %2483 = vrot.lane.b32.xlu0 %v2480, 96
  %v2484 = vpop.permute.xlu0 %2483
  %v2486 = vmul.f32 %v2479, %v2484
  %2488 = vrot.lane.b32.xlu0 %v2486, 16
  %v2489 = vpop.permute.xlu0 %2488
  %v2491 = vadd.f32 %v2481, %v2489
  %v2492 = vtanh.pop %v2491
  %2494 = vrot.lane.b32.xlu0 %v2492, 32
  %v2495 = vpop.permute.xlu0 %2494
  %v2497 = vmul.f32 %v2479, %v2495
  %2499 = vrot.lane.b32.xlu0 %v2497, 96
  %v2500 = vpop.permute.xlu0 %2499
  %vm2502 = vcmask 254080
  %2503 = vst.msk [vmem:[#allocation6 + $0x5] sm:$0x1] %vm2502, %v2500
  %v2504 = vld [vmem:[#allocation2 + $0x1] sm:$0x1]
  %v2505 = vsel %vm2298, %v2399, 0
  %2507 = vmatprep.subr.mxu0 0.0
  %2508 = vmatpush1.msra.mxu0 %v2130
  %2509 = vmatprep.subr.mxu0 0.0
  %2510 = vmatpush1.msra.mxu0 %v2131
  %2511 = vmatprep.subr.mxu0 0.0
  %2512 = vmatpush1.msra.mxu0 0.0
  %2513 = vmatprep.subr.mxu0 0.0
  %2514 = vmatpush1.msra.mxu0 0.0
  %2515 = vmatprep.subr.mxu0 0.0
  %2516 = vmatpush1.msra.mxu0 0.0
  %2517 = vmatprep.subr.mxu0 0.0
  %2518 = vmatpush1.msra.mxu0 0.0
  %2519 = vmatprep.subr.mxu0 0.0
  %2520 = vmatpush1.msra.mxu0 0.0
  %2521 = vmatprep.subr.mxu0 0.0
  %2522 = vmatpush1.msra.mxu0 0.0
  %2523 = vmatprep.subr.mxu0 0.0
  %2524 = vmatpush1.msra.mxu0 0.0
  %2525 = vmatprep.subr.mxu0 0.0
  %2526 = vmatpush1.msra.mxu0 0.0
  %2527 = vmatprep.subr.mxu0 0.0
  %2528 = vmatpush1.msra.mxu0 0.0
  %2529 = vmatprep.subr.mxu0 0.0
  %2530 = vmatpush1.msra.mxu0 0.0
  %2531 = vmatprep.subr.mxu0 0.0
  %2532 = vmatpush1.msra.mxu0 0.0
  %2533 = vmatprep.subr.mxu0 0.0
  %2534 = vmatpush1.msra.mxu0 0.0
  %2535 = vmatprep.subr.mxu0 0.0
  %2536 = vmatpush1.msra.mxu0 0.0
  %2537 = vmatprep.subr.mxu0 0.0
  %2538 = vmatpush1.msra.mxu0 0.0
  %2539 = vmatprep.subr.mxu0 0.0
  %2540 = vmatpush1.msra.mxu0 0.0
  %2541 = vmatprep.subr.mxu0 0.0
  %2542 = vmatpush1.msra.mxu0 0.0
  %2543 = vmatprep.subr.mxu0 0.0
  %2544 = vmatpush1.msra.mxu0 0.0
  %2545 = vmatprep.subr.mxu0 0.0
  %2546 = vmatpush1.msra.mxu0 0.0
  %2547 = vmatprep.subr.mxu0 0.0
  %2548 = vmatpush1.msra.mxu0 0.0
  %2549 = vmatprep.subr.mxu0 0.0
  %2550 = vmatpush1.msra.mxu0 0.0
  %2551 = vmatprep.subr.mxu0 0.0
  %2552 = vmatpush1.msra.mxu0 0.0
  %2553 = vmatprep.subr.mxu0 0.0
  %2554 = vmatpush1.msra.mxu0 0.0
  %2555 = vmatprep.subr.mxu0 0.0
  %2556 = vmatpush1.msra.mxu0 0.0
  %2557 = vmatprep.subr.mxu0 0.0
  %2558 = vmatpush1.msra.mxu0 0.0
  %2559 = vmatprep.subr.mxu0 0.0
  %2560 = vmatpush1.msra.mxu0 0.0
  %2561 = vmatprep.subr.mxu0 0.0
  %2562 = vmatpush1.msra.mxu0 0.0
  %2563 = vmatprep.subr.mxu0 0.0
  %2564 = vmatpush1.msra.mxu0 0.0
  %2565 = vmatprep.subr.mxu0 0.0
  %2566 = vmatpush1.msra.mxu0 0.0
  %2567 = vmatprep.subr.mxu0 0.0
  %2568 = vmatpush1.msra.mxu0 0.0
  %2569 = vmatprep.subr.mxu0 0.0
  %2570 = vmatpush1.msra.mxu0 0.0
  %2571 = vmatprep.mubr.f32.mxu0 0.0
  %2572 = vmatmul.mubr.f32.gmra.mrb[0].mxu0 %v2505
  %v2573 = vpop.f32.mrb[0].mxu0
  %v2574 = vadd.f32 0.0, %v2573
  %v2575 = vpop.f32.mrb[0].mxu0
  %2576 = vdwg.mxu0
  %v2577 = vadd.f32 %v2504, %v2574
  %v2578 = vxor.u32 %v2577, 2147483648
  %v2579 = vmul.f32 %v2578, 1.442695
  %v2580 = vpow.pop %v2579
  %v2581 = vadd.f32 %v2580, 1.0
  %v2582 = vrcp.pop %v2581
  %v2583 = vmul.f32 1.0, %v2582
  %v2584 = vtanh.pop %v2577
  %v2585 = vmul.f32 %v2583, %v2390
  %2587 = vrot.lane.b32.xlu0 %v2584, 96
  %v2588 = vpop.permute.xlu0 %2587
  %v2590 = vmul.f32 %v2583, %v2588
  %2592 = vrot.lane.b32.xlu0 %v2590, 16
  %v2593 = vpop.permute.xlu0 %2592
  %v2595 = vadd.f32 %v2585, %v2593
  %v2596 = vtanh.pop %v2595
  %2598 = vrot.lane.b32.xlu0 %v2596, 32
  %v2599 = vpop.permute.xlu0 %2598
  %v2601 = vmul.f32 %v2583, %v2599
  %2603 = vrot.lane.b32.xlu0 %v2601, 80
  %v2604 = vpop.permute.xlu0 %2603
  %2606 = vst.msk [vmem:[#allocation6 + $0x1] sm:$0x1] %vm1013, %v2604
  %v2607 = vld [vmem:[#allocation3 + $0x4] sm:$0x1]
  %2608 = vrot.lane.b32.xlu0 %v2497, 80
  %v2609 = vpop.permute.xlu0 %2608
  %v2610 = vsel %vm2298, %v2609, 0
  %2612 = vmatprep.subr.mxu0 0.0
  %2613 = vmatpush1.msra.mxu0 %v2133
  %2614 = vmatprep.subr.mxu0 0.0
  %2615 = vmatpush1.msra.mxu0 %v2134
  %2616 = vmatprep.subr.mxu0 0.0
  %2617 = vmatpush1.msra.mxu0 0.0
  %2618 = vmatprep.subr.mxu0 0.0
  %2619 = vmatpush1.msra.mxu0 0.0
  %2620 = vmatprep.subr.mxu0 0.0
  %2621 = vmatpush1.msra.mxu0 0.0
  %2622 = vmatprep.subr.mxu0 0.0
  %2623 = vmatpush1.msra.mxu0 0.0
  %2624 = vmatprep.subr.mxu0 0.0
  %2625 = vmatpush1.msra.mxu0 0.0
  %2626 = vmatprep.subr.mxu0 0.0
  %2627 = vmatpush1.msra.mxu0 0.0
  %2628 = vmatprep.subr.mxu0 0.0
  %2629 = vmatpush1.msra.mxu0 0.0
  %2630 = vmatprep.subr.mxu0 0.0
  %2631 = vmatpush1.msra.mxu0 0.0
  %2632 = vmatprep.subr.mxu0 0.0
  %2633 = vmatpush1.msra.mxu0 0.0
  %2634 = vmatprep.subr.mxu0 0.0
  %2635 = vmatpush1.msra.mxu0 0.0
  %2636 = vmatprep.subr.mxu0 0.0
  %2637 = vmatpush1.msra.mxu0 0.0
  %2638 = vmatprep.subr.mxu0 0.0
  %2639 = vmatpush1.msra.mxu0 0.0
  %2640 = vmatprep.subr.mxu0 0.0
  %2641 = vmatpush1.msra.mxu0 0.0
  %2642 = vmatprep.subr.mxu0 0.0
  %2643 = vmatpush1.msra.mxu0 0.0
  %2644 = vmatprep.subr.mxu0 0.0
  %2645 = vmatpush1.msra.mxu0 0.0
  %2646 = vmatprep.subr.mxu0 0.0
  %2647 = vmatpush1.msra.mxu0 0.0
  %2648 = vmatprep.subr.mxu0 0.0
  %2649 = vmatpush1.msra.mxu0 0.0
  %2650 = vmatprep.subr.mxu0 0.0
  %2651 = vmatpush1.msra.mxu0 0.0
  %2652 = vmatprep.subr.mxu0 0.0
  %2653 = vmatpush1.msra.mxu0 0.0
  %2654 = vmatprep.subr.mxu0 0.0
  %2655 = vmatpush1.msra.mxu0 0.0
  %2656 = vmatprep.subr.mxu0 0.0
  %2657 = vmatpush1.msra.mxu0 0.0
  %2658 = vmatprep.subr.mxu0 0.0
  %2659 = vmatpush1.msra.mxu0 0.0
  %2660 = vmatprep.subr.mxu0 0.0
  %2661 = vmatpush1.msra.mxu0 0.0
  %2662 = vmatprep.subr.mxu0 0.0
  %2663 = vmatpush1.msra.mxu0 0.0
  %2664 = vmatprep.subr.mxu0 0.0
  %2665 = vmatpush1.msra.mxu0 0.0
  %2666 = vmatprep.subr.mxu0 0.0
  %2667 = vmatpush1.msra.mxu0 0.0
  %2668 = vmatprep.subr.mxu0 0.0
  %2669 = vmatpush1.msra.mxu0 0.0
  %2670 = vmatprep.subr.mxu0 0.0
  %2671 = vmatpush1.msra.mxu0 0.0
  %2672 = vmatprep.subr.mxu0 0.0
  %2673 = vmatpush1.msra.mxu0 0.0
  %2674 = vmatprep.subr.mxu0 0.0
  %2675 = vmatpush1.msra.mxu0 0.0
  %2676 = vmatprep.mubr.f32.mxu0 0.0
  %2677 = vmatmul.mubr.f32.gmra.mrb[0].mxu0 %v2610
  %v2678 = vpop.f32.mrb[0].mxu0
  %v2679 = vadd.f32 0.0, %v2678
  %v2680 = vpop.f32.mrb[0].mxu0
  %2681 = vdwg.mxu0
  %v2682 = vadd.f32 %v2607, %v2679
  %v2683 = vxor.u32 %v2682, 2147483648
  %v2684 = vmul.f32 %v2683, 1.442695
  %v2685 = vpow.pop %v2684
  %v2686 = vadd.f32 %v2685, 1.0
  %v2687 = vrcp.pop %v2686
  %v2688 = vmul.f32 1.0, %v2687
  %v2689 = vtanh.pop %v2682
  %v2690 = vmul.f32 %v2688, %v2491
  %2692 = vrot.lane.b32.xlu0 %v2689, 96
  %v2693 = vpop.permute.xlu0 %2692
  %v2695 = vmul.f32 %v2688, %v2693
  %2697 = vrot.lane.b32.xlu0 %v2695, 16
  %v2698 = vpop.permute.xlu0 %2697
  %v2700 = vadd.f32 %v2690, %v2698
  %v2701 = vtanh.pop %v2700
  %2703 = vrot.lane.b32.xlu0 %v2701, 32
  %v2704 = vpop.permute.xlu0 %2703
  %v2706 = vmul.f32 %v2688, %v2704
  %2708 = vrot.lane.b32.xlu0 %v2706, 96
  %v2709 = vpop.permute.xlu0 %2708
  %2711 = vst.msk [vmem:[#allocation6 + $0x4] sm:$0x1] %vm2502, %v2709
  %v2712 = vld [vmem:[#allocation2 + $0x2] sm:$0x1]
  %v2713 = vsel %vm2298, %v2604, 0
  %2715 = vmatprep.subr.mxu0 0.0
  %2716 = vmatpush1.msra.mxu0 %v2130
  %2717 = vmatprep.subr.mxu0 0.0
  %2718 = vmatpush1.msra.mxu0 %v2131
  %2719 = vmatprep.subr.mxu0 0.0
  %2720 = vmatpush1.msra.mxu0 0.0
  %2721 = vmatprep.subr.mxu0 0.0
  %2722 = vmatpush1.msra.mxu0 0.0
  %2723 = vmatprep.subr.mxu0 0.0
  %2724 = vmatpush1.msra.mxu0 0.0
  %2725 = vmatprep.subr.mxu0 0.0
  %2726 = vmatpush1.msra.mxu0 0.0
  %2727 = vmatprep.subr.mxu0 0.0
  %2728 = vmatpush1.msra.mxu0 0.0
  %2729 = vmatprep.subr.mxu0 0.0
  %2730 = vmatpush1.msra.mxu0 0.0
  %2731 = vmatprep.subr.mxu0 0.0
  %2732 = vmatpush1.msra.mxu0 0.0
  %2733 = vmatprep.subr.mxu0 0.0
  %2734 = vmatpush1.msra.mxu0 0.0
  %2735 = vmatprep.subr.mxu0 0.0
  %2736 = vmatpush1.msra.mxu0 0.0
  %2737 = vmatprep.subr.mxu0 0.0
  %2738 = vmatpush1.msra.mxu0 0.0
  %2739 = vmatprep.subr.mxu0 0.0
  %2740 = vmatpush1.msra.mxu0 0.0
  %2741 = vmatprep.subr.mxu0 0.0
  %2742 = vmatpush1.msra.mxu0 0.0
  %2743 = vmatprep.subr.mxu0 0.0
  %2744 = vmatpush1.msra.mxu0 0.0
  %2745 = vmatprep.subr.mxu0 0.0
  %2746 = vmatpush1.msra.mxu0 0.0
  %2747 = vmatprep.subr.mxu0 0.0
  %2748 = vmatpush1.msra.mxu0 0.0
  %2749 = vmatprep.subr.mxu0 0.0
  %2750 = vmatpush1.msra.mxu0 0.0
  %2751 = vmatprep.subr.mxu0 0.0
  %2752 = vmatpush1.msra.mxu0 0.0
  %2753 = vmatprep.subr.mxu0 0.0
  %2754 = vmatpush1.msra.mxu0 0.0
  %2755 = vmatprep.subr.mxu0 0.0
  %2756 = vmatpush1.msra.mxu0 0.0
  %2757 = vmatprep.subr.mxu0 0.0
  %2758 = vmatpush1.msra.mxu0 0.0
  %2759 = vmatprep.subr.mxu0 0.0
  %2760 = vmatpush1.msra.mxu0 0.0
  %2761 = vmatprep.subr.mxu0 0.0
  %2762 = vmatpush1.msra.mxu0 0.0
  %2763 = vmatprep.subr.mxu0 0.0
  %2764 = vmatpush1.msra.mxu0 0.0
  %2765 = vmatprep.subr.mxu0 0.0
  %2766 = vmatpush1.msra.mxu0 0.0
  %2767 = vmatprep.subr.mxu0 0.0
  %2768 = vmatpush1.msra.mxu0 0.0
  %2769 = vmatprep.subr.mxu0 0.0
  %2770 = vmatpush1.msra.mxu0 0.0
  %2771 = vmatprep.subr.mxu0 0.0
  %2772 = vmatpush1.msra.mxu0 0.0
  %2773 = vmatprep.subr.mxu0 0.0
  %2774 = vmatpush1.msra.mxu0 0.0
  %2775 = vmatprep.subr.mxu0 0.0
  %2776 = vmatpush1.msra.mxu0 0.0
  %2777 = vmatprep.subr.mxu0 0.0
  %2778 = vmatpush1.msra.mxu0 0.0
  %2779 = vmatprep.mubr.f32.mxu0 0.0
  %2780 = vmatmul.mubr.f32.gmra.mrb[0].mxu0 %v2713
  %v2781 = vpop.f32.mrb[0].mxu0
  %v2782 = vadd.f32 0.0, %v2781
  %v2783 = vpop.f32.mrb[0].mxu0
  %2784 = vdwg.mxu0
  %v2785 = vadd.f32 %v2712, %v2782
  %v2786 = vxor.u32 %v2785, 2147483648
  %v2787 = vmul.f32 %v2786, 1.442695
  %v2788 = vpow.pop %v2787
  %v2789 = vadd.f32 %v2788, 1.0
  %v2790 = vrcp.pop %v2789
  %v2791 = vmul.f32 1.0, %v2790
  %v2792 = vtanh.pop %v2785
  %v2793 = vmul.f32 %v2791, %v2595
  %2795 = vrot.lane.b32.xlu0 %v2792, 96
  %v2796 = vpop.permute.xlu0 %2795
  %v2798 = vmul.f32 %v2791, %v2796
  %2800 = vrot.lane.b32.xlu0 %v2798, 16
  %v2801 = vpop.permute.xlu0 %2800
  %v2803 = vadd.f32 %v2793, %v2801
  %v2804 = vtanh.pop %v2803
  %2806 = vrot.lane.b32.xlu0 %v2804, 32
  %v2807 = vpop.permute.xlu0 %2806
  %v2809 = vmul.f32 %v2791, %v2807
  %2811 = vrot.lane.b32.xlu0 %v2809, 80
  %v2812 = vpop.permute.xlu0 %2811
  %2814 = vst.msk [vmem:[#allocation6 + $0x2] sm:$0x1] %vm1013, %v2812
  %v2815 = vld [vmem:[#allocation3 + $0x3] sm:$0x1]
  %2816 = vrot.lane.b32.xlu0 %v2706, 80
  %v2817 = vpop.permute.xlu0 %2816
  %v2818 = vsel %vm2298, %v2817, 0
  %2820 = vmatprep.subr.mxu0 0.0
  %2821 = vmatpush1.msra.mxu0 %v2133
  %2822 = vmatprep.subr.mxu0 0.0
  %2823 = vmatpush1.msra.mxu0 %v2134
  %2824 = vmatprep.subr.mxu0 0.0
  %2825 = vmatpush1.msra.mxu0 0.0
  %2826 = vmatprep.subr.mxu0 0.0
  %2827 = vmatpush1.msra.mxu0 0.0
  %2828 = vmatprep.subr.mxu0 0.0
  %2829 = vmatpush1.msra.mxu0 0.0
  %2830 = vmatprep.subr.mxu0 0.0
  %2831 = vmatpush1.msra.mxu0 0.0
  %2832 = vmatprep.subr.mxu0 0.0
  %2833 = vmatpush1.msra.mxu0 0.0
  %2834 = vmatprep.subr.mxu0 0.0
  %2835 = vmatpush1.msra.mxu0 0.0
  %2836 = vmatprep.subr.mxu0 0.0
  %2837 = vmatpush1.msra.mxu0 0.0
  %2838 = vmatprep.subr.mxu0 0.0
  %2839 = vmatpush1.msra.mxu0 0.0
  %2840 = vmatprep.subr.mxu0 0.0
  %2841 = vmatpush1.msra.mxu0 0.0
  %2842 = vmatprep.subr.mxu0 0.0
  %2843 = vmatpush1.msra.mxu0 0.0
  %2844 = vmatprep.subr.mxu0 0.0
  %2845 = vmatpush1.msra.mxu0 0.0
  %2846 = vmatprep.subr.mxu0 0.0
  %2847 = vmatpush1.msra.mxu0 0.0
  %2848 = vmatprep.subr.mxu0 0.0
  %2849 = vmatpush1.msra.mxu0 0.0
  %2850 = vmatprep.subr.mxu0 0.0
  %2851 = vmatpush1.msra.mxu0 0.0
  %2852 = vmatprep.subr.mxu0 0.0
  %2853 = vmatpush1.msra.mxu0 0.0
  %2854 = vmatprep.subr.mxu0 0.0
  %2855 = vmatpush1.msra.mxu0 0.0
  %2856 = vmatprep.subr.mxu0 0.0
  %2857 = vmatpush1.msra.mxu0 0.0
  %2858 = vmatprep.subr.mxu0 0.0
  %2859 = vmatpush1.msra.mxu0 0.0
  %2860 = vmatprep.subr.mxu0 0.0
  %2861 = vmatpush1.msra.mxu0 0.0
  %2862 = vmatprep.subr.mxu0 0.0
  %2863 = vmatpush1.msra.mxu0 0.0
  %2864 = vmatprep.subr.mxu0 0.0
  %2865 = vmatpush1.msra.mxu0 0.0
  %2866 = vmatprep.subr.mxu0 0.0
  %2867 = vmatpush1.msra.mxu0 0.0
  %2868 = vmatprep.subr.mxu0 0.0
  %2869 = vmatpush1.msra.mxu0 0.0
  %2870 = vmatprep.subr.mxu0 0.0
  %2871 = vmatpush1.msra.mxu0 0.0
  %2872 = vmatprep.subr.mxu0 0.0
  %2873 = vmatpush1.msra.mxu0 0.0
  %2874 = vmatprep.subr.mxu0 0.0
  %2875 = vmatpush1.msra.mxu0 0.0
  %2876 = vmatprep.subr.mxu0 0.0
  %2877 = vmatpush1.msra.mxu0 0.0
  %2878 = vmatprep.subr.mxu0 0.0
  %2879 = vmatpush1.msra.mxu0 0.0
  %2880 = vmatprep.subr.mxu0 0.0
  %2881 = vmatpush1.msra.mxu0 0.0
  %2882 = vmatprep.subr.mxu0 0.0
  %2883 = vmatpush1.msra.mxu0 0.0
  %2884 = vmatprep.mubr.f32.mxu0 0.0
  %2885 = vmatmul.mubr.f32.gmra.mrb[0].mxu0 %v2818
  %v2886 = vpop.f32.mrb[0].mxu0
  %v2887 = vadd.f32 0.0, %v2886
  %v2888 = vpop.f32.mrb[0].mxu0
  %2889 = vdwg.mxu0
  %v2890 = vadd.f32 %v2815, %v2887
  %v2891 = vxor.u32 %v2890, 2147483648
  %v2892 = vmul.f32 %v2891, 1.442695
  %v2893 = vpow.pop %v2892
  %v2894 = vadd.f32 %v2893, 1.0
  %v2895 = vrcp.pop %v2894
  %v2896 = vmul.f32 1.0, %v2895
  %v2897 = vtanh.pop %v2890
  %v2898 = vmul.f32 %v2896, %v2700
  %2900 = vrot.lane.b32.xlu0 %v2897, 96
  %v2901 = vpop.permute.xlu0 %2900
  %v2903 = vmul.f32 %v2896, %v2901
  %2905 = vrot.lane.b32.xlu0 %v2903, 16
  %v2906 = vpop.permute.xlu0 %2905
  %v2908 = vadd.f32 %v2898, %v2906
  %v2909 = vtanh.pop %v2908
  %2911 = vrot.lane.b32.xlu0 %v2909, 32
  %v2912 = vpop.permute.xlu0 %2911
  %v2914 = vmul.f32 %v2896, %v2912
  %2916 = vrot.lane.b32.xlu0 %v2914, 96
  %v2917 = vpop.permute.xlu0 %2916
  %2919 = vst.msk [vmem:[#allocation6 + $0x3] sm:$0x1] %vm2502, %v2917
  %v2920 = vld [vmem:[#allocation2 + $0x3] sm:$0x1]
  %v2921 = vsel %vm2298, %v2812, 0
  %2923 = vmatprep.subr.mxu0 0.0
  %2924 = vmatpush1.msra.mxu0 %v2130
  %2925 = vmatprep.subr.mxu0 0.0
  %2926 = vmatpush1.msra.mxu0 %v2131
  %2927 = vmatprep.subr.mxu0 0.0
  %2928 = vmatpush1.msra.mxu0 0.0
  %2929 = vmatprep.subr.mxu0 0.0
  %2930 = vmatpush1.msra.mxu0 0.0
  %2931 = vmatprep.subr.mxu0 0.0
  %2932 = vmatpush1.msra.mxu0 0.0
  %2933 = vmatprep.subr.mxu0 0.0
  %2934 = vmatpush1.msra.mxu0 0.0
  %2935 = vmatprep.subr.mxu0 0.0
  %2936 = vmatpush1.msra.mxu0 0.0
  %2937 = vmatprep.subr.mxu0 0.0
  %2938 = vmatpush1.msra.mxu0 0.0
  %2939 = vmatprep.subr.mxu0 0.0
  %2940 = vmatpush1.msra.mxu0 0.0
  %2941 = vmatprep.subr.mxu0 0.0
  %2942 = vmatpush1.msra.mxu0 0.0
  %2943 = vmatprep.subr.mxu0 0.0
  %2944 = vmatpush1.msra.mxu0 0.0
  %2945 = vmatprep.subr.mxu0 0.0
  %2946 = vmatpush1.msra.mxu0 0.0
  %2947 = vmatprep.subr.mxu0 0.0
  %2948 = vmatpush1.msra.mxu0 0.0
  %2949 = vmatprep.subr.mxu0 0.0
  %2950 = vmatpush1.msra.mxu0 0.0
  %2951 = vmatprep.subr.mxu0 0.0
  %2952 = vmatpush1.msra.mxu0 0.0
  %2953 = vmatprep.subr.mxu0 0.0
  %2954 = vmatpush1.msra.mxu0 0.0
  %2955 = vmatprep.subr.mxu0 0.0
  %2956 = vmatpush1.msra.mxu0 0.0
  %2957 = vmatprep.subr.mxu0 0.0
  %2958 = vmatpush1.msra.mxu0 0.0
  %2959 = vmatprep.subr.mxu0 0.0
  %2960 = vmatpush1.msra.mxu0 0.0
  %2961 = vmatprep.subr.mxu0 0.0
  %2962 = vmatpush1.msra.mxu0 0.0
  %2963 = vmatprep.subr.mxu0 0.0
  %2964 = vmatpush1.msra.mxu0 0.0
  %2965 = vmatprep.subr.mxu0 0.0
  %2966 = vmatpush1.msra.mxu0 0.0
  %2967 = vmatprep.subr.mxu0 0.0
  %2968 = vmatpush1.msra.mxu0 0.0
  %2969 = vmatprep.subr.mxu0 0.0
  %2970 = vmatpush1.msra.mxu0 0.0
  %2971 = vmatprep.subr.mxu0 0.0
  %2972 = vmatpush1.msra.mxu0 0.0
  %2973 = vmatprep.subr.mxu0 0.0
  %2974 = vmatpush1.msra.mxu0 0.0
  %2975 = vmatprep.subr.mxu0 0.0
  %2976 = vmatpush1.msra.mxu0 0.0
  %2977 = vmatprep.subr.mxu0 0.0
  %2978 = vmatpush1.msra.mxu0 0.0
  %2979 = vmatprep.subr.mxu0 0.0
  %2980 = vmatpush1.msra.mxu0 0.0
  %2981 = vmatprep.subr.mxu0 0.0
  %2982 = vmatpush1.msra.mxu0 0.0
  %2983 = vmatprep.subr.mxu0 0.0
  %2984 = vmatpush1.msra.mxu0 0.0
  %2985 = vmatprep.subr.mxu0 0.0
  %2986 = vmatpush1.msra.mxu0 0.0
  %2987 = vmatprep.mubr.f32.mxu0 0.0
  %2988 = vmatmul.mubr.f32.gmra.mrb[0].mxu0 %v2921
  %v2989 = vpop.f32.mrb[0].mxu0
  %v2990 = vadd.f32 0.0, %v2989
  %v2991 = vpop.f32.mrb[0].mxu0
  %2992 = vdwg.mxu0
  %v2993 = vadd.f32 %v2920, %v2990
  %v2994 = vxor.u32 %v2993, 2147483648
  %v2995 = vmul.f32 %v2994, 1.442695
  %v2996 = vpow.pop %v2995
  %v2997 = vadd.f32 %v2996, 1.0
  %v2998 = vrcp.pop %v2997
  %v2999 = vmul.f32 1.0, %v2998
  %v3000 = vtanh.pop %v2993
  %v3001 = vmul.f32 %v2999, %v2803
  %3003 = vrot.lane.b32.xlu0 %v3000, 96
  %v3004 = vpop.permute.xlu0 %3003
  %v3006 = vmul.f32 %v2999, %v3004
  %3008 = vrot.lane.b32.xlu0 %v3006, 16
  %v3009 = vpop.permute.xlu0 %3008
  %v3011 = vadd.f32 %v3001, %v3009
  %v3012 = vtanh.pop %v3011
  %3014 = vrot.lane.b32.xlu0 %v3012, 32
  %v3015 = vpop.permute.xlu0 %3014
  %v3017 = vmul.f32 %v2999, %v3015
  %3019 = vrot.lane.b32.xlu0 %v3017, 80
  %v3020 = vpop.permute.xlu0 %3019
  %3022 = vst.msk [vmem:[#allocation6 + $0x3] sm:$0x1] %vm1013, %v3020
  %v3023 = vld [vmem:[#allocation3 + $0x2] sm:$0x1]
  %3024 = vrot.lane.b32.xlu0 %v2914, 80
  %v3025 = vpop.permute.xlu0 %3024
  %v3026 = vsel %vm2298, %v3025, 0
  %3028 = vmatprep.subr.mxu0 0.0
  %3029 = vmatpush1.msra.mxu0 %v2133
  %3030 = vmatprep.subr.mxu0 0.0
  %3031 = vmatpush1.msra.mxu0 %v2134
  %3032 = vmatprep.subr.mxu0 0.0
  %3033 = vmatpush1.msra.mxu0 0.0
  %3034 = vmatprep.subr.mxu0 0.0
  %3035 = vmatpush1.msra.mxu0 0.0
  %3036 = vmatprep.subr.mxu0 0.0
  %3037 = vmatpush1.msra.mxu0 0.0
  %3038 = vmatprep.subr.mxu0 0.0
  %3039 = vmatpush1.msra.mxu0 0.0
  %3040 = vmatprep.subr.mxu0 0.0
  %3041 = vmatpush1.msra.mxu0 0.0
  %3042 = vmatprep.subr.mxu0 0.0
  %3043 = vmatpush1.msra.mxu0 0.0
  %3044 = vmatprep.subr.mxu0 0.0
  %3045 = vmatpush1.msra.mxu0 0.0
  %3046 = vmatprep.subr.mxu0 0.0
  %3047 = vmatpush1.msra.mxu0 0.0
  %3048 = vmatprep.subr.mxu0 0.0
  %3049 = vmatpush1.msra.mxu0 0.0
  %3050 = vmatprep.subr.mxu0 0.0
  %3051 = vmatpush1.msra.mxu0 0.0
  %3052 = vmatprep.subr.mxu0 0.0
  %3053 = vmatpush1.msra.mxu0 0.0
  %3054 = vmatprep.subr.mxu0 0.0
  %3055 = vmatpush1.msra.mxu0 0.0
  %3056 = vmatprep.subr.mxu0 0.0
  %3057 = vmatpush1.msra.mxu0 0.0
  %3058 = vmatprep.subr.mxu0 0.0
  %3059 = vmatpush1.msra.mxu0 0.0
  %3060 = vmatprep.subr.mxu0 0.0
  %3061 = vmatpush1.msra.mxu0 0.0
  %3062 = vmatprep.subr.mxu0 0.0
  %3063 = vmatpush1.msra.mxu0 0.0
  %3064 = vmatprep.subr.mxu0 0.0
  %3065 = vmatpush1.msra.mxu0 0.0
  %3066 = vmatprep.subr.mxu0 0.0
  %3067 = vmatpush1.msra.mxu0 0.0
  %3068 = vmatprep.subr.mxu0 0.0
  %3069 = vmatpush1.msra.mxu0 0.0
  %3070 = vmatprep.subr.mxu0 0.0
  %3071 = vmatpush1.msra.mxu0 0.0
  %3072 = vmatprep.subr.mxu0 0.0
  %3073 = vmatpush1.msra.mxu0 0.0
  %3074 = vmatprep.subr.mxu0 0.0
  %3075 = vmatpush1.msra.mxu0 0.0
  %3076 = vmatprep.subr.mxu0 0.0
  %3077 = vmatpush1.msra.mxu0 0.0
  %3078 = vmatprep.subr.mxu0 0.0
  %3079 = vmatpush1.msra.mxu0 0.0
  %3080 = vmatprep.subr.mxu0 0.0
  %3081 = vmatpush1.msra.mxu0 0.0
  %3082 = vmatprep.subr.mxu0 0.0
  %3083 = vmatpush1.msra.mxu0 0.0
  %3084 = vmatprep.subr.mxu0 0.0
  %3085 = vmatpush1.msra.mxu0 0.0
  %3086 = vmatprep.subr.mxu0 0.0
  %3087 = vmatpush1.msra.mxu0 0.0
  %3088 = vmatprep.subr.mxu0 0.0
  %3089 = vmatpush1.msra.mxu0 0.0
  %3090 = vmatprep.subr.mxu0 0.0
  %3091 = vmatpush1.msra.mxu0 0.0
  %3092 = vmatprep.mubr.f32.mxu0 0.0
  %3093 = vmatmul.mubr.f32.gmra.mrb[0].mxu0 %v3026
  %v3094 = vpop.f32.mrb[0].mxu0
  %v3095 = vadd.f32 0.0, %v3094
  %v3096 = vpop.f32.mrb[0].mxu0
  %3097 = vdwg.mxu0
  %v3098 = vadd.f32 %v3023, %v3095
  %v3099 = vxor.u32 %v3098, 2147483648
  %v3100 = vmul.f32 %v3099, 1.442695
  %v3101 = vpow.pop %v3100
  %v3102 = vadd.f32 %v3101, 1.0
  %v3103 = vrcp.pop %v3102
  %v3104 = vmul.f32 1.0, %v3103
  %v3105 = vtanh.pop %v3098
  %v3106 = vmul.f32 %v3104, %v2908
  %3108 = vrot.lane.b32.xlu0 %v3105, 96
  %v3109 = vpop.permute.xlu0 %3108
  %v3111 = vmul.f32 %v3104, %v3109
  %3113 = vrot.lane.b32.xlu0 %v3111, 16
  %v3114 = vpop.permute.xlu0 %3113
  %v3116 = vadd.f32 %v3106, %v3114
  %v3117 = vtanh.pop %v3116
  %3119 = vrot.lane.b32.xlu0 %v3117, 32
  %v3120 = vpop.permute.xlu0 %3119
  %v3122 = vmul.f32 %v3104, %v3120
  %3124 = vrot.lane.b32.xlu0 %v3122, 96
  %v3125 = vpop.permute.xlu0 %3124
  %3127 = vst.msk [vmem:[#allocation6 + $0x2] sm:$0x1] %vm2502, %v3125
  %v3128 = vld [vmem:[#allocation2 + $0x4] sm:$0x1]
  %v3129 = vsel %vm2298, %v3020, 0
  %3131 = vmatprep.subr.mxu0 0.0
  %3132 = vmatpush1.msra.mxu0 %v2130
  %3133 = vmatprep.subr.mxu0 0.0
  %3134 = vmatpush1.msra.mxu0 %v2131
  %3135 = vmatprep.subr.mxu0 0.0
  %3136 = vmatpush1.msra.mxu0 0.0
  %3137 = vmatprep.subr.mxu0 0.0
  %3138 = vmatpush1.msra.mxu0 0.0
  %3139 = vmatprep.subr.mxu0 0.0
  %3140 = vmatpush1.msra.mxu0 0.0
  %3141 = vmatprep.subr.mxu0 0.0
  %3142 = vmatpush1.msra.mxu0 0.0
  %3143 = vmatprep.subr.mxu0 0.0
  %3144 = vmatpush1.msra.mxu0 0.0
  %3145 = vmatprep.subr.mxu0 0.0
  %3146 = vmatpush1.msra.mxu0 0.0
  %3147 = vmatprep.subr.mxu0 0.0
  %3148 = vmatpush1.msra.mxu0 0.0
  %3149 = vmatprep.subr.mxu0 0.0
  %3150 = vmatpush1.msra.mxu0 0.0
  %3151 = vmatprep.subr.mxu0 0.0
  %3152 = vmatpush1.msra.mxu0 0.0
  %3153 = vmatprep.subr.mxu0 0.0
  %3154 = vmatpush1.msra.mxu0 0.0
  %3155 = vmatprep.subr.mxu0 0.0
  %3156 = vmatpush1.msra.mxu0 0.0
  %3157 = vmatprep.subr.mxu0 0.0
  %3158 = vmatpush1.msra.mxu0 0.0
  %3159 = vmatprep.subr.mxu0 0.0
  %3160 = vmatpush1.msra.mxu0 0.0
  %3161 = vmatprep.subr.mxu0 0.0
  %3162 = vmatpush1.msra.mxu0 0.0
  %3163 = vmatprep.subr.mxu0 0.0
  %3164 = vmatpush1.msra.mxu0 0.0
  %3165 = vmatprep.subr.mxu0 0.0
  %3166 = vmatpush1.msra.mxu0 0.0
  %3167 = vmatprep.subr.mxu0 0.0
  %3168 = vmatpush1.msra.mxu0 0.0
  %3169 = vmatprep.subr.mxu0 0.0
  %3170 = vmatpush1.msra.mxu0 0.0
  %3171 = vmatprep.subr.mxu0 0.0
  %3172 = vmatpush1.msra.mxu0 0.0
  %3173 = vmatprep.subr.mxu0 0.0
  %3174 = vmatpush1.msra.mxu0 0.0
  %3175 = vmatprep.subr.mxu0 0.0
  %3176 = vmatpush1.msra.mxu0 0.0
  %3177 = vmatprep.subr.mxu0 0.0
  %3178 = vmatpush1.msra.mxu0 0.0
  %3179 = vmatprep.subr.mxu0 0.0
  %3180 = vmatpush1.msra.mxu0 0.0
  %3181 = vmatprep.subr.mxu0 0.0
  %3182 = vmatpush1.msra.mxu0 0.0
  %3183 = vmatprep.subr.mxu0 0.0
  %3184 = vmatpush1.msra.mxu0 0.0
  %3185 = vmatprep.subr.mxu0 0.0
  %3186 = vmatpush1.msra.mxu0 0.0
  %3187 = vmatprep.subr.mxu0 0.0
  %3188 = vmatpush1.msra.mxu0 0.0
  %3189 = vmatprep.subr.mxu0 0.0
  %3190 = vmatpush1.msra.mxu0 0.0
  %3191 = vmatprep.subr.mxu0 0.0
  %3192 = vmatpush1.msra.mxu0 0.0
  %3193 = vmatprep.subr.mxu0 0.0
  %3194 = vmatpush1.msra.mxu0 0.0
  %3195 = vmatprep.mubr.f32.mxu0 0.0
  %3196 = vmatmul.mubr.f32.gmra.mrb[0].mxu0 %v3129
  %v3197 = vpop.f32.mrb[0].mxu0
  %v3198 = vadd.f32 0.0, %v3197
  %v3199 = vpop.f32.mrb[0].mxu0
  %3200 = vdwg.mxu0
  %v3201 = vadd.f32 %v3128, %v3198
  %v3202 = vxor.u32 %v3201, 2147483648
  %v3203 = vmul.f32 %v3202, 1.442695
  %v3204 = vpow.pop %v3203
  %v3205 = vadd.f32 %v3204, 1.0
  %v3206 = vrcp.pop %v3205
  %v3207 = vmul.f32 1.0, %v3206
  %v3208 = vtanh.pop %v3201
  %v3209 = vmul.f32 %v3207, %v3011
  %3211 = vrot.lane.b32.xlu0 %v3208, 96
  %v3212 = vpop.permute.xlu0 %3211
  %v3214 = vmul.f32 %v3207, %v3212
  %3216 = vrot.lane.b32.xlu0 %v3214, 16
  %v3217 = vpop.permute.xlu0 %3216
  %v3219 = vadd.f32 %v3209, %v3217
  %v3220 = vtanh.pop %v3219
  %3222 = vrot.lane.b32.xlu0 %v3220, 32
  %v3223 = vpop.permute.xlu0 %3222
  %v3225 = vmul.f32 %v3207, %v3223
  %3227 = vrot.lane.b32.xlu0 %v3225, 80
  %v3228 = vpop.permute.xlu0 %3227
  %3230 = vst.msk [vmem:[#allocation6 + $0x4] sm:$0x1] %vm1013, %v3228
  %v3231 = vld [vmem:[#allocation3 + $0x1] sm:$0x1]
  %3232 = vrot.lane.b32.xlu0 %v3122, 80
  %v3233 = vpop.permute.xlu0 %3232
  %v3234 = vsel %vm2298, %v3233, 0
  %3236 = vmatprep.subr.mxu0 0.0
  %3237 = vmatpush1.msra.mxu0 %v2133
  %3238 = vmatprep.subr.mxu0 0.0
  %3239 = vmatpush1.msra.mxu0 %v2134
  %3240 = vmatprep.subr.mxu0 0.0
  %3241 = vmatpush1.msra.mxu0 0.0
  %3242 = vmatprep.subr.mxu0 0.0
  %3243 = vmatpush1.msra.mxu0 0.0
  %3244 = vmatprep.subr.mxu0 0.0
  %3245 = vmatpush1.msra.mxu0 0.0
  %3246 = vmatprep.subr.mxu0 0.0
  %3247 = vmatpush1.msra.mxu0 0.0
  %3248 = vmatprep.subr.mxu0 0.0
  %3249 = vmatpush1.msra.mxu0 0.0
  %3250 = vmatprep.subr.mxu0 0.0
  %3251 = vmatpush1.msra.mxu0 0.0
  %3252 = vmatprep.subr.mxu0 0.0
  %3253 = vmatpush1.msra.mxu0 0.0
  %3254 = vmatprep.subr.mxu0 0.0
  %3255 = vmatpush1.msra.mxu0 0.0
  %3256 = vmatprep.subr.mxu0 0.0
  %3257 = vmatpush1.msra.mxu0 0.0
  %3258 = vmatprep.subr.mxu0 0.0
  %3259 = vmatpush1.msra.mxu0 0.0
  %3260 = vmatprep.subr.mxu0 0.0
  %3261 = vmatpush1.msra.mxu0 0.0
  %3262 = vmatprep.subr.mxu0 0.0
  %3263 = vmatpush1.msra.mxu0 0.0
  %3264 = vmatprep.subr.mxu0 0.0
  %3265 = vmatpush1.msra.mxu0 0.0
  %3266 = vmatprep.subr.mxu0 0.0
  %3267 = vmatpush1.msra.mxu0 0.0
  %3268 = vmatprep.subr.mxu0 0.0
  %3269 = vmatpush1.msra.mxu0 0.0
  %3270 = vmatprep.subr.mxu0 0.0
  %3271 = vmatpush1.msra.mxu0 0.0
  %3272 = vmatprep.subr.mxu0 0.0
  %3273 = vmatpush1.msra.mxu0 0.0
  %3274 = vmatprep.subr.mxu0 0.0
  %3275 = vmatpush1.msra.mxu0 0.0
  %3276 = vmatprep.subr.mxu0 0.0
  %3277 = vmatpush1.msra.mxu0 0.0
  %3278 = vmatprep.subr.mxu0 0.0
  %3279 = vmatpush1.msra.mxu0 0.0
  %3280 = vmatprep.subr.mxu0 0.0
  %3281 = vmatpush1.msra.mxu0 0.0
  %3282 = vmatprep.subr.mxu0 0.0
  %3283 = vmatpush1.msra.mxu0 0.0
  %3284 = vmatprep.subr.mxu0 0.0
  %3285 = vmatpush1.msra.mxu0 0.0
  %3286 = vmatprep.subr.mxu0 0.0
  %3287 = vmatpush1.msra.mxu0 0.0
  %3288 = vmatprep.subr.mxu0 0.0
  %3289 = vmatpush1.msra.mxu0 0.0
  %3290 = vmatprep.subr.mxu0 0.0
  %3291 = vmatpush1.msra.mxu0 0.0
  %3292 = vmatprep.subr.mxu0 0.0
  %3293 = vmatpush1.msra.mxu0 0.0
  %3294 = vmatprep.subr.mxu0 0.0
  %3295 = vmatpush1.msra.mxu0 0.0
  %3296 = vmatprep.subr.mxu0 0.0
  %3297 = vmatpush1.msra.mxu0 0.0
  %3298 = vmatprep.subr.mxu0 0.0
  %3299 = vmatpush1.msra.mxu0 0.0
  %3300 = vmatprep.mubr.f32.mxu0 0.0
  %3301 = vmatmul.mubr.f32.gmra.mrb[0].mxu0 %v3234
  %v3302 = vpop.f32.mrb[0].mxu0
  %v3303 = vadd.f32 0.0, %v3302
  %v3304 = vpop.f32.mrb[0].mxu0
  %3305 = vdwg.mxu0
  %v3306 = vadd.f32 %v3231, %v3303
  %v3307 = vxor.u32 %v3306, 2147483648
  %v3308 = vmul.f32 %v3307, 1.442695
  %v3309 = vpow.pop %v3308
  %v3310 = vadd.f32 %v3309, 1.0
  %v3311 = vrcp.pop %v3310
  %v3312 = vmul.f32 1.0, %v3311
  %v3313 = vtanh.pop %v3306
  %v3314 = vmul.f32 %v3312, %v3116
  %3316 = vrot.lane.b32.xlu0 %v3313, 96
  %v3317 = vpop.permute.xlu0 %3316
  %v3319 = vmul.f32 %v3312, %v3317
  %3321 = vrot.lane.b32.xlu0 %v3319, 16
  %v3322 = vpop.permute.xlu0 %3321
  %v3324 = vadd.f32 %v3314, %v3322
  %v3325 = vtanh.pop %v3324
  %3327 = vrot.lane.b32.xlu0 %v3325, 32
  %v3328 = vpop.permute.xlu0 %3327
  %v3330 = vmul.f32 %v3312, %v3328
  %3332 = vrot.lane.b32.xlu0 %v3330, 96
  %v3333 = vpop.permute.xlu0 %3332
  %3335 = vst.msk [vmem:[#allocation6 + $0x1] sm:$0x1] %vm2502, %v3333
  %v3336 = vld [vmem:[#allocation2 + $0x5] sm:$0x1]
  %v3337 = vsel %vm2298, %v3228, 0
  %3339 = vmatprep.subr.mxu0 0.0
  %3340 = vmatpush1.msra.mxu0 %v2130
  %3341 = vmatprep.subr.mxu0 0.0
  %3342 = vmatpush1.msra.mxu0 %v2131
  %3343 = vmatprep.subr.mxu0 0.0
  %3344 = vmatpush1.msra.mxu0 0.0
  %3345 = vmatprep.subr.mxu0 0.0
  %3346 = vmatpush1.msra.mxu0 0.0
  %3347 = vmatprep.subr.mxu0 0.0
  %3348 = vmatpush1.msra.mxu0 0.0
  %3349 = vmatprep.subr.mxu0 0.0
  %3350 = vmatpush1.msra.mxu0 0.0
  %3351 = vmatprep.subr.mxu0 0.0
  %3352 = vmatpush1.msra.mxu0 0.0
  %3353 = vmatprep.subr.mxu0 0.0
  %3354 = vmatpush1.msra.mxu0 0.0
  %3355 = vmatprep.subr.mxu0 0.0
  %3356 = vmatpush1.msra.mxu0 0.0
  %3357 = vmatprep.subr.mxu0 0.0
  %3358 = vmatpush1.msra.mxu0 0.0
  %3359 = vmatprep.subr.mxu0 0.0
  %3360 = vmatpush1.msra.mxu0 0.0
  %3361 = vmatprep.subr.mxu0 0.0
  %3362 = vmatpush1.msra.mxu0 0.0
  %3363 = vmatprep.subr.mxu0 0.0
  %3364 = vmatpush1.msra.mxu0 0.0
  %3365 = vmatprep.subr.mxu0 0.0
  %3366 = vmatpush1.msra.mxu0 0.0
  %3367 = vmatprep.subr.mxu0 0.0
  %3368 = vmatpush1.msra.mxu0 0.0
  %3369 = vmatprep.subr.mxu0 0.0
  %3370 = vmatpush1.msra.mxu0 0.0
  %3371 = vmatprep.subr.mxu0 0.0
  %3372 = vmatpush1.msra.mxu0 0.0
  %3373 = vmatprep.subr.mxu0 0.0
  %3374 = vmatpush1.msra.mxu0 0.0
  %3375 = vmatprep.subr.mxu0 0.0
  %3376 = vmatpush1.msra.mxu0 0.0
  %3377 = vmatprep.subr.mxu0 0.0
  %3378 = vmatpush1.msra.mxu0 0.0
  %3379 = vmatprep.subr.mxu0 0.0
  %3380 = vmatpush1.msra.mxu0 0.0
  %3381 = vmatprep.subr.mxu0 0.0
  %3382 = vmatpush1.msra.mxu0 0.0
  %3383 = vmatprep.subr.mxu0 0.0
  %3384 = vmatpush1.msra.mxu0 0.0
  %3385 = vmatprep.subr.mxu0 0.0
  %3386 = vmatpush1.msra.mxu0 0.0
  %3387 = vmatprep.subr.mxu0 0.0
  %3388 = vmatpush1.msra.mxu0 0.0
  %3389 = vmatprep.subr.mxu0 0.0
  %3390 = vmatpush1.msra.mxu0 0.0
  %3391 = vmatprep.subr.mxu0 0.0
  %3392 = vmatpush1.msra.mxu0 0.0
  %3393 = vmatprep.subr.mxu0 0.0
  %3394 = vmatpush1.msra.mxu0 0.0
  %3395 = vmatprep.subr.mxu0 0.0
  %3396 = vmatpush1.msra.mxu0 0.0
  %3397 = vmatprep.subr.mxu0 0.0
  %3398 = vmatpush1.msra.mxu0 0.0
  %3399 = vmatprep.subr.mxu0 0.0
  %3400 = vmatpush1.msra.mxu0 0.0
  %3401 = vmatprep.subr.mxu0 0.0
  %3402 = vmatpush1.msra.mxu0 0.0
  %3403 = vmatprep.mubr.f32.mxu0 0.0
  %3404 = vmatmul.mubr.f32.gmra.mrb[0].mxu0 %v3337
  %v3405 = vpop.f32.mrb[0].mxu0
  %v3406 = vadd.f32 0.0, %v3405
  %v3407 = vpop.f32.mrb[0].mxu0
  %3408 = vdwg.mxu0
  %v3409 = vadd.f32 %v3336, %v3406
  %v3410 = vxor.u32 %v3409, 2147483648
  %v3411 = vmul.f32 %v3410, 1.442695
  %v3412 = vpow.pop %v3411
  %v3413 = vadd.f32 %v3412, 1.0
  %v3414 = vrcp.pop %v3413
  %v3415 = vmul.f32 1.0, %v3414
  %v3416 = vtanh.pop %v3409
  %v3417 = vmul.f32 %v3415, %v3219
  %3419 = vrot.lane.b32.xlu0 %v3416, 96
  %v3420 = vpop.permute.xlu0 %3419
  %v3422 = vmul.f32 %v3415, %v3420
  %3424 = vrot.lane.b32.xlu0 %v3422, 16
  %v3425 = vpop.permute.xlu0 %3424
  %v3427 = vadd.f32 %v3417, %v3425
  %v3428 = vtanh.pop %v3427
  %3430 = vrot.lane.b32.xlu0 %v3428, 32
  %v3431 = vpop.permute.xlu0 %3430
  %v3433 = vmul.f32 %v3415, %v3431
  %3435 = vrot.lane.b32.xlu0 %v3433, 80
  %v3436 = vpop.permute.xlu0 %3435
  %3438 = vst.msk [vmem:[#allocation6 + $0x5] sm:$0x1] %vm1013, %v3436
  %v3439 = vld [vmem:[#allocation3] sm:$0x1]
  %3440 = vrot.lane.b32.xlu0 %v3330, 80
  %v3441 = vpop.permute.xlu0 %3440
  %v3442 = vsel %vm2298, %v3441, 0
  %3444 = vmatprep.subr.mxu0 0.0
  %3445 = vmatpush1.msra.mxu0 %v2133
  %3446 = vmatprep.subr.mxu0 0.0
  %3447 = vmatpush1.msra.mxu0 %v2134
  %3448 = vmatprep.subr.mxu0 0.0
  %3449 = vmatpush1.msra.mxu0 0.0
  %3450 = vmatprep.subr.mxu0 0.0
  %3451 = vmatpush1.msra.mxu0 0.0
  %3452 = vmatprep.subr.mxu0 0.0
  %3453 = vmatpush1.msra.mxu0 0.0
  %3454 = vmatprep.subr.mxu0 0.0
  %3455 = vmatpush1.msra.mxu0 0.0
  %3456 = vmatprep.subr.mxu0 0.0
  %3457 = vmatpush1.msra.mxu0 0.0
  %3458 = vmatprep.subr.mxu0 0.0
  %3459 = vmatpush1.msra.mxu0 0.0
  %3460 = vmatprep.subr.mxu0 0.0
  %3461 = vmatpush1.msra.mxu0 0.0
  %3462 = vmatprep.subr.mxu0 0.0
  %3463 = vmatpush1.msra.mxu0 0.0
  %3464 = vmatprep.subr.mxu0 0.0
  %3465 = vmatpush1.msra.mxu0 0.0
  %3466 = vmatprep.subr.mxu0 0.0
  %3467 = vmatpush1.msra.mxu0 0.0
  %3468 = vmatprep.subr.mxu0 0.0
  %3469 = vmatpush1.msra.mxu0 0.0
  %3470 = vmatprep.subr.mxu0 0.0
  %3471 = vmatpush1.msra.mxu0 0.0
  %3472 = vmatprep.subr.mxu0 0.0
  %3473 = vmatpush1.msra.mxu0 0.0
  %3474 = vmatprep.subr.mxu0 0.0
  %3475 = vmatpush1.msra.mxu0 0.0
  %3476 = vmatprep.subr.mxu0 0.0
  %3477 = vmatpush1.msra.mxu0 0.0
  %3478 = vmatprep.subr.mxu0 0.0
  %3479 = vmatpush1.msra.mxu0 0.0
  %3480 = vmatprep.subr.mxu0 0.0
  %3481 = vmatpush1.msra.mxu0 0.0
  %3482 = vmatprep.subr.mxu0 0.0
  %3483 = vmatpush1.msra.mxu0 0.0
  %3484 = vmatprep.subr.mxu0 0.0
  %3485 = vmatpush1.msra.mxu0 0.0
  %3486 = vmatprep.subr.mxu0 0.0
  %3487 = vmatpush1.msra.mxu0 0.0
  %3488 = vmatprep.subr.mxu0 0.0
  %3489 = vmatpush1.msra.mxu0 0.0
  %3490 = vmatprep.subr.mxu0 0.0
  %3491 = vmatpush1.msra.mxu0 0.0
  %3492 = vmatprep.subr.mxu0 0.0
  %3493 = vmatpush1.msra.mxu0 0.0
  %3494 = vmatprep.subr.mxu0 0.0
  %3495 = vmatpush1.msra.mxu0 0.0
  %3496 = vmatprep.subr.mxu0 0.0
  %3497 = vmatpush1.msra.mxu0 0.0
  %3498 = vmatprep.subr.mxu0 0.0
  %3499 = vmatpush1.msra.mxu0 0.0
  %3500 = vmatprep.subr.mxu0 0.0
  %3501 = vmatpush1.msra.mxu0 0.0
  %3502 = vmatprep.subr.mxu0 0.0
  %3503 = vmatpush1.msra.mxu0 0.0
  %3504 = vmatprep.subr.mxu0 0.0
  %3505 = vmatpush1.msra.mxu0 0.0
  %3506 = vmatprep.subr.mxu0 0.0
  %3507 = vmatpush1.msra.mxu0 0.0
  %3508 = vmatprep.mubr.f32.mxu0 0.0
  %3509 = vmatmul.mubr.f32.gmra.mrb[0].mxu0 %v3442
  %v3510 = vpop.f32.mrb[0].mxu0
  %v3511 = vadd.f32 0.0, %v3510
  %v3512 = vpop.f32.mrb[0].mxu0
  %3513 = vdwg.mxu0
  %v3514 = vadd.f32 %v3439, %v3511
  %v3515 = vxor.u32 %v3514, 2147483648
  %v3516 = vmul.f32 %v3515, 1.442695
  %v3517 = vpow.pop %v3516
  %v3518 = vadd.f32 %v3517, 1.0
  %v3519 = vrcp.pop %v3518
  %v3520 = vmul.f32 1.0, %v3519
  %v3521 = vtanh.pop %v3514
  %v3522 = vmul.f32 %v3520, %v3324
  %3524 = vrot.lane.b32.xlu0 %v3521, 96
  %v3525 = vpop.permute.xlu0 %3524
  %v3527 = vmul.f32 %v3520, %v3525
  %3529 = vrot.lane.b32.xlu0 %v3527, 16
  %v3530 = vpop.permute.xlu0 %3529
  %v3532 = vadd.f32 %v3522, %v3530
  %v3533 = vtanh.pop %v3532
  %3535 = vrot.lane.b32.xlu0 %v3533, 32
  %v3536 = vpop.permute.xlu0 %3535
  %v3538 = vmul.f32 %v3520, %v3536
  %3540 = vrot.lane.b32.xlu0 %v3538, 96
  %v3541 = vpop.permute.xlu0 %3540
  %3543 = vst.msk [vmem:[#allocation6] sm:$0x1] %vm2502, %v3541
  %s3544 = scalar_lea.vmem %s8, 96
  %v3545 = vld [vmem:[%s3544] sm:$0xff]
  %v3546 = vld [vmem:[%s3544 + $0x8] sm:$0xff]
  %v3547 = vld [vmem:[%s3544 + $0x10] sm:$0xff]
  %v3548 = vld [vmem:[%s3544 + $0x18] sm:$0xff]
  %v3549 = vld [vmem:[%s3544 + $0x20] sm:$0xff]
  %v3550 = vld [vmem:[%s3544 + $0x28] sm:$0xff]
  %s3551 = scalar_lea.vmem %s8, 144
  %v3552 = vld [vmem:[%s3551] sm:$0xff]
  %v3553 = vld [vmem:[%s3551 + $0x8] sm:$0xff]
  %v3554 = vld [vmem:[%s3551 + $0x10] sm:$0xff]
  %v3555 = vld [vmem:[%s3551 + $0x18] sm:$0xff]
  %v3556 = vld [vmem:[%s3551 + $0x20] sm:$0xff]
  %v3557 = vld [vmem:[%s3551 + $0x28] sm:$0xff]
  %s3558 = scalar_lea.vmem %s9, 32
  %v3559 = vld [vmem:[%s3558] sm:$0xff]
  %v3560 = vld [vmem:[%s3558 + $0x8] sm:$0xff]
  %s3561 = scalar_lea.vmem %s9, 48
  %v3562 = vld [vmem:[%s3561] sm:$0xff]
  %v3563 = vld [vmem:[%s3561 + $0x8] sm:$0xff]
  %s3564 = scalar_lea.vmem %s10, 2
  %v3565 = vld [vmem:[%s3564] sm:$0x1]
  %s3566 = scalar_lea.vmem %s10, 3
  %v3567 = vld [vmem:[%s3566] sm:$0x1]
  %v3569 = vlaneseq
  %v3570 = vshrl.u32 %v3569, 7
  %v3571 = vsub.s32 0, %v3570
  %v3572 = vrot.slane %v3565, %v3571
  %v3575 = vsel %vm2144, %v2115, 0
  %v3578 = vsel %vm2144, %v2116, 0
  %3580 = vmatprep.subr.mxu0 0.0
  %3581 = vmatpush1.msra.mxu0 %v3545
  %3582 = vmatprep.subr.mxu0 0.0
  %3583 = vmatpush1.msra.mxu0 %v3546
  %3584 = vmatprep.subr.mxu0 0.0
  %3585 = vmatpush1.msra.mxu0 %v3547
  %3586 = vmatprep.subr.mxu0 0.0
  %3587 = vmatpush1.msra.mxu0 %v3548
  %3588 = vmatprep.subr.mxu0 0.0
  %3589 = vmatpush1.msra.mxu0 %v3549
  %3590 = vmatprep.subr.mxu0 0.0
  %3591 = vmatpush1.msra.mxu0 %v3550
  %3592 = vmatprep.subr.mxu0 0.0
  %3593 = vmatpush1.msra.mxu0 0.0
  %3594 = vmatprep.subr.mxu0 0.0
  %3595 = vmatpush1.msra.mxu0 0.0
  %3596 = vmatprep.subr.mxu0 0.0
  %3597 = vmatpush1.msra.mxu0 0.0
  %3598 = vmatprep.subr.mxu0 0.0
  %3599 = vmatpush1.msra.mxu0 0.0
  %3600 = vmatprep.subr.mxu0 0.0
  %3601 = vmatpush1.msra.mxu0 0.0
  %3602 = vmatprep.subr.mxu0 0.0
  %3603 = vmatpush1.msra.mxu0 0.0
  %3604 = vmatprep.subr.mxu0 0.0
  %3605 = vmatpush1.msra.mxu0 0.0
  %3606 = vmatprep.subr.mxu0 0.0
  %3607 = vmatpush1.msra.mxu0 0.0
  %3608 = vmatprep.subr.mxu0 0.0
  %3609 = vmatpush1.msra.mxu0 0.0
  %3610 = vmatprep.subr.mxu0 0.0
  %3611 = vmatpush1.msra.mxu0 0.0
  %3612 = vmatprep.subr.mxu0 0.0
  %3613 = vmatpush1.msra.mxu0 0.0
  %3614 = vmatprep.subr.mxu0 0.0
  %3615 = vmatpush1.msra.mxu0 0.0
  %3616 = vmatprep.subr.mxu0 0.0
  %3617 = vmatpush1.msra.mxu0 0.0
  %3618 = vmatprep.subr.mxu0 0.0
  %3619 = vmatpush1.msra.mxu0 0.0
  %3620 = vmatprep.subr.mxu0 0.0
  %3621 = vmatpush1.msra.mxu0 0.0
  %3622 = vmatprep.subr.mxu0 0.0
  %3623 = vmatpush1.msra.mxu0 0.0
  %3624 = vmatprep.subr.mxu0 0.0
  %3625 = vmatpush1.msra.mxu0 0.0
  %3626 = vmatprep.subr.mxu0 0.0
  %3627 = vmatpush1.msra.mxu0 0.0
  %3628 = vmatprep.subr.mxu0 0.0
  %3629 = vmatpush1.msra.mxu0 0.0
  %3630 = vmatprep.subr.mxu0 0.0
  %3631 = vmatpush1.msra.mxu0 0.0
  %3632 = vmatprep.subr.mxu0 0.0
  %3633 = vmatpush1.msra.mxu0 0.0
  %3634 = vmatprep.subr.mxu0 0.0
  %3635 = vmatpush1.msra.mxu0 0.0
  %3636 = vmatprep.subr.mxu0 0.0
  %3637 = vmatpush1.msra.mxu0 0.0
  %3638 = vmatprep.subr.mxu0 0.0
  %3639 = vmatpush1.msra.mxu0 0.0
  %3640 = vmatprep.subr.mxu0 0.0
  %3641 = vmatpush1.msra.mxu0 0.0
  %3642 = vmatprep.subr.mxu0 0.0
  %3643 = vmatpush1.msra.mxu0 0.0
  %3644 = vmatprep.mubr.f32.mxu0 0.0
  %3645 = vmatmul.mubr.f32.gmra.mrb[0].mxu0 %v3575
  %v3646 = vpop.f32.mrb[0].mxu0
  %v3647 = vadd.f32 %v3572, %v3646
  %v3648 = vpop.f32.mrb[0].mxu0
  %3649 = vmatprep.mubr.f32.mxu0 0.0
  %3650 = vmatmul.mubr.f32.gmra.mrb[0].mxu0 %v3578
  %v3651 = vpop.f32.mrb[0].mxu0
  %v3652 = vadd.f32 %v3572, %v3651
  %v3653 = vpop.f32.mrb[0].mxu0
  %3654 = vdwg.mxu0
  %vm3655 = vcmask 523264
  %3656 = vst.msk [vmem:[#allocation4] sm:$0xff] %vm3655, %v3647
  %vm3657 = vcmask 517120
  %3658 = vst.msk [vmem:[#allocation4 + $0x8] sm:$0x3] %vm3657, %v3652
  %v3660 = vlaneseq
  %v3661 = vshrl.u32 %v3660, 7
  %v3662 = vsub.s32 0, %v3661
  %v3663 = vrot.slane %v3567, %v3662
  %3665 = vmatprep.subr.mxu0 0.0
  %3666 = vmatpush1.msra.mxu0 %v3552
  %3667 = vmatprep.subr.mxu0 0.0
  %3668 = vmatpush1.msra.mxu0 %v3553
  %3669 = vmatprep.subr.mxu0 0.0
  %3670 = vmatpush1.msra.mxu0 %v3554
  %3671 = vmatprep.subr.mxu0 0.0
  %3672 = vmatpush1.msra.mxu0 %v3555
  %3673 = vmatprep.subr.mxu0 0.0
  %3674 = vmatpush1.msra.mxu0 %v3556
  %3675 = vmatprep.subr.mxu0 0.0
  %3676 = vmatpush1.msra.mxu0 %v3557
  %3677 = vmatprep.subr.mxu0 0.0
  %3678 = vmatpush1.msra.mxu0 0.0
  %3679 = vmatprep.subr.mxu0 0.0
  %3680 = vmatpush1.msra.mxu0 0.0
  %3681 = vmatprep.subr.mxu0 0.0
  %3682 = vmatpush1.msra.mxu0 0.0
  %3683 = vmatprep.subr.mxu0 0.0
  %3684 = vmatpush1.msra.mxu0 0.0
  %3685 = vmatprep.subr.mxu0 0.0
  %3686 = vmatpush1.msra.mxu0 0.0
  %3687 = vmatprep.subr.mxu0 0.0
  %3688 = vmatpush1.msra.mxu0 0.0
  %3689 = vmatprep.subr.mxu0 0.0
  %3690 = vmatpush1.msra.mxu0 0.0
  %3691 = vmatprep.subr.mxu0 0.0
  %3692 = vmatpush1.msra.mxu0 0.0
  %3693 = vmatprep.subr.mxu0 0.0
  %3694 = vmatpush1.msra.mxu0 0.0
  %3695 = vmatprep.subr.mxu0 0.0
  %3696 = vmatpush1.msra.mxu0 0.0
  %3697 = vmatprep.subr.mxu0 0.0
  %3698 = vmatpush1.msra.mxu0 0.0
  %3699 = vmatprep.subr.mxu0 0.0
  %3700 = vmatpush1.msra.mxu0 0.0
  %3701 = vmatprep.subr.mxu0 0.0
  %3702 = vmatpush1.msra.mxu0 0.0
  %3703 = vmatprep.subr.mxu0 0.0
  %3704 = vmatpush1.msra.mxu0 0.0
  %3705 = vmatprep.subr.mxu0 0.0
  %3706 = vmatpush1.msra.mxu0 0.0
  %3707 = vmatprep.subr.mxu0 0.0
  %3708 = vmatpush1.msra.mxu0 0.0
  %3709 = vmatprep.subr.mxu0 0.0
  %3710 = vmatpush1.msra.mxu0 0.0
  %3711 = vmatprep.subr.mxu0 0.0
  %3712 = vmatpush1.msra.mxu0 0.0
  %3713 = vmatprep.subr.mxu0 0.0
  %3714 = vmatpush1.msra.mxu0 0.0
  %3715 = vmatprep.subr.mxu0 0.0
  %3716 = vmatpush1.msra.mxu0 0.0
  %3717 = vmatprep.subr.mxu0 0.0
  %3718 = vmatpush1.msra.mxu0 0.0
  %3719 = vmatprep.subr.mxu0 0.0
  %3720 = vmatpush1.msra.mxu0 0.0
  %3721 = vmatprep.subr.mxu0 0.0
  %3722 = vmatpush1.msra.mxu0 0.0
  %3723 = vmatprep.subr.mxu0 0.0
  %3724 = vmatpush1.msra.mxu0 0.0
  %3725 = vmatprep.subr.mxu0 0.0
  %3726 = vmatpush1.msra.mxu0 0.0
  %3727 = vmatprep.subr.mxu0 0.0
  %3728 = vmatpush1.msra.mxu0 0.0
  %3729 = vmatprep.mubr.f32.mxu0 0.0
  %3730 = vmatmul.mubr.f32.gmra.mrb[0].mxu0 %v3575
  %v3731 = vpop.f32.mrb[0].mxu0
  %v3732 = vadd.f32 %v3663, %v3731
  %v3733 = vpop.f32.mrb[0].mxu0
  %3734 = vmatprep.mubr.f32.mxu0 0.0
  %3735 = vmatmul.mubr.f32.gmra.mrb[0].mxu0 %v3578
  %v3736 = vpop.f32.mrb[0].mxu0
  %v3737 = vadd.f32 %v3663, %v3736
  %v3738 = vpop.f32.mrb[0].mxu0
  %3739 = vdwg.mxu0
  %3740 = vst.msk [vmem:[#allocation5] sm:$0xff] %vm3655, %v3732
  %3741 = vst.msk [vmem:[#allocation5 + $0x8] sm:$0x3] %vm3657, %v3737
  %v3742 = vld [vmem:[#allocation4] sm:$0x1]
  %3743 = vmatprep.subr.mxu0 0.0
  %3744 = vmatpush1.msra.mxu0 %v3559
  %3745 = vmatprep.subr.mxu0 0.0
  %3746 = vmatpush1.msra.mxu0 %v3560
  %3747 = vmatprep.subr.mxu0 0.0
  %3748 = vmatpush1.msra.mxu0 0.0
  %3749 = vmatprep.subr.mxu0 0.0
  %3750 = vmatpush1.msra.mxu0 0.0
  %3751 = vmatprep.subr.mxu0 0.0
  %3752 = vmatpush1.msra.mxu0 0.0
  %3753 = vmatprep.subr.mxu0 0.0
  %3754 = vmatpush1.msra.mxu0 0.0
  %3755 = vmatprep.subr.mxu0 0.0
  %3756 = vmatpush1.msra.mxu0 0.0
  %3757 = vmatprep.subr.mxu0 0.0
  %3758 = vmatpush1.msra.mxu0 0.0
  %3759 = vmatprep.subr.mxu0 0.0
  %3760 = vmatpush1.msra.mxu0 0.0
  %3761 = vmatprep.subr.mxu0 0.0
  %3762 = vmatpush1.msra.mxu0 0.0
  %3763 = vmatprep.subr.mxu0 0.0
  %3764 = vmatpush1.msra.mxu0 0.0
  %3765 = vmatprep.subr.mxu0 0.0
  %3766 = vmatpush1.msra.mxu0 0.0
  %3767 = vmatprep.subr.mxu0 0.0
  %3768 = vmatpush1.msra.mxu0 0.0
  %3769 = vmatprep.subr.mxu0 0.0
  %3770 = vmatpush1.msra.mxu0 0.0
  %3771 = vmatprep.subr.mxu0 0.0
  %3772 = vmatpush1.msra.mxu0 0.0
  %3773 = vmatprep.subr.mxu0 0.0
  %3774 = vmatpush1.msra.mxu0 0.0
  %3775 = vmatprep.subr.mxu0 0.0
  %3776 = vmatpush1.msra.mxu0 0.0
  %3777 = vmatprep.subr.mxu0 0.0
  %3778 = vmatpush1.msra.mxu0 0.0
  %3779 = vmatprep.subr.mxu0 0.0
  %3780 = vmatpush1.msra.mxu0 0.0
  %3781 = vmatprep.subr.mxu0 0.0
  %3782 = vmatpush1.msra.mxu0 0.0
  %3783 = vmatprep.subr.mxu0 0.0
  %3784 = vmatpush1.msra.mxu0 0.0
  %3785 = vmatprep.subr.mxu0 0.0
  %3786 = vmatpush1.msra.mxu0 0.0
  %3787 = vmatprep.subr.mxu0 0.0
  %3788 = vmatpush1.msra.mxu0 0.0
  %3789 = vmatprep.subr.mxu0 0.0
  %3790 = vmatpush1.msra.mxu0 0.0
  %3791 = vmatprep.subr.mxu0 0.0
  %3792 = vmatpush1.msra.mxu0 0.0
  %3793 = vmatprep.subr.mxu0 0.0
  %3794 = vmatpush1.msra.mxu0 0.0
  %3795 = vmatprep.subr.mxu0 0.0
  %3796 = vmatpush1.msra.mxu0 0.0
  %3797 = vmatprep.subr.mxu0 0.0
  %3798 = vmatpush1.msra.mxu0 0.0
  %3799 = vmatprep.subr.mxu0 0.0
  %3800 = vmatpush1.msra.mxu0 0.0
  %3801 = vmatprep.subr.mxu0 0.0
  %3802 = vmatpush1.msra.mxu0 0.0
  %3803 = vmatprep.subr.mxu0 0.0
  %3804 = vmatpush1.msra.mxu0 0.0
  %3805 = vmatprep.subr.mxu0 0.0
  %3806 = vmatpush1.msra.mxu0 0.0
  %3807 = vmatprep.mubr.f32.mxu0 0.0
  %3808 = vmatmul.mubr.f32.gmra.mrb[0].mxu0 %v2300
  %v3809 = vpop.f32.mrb[0].mxu0
  %v3810 = vadd.f32 0.0, %v3809
  %v3811 = vpop.f32.mrb[0].mxu0
  %3812 = vdwg.mxu0
  %v3813 = vadd.f32 %v3742, %v3810
  %v3814 = vxor.u32 %v3813, 2147483648
  %v3815 = vmul.f32 %v3814, 1.442695
  %v3816 = vpow.pop %v3815
  %v3817 = vadd.f32 %v3816, 1.0
  %v3818 = vrcp.pop %v3817
  %v3819 = vmul.f32 1.0, %v3818
  %v3820 = vtanh.pop %v3813
  %v3821 = vmul.f32 %v3819, 0.0
  %3823 = vrot.lane.b32.xlu0 %v3820, 96
  %v3824 = vpop.permute.xlu0 %3823
  %v3826 = vmul.f32 %v3819, %v3824
  %3828 = vrot.lane.b32.xlu0 %v3826, 16
  %v3829 = vpop.permute.xlu0 %3828
  %v3831 = vadd.f32 %v3821, %v3829
  %v3832 = vtanh.pop %v3831
  %3834 = vrot.lane.b32.xlu0 %v3832, 32
  %v3835 = vpop.permute.xlu0 %3834
  %v3837 = vmul.f32 %v3819, %v3835
  %3839 = vrot.lane.b32.xlu0 %v3837, 80
  %v3840 = vpop.permute.xlu0 %3839
  %3842 = vst.msk [vmem:[#allocation7] sm:$0x1] %vm1013, %v3840
  %v3843 = vld [vmem:[#allocation5 + $0x9] sm:$0x1]
  %3844 = vmatprep.subr.mxu0 0.0
  %3845 = vmatpush1.msra.mxu0 %v3562
  %3846 = vmatprep.subr.mxu0 0.0
  %3847 = vmatpush1.msra.mxu0 %v3563
  %3848 = vmatprep.subr.mxu0 0.0
  %3849 = vmatpush1.msra.mxu0 0.0
  %3850 = vmatprep.subr.mxu0 0.0
  %3851 = vmatpush1.msra.mxu0 0.0
  %3852 = vmatprep.subr.mxu0 0.0
  %3853 = vmatpush1.msra.mxu0 0.0
  %3854 = vmatprep.subr.mxu0 0.0
  %3855 = vmatpush1.msra.mxu0 0.0
  %3856 = vmatprep.subr.mxu0 0.0
  %3857 = vmatpush1.msra.mxu0 0.0
  %3858 = vmatprep.subr.mxu0 0.0
  %3859 = vmatpush1.msra.mxu0 0.0
  %3860 = vmatprep.subr.mxu0 0.0
  %3861 = vmatpush1.msra.mxu0 0.0
  %3862 = vmatprep.subr.mxu0 0.0
  %3863 = vmatpush1.msra.mxu0 0.0
  %3864 = vmatprep.subr.mxu0 0.0
  %3865 = vmatpush1.msra.mxu0 0.0
  %3866 = vmatprep.subr.mxu0 0.0
  %3867 = vmatpush1.msra.mxu0 0.0
  %3868 = vmatprep.subr.mxu0 0.0
  %3869 = vmatpush1.msra.mxu0 0.0
  %3870 = vmatprep.subr.mxu0 0.0
  %3871 = vmatpush1.msra.mxu0 0.0
  %3872 = vmatprep.subr.mxu0 0.0
  %3873 = vmatpush1.msra.mxu0 0.0
  %3874 = vmatprep.subr.mxu0 0.0
  %3875 = vmatpush1.msra.mxu0 0.0
  %3876 = vmatprep.subr.mxu0 0.0
  %3877 = vmatpush1.msra.mxu0 0.0
  %3878 = vmatprep.subr.mxu0 0.0
  %3879 = vmatpush1.msra.mxu0 0.0
  %3880 = vmatprep.subr.mxu0 0.0
  %3881 = vmatpush1.msra.mxu0 0.0
  %3882 = vmatprep.subr.mxu0 0.0
  %3883 = vmatpush1.msra.mxu0 0.0
  %3884 = vmatprep.subr.mxu0 0.0
  %3885 = vmatpush1.msra.mxu0 0.0
  %3886 = vmatprep.subr.mxu0 0.0
  %3887 = vmatpush1.msra.mxu0 0.0
  %3888 = vmatprep.subr.mxu0 0.0
  %3889 = vmatpush1.msra.mxu0 0.0
  %3890 = vmatprep.subr.mxu0 0.0
  %3891 = vmatpush1.msra.mxu0 0.0
  %3892 = vmatprep.subr.mxu0 0.0
  %3893 = vmatpush1.msra.mxu0 0.0
  %3894 = vmatprep.subr.mxu0 0.0
  %3895 = vmatpush1.msra.mxu0 0.0
  %3896 = vmatprep.subr.mxu0 0.0
  %3897 = vmatpush1.msra.mxu0 0.0
  %3898 = vmatprep.subr.mxu0 0.0
  %3899 = vmatpush1.msra.mxu0 0.0
  %3900 = vmatprep.subr.mxu0 0.0
  %3901 = vmatpush1.msra.mxu0 0.0
  %3902 = vmatprep.subr.mxu0 0.0
  %3903 = vmatpush1.msra.mxu0 0.0
  %3904 = vmatprep.subr.mxu0 0.0
  %3905 = vmatpush1.msra.mxu0 0.0
  %3906 = vmatprep.subr.mxu0 0.0
  %3907 = vmatpush1.msra.mxu0 0.0
  %3908 = vmatprep.mubr.f32.mxu0 0.0
  %3909 = vmatmul.mubr.f32.gmra.mrb[0].mxu0 %v2300
  %v3910 = vpop.f32.mrb[0].mxu0
  %v3911 = vadd.f32 0.0, %v3910
  %v3912 = vpop.f32.mrb[0].mxu0
  %3913 = vdwg.mxu0
  %v3914 = vadd.f32 %v3843, %v3911
  %v3915 = vxor.u32 %v3914, 2147483648
  %v3916 = vmul.f32 %v3915, 1.442695
  %v3917 = vpow.pop %v3916
  %v3918 = vadd.f32 %v3917, 1.0
  %v3919 = vrcp.pop %v3918
  %v3920 = vmul.f32 1.0, %v3919
  %v3921 = vtanh.pop %v3914
  %v3922 = vmul.f32 %v3920, 0.0
  %3924 = vrot.lane.b32.xlu0 %v3921, 96
  %v3925 = vpop.permute.xlu0 %3924
  %v3927 = vmul.f32 %v3920, %v3925
  %3929 = vrot.lane.b32.xlu0 %v3927, 16
  %v3930 = vpop.permute.xlu0 %3929
  %v3932 = vadd.f32 %v3922, %v3930
  %v3933 = vtanh.pop %v3932
  %3935 = vrot.lane.b32.xlu0 %v3933, 32
  %v3936 = vpop.permute.xlu0 %3935
  %v3938 = vmul.f32 %v3920, %v3936
  %3940 = vrot.lane.b32.xlu0 %v3938, 96
  %v3941 = vpop.permute.xlu0 %3940
  %3943 = vst.msk [vmem:[#allocation7 + $0x9] sm:$0x1] %vm2502, %v3941
  %v3944 = vld [vmem:[#allocation4 + $0x1] sm:$0x1]
  %v3945 = vsel %vm2298, %v3840, 0
  %3947 = vmatprep.subr.mxu0 0.0
  %3948 = vmatpush1.msra.mxu0 %v3559
  %3949 = vmatprep.subr.mxu0 0.0
  %3950 = vmatpush1.msra.mxu0 %v3560
  %3951 = vmatprep.subr.mxu0 0.0
  %3952 = vmatpush1.msra.mxu0 0.0
  %3953 = vmatprep.subr.mxu0 0.0
  %3954 = vmatpush1.msra.mxu0 0.0
  %3955 = vmatprep.subr.mxu0 0.0
  %3956 = vmatpush1.msra.mxu0 0.0
  %3957 = vmatprep.subr.mxu0 0.0
  %3958 = vmatpush1.msra.mxu0 0.0
  %3959 = vmatprep.subr.mxu0 0.0
  %3960 = vmatpush1.msra.mxu0 0.0
  %3961 = vmatprep.subr.mxu0 0.0
  %3962 = vmatpush1.msra.mxu0 0.0
  %3963 = vmatprep.subr.mxu0 0.0
  %3964 = vmatpush1.msra.mxu0 0.0
  %3965 = vmatprep.subr.mxu0 0.0
  %3966 = vmatpush1.msra.mxu0 0.0
  %3967 = vmatprep.subr.mxu0 0.0
  %3968 = vmatpush1.msra.mxu0 0.0
  %3969 = vmatprep.subr.mxu0 0.0
  %3970 = vmatpush1.msra.mxu0 0.0
  %3971 = vmatprep.subr.mxu0 0.0
  %3972 = vmatpush1.msra.mxu0 0.0
  %3973 = vmatprep.subr.mxu0 0.0
  %3974 = vmatpush1.msra.mxu0 0.0
  %3975 = vmatprep.subr.mxu0 0.0
  %3976 = vmatpush1.msra.mxu0 0.0
  %3977 = vmatprep.subr.mxu0 0.0
  %3978 = vmatpush1.msra.mxu0 0.0
  %3979 = vmatprep.subr.mxu0 0.0
  %3980 = vmatpush1.msra.mxu0 0.0
  %3981 = vmatprep.subr.mxu0 0.0
  %3982 = vmatpush1.msra.mxu0 0.0
  %3983 = vmatprep.subr.mxu0 0.0
  %3984 = vmatpush1.msra.mxu0 0.0
  %3985 = vmatprep.subr.mxu0 0.0
  %3986 = vmatpush1.msra.mxu0 0.0
  %3987 = vmatprep.subr.mxu0 0.0
  %3988 = vmatpush1.msra.mxu0 0.0
  %3989 = vmatprep.subr.mxu0 0.0
  %3990 = vmatpush1.msra.mxu0 0.0
  %3991 = vmatprep.subr.mxu0 0.0
  %3992 = vmatpush1.msra.mxu0 0.0
  %3993 = vmatprep.subr.mxu0 0.0
  %3994 = vmatpush1.msra.mxu0 0.0
  %3995 = vmatprep.subr.mxu0 0.0
  %3996 = vmatpush1.msra.mxu0 0.0
  %3997 = vmatprep.subr.mxu0 0.0
  %3998 = vmatpush1.msra.mxu0 0.0
  %3999 = vmatprep.subr.mxu0 0.0
  %4000 = vmatpush1.msra.mxu0 0.0
  %4001 = vmatprep.subr.mxu0 0.0
  %4002 = vmatpush1.msra.mxu0 0.0
  %4003 = vmatprep.subr.mxu0 0.0
  %4004 = vmatpush1.msra.mxu0 0.0
  %4005 = vmatprep.subr.mxu0 0.0
  %4006 = vmatpush1.msra.mxu0 0.0
  %4007 = vmatprep.subr.mxu0 0.0
  %4008 = vmatpush1.msra.mxu0 0.0
  %4009 = vmatprep.subr.mxu0 0.0
  %4010 = vmatpush1.msra.mxu0 0.0
  %4011 = vmatprep.mubr.f32.mxu0 0.0
  %4012 = vmatmul.mubr.f32.gmra.mrb[0].mxu0 %v3945
  %v4013 = vpop.f32.mrb[0].mxu0
  %v4014 = vadd.f32 0.0, %v4013
  %v4015 = vpop.f32.mrb[0].mxu0
  %4016 = vdwg.mxu0
  %v4017 = vadd.f32 %v3944, %v4014
  %v4018 = vxor.u32 %v4017, 2147483648
  %v4019 = vmul.f32 %v4018, 1.442695
  %v4020 = vpow.pop %v4019
  %v4021 = vadd.f32 %v4020, 1.0
  %v4022 = vrcp.pop %v4021
  %v4023 = vmul.f32 1.0, %v4022
  %v4024 = vtanh.pop %v4017
  %v4025 = vmul.f32 %v4023, %v3831
  %4027 = vrot.lane.b32.xlu0 %v4024, 96
  %v4028 = vpop.permute.xlu0 %4027
  %v4030 = vmul.f32 %v4023, %v4028
  %4032 = vrot.lane.b32.xlu0 %v4030, 16
  %v4033 = vpop.permute.xlu0 %4032
  %v4035 = vadd.f32 %v4025, %v4033
  %v4036 = vtanh.pop %v4035
  %4038 = vrot.lane.b32.xlu0 %v4036, 32
  %v4039 = vpop.permute.xlu0 %4038
  %v4041 = vmul.f32 %v4023, %v4039
  %4043 = vrot.lane.b32.xlu0 %v4041, 80
  %v4044 = vpop.permute.xlu0 %4043
  %4046 = vst.msk [vmem:[#allocation7 + $0x1] sm:$0x1] %vm1013, %v4044
  %v4047 = vld [vmem:[#allocation5 + $0x8] sm:$0x1]
  %4048 = vrot.lane.b32.xlu0 %v3938, 80
  %v4049 = vpop.permute.xlu0 %4048
  %v4050 = vsel %vm2298, %v4049, 0
  %4052 = vmatprep.subr.mxu0 0.0
  %4053 = vmatpush1.msra.mxu0 %v3562
  %4054 = vmatprep.subr.mxu0 0.0
  %4055 = vmatpush1.msra.mxu0 %v3563
  %4056 = vmatprep.subr.mxu0 0.0
  %4057 = vmatpush1.msra.mxu0 0.0
  %4058 = vmatprep.subr.mxu0 0.0
  %4059 = vmatpush1.msra.mxu0 0.0
  %4060 = vmatprep.subr.mxu0 0.0
  %4061 = vmatpush1.msra.mxu0 0.0
  %4062 = vmatprep.subr.mxu0 0.0
  %4063 = vmatpush1.msra.mxu0 0.0
  %4064 = vmatprep.subr.mxu0 0.0
  %4065 = vmatpush1.msra.mxu0 0.0
  %4066 = vmatprep.subr.mxu0 0.0
  %4067 = vmatpush1.msra.mxu0 0.0
  %4068 = vmatprep.subr.mxu0 0.0
  %4069 = vmatpush1.msra.mxu0 0.0
  %4070 = vmatprep.subr.mxu0 0.0
  %4071 = vmatpush1.msra.mxu0 0.0
  %4072 = vmatprep.subr.mxu0 0.0
  %4073 = vmatpush1.msra.mxu0 0.0
  %4074 = vmatprep.subr.mxu0 0.0
  %4075 = vmatpush1.msra.mxu0 0.0
  %4076 = vmatprep.subr.mxu0 0.0
  %4077 = vmatpush1.msra.mxu0 0.0
  %4078 = vmatprep.subr.mxu0 0.0
  %4079 = vmatpush1.msra.mxu0 0.0
  %4080 = vmatprep.subr.mxu0 0.0
  %4081 = vmatpush1.msra.mxu0 0.0
  %4082 = vmatprep.subr.mxu0 0.0
  %4083 = vmatpush1.msra.mxu0 0.0
  %4084 = vmatprep.subr.mxu0 0.0
  %4085 = vmatpush1.msra.mxu0 0.0
  %4086 = vmatprep.subr.mxu0 0.0
  %4087 = vmatpush1.msra.mxu0 0.0
  %4088 = vmatprep.subr.mxu0 0.0
  %4089 = vmatpush1.msra.mxu0 0.0
  %4090 = vmatprep.subr.mxu0 0.0
  %4091 = vmatpush1.msra.mxu0 0.0
  %4092 = vmatprep.subr.mxu0 0.0
  %4093 = vmatpush1.msra.mxu0 0.0
  %4094 = vmatprep.subr.mxu0 0.0
  %4095 = vmatpush1.msra.mxu0 0.0
  %4096 = vmatprep.subr.mxu0 0.0
  %4097 = vmatpush1.msra.mxu0 0.0
  %4098 = vmatprep.subr.mxu0 0.0
  %4099 = vmatpush1.msra.mxu0 0.0
  %4100 = vmatprep.subr.mxu0 0.0
  %4101 = vmatpush1.msra.mxu0 0.0
  %4102 = vmatprep.subr.mxu0 0.0
  %4103 = vmatpush1.msra.mxu0 0.0
  %4104 = vmatprep.subr.mxu0 0.0
  %4105 = vmatpush1.msra.mxu0 0.0
  %4106 = vmatprep.subr.mxu0 0.0
  %4107 = vmatpush1.msra.mxu0 0.0
  %4108 = vmatprep.subr.mxu0 0.0
  %4109 = vmatpush1.msra.mxu0 0.0
  %4110 = vmatprep.subr.mxu0 0.0
  %4111 = vmatpush1.msra.mxu0 0.0
  %4112 = vmatprep.subr.mxu0 0.0
  %4113 = vmatpush1.msra.mxu0 0.0
  %4114 = vmatprep.subr.mxu0 0.0
  %4115 = vmatpush1.msra.mxu0 0.0
  %4116 = vmatprep.mubr.f32.mxu0 0.0
  %4117 = vmatmul.mubr.f32.gmra.mrb[0].mxu0 %v4050
  %v4118 = vpop.f32.mrb[0].mxu0
  %v4119 = vadd.f32 0.0, %v4118
  %v4120 = vpop.f32.mrb[0].mxu0
  %4121 = vdwg.mxu0
  %v4122 = vadd.f32 %v4047, %v4119
  %v4123 = vxor.u32 %v4122, 2147483648
  %v4124 = vmul.f32 %v4123, 1.442695
  %v4125 = vpow.pop %v4124
  %v4126 = vadd.f32 %v4125, 1.0
  %v4127 = vrcp.pop %v4126
  %v4128 = vmul.f32 1.0, %v4127
  %v4129 = vtanh.pop %v4122
  %v4130 = vmul.f32 %v4128, %v3932
  %4132 = vrot.lane.b32.xlu0 %v4129, 96
  %v4133 = vpop.permute.xlu0 %4132
  %v4135 = vmul.f32 %v4128, %v4133
  %4137 = vrot.lane.b32.xlu0 %v4135, 16
  %v4138 = vpop.permute.xlu0 %4137
  %v4140 = vadd.f32 %v4130, %v4138
  %v4141 = vtanh.pop %v4140
  %4143 = vrot.lane.b32.xlu0 %v4141, 32
  %v4144 = vpop.permute.xlu0 %4143
  %v4146 = vmul.f32 %v4128, %v4144
  %4148 = vrot.lane.b32.xlu0 %v4146, 96
  %v4149 = vpop.permute.xlu0 %4148
  %4151 = vst.msk [vmem:[#allocation7 + $0x8] sm:$0x1] %vm2502, %v4149
  %v4152 = vld [vmem:[#allocation4 + $0x2] sm:$0x1]
  %v4153 = vsel %vm2298, %v4044, 0
  %4155 = vmatprep.subr.mxu0 0.0
  %4156 = vmatpush1.msra.mxu0 %v3559
  %4157 = vmatprep.subr.mxu0 0.0
  %4158 = vmatpush1.msra.mxu0 %v3560
  %4159 = vmatprep.subr.mxu0 0.0
  %4160 = vmatpush1.msra.mxu0 0.0
  %4161 = vmatprep.subr.mxu0 0.0
  %4162 = vmatpush1.msra.mxu0 0.0
  %4163 = vmatprep.subr.mxu0 0.0
  %4164 = vmatpush1.msra.mxu0 0.0
  %4165 = vmatprep.subr.mxu0 0.0
  %4166 = vmatpush1.msra.mxu0 0.0
  %4167 = vmatprep.subr.mxu0 0.0
  %4168 = vmatpush1.msra.mxu0 0.0
  %4169 = vmatprep.subr.mxu0 0.0
  %4170 = vmatpush1.msra.mxu0 0.0
  %4171 = vmatprep.subr.mxu0 0.0
  %4172 = vmatpush1.msra.mxu0 0.0
  %4173 = vmatprep.subr.mxu0 0.0
  %4174 = vmatpush1.msra.mxu0 0.0
  %4175 = vmatprep.subr.mxu0 0.0
  %4176 = vmatpush1.msra.mxu0 0.0
  %4177 = vmatprep.subr.mxu0 0.0
  %4178 = vmatpush1.msra.mxu0 0.0
  %4179 = vmatprep.subr.mxu0 0.0
  %4180 = vmatpush1.msra.mxu0 0.0
  %4181 = vmatprep.subr.mxu0 0.0
  %4182 = vmatpush1.msra.mxu0 0.0
  %4183 = vmatprep.subr.mxu0 0.0
  %4184 = vmatpush1.msra.mxu0 0.0
  %4185 = vmatprep.subr.mxu0 0.0
  %4186 = vmatpush1.msra.mxu0 0.0
  %4187 = vmatprep.subr.mxu0 0.0
  %4188 = vmatpush1.msra.mxu0 0.0
  %4189 = vmatprep.subr.mxu0 0.0
  %4190 = vmatpush1.msra.mxu0 0.0
  %4191 = vmatprep.subr.mxu0 0.0
  %4192 = vmatpush1.msra.mxu0 0.0
  %4193 = vmatprep.subr.mxu0 0.0
  %4194 = vmatpush1.msra.mxu0 0.0
  %4195 = vmatprep.subr.mxu0 0.0
  %4196 = vmatpush1.msra.mxu0 0.0
  %4197 = vmatprep.subr.mxu0 0.0
  %4198 = vmatpush1.msra.mxu0 0.0
  %4199 = vmatprep.subr.mxu0 0.0
  %4200 = vmatpush1.msra.mxu0 0.0
  %4201 = vmatprep.subr.mxu0 0.0
  %4202 = vmatpush1.msra.mxu0 0.0
  %4203 = vmatprep.subr.mxu0 0.0
  %4204 = vmatpush1.msra.mxu0 0.0
  %4205 = vmatprep.subr.mxu0 0.0
  %4206 = vmatpush1.msra.mxu0 0.0
  %4207 = vmatprep.subr.mxu0 0.0
  %4208 = vmatpush1.msra.mxu0 0.0
  %4209 = vmatprep.subr.mxu0 0.0
  %4210 = vmatpush1.msra.mxu0 0.0
  %4211 = vmatprep.subr.mxu0 0.0
  %4212 = vmatpush1.msra.mxu0 0.0
  %4213 = vmatprep.subr.mxu0 0.0
  %4214 = vmatpush1.msra.mxu0 0.0
  %4215 = vmatprep.subr.mxu0 0.0
  %4216 = vmatpush1.msra.mxu0 0.0
  %4217 = vmatprep.subr.mxu0 0.0
  %4218 = vmatpush1.msra.mxu0 0.0
  %4219 = vmatprep.mubr.f32.mxu0 0.0
  %4220 = vmatmul.mubr.f32.gmra.mrb[0].mxu0 %v4153
  %v4221 = vpop.f32.mrb[0].mxu0
  %v4222 = vadd.f32 0.0, %v4221
  %v4223 = vpop.f32.mrb[0].mxu0
  %4224 = vdwg.mxu0
  %v4225 = vadd.f32 %v4152, %v4222
  %v4226 = vxor.u32 %v4225, 2147483648
  %v4227 = vmul.f32 %v4226, 1.442695
  %v4228 = vpow.pop %v4227
  %v4229 = vadd.f32 %v4228, 1.0
  %v4230 = vrcp.pop %v4229
  %v4231 = vmul.f32 1.0, %v4230
  %v4232 = vtanh.pop %v4225
  %v4233 = vmul.f32 %v4231, %v4035
  %4235 = vrot.lane.b32.xlu0 %v4232, 96
  %v4236 = vpop.permute.xlu0 %4235
  %v4238 = vmul.f32 %v4231, %v4236
  %4240 = vrot.lane.b32.xlu0 %v4238, 16
  %v4241 = vpop.permute.xlu0 %4240
  %v4243 = vadd.f32 %v4233, %v4241
  %v4244 = vtanh.pop %v4243
  %4246 = vrot.lane.b32.xlu0 %v4244, 32
  %v4247 = vpop.permute.xlu0 %4246
  %v4249 = vmul.f32 %v4231, %v4247
  %4251 = vrot.lane.b32.xlu0 %v4249, 80
  %v4252 = vpop.permute.xlu0 %4251
  %4254 = vst.msk [vmem:[#allocation7 + $0x2] sm:$0x1] %vm1013, %v4252
  %v4255 = vld [vmem:[#allocation5 + $0x7] sm:$0x1]
  %4256 = vrot.lane.b32.xlu0 %v4146, 80
  %v4257 = vpop.permute.xlu0 %4256
  %v4258 = vsel %vm2298, %v4257, 0
  %4260 = vmatprep.subr.mxu0 0.0
  %4261 = vmatpush1.msra.mxu0 %v3562
  %4262 = vmatprep.subr.mxu0 0.0
  %4263 = vmatpush1.msra.mxu0 %v3563
  %4264 = vmatprep.subr.mxu0 0.0
  %4265 = vmatpush1.msra.mxu0 0.0
  %4266 = vmatprep.subr.mxu0 0.0
  %4267 = vmatpush1.msra.mxu0 0.0
  %4268 = vmatprep.subr.mxu0 0.0
  %4269 = vmatpush1.msra.mxu0 0.0
  %4270 = vmatprep.subr.mxu0 0.0
  %4271 = vmatpush1.msra.mxu0 0.0
  %4272 = vmatprep.subr.mxu0 0.0
  %4273 = vmatpush1.msra.mxu0 0.0
  %4274 = vmatprep.subr.mxu0 0.0
  %4275 = vmatpush1.msra.mxu0 0.0
  %4276 = vmatprep.subr.mxu0 0.0
  %4277 = vmatpush1.msra.mxu0 0.0
  %4278 = vmatprep.subr.mxu0 0.0
  %4279 = vmatpush1.msra.mxu0 0.0
  %4280 = vmatprep.subr.mxu0 0.0
  %4281 = vmatpush1.msra.mxu0 0.0
  %4282 = vmatprep.subr.mxu0 0.0
  %4283 = vmatpush1.msra.mxu0 0.0
  %4284 = vmatprep.subr.mxu0 0.0
  %4285 = vmatpush1.msra.mxu0 0.0
  %4286 = vmatprep.subr.mxu0 0.0
  %4287 = vmatpush1.msra.mxu0 0.0
  %4288 = vmatprep.subr.mxu0 0.0
  %4289 = vmatpush1.msra.mxu0 0.0
  %4290 = vmatprep.subr.mxu0 0.0
  %4291 = vmatpush1.msra.mxu0 0.0
  %4292 = vmatprep.subr.mxu0 0.0
  %4293 = vmatpush1.msra.mxu0 0.0
  %4294 = vmatprep.subr.mxu0 0.0
  %4295 = vmatpush1.msra.mxu0 0.0
  %4296 = vmatprep.subr.mxu0 0.0
  %4297 = vmatpush1.msra.mxu0 0.0
  %4298 = vmatprep.subr.mxu0 0.0
  %4299 = vmatpush1.msra.mxu0 0.0
  %4300 = vmatprep.subr.mxu0 0.0
  %4301 = vmatpush1.msra.mxu0 0.0
  %4302 = vmatprep.subr.mxu0 0.0
  %4303 = vmatpush1.msra.mxu0 0.0
  %4304 = vmatprep.subr.mxu0 0.0
  %4305 = vmatpush1.msra.mxu0 0.0
  %4306 = vmatprep.subr.mxu0 0.0
  %4307 = vmatpush1.msra.mxu0 0.0
  %4308 = vmatprep.subr.mxu0 0.0
  %4309 = vmatpush1.msra.mxu0 0.0
  %4310 = vmatprep.subr.mxu0 0.0
  %4311 = vmatpush1.msra.mxu0 0.0
  %4312 = vmatprep.subr.mxu0 0.0
  %4313 = vmatpush1.msra.mxu0 0.0
  %4314 = vmatprep.subr.mxu0 0.0
  %4315 = vmatpush1.msra.mxu0 0.0
  %4316 = vmatprep.subr.mxu0 0.0
  %4317 = vmatpush1.msra.mxu0 0.0
  %4318 = vmatprep.subr.mxu0 0.0
  %4319 = vmatpush1.msra.mxu0 0.0
  %4320 = vmatprep.subr.mxu0 0.0
  %4321 = vmatpush1.msra.mxu0 0.0
  %4322 = vmatprep.subr.mxu0 0.0
  %4323 = vmatpush1.msra.mxu0 0.0
  %4324 = vmatprep.mubr.f32.mxu0 0.0
  %4325 = vmatmul.mubr.f32.gmra.mrb[0].mxu0 %v4258
  %v4326 = vpop.f32.mrb[0].mxu0
  %v4327 = vadd.f32 0.0, %v4326
  %v4328 = vpop.f32.mrb[0].mxu0
  %4329 = vdwg.mxu0
  %v4330 = vadd.f32 %v4255, %v4327
  %v4331 = vxor.u32 %v4330, 2147483648
  %v4332 = vmul.f32 %v4331, 1.442695
  %v4333 = vpow.pop %v4332
  %v4334 = vadd.f32 %v4333, 1.0
  %v4335 = vrcp.pop %v4334
  %v4336 = vmul.f32 1.0, %v4335
  %v4337 = vtanh.pop %v4330
  %v4338 = vmul.f32 %v4336, %v4140
  %4340 = vrot.lane.b32.xlu0 %v4337, 96
  %v4341 = vpop.permute.xlu0 %4340
  %v4343 = vmul.f32 %v4336, %v4341
  %4345 = vrot.lane.b32.xlu0 %v4343, 16
  %v4346 = vpop.permute.xlu0 %4345
  %v4348 = vadd.f32 %v4338, %v4346
  %v4349 = vtanh.pop %v4348
  %4351 = vrot.lane.b32.xlu0 %v4349, 32
  %v4352 = vpop.permute.xlu0 %4351
  %v4354 = vmul.f32 %v4336, %v4352
  %4356 = vrot.lane.b32.xlu0 %v4354, 96
  %v4357 = vpop.permute.xlu0 %4356
  %4359 = vst.msk [vmem:[#allocation7 + $0x7] sm:$0x1] %vm2502, %v4357
  %v4360 = vld [vmem:[#allocation4 + $0x3] sm:$0x1]
  %v4361 = vsel %vm2298, %v4252, 0
  %4363 = vmatprep.subr.mxu0 0.0
  %4364 = vmatpush1.msra.mxu0 %v3559
  %4365 = vmatprep.subr.mxu0 0.0
  %4366 = vmatpush1.msra.mxu0 %v3560
  %4367 = vmatprep.subr.mxu0 0.0
  %4368 = vmatpush1.msra.mxu0 0.0
  %4369 = vmatprep.subr.mxu0 0.0
  %4370 = vmatpush1.msra.mxu0 0.0
  %4371 = vmatprep.subr.mxu0 0.0
  %4372 = vmatpush1.msra.mxu0 0.0
  %4373 = vmatprep.subr.mxu0 0.0
  %4374 = vmatpush1.msra.mxu0 0.0
  %4375 = vmatprep.subr.mxu0 0.0
  %4376 = vmatpush1.msra.mxu0 0.0
  %4377 = vmatprep.subr.mxu0 0.0
  %4378 = vmatpush1.msra.mxu0 0.0
  %4379 = vmatprep.subr.mxu0 0.0
  %4380 = vmatpush1.msra.mxu0 0.0
  %4381 = vmatprep.subr.mxu0 0.0
  %4382 = vmatpush1.msra.mxu0 0.0
  %4383 = vmatprep.subr.mxu0 0.0
  %4384 = vmatpush1.msra.mxu0 0.0
  %4385 = vmatprep.subr.mxu0 0.0
  %4386 = vmatpush1.msra.mxu0 0.0
  %4387 = vmatprep.subr.mxu0 0.0
  %4388 = vmatpush1.msra.mxu0 0.0
  %4389 = vmatprep.subr.mxu0 0.0
  %4390 = vmatpush1.msra.mxu0 0.0
  %4391 = vmatprep.subr.mxu0 0.0
  %4392 = vmatpush1.msra.mxu0 0.0
  %4393 = vmatprep.subr.mxu0 0.0
  %4394 = vmatpush1.msra.mxu0 0.0
  %4395 = vmatprep.subr.mxu0 0.0
  %4396 = vmatpush1.msra.mxu0 0.0
  %4397 = vmatprep.subr.mxu0 0.0
  %4398 = vmatpush1.msra.mxu0 0.0
  %4399 = vmatprep.subr.mxu0 0.0
  %4400 = vmatpush1.msra.mxu0 0.0
  %4401 = vmatprep.subr.mxu0 0.0
  %4402 = vmatpush1.msra.mxu0 0.0
  %4403 = vmatprep.subr.mxu0 0.0
  %4404 = vmatpush1.msra.mxu0 0.0
  %4405 = vmatprep.subr.mxu0 0.0
  %4406 = vmatpush1.msra.mxu0 0.0
  %4407 = vmatprep.subr.mxu0 0.0
  %4408 = vmatpush1.msra.mxu0 0.0
  %4409 = vmatprep.subr.mxu0 0.0
  %4410 = vmatpush1.msra.mxu0 0.0
  %4411 = vmatprep.subr.mxu0 0.0
  %4412 = vmatpush1.msra.mxu0 0.0
  %4413 = vmatprep.subr.mxu0 0.0
  %4414 = vmatpush1.msra.mxu0 0.0
  %4415 = vmatprep.subr.mxu0 0.0
  %4416 = vmatpush1.msra.mxu0 0.0
  %4417 = vmatprep.subr.mxu0 0.0
  %4418 = vmatpush1.msra.mxu0 0.0
  %4419 = vmatprep.subr.mxu0 0.0
  %4420 = vmatpush1.msra.mxu0 0.0
  %4421 = vmatprep.subr.mxu0 0.0
  %4422 = vmatpush1.msra.mxu0 0.0
  %4423 = vmatprep.subr.mxu0 0.0
  %4424 = vmatpush1.msra.mxu0 0.0
  %4425 = vmatprep.subr.mxu0 0.0
  %4426 = vmatpush1.msra.mxu0 0.0
  %4427 = vmatprep.mubr.f32.mxu0 0.0
  %4428 = vmatmul.mubr.f32.gmra.mrb[0].mxu0 %v4361
  %v4429 = vpop.f32.mrb[0].mxu0
  %v4430 = vadd.f32 0.0, %v4429
  %v4431 = vpop.f32.mrb[0].mxu0
  %4432 = vdwg.mxu0
  %v4433 = vadd.f32 %v4360, %v4430
  %v4434 = vxor.u32 %v4433, 2147483648
  %v4435 = vmul.f32 %v4434, 1.442695
  %v4436 = vpow.pop %v4435
  %v4437 = vadd.f32 %v4436, 1.0
  %v4438 = vrcp.pop %v4437
  %v4439 = vmul.f32 1.0, %v4438
  %v4440 = vtanh.pop %v4433
  %v4441 = vmul.f32 %v4439, %v4243
  %4443 = vrot.lane.b32.xlu0 %v4440, 96
  %v4444 = vpop.permute.xlu0 %4443
  %v4446 = vmul.f32 %v4439, %v4444
  %4448 = vrot.lane.b32.xlu0 %v4446, 16
  %v4449 = vpop.permute.xlu0 %4448
  %v4451 = vadd.f32 %v4441, %v4449
  %v4452 = vtanh.pop %v4451
  %4454 = vrot.lane.b32.xlu0 %v4452, 32
  %v4455 = vpop.permute.xlu0 %4454
  %v4457 = vmul.f32 %v4439, %v4455
  %4459 = vrot.lane.b32.xlu0 %v4457, 80
  %v4460 = vpop.permute.xlu0 %4459
  %4462 = vst.msk [vmem:[#allocation7 + $0x3] sm:$0x1] %vm1013, %v4460
  %v4463 = vld [vmem:[#allocation5 + $0x6] sm:$0x1]
  %4464 = vrot.lane.b32.xlu0 %v4354, 80
  %v4465 = vpop.permute.xlu0 %4464
  %v4466 = vsel %vm2298, %v4465, 0
  %4468 = vmatprep.subr.mxu0 0.0
  %4469 = vmatpush1.msra.mxu0 %v3562
  %4470 = vmatprep.subr.mxu0 0.0
  %4471 = vmatpush1.msra.mxu0 %v3563
  %4472 = vmatprep.subr.mxu0 0.0
  %4473 = vmatpush1.msra.mxu0 0.0
  %4474 = vmatprep.subr.mxu0 0.0
  %4475 = vmatpush1.msra.mxu0 0.0
  %4476 = vmatprep.subr.mxu0 0.0
  %4477 = vmatpush1.msra.mxu0 0.0
  %4478 = vmatprep.subr.mxu0 0.0
  %4479 = vmatpush1.msra.mxu0 0.0
  %4480 = vmatprep.subr.mxu0 0.0
  %4481 = vmatpush1.msra.mxu0 0.0
  %4482 = vmatprep.subr.mxu0 0.0
  %4483 = vmatpush1.msra.mxu0 0.0
  %4484 = vmatprep.subr.mxu0 0.0
  %4485 = vmatpush1.msra.mxu0 0.0
  %4486 = vmatprep.subr.mxu0 0.0
  %4487 = vmatpush1.msra.mxu0 0.0
  %4488 = vmatprep.subr.mxu0 0.0
  %4489 = vmatpush1.msra.mxu0 0.0
  %4490 = vmatprep.subr.mxu0 0.0
  %4491 = vmatpush1.msra.mxu0 0.0
  %4492 = vmatprep.subr.mxu0 0.0
  %4493 = vmatpush1.msra.mxu0 0.0
  %4494 = vmatprep.subr.mxu0 0.0
  %4495 = vmatpush1.msra.mxu0 0.0
  %4496 = vmatprep.subr.mxu0 0.0
  %4497 = vmatpush1.msra.mxu0 0.0
  %4498 = vmatprep.subr.mxu0 0.0
  %4499 = vmatpush1.msra.mxu0 0.0
  %4500 = vmatprep.subr.mxu0 0.0
  %4501 = vmatpush1.msra.mxu0 0.0
  %4502 = vmatprep.subr.mxu0 0.0
  %4503 = vmatpush1.msra.mxu0 0.0
  %4504 = vmatprep.subr.mxu0 0.0
  %4505 = vmatpush1.msra.mxu0 0.0
  %4506 = vmatprep.subr.mxu0 0.0
  %4507 = vmatpush1.msra.mxu0 0.0
  %4508 = vmatprep.subr.mxu0 0.0
  %4509 = vmatpush1.msra.mxu0 0.0
  %4510 = vmatprep.subr.mxu0 0.0
  %4511 = vmatpush1.msra.mxu0 0.0
  %4512 = vmatprep.subr.mxu0 0.0
  %4513 = vmatpush1.msra.mxu0 0.0
  %4514 = vmatprep.subr.mxu0 0.0
  %4515 = vmatpush1.msra.mxu0 0.0
  %4516 = vmatprep.subr.mxu0 0.0
  %4517 = vmatpush1.msra.mxu0 0.0
  %4518 = vmatprep.subr.mxu0 0.0
  %4519 = vmatpush1.msra.mxu0 0.0
  %4520 = vmatprep.subr.mxu0 0.0
  %4521 = vmatpush1.msra.mxu0 0.0
  %4522 = vmatprep.subr.mxu0 0.0
  %4523 = vmatpush1.msra.mxu0 0.0
  %4524 = vmatprep.subr.mxu0 0.0
  %4525 = vmatpush1.msra.mxu0 0.0
  %4526 = vmatprep.subr.mxu0 0.0
  %4527 = vmatpush1.msra.mxu0 0.0
  %4528 = vmatprep.subr.mxu0 0.0
  %4529 = vmatpush1.msra.mxu0 0.0
  %4530 = vmatprep.subr.mxu0 0.0
  %4531 = vmatpush1.msra.mxu0 0.0
  %4532 = vmatprep.mubr.f32.mxu0 0.0
  %4533 = vmatmul.mubr.f32.gmra.mrb[0].mxu0 %v4466
  %v4534 = vpop.f32.mrb[0].mxu0
  %v4535 = vadd.f32 0.0, %v4534
  %v4536 = vpop.f32.mrb[0].mxu0
  %4537 = vdwg.mxu0
  %v4538 = vadd.f32 %v4463, %v4535
  %v4539 = vxor.u32 %v4538, 2147483648
  %v4540 = vmul.f32 %v4539, 1.442695
  %v4541 = vpow.pop %v4540
  %v4542 = vadd.f32 %v4541, 1.0
  %v4543 = vrcp.pop %v4542
  %v4544 = vmul.f32 1.0, %v4543
  %v4545 = vtanh.pop %v4538
  %v4546 = vmul.f32 %v4544, %v4348
  %4548 = vrot.lane.b32.xlu0 %v4545, 96
  %v4549 = vpop.permute.xlu0 %4548
  %v4551 = vmul.f32 %v4544, %v4549
  %4553 = vrot.lane.b32.xlu0 %v4551, 16
  %v4554 = vpop.permute.xlu0 %4553
  %v4556 = vadd.f32 %v4546, %v4554
  %v4557 = vtanh.pop %v4556
  %4559 = vrot.lane.b32.xlu0 %v4557, 32
  %v4560 = vpop.permute.xlu0 %4559
  %v4562 = vmul.f32 %v4544, %v4560
  %4564 = vrot.lane.b32.xlu0 %v4562, 96
  %v4565 = vpop.permute.xlu0 %4564
  %4567 = vst.msk [vmem:[#allocation7 + $0x6] sm:$0x1] %vm2502, %v4565
  %v4568 = vld [vmem:[#allocation4 + $0x4] sm:$0x1]
  %v4569 = vsel %vm2298, %v4460, 0
  %4571 = vmatprep.subr.mxu0 0.0
  %4572 = vmatpush1.msra.mxu0 %v3559
  %4573 = vmatprep.subr.mxu0 0.0
  %4574 = vmatpush1.msra.mxu0 %v3560
  %4575 = vmatprep.subr.mxu0 0.0
  %4576 = vmatpush1.msra.mxu0 0.0
  %4577 = vmatprep.subr.mxu0 0.0
  %4578 = vmatpush1.msra.mxu0 0.0
  %4579 = vmatprep.subr.mxu0 0.0
  %4580 = vmatpush1.msra.mxu0 0.0
  %4581 = vmatprep.subr.mxu0 0.0
  %4582 = vmatpush1.msra.mxu0 0.0
  %4583 = vmatprep.subr.mxu0 0.0
  %4584 = vmatpush1.msra.mxu0 0.0
  %4585 = vmatprep.subr.mxu0 0.0
  %4586 = vmatpush1.msra.mxu0 0.0
  %4587 = vmatprep.subr.mxu0 0.0
  %4588 = vmatpush1.msra.mxu0 0.0
  %4589 = vmatprep.subr.mxu0 0.0
  %4590 = vmatpush1.msra.mxu0 0.0
  %4591 = vmatprep.subr.mxu0 0.0
  %4592 = vmatpush1.msra.mxu0 0.0
  %4593 = vmatprep.subr.mxu0 0.0
  %4594 = vmatpush1.msra.mxu0 0.0
  %4595 = vmatprep.subr.mxu0 0.0
  %4596 = vmatpush1.msra.mxu0 0.0
  %4597 = vmatprep.subr.mxu0 0.0
  %4598 = vmatpush1.msra.mxu0 0.0
  %4599 = vmatprep.subr.mxu0 0.0
  %4600 = vmatpush1.msra.mxu0 0.0
  %4601 = vmatprep.subr.mxu0 0.0
  %4602 = vmatpush1.msra.mxu0 0.0
  %4603 = vmatprep.subr.mxu0 0.0
  %4604 = vmatpush1.msra.mxu0 0.0
  %4605 = vmatprep.subr.mxu0 0.0
  %4606 = vmatpush1.msra.mxu0 0.0
  %4607 = vmatprep.subr.mxu0 0.0
  %4608 = vmatpush1.msra.mxu0 0.0
  %4609 = vmatprep.subr.mxu0 0.0
  %4610 = vmatpush1.msra.mxu0 0.0
  %4611 = vmatprep.subr.mxu0 0.0
  %4612 = vmatpush1.msra.mxu0 0.0
  %4613 = vmatprep.subr.mxu0 0.0
  %4614 = vmatpush1.msra.mxu0 0.0
  %4615 = vmatprep.subr.mxu0 0.0
  %4616 = vmatpush1.msra.mxu0 0.0
  %4617 = vmatprep.subr.mxu0 0.0
  %4618 = vmatpush1.msra.mxu0 0.0
  %4619 = vmatprep.subr.mxu0 0.0
  %4620 = vmatpush1.msra.mxu0 0.0
  %4621 = vmatprep.subr.mxu0 0.0
  %4622 = vmatpush1.msra.mxu0 0.0
  %4623 = vmatprep.subr.mxu0 0.0
  %4624 = vmatpush1.msra.mxu0 0.0
  %4625 = vmatprep.subr.mxu0 0.0
  %4626 = vmatpush1.msra.mxu0 0.0
  %4627 = vmatprep.subr.mxu0 0.0
  %4628 = vmatpush1.msra.mxu0 0.0
  %4629 = vmatprep.subr.mxu0 0.0
  %4630 = vmatpush1.msra.mxu0 0.0
  %4631 = vmatprep.subr.mxu0 0.0
  %4632 = vmatpush1.msra.mxu0 0.0
  %4633 = vmatprep.subr.mxu0 0.0
  %4634 = vmatpush1.msra.mxu0 0.0
  %4635 = vmatprep.mubr.f32.mxu0 0.0
  %4636 = vmatmul.mubr.f32.gmra.mrb[0].mxu0 %v4569
  %v4637 = vpop.f32.mrb[0].mxu0
  %v4638 = vadd.f32 0.0, %v4637
  %v4639 = vpop.f32.mrb[0].mxu0
  %4640 = vdwg.mxu0
  %v4641 = vadd.f32 %v4568, %v4638
  %v4642 = vxor.u32 %v4641, 2147483648
  %v4643 = vmul.f32 %v4642, 1.442695
  %v4644 = vpow.pop %v4643
  %v4645 = vadd.f32 %v4644, 1.0
  %v4646 = vrcp.pop %v4645
  %v4647 = vmul.f32 1.0, %v4646
  %v4648 = vtanh.pop %v4641
  %v4649 = vmul.f32 %v4647, %v4451
  %4651 = vrot.lane.b32.xlu0 %v4648, 96
  %v4652 = vpop.permute.xlu0 %4651
  %v4654 = vmul.f32 %v4647, %v4652
  %4656 = vrot.lane.b32.xlu0 %v4654, 16
  %v4657 = vpop.permute.xlu0 %4656
  %v4659 = vadd.f32 %v4649, %v4657
  %v4660 = vtanh.pop %v4659
  %4662 = vrot.lane.b32.xlu0 %v4660, 32
  %v4663 = vpop.permute.xlu0 %4662
  %v4665 = vmul.f32 %v4647, %v4663
  %4667 = vrot.lane.b32.xlu0 %v4665, 80
  %v4668 = vpop.permute.xlu0 %4667
  %4670 = vst.msk [vmem:[#allocation7 + $0x4] sm:$0x1] %vm1013, %v4668
  %v4671 = vld [vmem:[#allocation5 + $0x5] sm:$0x1]
  %4672 = vrot.lane.b32.xlu0 %v4562, 80
  %v4673 = vpop.permute.xlu0 %4672
  %v4674 = vsel %vm2298, %v4673, 0
  %4676 = vmatprep.subr.mxu0 0.0
  %4677 = vmatpush1.msra.mxu0 %v3562
  %4678 = vmatprep.subr.mxu0 0.0
  %4679 = vmatpush1.msra.mxu0 %v3563
  %4680 = vmatprep.subr.mxu0 0.0
  %4681 = vmatpush1.msra.mxu0 0.0
  %4682 = vmatprep.subr.mxu0 0.0
  %4683 = vmatpush1.msra.mxu0 0.0
  %4684 = vmatprep.subr.mxu0 0.0
  %4685 = vmatpush1.msra.mxu0 0.0
  %4686 = vmatprep.subr.mxu0 0.0
  %4687 = vmatpush1.msra.mxu0 0.0
  %4688 = vmatprep.subr.mxu0 0.0
  %4689 = vmatpush1.msra.mxu0 0.0
  %4690 = vmatprep.subr.mxu0 0.0
  %4691 = vmatpush1.msra.mxu0 0.0
  %4692 = vmatprep.subr.mxu0 0.0
  %4693 = vmatpush1.msra.mxu0 0.0
  %4694 = vmatprep.subr.mxu0 0.0
  %4695 = vmatpush1.msra.mxu0 0.0
  %4696 = vmatprep.subr.mxu0 0.0
  %4697 = vmatpush1.msra.mxu0 0.0
  %4698 = vmatprep.subr.mxu0 0.0
  %4699 = vmatpush1.msra.mxu0 0.0
  %4700 = vmatprep.subr.mxu0 0.0
  %4701 = vmatpush1.msra.mxu0 0.0
  %4702 = vmatprep.subr.mxu0 0.0
  %4703 = vmatpush1.msra.mxu0 0.0
  %4704 = vmatprep.subr.mxu0 0.0
  %4705 = vmatpush1.msra.mxu0 0.0
  %4706 = vmatprep.subr.mxu0 0.0
  %4707 = vmatpush1.msra.mxu0 0.0
  %4708 = vmatprep.subr.mxu0 0.0
  %4709 = vmatpush1.msra.mxu0 0.0
  %4710 = vmatprep.subr.mxu0 0.0
  %4711 = vmatpush1.msra.mxu0 0.0
  %4712 = vmatprep.subr.mxu0 0.0
  %4713 = vmatpush1.msra.mxu0 0.0
  %4714 = vmatprep.subr.mxu0 0.0
  %4715 = vmatpush1.msra.mxu0 0.0
  %4716 = vmatprep.subr.mxu0 0.0
  %4717 = vmatpush1.msra.mxu0 0.0
  %4718 = vmatprep.subr.mxu0 0.0
  %4719 = vmatpush1.msra.mxu0 0.0
  %4720 = vmatprep.subr.mxu0 0.0
  %4721 = vmatpush1.msra.mxu0 0.0
  %4722 = vmatprep.subr.mxu0 0.0
  %4723 = vmatpush1.msra.mxu0 0.0
  %4724 = vmatprep.subr.mxu0 0.0
  %4725 = vmatpush1.msra.mxu0 0.0
  %4726 = vmatprep.subr.mxu0 0.0
  %4727 = vmatpush1.msra.mxu0 0.0
  %4728 = vmatprep.subr.mxu0 0.0
  %4729 = vmatpush1.msra.mxu0 0.0
  %4730 = vmatprep.subr.mxu0 0.0
  %4731 = vmatpush1.msra.mxu0 0.0
  %4732 = vmatprep.subr.mxu0 0.0
  %4733 = vmatpush1.msra.mxu0 0.0
  %4734 = vmatprep.subr.mxu0 0.0
  %4735 = vmatpush1.msra.mxu0 0.0
  %4736 = vmatprep.subr.mxu0 0.0
  %4737 = vmatpush1.msra.mxu0 0.0
  %4738 = vmatprep.subr.mxu0 0.0
  %4739 = vmatpush1.msra.mxu0 0.0
  %4740 = vmatprep.mubr.f32.mxu0 0.0
  %4741 = vmatmul.mubr.f32.gmra.mrb[0].mxu0 %v4674
  %v4742 = vpop.f32.mrb[0].mxu0
  %v4743 = vadd.f32 0.0, %v4742
  %v4744 = vpop.f32.mrb[0].mxu0
  %4745 = vdwg.mxu0
  %v4746 = vadd.f32 %v4671, %v4743
  %v4747 = vxor.u32 %v4746, 2147483648
  %v4748 = vmul.f32 %v4747, 1.442695
  %v4749 = vpow.pop %v4748
  %v4750 = vadd.f32 %v4749, 1.0
  %v4751 = vrcp.pop %v4750
  %v4752 = vmul.f32 1.0, %v4751
  %v4753 = vtanh.pop %v4746
  %v4754 = vmul.f32 %v4752, %v4556
  %4756 = vrot.lane.b32.xlu0 %v4753, 96
  %v4757 = vpop.permute.xlu0 %4756
  %v4759 = vmul.f32 %v4752, %v4757
  %4761 = vrot.lane.b32.xlu0 %v4759, 16
  %v4762 = vpop.permute.xlu0 %4761
  %v4764 = vadd.f32 %v4754, %v4762
  %v4765 = vtanh.pop %v4764
  %4767 = vrot.lane.b32.xlu0 %v4765, 32
  %v4768 = vpop.permute.xlu0 %4767
  %v4770 = vmul.f32 %v4752, %v4768
  %4772 = vrot.lane.b32.xlu0 %v4770, 96
  %v4773 = vpop.permute.xlu0 %4772
  %4775 = vst.msk [vmem:[#allocation7 + $0x5] sm:$0x1] %vm2502, %v4773
  %v4776 = vld [vmem:[#allocation4 + $0x5] sm:$0x1]
  %v4777 = vsel %vm2298, %v4668, 0
  %4779 = vmatprep.subr.mxu0 0.0
  %4780 = vmatpush1.msra.mxu0 %v3559
  %4781 = vmatprep.subr.mxu0 0.0
  %4782 = vmatpush1.msra.mxu0 %v3560
  %4783 = vmatprep.subr.mxu0 0.0
  %4784 = vmatpush1.msra.mxu0 0.0
  %4785 = vmatprep.subr.mxu0 0.0
  %4786 = vmatpush1.msra.mxu0 0.0
  %4787 = vmatprep.subr.mxu0 0.0
  %4788 = vmatpush1.msra.mxu0 0.0
  %4789 = vmatprep.subr.mxu0 0.0
  %4790 = vmatpush1.msra.mxu0 0.0
  %4791 = vmatprep.subr.mxu0 0.0
  %4792 = vmatpush1.msra.mxu0 0.0
  %4793 = vmatprep.subr.mxu0 0.0
  %4794 = vmatpush1.msra.mxu0 0.0
  %4795 = vmatprep.subr.mxu0 0.0
  %4796 = vmatpush1.msra.mxu0 0.0
  %4797 = vmatprep.subr.mxu0 0.0
  %4798 = vmatpush1.msra.mxu0 0.0
  %4799 = vmatprep.subr.mxu0 0.0
  %4800 = vmatpush1.msra.mxu0 0.0
  %4801 = vmatprep.subr.mxu0 0.0
  %4802 = vmatpush1.msra.mxu0 0.0
  %4803 = vmatprep.subr.mxu0 0.0
  %4804 = vmatpush1.msra.mxu0 0.0
  %4805 = vmatprep.subr.mxu0 0.0
  %4806 = vmatpush1.msra.mxu0 0.0
  %4807 = vmatprep.subr.mxu0 0.0
  %4808 = vmatpush1.msra.mxu0 0.0
  %4809 = vmatprep.subr.mxu0 0.0
  %4810 = vmatpush1.msra.mxu0 0.0
  %4811 = vmatprep.subr.mxu0 0.0
  %4812 = vmatpush1.msra.mxu0 0.0
  %4813 = vmatprep.subr.mxu0 0.0
  %4814 = vmatpush1.msra.mxu0 0.0
  %4815 = vmatprep.subr.mxu0 0.0
  %4816 = vmatpush1.msra.mxu0 0.0
  %4817 = vmatprep.subr.mxu0 0.0
  %4818 = vmatpush1.msra.mxu0 0.0
  %4819 = vmatprep.subr.mxu0 0.0
  %4820 = vmatpush1.msra.mxu0 0.0
  %4821 = vmatprep.subr.mxu0 0.0
  %4822 = vmatpush1.msra.mxu0 0.0
  %4823 = vmatprep.subr.mxu0 0.0
  %4824 = vmatpush1.msra.mxu0 0.0
  %4825 = vmatprep.subr.mxu0 0.0
  %4826 = vmatpush1.msra.mxu0 0.0
  %4827 = vmatprep.subr.mxu0 0.0
  %4828 = vmatpush1.msra.mxu0 0.0
  %4829 = vmatprep.subr.mxu0 0.0
  %4830 = vmatpush1.msra.mxu0 0.0
  %4831 = vmatprep.subr.mxu0 0.0
  %4832 = vmatpush1.msra.mxu0 0.0
  %4833 = vmatprep.subr.mxu0 0.0
  %4834 = vmatpush1.msra.mxu0 0.0
  %4835 = vmatprep.subr.mxu0 0.0
  %4836 = vmatpush1.msra.mxu0 0.0
  %4837 = vmatprep.subr.mxu0 0.0
  %4838 = vmatpush1.msra.mxu0 0.0
  %4839 = vmatprep.subr.mxu0 0.0
  %4840 = vmatpush1.msra.mxu0 0.0
  %4841 = vmatprep.subr.mxu0 0.0
  %4842 = vmatpush1.msra.mxu0 0.0
  %4843 = vmatprep.mubr.f32.mxu0 0.0
  %4844 = vmatmul.mubr.f32.gmra.mrb[0].mxu0 %v4777
  %v4845 = vpop.f32.mrb[0].mxu0
  %v4846 = vadd.f32 0.0, %v4845
  %v4847 = vpop.f32.mrb[0].mxu0
  %4848 = vdwg.mxu0
  %v4849 = vadd.f32 %v4776, %v4846
  %v4850 = vxor.u32 %v4849, 2147483648
  %v4851 = vmul.f32 %v4850, 1.442695
  %v4852 = vpow.pop %v4851
  %v4853 = vadd.f32 %v4852, 1.0
  %v4854 = vrcp.pop %v4853
  %v4855 = vmul.f32 1.0, %v4854
  %v4856 = vtanh.pop %v4849
  %v4857 = vmul.f32 %v4855, %v4659
  %4859 = vrot.lane.b32.xlu0 %v4856, 96
  %v4860 = vpop.permute.xlu0 %4859
  %v4862 = vmul.f32 %v4855, %v4860
  %4864 = vrot.lane.b32.xlu0 %v4862, 16
  %v4865 = vpop.permute.xlu0 %4864
  %v4867 = vadd.f32 %v4857, %v4865
  %v4868 = vtanh.pop %v4867
  %4870 = vrot.lane.b32.xlu0 %v4868, 32
  %v4871 = vpop.permute.xlu0 %4870
  %v4873 = vmul.f32 %v4855, %v4871
  %4875 = vrot.lane.b32.xlu0 %v4873, 80
  %v4876 = vpop.permute.xlu0 %4875
  %4878 = vst.msk [vmem:[#allocation7 + $0x5] sm:$0x1] %vm1013, %v4876
  %v4879 = vld [vmem:[#allocation5 + $0x4] sm:$0x1]
  %4880 = vrot.lane.b32.xlu0 %v4770, 80
  %v4881 = vpop.permute.xlu0 %4880
  %v4882 = vsel %vm2298, %v4881, 0
  %4884 = vmatprep.subr.mxu0 0.0
  %4885 = vmatpush1.msra.mxu0 %v3562
  %4886 = vmatprep.subr.mxu0 0.0
  %4887 = vmatpush1.msra.mxu0 %v3563
  %4888 = vmatprep.subr.mxu0 0.0
  %4889 = vmatpush1.msra.mxu0 0.0
  %4890 = vmatprep.subr.mxu0 0.0
  %4891 = vmatpush1.msra.mxu0 0.0
  %4892 = vmatprep.subr.mxu0 0.0
  %4893 = vmatpush1.msra.mxu0 0.0
  %4894 = vmatprep.subr.mxu0 0.0
  %4895 = vmatpush1.msra.mxu0 0.0
  %4896 = vmatprep.subr.mxu0 0.0
  %4897 = vmatpush1.msra.mxu0 0.0
  %4898 = vmatprep.subr.mxu0 0.0
  %4899 = vmatpush1.msra.mxu0 0.0
  %4900 = vmatprep.subr.mxu0 0.0
  %4901 = vmatpush1.msra.mxu0 0.0
  %4902 = vmatprep.subr.mxu0 0.0
  %4903 = vmatpush1.msra.mxu0 0.0
  %4904 = vmatprep.subr.mxu0 0.0
  %4905 = vmatpush1.msra.mxu0 0.0
  %4906 = vmatprep.subr.mxu0 0.0
  %4907 = vmatpush1.msra.mxu0 0.0
  %4908 = vmatprep.subr.mxu0 0.0
  %4909 = vmatpush1.msra.mxu0 0.0
  %4910 = vmatprep.subr.mxu0 0.0
  %4911 = vmatpush1.msra.mxu0 0.0
  %4912 = vmatprep.subr.mxu0 0.0
  %4913 = vmatpush1.msra.mxu0 0.0
  %4914 = vmatprep.subr.mxu0 0.0
  %4915 = vmatpush1.msra.mxu0 0.0
  %4916 = vmatprep.subr.mxu0 0.0
  %4917 = vmatpush1.msra.mxu0 0.0
  %4918 = vmatprep.subr.mxu0 0.0
  %4919 = vmatpush1.msra.mxu0 0.0
  %4920 = vmatprep.subr.mxu0 0.0
  %4921 = vmatpush1.msra.mxu0 0.0
  %4922 = vmatprep.subr.mxu0 0.0
  %4923 = vmatpush1.msra.mxu0 0.0
  %4924 = vmatprep.subr.mxu0 0.0
  %4925 = vmatpush1.msra.mxu0 0.0
  %4926 = vmatprep.subr.mxu0 0.0
  %4927 = vmatpush1.msra.mxu0 0.0
  %4928 = vmatprep.subr.mxu0 0.0
  %4929 = vmatpush1.msra.mxu0 0.0
  %4930 = vmatprep.subr.mxu0 0.0
  %4931 = vmatpush1.msra.mxu0 0.0
  %4932 = vmatprep.subr.mxu0 0.0
  %4933 = vmatpush1.msra.mxu0 0.0
  %4934 = vmatprep.subr.mxu0 0.0
  %4935 = vmatpush1.msra.mxu0 0.0
  %4936 = vmatprep.subr.mxu0 0.0
  %4937 = vmatpush1.msra.mxu0 0.0
  %4938 = vmatprep.subr.mxu0 0.0
  %4939 = vmatpush1.msra.mxu0 0.0
  %4940 = vmatprep.subr.mxu0 0.0
  %4941 = vmatpush1.msra.mxu0 0.0
  %4942 = vmatprep.subr.mxu0 0.0
  %4943 = vmatpush1.msra.mxu0 0.0
  %4944 = vmatprep.subr.mxu0 0.0
  %4945 = vmatpush1.msra.mxu0 0.0
  %4946 = vmatprep.subr.mxu0 0.0
  %4947 = vmatpush1.msra.mxu0 0.0
  %4948 = vmatprep.mubr.f32.mxu0 0.0
  %4949 = vmatmul.mubr.f32.gmra.mrb[0].mxu0 %v4882
  %v4950 = vpop.f32.mrb[0].mxu0
  %v4951 = vadd.f32 0.0, %v4950
  %v4952 = vpop.f32.mrb[0].mxu0
  %4953 = vdwg.mxu0
  %v4954 = vadd.f32 %v4879, %v4951
  %v4955 = vxor.u32 %v4954, 2147483648
  %v4956 = vmul.f32 %v4955, 1.442695
  %v4957 = vpow.pop %v4956
  %v4958 = vadd.f32 %v4957, 1.0
  %v4959 = vrcp.pop %v4958
  %v4960 = vmul.f32 1.0, %v4959
  %v4961 = vtanh.pop %v4954
  %v4962 = vmul.f32 %v4960, %v4764
  %4964 = vrot.lane.b32.xlu0 %v4961, 96
  %v4965 = vpop.permute.xlu0 %4964
  %v4967 = vmul.f32 %v4960, %v4965
  %4969 = vrot.lane.b32.xlu0 %v4967, 16
  %v4970 = vpop.permute.xlu0 %4969
  %v4972 = vadd.f32 %v4962, %v4970
  %v4973 = vtanh.pop %v4972
  %4975 = vrot.lane.b32.xlu0 %v4973, 32
  %v4976 = vpop.permute.xlu0 %4975
  %v4978 = vmul.f32 %v4960, %v4976
  %4980 = vrot.lane.b32.xlu0 %v4978, 96
  %v4981 = vpop.permute.xlu0 %4980
  %4983 = vst.msk [vmem:[#allocation7 + $0x4] sm:$0x1] %vm2502, %v4981
  %v4984 = vld [vmem:[#allocation4 + $0x6] sm:$0x1]
  %v4985 = vsel %vm2298, %v4876, 0
  %4987 = vmatprep.subr.mxu0 0.0
  %4988 = vmatpush1.msra.mxu0 %v3559
  %4989 = vmatprep.subr.mxu0 0.0
  %4990 = vmatpush1.msra.mxu0 %v3560
  %4991 = vmatprep.subr.mxu0 0.0
  %4992 = vmatpush1.msra.mxu0 0.0
  %4993 = vmatprep.subr.mxu0 0.0
  %4994 = vmatpush1.msra.mxu0 0.0
  %4995 = vmatprep.subr.mxu0 0.0
  %4996 = vmatpush1.msra.mxu0 0.0
  %4997 = vmatprep.subr.mxu0 0.0
  %4998 = vmatpush1.msra.mxu0 0.0
  %4999 = vmatprep.subr.mxu0 0.0
  %5000 = vmatpush1.msra.mxu0 0.0
  %5001 = vmatprep.subr.mxu0 0.0
  %5002 = vmatpush1.msra.mxu0 0.0
  %5003 = vmatprep.subr.mxu0 0.0
  %5004 = vmatpush1.msra.mxu0 0.0
  %5005 = vmatprep.subr.mxu0 0.0
  %5006 = vmatpush1.msra.mxu0 0.0
  %5007 = vmatprep.subr.mxu0 0.0
  %5008 = vmatpush1.msra.mxu0 0.0
  %5009 = vmatprep.subr.mxu0 0.0
  %5010 = vmatpush1.msra.mxu0 0.0
  %5011 = vmatprep.subr.mxu0 0.0
  %5012 = vmatpush1.msra.mxu0 0.0
  %5013 = vmatprep.subr.mxu0 0.0
  %5014 = vmatpush1.msra.mxu0 0.0
  %5015 = vmatprep.subr.mxu0 0.0
  %5016 = vmatpush1.msra.mxu0 0.0
  %5017 = vmatprep.subr.mxu0 0.0
  %5018 = vmatpush1.msra.mxu0 0.0
  %5019 = vmatprep.subr.mxu0 0.0
  %5020 = vmatpush1.msra.mxu0 0.0
  %5021 = vmatprep.subr.mxu0 0.0
  %5022 = vmatpush1.msra.mxu0 0.0
  %5023 = vmatprep.subr.mxu0 0.0
  %5024 = vmatpush1.msra.mxu0 0.0
  %5025 = vmatprep.subr.mxu0 0.0
  %5026 = vmatpush1.msra.mxu0 0.0
  %5027 = vmatprep.subr.mxu0 0.0
  %5028 = vmatpush1.msra.mxu0 0.0
  %5029 = vmatprep.subr.mxu0 0.0
  %5030 = vmatpush1.msra.mxu0 0.0
  %5031 = vmatprep.subr.mxu0 0.0
  %5032 = vmatpush1.msra.mxu0 0.0
  %5033 = vmatprep.subr.mxu0 0.0
  %5034 = vmatpush1.msra.mxu0 0.0
  %5035 = vmatprep.subr.mxu0 0.0
  %5036 = vmatpush1.msra.mxu0 0.0
  %5037 = vmatprep.subr.mxu0 0.0
  %5038 = vmatpush1.msra.mxu0 0.0
  %5039 = vmatprep.subr.mxu0 0.0
  %5040 = vmatpush1.msra.mxu0 0.0
  %5041 = vmatprep.subr.mxu0 0.0
  %5042 = vmatpush1.msra.mxu0 0.0
  %5043 = vmatprep.subr.mxu0 0.0
  %5044 = vmatpush1.msra.mxu0 0.0
  %5045 = vmatprep.subr.mxu0 0.0
  %5046 = vmatpush1.msra.mxu0 0.0
  %5047 = vmatprep.subr.mxu0 0.0
  %5048 = vmatpush1.msra.mxu0 0.0
  %5049 = vmatprep.subr.mxu0 0.0
  %5050 = vmatpush1.msra.mxu0 0.0
  %5051 = vmatprep.mubr.f32.mxu0 0.0
  %5052 = vmatmul.mubr.f32.gmra.mrb[0].mxu0 %v4985
  %v5053 = vpop.f32.mrb[0].mxu0
  %v5054 = vadd.f32 0.0, %v5053
  %v5055 = vpop.f32.mrb[0].mxu0
  %5056 = vdwg.mxu0
  %v5057 = vadd.f32 %v4984, %v5054
  %v5058 = vxor.u32 %v5057, 2147483648
  %v5059 = vmul.f32 %v5058, 1.442695
  %v5060 = vpow.pop %v5059
  %v5061 = vadd.f32 %v5060, 1.0
  %v5062 = vrcp.pop %v5061
  %v5063 = vmul.f32 1.0, %v5062
  %v5064 = vtanh.pop %v5057
  %v5065 = vmul.f32 %v5063, %v4867
  %5067 = vrot.lane.b32.xlu0 %v5064, 96
  %v5068 = vpop.permute.xlu0 %5067
  %v5070 = vmul.f32 %v5063, %v5068
  %5072 = vrot.lane.b32.xlu0 %v5070, 16
  %v5073 = vpop.permute.xlu0 %5072
  %v5075 = vadd.f32 %v5065, %v5073
  %v5076 = vtanh.pop %v5075
  %5078 = vrot.lane.b32.xlu0 %v5076, 32
  %v5079 = vpop.permute.xlu0 %5078
  %v5081 = vmul.f32 %v5063, %v5079
  %5083 = vrot.lane.b32.xlu0 %v5081, 80
  %v5084 = vpop.permute.xlu0 %5083
  %5086 = vst.msk [vmem:[#allocation7 + $0x6] sm:$0x1] %vm1013, %v5084
  %v5087 = vld [vmem:[#allocation5 + $0x3] sm:$0x1]
  %5088 = vrot.lane.b32.xlu0 %v4978, 80
  %v5089 = vpop.permute.xlu0 %5088
  %v5090 = vsel %vm2298, %v5089, 0
  %5092 = vmatprep.subr.mxu0 0.0
  %5093 = vmatpush1.msra.mxu0 %v3562
  %5094 = vmatprep.subr.mxu0 0.0
  %5095 = vmatpush1.msra.mxu0 %v3563
  %5096 = vmatprep.subr.mxu0 0.0
  %5097 = vmatpush1.msra.mxu0 0.0
  %5098 = vmatprep.subr.mxu0 0.0
  %5099 = vmatpush1.msra.mxu0 0.0
  %5100 = vmatprep.subr.mxu0 0.0
  %5101 = vmatpush1.msra.mxu0 0.0
  %5102 = vmatprep.subr.mxu0 0.0
  %5103 = vmatpush1.msra.mxu0 0.0
  %5104 = vmatprep.subr.mxu0 0.0
  %5105 = vmatpush1.msra.mxu0 0.0
  %5106 = vmatprep.subr.mxu0 0.0
  %5107 = vmatpush1.msra.mxu0 0.0
  %5108 = vmatprep.subr.mxu0 0.0
  %5109 = vmatpush1.msra.mxu0 0.0
  %5110 = vmatprep.subr.mxu0 0.0
  %5111 = vmatpush1.msra.mxu0 0.0
  %5112 = vmatprep.subr.mxu0 0.0
  %5113 = vmatpush1.msra.mxu0 0.0
  %5114 = vmatprep.subr.mxu0 0.0
  %5115 = vmatpush1.msra.mxu0 0.0
  %5116 = vmatprep.subr.mxu0 0.0
  %5117 = vmatpush1.msra.mxu0 0.0
  %5118 = vmatprep.subr.mxu0 0.0
  %5119 = vmatpush1.msra.mxu0 0.0
  %5120 = vmatprep.subr.mxu0 0.0
  %5121 = vmatpush1.msra.mxu0 0.0
  %5122 = vmatprep.subr.mxu0 0.0
  %5123 = vmatpush1.msra.mxu0 0.0
  %5124 = vmatprep.subr.mxu0 0.0
  %5125 = vmatpush1.msra.mxu0 0.0
  %5126 = vmatprep.subr.mxu0 0.0
  %5127 = vmatpush1.msra.mxu0 0.0
  %5128 = vmatprep.subr.mxu0 0.0
  %5129 = vmatpush1.msra.mxu0 0.0
  %5130 = vmatprep.subr.mxu0 0.0
  %5131 = vmatpush1.msra.mxu0 0.0
  %5132 = vmatprep.subr.mxu0 0.0
  %5133 = vmatpush1.msra.mxu0 0.0
  %5134 = vmatprep.subr.mxu0 0.0
  %5135 = vmatpush1.msra.mxu0 0.0
  %5136 = vmatprep.subr.mxu0 0.0
  %5137 = vmatpush1.msra.mxu0 0.0
  %5138 = vmatprep.subr.mxu0 0.0
  %5139 = vmatpush1.msra.mxu0 0.0
  %5140 = vmatprep.subr.mxu0 0.0
  %5141 = vmatpush1.msra.mxu0 0.0
  %5142 = vmatprep.subr.mxu0 0.0
  %5143 = vmatpush1.msra.mxu0 0.0
  %5144 = vmatprep.subr.mxu0 0.0
  %5145 = vmatpush1.msra.mxu0 0.0
  %5146 = vmatprep.subr.mxu0 0.0
  %5147 = vmatpush1.msra.mxu0 0.0
  %5148 = vmatprep.subr.mxu0 0.0
  %5149 = vmatpush1.msra.mxu0 0.0
  %5150 = vmatprep.subr.mxu0 0.0
  %5151 = vmatpush1.msra.mxu0 0.0
  %5152 = vmatprep.subr.mxu0 0.0
  %5153 = vmatpush1.msra.mxu0 0.0
  %5154 = vmatprep.subr.mxu0 0.0
  %5155 = vmatpush1.msra.mxu0 0.0
  %5156 = vmatprep.mubr.f32.mxu0 0.0
  %5157 = vmatmul.mubr.f32.gmra.mrb[0].mxu0 %v5090
  %v5158 = vpop.f32.mrb[0].mxu0
  %v5159 = vadd.f32 0.0, %v5158
  %v5160 = vpop.f32.mrb[0].mxu0
  %5161 = vdwg.mxu0
  %v5162 = vadd.f32 %v5087, %v5159
  %v5163 = vxor.u32 %v5162, 2147483648
  %v5164 = vmul.f32 %v5163, 1.442695
  %v5165 = vpow.pop %v5164
  %v5166 = vadd.f32 %v5165, 1.0
  %v5167 = vrcp.pop %v5166
  %v5168 = vmul.f32 1.0, %v5167
  %v5169 = vtanh.pop %v5162
  %v5170 = vmul.f32 %v5168, %v4972
  %5172 = vrot.lane.b32.xlu0 %v5169, 96
  %v5173 = vpop.permute.xlu0 %5172
  %v5175 = vmul.f32 %v5168, %v5173
  %5177 = vrot.lane.b32.xlu0 %v5175, 16
  %v5178 = vpop.permute.xlu0 %5177
  %v5180 = vadd.f32 %v5170, %v5178
  %v5181 = vtanh.pop %v5180
  %5183 = vrot.lane.b32.xlu0 %v5181, 32
  %v5184 = vpop.permute.xlu0 %5183
  %v5186 = vmul.f32 %v5168, %v5184
  %5188 = vrot.lane.b32.xlu0 %v5186, 96
  %v5189 = vpop.permute.xlu0 %5188
  %5191 = vst.msk [vmem:[#allocation7 + $0x3] sm:$0x1] %vm2502, %v5189
  %v5192 = vld [vmem:[#allocation4 + $0x7] sm:$0x1]
  %v5193 = vsel %vm2298, %v5084, 0
  %5195 = vmatprep.subr.mxu0 0.0
  %5196 = vmatpush1.msra.mxu0 %v3559
  %5197 = vmatprep.subr.mxu0 0.0
  %5198 = vmatpush1.msra.mxu0 %v3560
  %5199 = vmatprep.subr.mxu0 0.0
  %5200 = vmatpush1.msra.mxu0 0.0
  %5201 = vmatprep.subr.mxu0 0.0
  %5202 = vmatpush1.msra.mxu0 0.0
  %5203 = vmatprep.subr.mxu0 0.0
  %5204 = vmatpush1.msra.mxu0 0.0
  %5205 = vmatprep.subr.mxu0 0.0
  %5206 = vmatpush1.msra.mxu0 0.0
  %5207 = vmatprep.subr.mxu0 0.0
  %5208 = vmatpush1.msra.mxu0 0.0
  %5209 = vmatprep.subr.mxu0 0.0
  %5210 = vmatpush1.msra.mxu0 0.0
  %5211 = vmatprep.subr.mxu0 0.0
  %5212 = vmatpush1.msra.mxu0 0.0
  %5213 = vmatprep.subr.mxu0 0.0
  %5214 = vmatpush1.msra.mxu0 0.0
  %5215 = vmatprep.subr.mxu0 0.0
  %5216 = vmatpush1.msra.mxu0 0.0
  %5217 = vmatprep.subr.mxu0 0.0
  %5218 = vmatpush1.msra.mxu0 0.0
  %5219 = vmatprep.subr.mxu0 0.0
  %5220 = vmatpush1.msra.mxu0 0.0
  %5221 = vmatprep.subr.mxu0 0.0
  %5222 = vmatpush1.msra.mxu0 0.0
  %5223 = vmatprep.subr.mxu0 0.0
  %5224 = vmatpush1.msra.mxu0 0.0
  %5225 = vmatprep.subr.mxu0 0.0
  %5226 = vmatpush1.msra.mxu0 0.0
  %5227 = vmatprep.subr.mxu0 0.0
  %5228 = vmatpush1.msra.mxu0 0.0
  %5229 = vmatprep.subr.mxu0 0.0
  %5230 = vmatpush1.msra.mxu0 0.0
  %5231 = vmatprep.subr.mxu0 0.0
  %5232 = vmatpush1.msra.mxu0 0.0
  %5233 = vmatprep.subr.mxu0 0.0
  %5234 = vmatpush1.msra.mxu0 0.0
  %5235 = vmatprep.subr.mxu0 0.0
  %5236 = vmatpush1.msra.mxu0 0.0
  %5237 = vmatprep.subr.mxu0 0.0
  %5238 = vmatpush1.msra.mxu0 0.0
  %5239 = vmatprep.subr.mxu0 0.0
  %5240 = vmatpush1.msra.mxu0 0.0
  %5241 = vmatprep.subr.mxu0 0.0
  %5242 = vmatpush1.msra.mxu0 0.0
  %5243 = vmatprep.subr.mxu0 0.0
  %5244 = vmatpush1.msra.mxu0 0.0
  %5245 = vmatprep.subr.mxu0 0.0
  %5246 = vmatpush1.msra.mxu0 0.0
  %5247 = vmatprep.subr.mxu0 0.0
  %5248 = vmatpush1.msra.mxu0 0.0
  %5249 = vmatprep.subr.mxu0 0.0
  %5250 = vmatpush1.msra.mxu0 0.0
  %5251 = vmatprep.subr.mxu0 0.0
  %5252 = vmatpush1.msra.mxu0 0.0
  %5253 = vmatprep.subr.mxu0 0.0
  %5254 = vmatpush1.msra.mxu0 0.0
  %5255 = vmatprep.subr.mxu0 0.0
  %5256 = vmatpush1.msra.mxu0 0.0
  %5257 = vmatprep.subr.mxu0 0.0
  %5258 = vmatpush1.msra.mxu0 0.0
  %5259 = vmatprep.mubr.f32.mxu0 0.0
  %5260 = vmatmul.mubr.f32.gmra.mrb[0].mxu0 %v5193
  %v5261 = vpop.f32.mrb[0].mxu0
  %v5262 = vadd.f32 0.0, %v5261
  %v5263 = vpop.f32.mrb[0].mxu0
  %5264 = vdwg.mxu0
  %v5265 = vadd.f32 %v5192, %v5262
  %v5266 = vxor.u32 %v5265, 2147483648
  %v5267 = vmul.f32 %v5266, 1.442695
  %v5268 = vpow.pop %v5267
  %v5269 = vadd.f32 %v5268, 1.0
  %v5270 = vrcp.pop %v5269
  %v5271 = vmul.f32 1.0, %v5270
  %v5272 = vtanh.pop %v5265
  %v5273 = vmul.f32 %v5271, %v5075
  %5275 = vrot.lane.b32.xlu0 %v5272, 96
  %v5276 = vpop.permute.xlu0 %5275
  %v5278 = vmul.f32 %v5271, %v5276
  %5280 = vrot.lane.b32.xlu0 %v5278, 16
  %v5281 = vpop.permute.xlu0 %5280
  %v5283 = vadd.f32 %v5273, %v5281
  %v5284 = vtanh.pop %v5283
  %5286 = vrot.lane.b32.xlu0 %v5284, 32
  %v5287 = vpop.permute.xlu0 %5286
  %v5289 = vmul.f32 %v5271, %v5287
  %5291 = vrot.lane.b32.xlu0 %v5289, 80
  %v5292 = vpop.permute.xlu0 %5291
  %5294 = vst.msk [vmem:[#allocation7 + $0x7] sm:$0x1] %vm1013, %v5292
  %v5295 = vld [vmem:[#allocation5 + $0x2] sm:$0x1]
  %5296 = vrot.lane.b32.xlu0 %v5186, 80
  %v5297 = vpop.permute.xlu0 %5296
  %v5298 = vsel %vm2298, %v5297, 0
  %5300 = vmatprep.subr.mxu0 0.0
  %5301 = vmatpush1.msra.mxu0 %v3562
  %5302 = vmatprep.subr.mxu0 0.0
  %5303 = vmatpush1.msra.mxu0 %v3563
  %5304 = vmatprep.subr.mxu0 0.0
  %5305 = vmatpush1.msra.mxu0 0.0
  %5306 = vmatprep.subr.mxu0 0.0
  %5307 = vmatpush1.msra.mxu0 0.0
  %5308 = vmatprep.subr.mxu0 0.0
  %5309 = vmatpush1.msra.mxu0 0.0
  %5310 = vmatprep.subr.mxu0 0.0
  %5311 = vmatpush1.msra.mxu0 0.0
  %5312 = vmatprep.subr.mxu0 0.0
  %5313 = vmatpush1.msra.mxu0 0.0
  %5314 = vmatprep.subr.mxu0 0.0
  %5315 = vmatpush1.msra.mxu0 0.0
  %5316 = vmatprep.subr.mxu0 0.0
  %5317 = vmatpush1.msra.mxu0 0.0
  %5318 = vmatprep.subr.mxu0 0.0
  %5319 = vmatpush1.msra.mxu0 0.0
  %5320 = vmatprep.subr.mxu0 0.0
  %5321 = vmatpush1.msra.mxu0 0.0
  %5322 = vmatprep.subr.mxu0 0.0
  %5323 = vmatpush1.msra.mxu0 0.0
  %5324 = vmatprep.subr.mxu0 0.0
  %5325 = vmatpush1.msra.mxu0 0.0
  %5326 = vmatprep.subr.mxu0 0.0
  %5327 = vmatpush1.msra.mxu0 0.0
  %5328 = vmatprep.subr.mxu0 0.0
  %5329 = vmatpush1.msra.mxu0 0.0
  %5330 = vmatprep.subr.mxu0 0.0
  %5331 = vmatpush1.msra.mxu0 0.0
  %5332 = vmatprep.subr.mxu0 0.0
  %5333 = vmatpush1.msra.mxu0 0.0
  %5334 = vmatprep.subr.mxu0 0.0
  %5335 = vmatpush1.msra.mxu0 0.0
  %5336 = vmatprep.subr.mxu0 0.0
  %5337 = vmatpush1.msra.mxu0 0.0
  %5338 = vmatprep.subr.mxu0 0.0
  %5339 = vmatpush1.msra.mxu0 0.0
  %5340 = vmatprep.subr.mxu0 0.0
  %5341 = vmatpush1.msra.mxu0 0.0
  %5342 = vmatprep.subr.mxu0 0.0
  %5343 = vmatpush1.msra.mxu0 0.0
  %5344 = vmatprep.subr.mxu0 0.0
  %5345 = vmatpush1.msra.mxu0 0.0
  %5346 = vmatprep.subr.mxu0 0.0
  %5347 = vmatpush1.msra.mxu0 0.0
  %5348 = vmatprep.subr.mxu0 0.0
  %5349 = vmatpush1.msra.mxu0 0.0
  %5350 = vmatprep.subr.mxu0 0.0
  %5351 = vmatpush1.msra.mxu0 0.0
  %5352 = vmatprep.subr.mxu0 0.0
  %5353 = vmatpush1.msra.mxu0 0.0
  %5354 = vmatprep.subr.mxu0 0.0
  %5355 = vmatpush1.msra.mxu0 0.0
  %5356 = vmatprep.subr.mxu0 0.0
  %5357 = vmatpush1.msra.mxu0 0.0
  %5358 = vmatprep.subr.mxu0 0.0
  %5359 = vmatpush1.msra.mxu0 0.0
  %5360 = vmatprep.subr.mxu0 0.0
  %5361 = vmatpush1.msra.mxu0 0.0
  %5362 = vmatprep.subr.mxu0 0.0
  %5363 = vmatpush1.msra.mxu0 0.0
  %5364 = vmatprep.mubr.f32.mxu0 0.0
  %5365 = vmatmul.mubr.f32.gmra.mrb[0].mxu0 %v5298
  %v5366 = vpop.f32.mrb[0].mxu0
  %v5367 = vadd.f32 0.0, %v5366
  %v5368 = vpop.f32.mrb[0].mxu0
  %5369 = vdwg.mxu0
  %v5370 = vadd.f32 %v5295, %v5367
  %v5371 = vxor.u32 %v5370, 2147483648
  %v5372 = vmul.f32 %v5371, 1.442695
  %v5373 = vpow.pop %v5372
  %v5374 = vadd.f32 %v5373, 1.0
  %v5375 = vrcp.pop %v5374
  %v5376 = vmul.f32 1.0, %v5375
  %v5377 = vtanh.pop %v5370
  %v5378 = vmul.f32 %v5376, %v5180
  %5380 = vrot.lane.b32.xlu0 %v5377, 96
  %v5381 = vpop.permute.xlu0 %5380
  %v5383 = vmul.f32 %v5376, %v5381
  %5385 = vrot.lane.b32.xlu0 %v5383, 16
  %v5386 = vpop.permute.xlu0 %5385
  %v5388 = vadd.f32 %v5378, %v5386
  %v5389 = vtanh.pop %v5388
  %5391 = vrot.lane.b32.xlu0 %v5389, 32
  %v5392 = vpop.permute.xlu0 %5391
  %v5394 = vmul.f32 %v5376, %v5392
  %5396 = vrot.lane.b32.xlu0 %v5394, 96
  %v5397 = vpop.permute.xlu0 %5396
  %5399 = vst.msk [vmem:[#allocation7 + $0x2] sm:$0x1] %vm2502, %v5397
  %v5400 = vld [vmem:[#allocation4 + $0x8] sm:$0x1]
  %v5401 = vsel %vm2298, %v5292, 0
  %5403 = vmatprep.subr.mxu0 0.0
  %5404 = vmatpush1.msra.mxu0 %v3559
  %5405 = vmatprep.subr.mxu0 0.0
  %5406 = vmatpush1.msra.mxu0 %v3560
  %5407 = vmatprep.subr.mxu0 0.0
  %5408 = vmatpush1.msra.mxu0 0.0
  %5409 = vmatprep.subr.mxu0 0.0
  %5410 = vmatpush1.msra.mxu0 0.0
  %5411 = vmatprep.subr.mxu0 0.0
  %5412 = vmatpush1.msra.mxu0 0.0
  %5413 = vmatprep.subr.mxu0 0.0
  %5414 = vmatpush1.msra.mxu0 0.0
  %5415 = vmatprep.subr.mxu0 0.0
  %5416 = vmatpush1.msra.mxu0 0.0
  %5417 = vmatprep.subr.mxu0 0.0
  %5418 = vmatpush1.msra.mxu0 0.0
  %5419 = vmatprep.subr.mxu0 0.0
  %5420 = vmatpush1.msra.mxu0 0.0
  %5421 = vmatprep.subr.mxu0 0.0
  %5422 = vmatpush1.msra.mxu0 0.0
  %5423 = vmatprep.subr.mxu0 0.0
  %5424 = vmatpush1.msra.mxu0 0.0
  %5425 = vmatprep.subr.mxu0 0.0
  %5426 = vmatpush1.msra.mxu0 0.0
  %5427 = vmatprep.subr.mxu0 0.0
  %5428 = vmatpush1.msra.mxu0 0.0
  %5429 = vmatprep.subr.mxu0 0.0
  %5430 = vmatpush1.msra.mxu0 0.0
  %5431 = vmatprep.subr.mxu0 0.0
  %5432 = vmatpush1.msra.mxu0 0.0
  %5433 = vmatprep.subr.mxu0 0.0
  %5434 = vmatpush1.msra.mxu0 0.0
  %5435 = vmatprep.subr.mxu0 0.0
  %5436 = vmatpush1.msra.mxu0 0.0
  %5437 = vmatprep.subr.mxu0 0.0
  %5438 = vmatpush1.msra.mxu0 0.0
  %5439 = vmatprep.subr.mxu0 0.0
  %5440 = vmatpush1.msra.mxu0 0.0
  %5441 = vmatprep.subr.mxu0 0.0
  %5442 = vmatpush1.msra.mxu0 0.0
  %5443 = vmatprep.subr.mxu0 0.0
  %5444 = vmatpush1.msra.mxu0 0.0
  %5445 = vmatprep.subr.mxu0 0.0
  %5446 = vmatpush1.msra.mxu0 0.0
  %5447 = vmatprep.subr.mxu0 0.0
  %5448 = vmatpush1.msra.mxu0 0.0
  %5449 = vmatprep.subr.mxu0 0.0
  %5450 = vmatpush1.msra.mxu0 0.0
  %5451 = vmatprep.subr.mxu0 0.0
  %5452 = vmatpush1.msra.mxu0 0.0
  %5453 = vmatprep.subr.mxu0 0.0
  %5454 = vmatpush1.msra.mxu0 0.0
  %5455 = vmatprep.subr.mxu0 0.0
  %5456 = vmatpush1.msra.mxu0 0.0
  %5457 = vmatprep.subr.mxu0 0.0
  %5458 = vmatpush1.msra.mxu0 0.0
  %5459 = vmatprep.subr.mxu0 0.0
  %5460 = vmatpush1.msra.mxu0 0.0
  %5461 = vmatprep.subr.mxu0 0.0
  %5462 = vmatpush1.msra.mxu0 0.0
  %5463 = vmatprep.subr.mxu0 0.0
  %5464 = vmatpush1.msra.mxu0 0.0
  %5465 = vmatprep.subr.mxu0 0.0
  %5466 = vmatpush1.msra.mxu0 0.0
  %5467 = vmatprep.mubr.f32.mxu0 0.0
  %5468 = vmatmul.mubr.f32.gmra.mrb[0].mxu0 %v5401
  %v5469 = vpop.f32.mrb[0].mxu0
  %v5470 = vadd.f32 0.0, %v5469
  %v5471 = vpop.f32.mrb[0].mxu0
  %5472 = vdwg.mxu0
  %v5473 = vadd.f32 %v5400, %v5470
  %v5474 = vxor.u32 %v5473, 2147483648
  %v5475 = vmul.f32 %v5474, 1.442695
  %v5476 = vpow.pop %v5475
  %v5477 = vadd.f32 %v5476, 1.0
  %v5478 = vrcp.pop %v5477
  %v5479 = vmul.f32 1.0, %v5478
  %v5480 = vtanh.pop %v5473
  %v5481 = vmul.f32 %v5479, %v5283
  %5483 = vrot.lane.b32.xlu0 %v5480, 96
  %v5484 = vpop.permute.xlu0 %5483
  %v5486 = vmul.f32 %v5479, %v5484
  %5488 = vrot.lane.b32.xlu0 %v5486, 16
  %v5489 = vpop.permute.xlu0 %5488
  %v5491 = vadd.f32 %v5481, %v5489
  %v5492 = vtanh.pop %v5491
  %5494 = vrot.lane.b32.xlu0 %v5492, 32
  %v5495 = vpop.permute.xlu0 %5494
  %v5497 = vmul.f32 %v5479, %v5495
  %5499 = vrot.lane.b32.xlu0 %v5497, 80
  %v5500 = vpop.permute.xlu0 %5499
  %5502 = vst.msk [vmem:[#allocation7 + $0x8] sm:$0x1] %vm1013, %v5500
  %v5503 = vld [vmem:[#allocation5 + $0x1] sm:$0x1]
  %5504 = vrot.lane.b32.xlu0 %v5394, 80
  %v5505 = vpop.permute.xlu0 %5504
  %v5506 = vsel %vm2298, %v5505, 0
  %5508 = vmatprep.subr.mxu0 0.0
  %5509 = vmatpush1.msra.mxu0 %v3562
  %5510 = vmatprep.subr.mxu0 0.0
  %5511 = vmatpush1.msra.mxu0 %v3563
  %5512 = vmatprep.subr.mxu0 0.0
  %5513 = vmatpush1.msra.mxu0 0.0
  %5514 = vmatprep.subr.mxu0 0.0
  %5515 = vmatpush1.msra.mxu0 0.0
  %5516 = vmatprep.subr.mxu0 0.0
  %5517 = vmatpush1.msra.mxu0 0.0
  %5518 = vmatprep.subr.mxu0 0.0
  %5519 = vmatpush1.msra.mxu0 0.0
  %5520 = vmatprep.subr.mxu0 0.0
  %5521 = vmatpush1.msra.mxu0 0.0
  %5522 = vmatprep.subr.mxu0 0.0
  %5523 = vmatpush1.msra.mxu0 0.0
  %5524 = vmatprep.subr.mxu0 0.0
  %5525 = vmatpush1.msra.mxu0 0.0
  %5526 = vmatprep.subr.mxu0 0.0
  %5527 = vmatpush1.msra.mxu0 0.0
  %5528 = vmatprep.subr.mxu0 0.0
  %5529 = vmatpush1.msra.mxu0 0.0
  %5530 = vmatprep.subr.mxu0 0.0
  %5531 = vmatpush1.msra.mxu0 0.0
  %5532 = vmatprep.subr.mxu0 0.0
  %5533 = vmatpush1.msra.mxu0 0.0
  %5534 = vmatprep.subr.mxu0 0.0
  %5535 = vmatpush1.msra.mxu0 0.0
  %5536 = vmatprep.subr.mxu0 0.0
  %5537 = vmatpush1.msra.mxu0 0.0
  %5538 = vmatprep.subr.mxu0 0.0
  %5539 = vmatpush1.msra.mxu0 0.0
  %5540 = vmatprep.subr.mxu0 0.0
  %5541 = vmatpush1.msra.mxu0 0.0
  %5542 = vmatprep.subr.mxu0 0.0
  %5543 = vmatpush1.msra.mxu0 0.0
  %5544 = vmatprep.subr.mxu0 0.0
  %5545 = vmatpush1.msra.mxu0 0.0
  %5546 = vmatprep.subr.mxu0 0.0
  %5547 = vmatpush1.msra.mxu0 0.0
  %5548 = vmatprep.subr.mxu0 0.0
  %5549 = vmatpush1.msra.mxu0 0.0
  %5550 = vmatprep.subr.mxu0 0.0
  %5551 = vmatpush1.msra.mxu0 0.0
  %5552 = vmatprep.subr.mxu0 0.0
  %5553 = vmatpush1.msra.mxu0 0.0
  %5554 = vmatprep.subr.mxu0 0.0
  %5555 = vmatpush1.msra.mxu0 0.0
  %5556 = vmatprep.subr.mxu0 0.0
  %5557 = vmatpush1.msra.mxu0 0.0
  %5558 = vmatprep.subr.mxu0 0.0
  %5559 = vmatpush1.msra.mxu0 0.0
  %5560 = vmatprep.subr.mxu0 0.0
  %5561 = vmatpush1.msra.mxu0 0.0
  %5562 = vmatprep.subr.mxu0 0.0
  %5563 = vmatpush1.msra.mxu0 0.0
  %5564 = vmatprep.subr.mxu0 0.0
  %5565 = vmatpush1.msra.mxu0 0.0
  %5566 = vmatprep.subr.mxu0 0.0
  %5567 = vmatpush1.msra.mxu0 0.0
  %5568 = vmatprep.subr.mxu0 0.0
  %5569 = vmatpush1.msra.mxu0 0.0
  %5570 = vmatprep.subr.mxu0 0.0
  %5571 = vmatpush1.msra.mxu0 0.0
  %5572 = vmatprep.mubr.f32.mxu0 0.0
  %5573 = vmatmul.mubr.f32.gmra.mrb[0].mxu0 %v5506
  %v5574 = vpop.f32.mrb[0].mxu0
  %v5575 = vadd.f32 0.0, %v5574
  %v5576 = vpop.f32.mrb[0].mxu0
  %5577 = vdwg.mxu0
  %v5578 = vadd.f32 %v5503, %v5575
  %v5579 = vxor.u32 %v5578, 2147483648
  %v5580 = vmul.f32 %v5579, 1.442695
  %v5581 = vpow.pop %v5580
  %v5582 = vadd.f32 %v5581, 1.0
  %v5583 = vrcp.pop %v5582
  %v5584 = vmul.f32 1.0, %v5583
  %v5585 = vtanh.pop %v5578
  %v5586 = vmul.f32 %v5584, %v5388
  %5588 = vrot.lane.b32.xlu0 %v5585, 96
  %v5589 = vpop.permute.xlu0 %5588
  %v5591 = vmul.f32 %v5584, %v5589
  %5593 = vrot.lane.b32.xlu0 %v5591, 16
  %v5594 = vpop.permute.xlu0 %5593
  %v5596 = vadd.f32 %v5586, %v5594
  %v5597 = vtanh.pop %v5596
  %5599 = vrot.lane.b32.xlu0 %v5597, 32
  %v5600 = vpop.permute.xlu0 %5599
  %v5602 = vmul.f32 %v5584, %v5600
  %5604 = vrot.lane.b32.xlu0 %v5602, 96
  %v5605 = vpop.permute.xlu0 %5604
  %5607 = vst.msk [vmem:[#allocation7 + $0x1] sm:$0x1] %vm2502, %v5605
  %v5608 = vld [vmem:[#allocation4 + $0x9] sm:$0x1]
  %v5609 = vsel %vm2298, %v5500, 0
  %5611 = vmatprep.subr.mxu0 0.0
  %5612 = vmatpush1.msra.mxu0 %v3559
  %5613 = vmatprep.subr.mxu0 0.0
  %5614 = vmatpush1.msra.mxu0 %v3560
  %5615 = vmatprep.subr.mxu0 0.0
  %5616 = vmatpush1.msra.mxu0 0.0
  %5617 = vmatprep.subr.mxu0 0.0
  %5618 = vmatpush1.msra.mxu0 0.0
  %5619 = vmatprep.subr.mxu0 0.0
  %5620 = vmatpush1.msra.mxu0 0.0
  %5621 = vmatprep.subr.mxu0 0.0
  %5622 = vmatpush1.msra.mxu0 0.0
  %5623 = vmatprep.subr.mxu0 0.0
  %5624 = vmatpush1.msra.mxu0 0.0
  %5625 = vmatprep.subr.mxu0 0.0
  %5626 = vmatpush1.msra.mxu0 0.0
  %5627 = vmatprep.subr.mxu0 0.0
  %5628 = vmatpush1.msra.mxu0 0.0
  %5629 = vmatprep.subr.mxu0 0.0
  %5630 = vmatpush1.msra.mxu0 0.0
  %5631 = vmatprep.subr.mxu0 0.0
  %5632 = vmatpush1.msra.mxu0 0.0
  %5633 = vmatprep.subr.mxu0 0.0
  %5634 = vmatpush1.msra.mxu0 0.0
  %5635 = vmatprep.subr.mxu0 0.0
  %5636 = vmatpush1.msra.mxu0 0.0
  %5637 = vmatprep.subr.mxu0 0.0
  %5638 = vmatpush1.msra.mxu0 0.0
  %5639 = vmatprep.subr.mxu0 0.0
  %5640 = vmatpush1.msra.mxu0 0.0
  %5641 = vmatprep.subr.mxu0 0.0
  %5642 = vmatpush1.msra.mxu0 0.0
  %5643 = vmatprep.subr.mxu0 0.0
  %5644 = vmatpush1.msra.mxu0 0.0
  %5645 = vmatprep.subr.mxu0 0.0
  %5646 = vmatpush1.msra.mxu0 0.0
  %5647 = vmatprep.subr.mxu0 0.0
  %5648 = vmatpush1.msra.mxu0 0.0
  %5649 = vmatprep.subr.mxu0 0.0
  %5650 = vmatpush1.msra.mxu0 0.0
  %5651 = vmatprep.subr.mxu0 0.0
  %5652 = vmatpush1.msra.mxu0 0.0
  %5653 = vmatprep.subr.mxu0 0.0
  %5654 = vmatpush1.msra.mxu0 0.0
  %5655 = vmatprep.subr.mxu0 0.0
  %5656 = vmatpush1.msra.mxu0 0.0
  %5657 = vmatprep.subr.mxu0 0.0
  %5658 = vmatpush1.msra.mxu0 0.0
  %5659 = vmatprep.subr.mxu0 0.0
  %5660 = vmatpush1.msra.mxu0 0.0
  %5661 = vmatprep.subr.mxu0 0.0
  %5662 = vmatpush1.msra.mxu0 0.0
  %5663 = vmatprep.subr.mxu0 0.0
  %5664 = vmatpush1.msra.mxu0 0.0
  %5665 = vmatprep.subr.mxu0 0.0
  %5666 = vmatpush1.msra.mxu0 0.0
  %5667 = vmatprep.subr.mxu0 0.0
  %5668 = vmatpush1.msra.mxu0 0.0
  %5669 = vmatprep.subr.mxu0 0.0
  %5670 = vmatpush1.msra.mxu0 0.0
  %5671 = vmatprep.subr.mxu0 0.0
  %5672 = vmatpush1.msra.mxu0 0.0
  %5673 = vmatprep.subr.mxu0 0.0
  %5674 = vmatpush1.msra.mxu0 0.0
  %5675 = vmatprep.mubr.f32.mxu0 0.0
  %5676 = vmatmul.mubr.f32.gmra.mrb[0].mxu0 %v5609
  %v5677 = vpop.f32.mrb[0].mxu0
  %v5678 = vadd.f32 0.0, %v5677
  %v5679 = vpop.f32.mrb[0].mxu0
  %5680 = vdwg.mxu0
  %v5681 = vadd.f32 %v5608, %v5678
  %v5682 = vxor.u32 %v5681, 2147483648
  %v5683 = vmul.f32 %v5682, 1.442695
  %v5684 = vpow.pop %v5683
  %v5685 = vadd.f32 %v5684, 1.0
  %v5686 = vrcp.pop %v5685
  %v5687 = vmul.f32 1.0, %v5686
  %v5688 = vtanh.pop %v5681
  %v5689 = vmul.f32 %v5687, %v5491
  %5691 = vrot.lane.b32.xlu0 %v5688, 96
  %v5692 = vpop.permute.xlu0 %5691
  %v5694 = vmul.f32 %v5687, %v5692
  %5696 = vrot.lane.b32.xlu0 %v5694, 16
  %v5697 = vpop.permute.xlu0 %5696
  %v5699 = vadd.f32 %v5689, %v5697
  %v5700 = vtanh.pop %v5699
  %5702 = vrot.lane.b32.xlu0 %v5700, 32
  %v5703 = vpop.permute.xlu0 %5702
  %v5705 = vmul.f32 %v5687, %v5703
  %5707 = vrot.lane.b32.xlu0 %v5705, 80
  %v5708 = vpop.permute.xlu0 %5707
  %5710 = vst.msk [vmem:[#allocation7 + $0x9] sm:$0x1] %vm1013, %v5708
  %v5711 = vld [vmem:[#allocation5] sm:$0x1]
  %5712 = vrot.lane.b32.xlu0 %v5602, 80
  %v5713 = vpop.permute.xlu0 %5712
  %v5714 = vsel %vm2298, %v5713, 0
  %5716 = vmatprep.subr.mxu0 0.0
  %5717 = vmatpush1.msra.mxu0 %v3562
  %5718 = vmatprep.subr.mxu0 0.0
  %5719 = vmatpush1.msra.mxu0 %v3563
  %5720 = vmatprep.subr.mxu0 0.0
  %5721 = vmatpush1.msra.mxu0 0.0
  %5722 = vmatprep.subr.mxu0 0.0
  %5723 = vmatpush1.msra.mxu0 0.0
  %5724 = vmatprep.subr.mxu0 0.0
  %5725 = vmatpush1.msra.mxu0 0.0
  %5726 = vmatprep.subr.mxu0 0.0
  %5727 = vmatpush1.msra.mxu0 0.0
  %5728 = vmatprep.subr.mxu0 0.0
  %5729 = vmatpush1.msra.mxu0 0.0
  %5730 = vmatprep.subr.mxu0 0.0
  %5731 = vmatpush1.msra.mxu0 0.0
  %5732 = vmatprep.subr.mxu0 0.0
  %5733 = vmatpush1.msra.mxu0 0.0
  %5734 = vmatprep.subr.mxu0 0.0
  %5735 = vmatpush1.msra.mxu0 0.0
  %5736 = vmatprep.subr.mxu0 0.0
  %5737 = vmatpush1.msra.mxu0 0.0
  %5738 = vmatprep.subr.mxu0 0.0
  %5739 = vmatpush1.msra.mxu0 0.0
  %5740 = vmatprep.subr.mxu0 0.0
  %5741 = vmatpush1.msra.mxu0 0.0
  %5742 = vmatprep.subr.mxu0 0.0
  %5743 = vmatpush1.msra.mxu0 0.0
  %5744 = vmatprep.subr.mxu0 0.0
  %5745 = vmatpush1.msra.mxu0 0.0
  %5746 = vmatprep.subr.mxu0 0.0
  %5747 = vmatpush1.msra.mxu0 0.0
  %5748 = vmatprep.subr.mxu0 0.0
  %5749 = vmatpush1.msra.mxu0 0.0
  %5750 = vmatprep.subr.mxu0 0.0
  %5751 = vmatpush1.msra.mxu0 0.0
  %5752 = vmatprep.subr.mxu0 0.0
  %5753 = vmatpush1.msra.mxu0 0.0
  %5754 = vmatprep.subr.mxu0 0.0
  %5755 = vmatpush1.msra.mxu0 0.0
  %5756 = vmatprep.subr.mxu0 0.0
  %5757 = vmatpush1.msra.mxu0 0.0
  %5758 = vmatprep.subr.mxu0 0.0
  %5759 = vmatpush1.msra.mxu0 0.0
  %5760 = vmatprep.subr.mxu0 0.0
  %5761 = vmatpush1.msra.mxu0 0.0
  %5762 = vmatprep.subr.mxu0 0.0
  %5763 = vmatpush1.msra.mxu0 0.0
  %5764 = vmatprep.subr.mxu0 0.0
  %5765 = vmatpush1.msra.mxu0 0.0
  %5766 = vmatprep.subr.mxu0 0.0
  %5767 = vmatpush1.msra.mxu0 0.0
  %5768 = vmatprep.subr.mxu0 0.0
  %5769 = vmatpush1.msra.mxu0 0.0
  %5770 = vmatprep.subr.mxu0 0.0
  %5771 = vmatpush1.msra.mxu0 0.0
  %5772 = vmatprep.subr.mxu0 0.0
  %5773 = vmatpush1.msra.mxu0 0.0
  %5774 = vmatprep.subr.mxu0 0.0
  %5775 = vmatpush1.msra.mxu0 0.0
  %5776 = vmatprep.subr.mxu0 0.0
  %5777 = vmatpush1.msra.mxu0 0.0
  %5778 = vmatprep.subr.mxu0 0.0
  %5779 = vmatpush1.msra.mxu0 0.0
  %5780 = vmatprep.mubr.f32.mxu0 0.0
  %5781 = vmatmul.mubr.f32.gmra.mrb[0].mxu0 %v5714
  %v5782 = vpop.f32.mrb[0].mxu0
  %v5783 = vadd.f32 0.0, %v5782
  %v5784 = vpop.f32.mrb[0].mxu0
  %5785 = vdwg.mxu0
  %v5786 = vadd.f32 %v5711, %v5783
  %v5787 = vxor.u32 %v5786, 2147483648
  %v5788 = vmul.f32 %v5787, 1.442695
  %v5789 = vpow.pop %v5788
  %v5790 = vadd.f32 %v5789, 1.0
  %v5791 = vrcp.pop %v5790
  %v5792 = vmul.f32 1.0, %v5791
  %v5793 = vtanh.pop %v5786
  %v5794 = vmul.f32 %v5792, %v5596
  %5796 = vrot.lane.b32.xlu0 %v5793, 96
  %v5797 = vpop.permute.xlu0 %5796
  %v5799 = vmul.f32 %v5792, %v5797
  %5801 = vrot.lane.b32.xlu0 %v5799, 16
  %v5802 = vpop.permute.xlu0 %5801
  %v5804 = vadd.f32 %v5794, %v5802
  %v5805 = vtanh.pop %v5804
  %5807 = vrot.lane.b32.xlu0 %v5805, 32
  %v5808 = vpop.permute.xlu0 %5807
  %v5810 = vmul.f32 %v5792, %v5808
  %5812 = vrot.lane.b32.xlu0 %v5810, 96
  %v5813 = vpop.permute.xlu0 %5812
  %5815 = vst.msk [vmem:[#allocation7] sm:$0x1] %vm2502, %v5813
  %v5816 = vld [vmem:[#allocation6] sm:$0x3f]
  %v5817 = vld [vmem:[#allocation7] sm:$0xff]
  %v5818 = vld [vmem:[#allocation7 + $0x8] sm:$0x3]
  %v5820 = vsel %vm2105, %v5817, 0
  %v5823 = vsel %vm2105, %v5818, 0
  %v5826 = vsel %vm2105, %v5816, 0
  %5828 = vmatprep.subr.mxu0 0.0
  %5829 = vmatpush1.xpose.msra.mxu0 %v5826
  %5830 = vmatprep.subr.mxu0 0.0
  %5831 = vmatpush1.xpose.msra.mxu0 0.0
  %5832 = vmatprep.subr.mxu0 0.0
  %5833 = vmatpush1.xpose.msra.mxu0 0.0
  %5834 = vmatprep.subr.mxu0 0.0
  %5835 = vmatpush1.xpose.msra.mxu0 0.0
  %5836 = vmatprep.subr.mxu0 0.0
  %5837 = vmatpush1.xpose.msra.mxu0 0.0
  %5838 = vmatprep.subr.mxu0 0.0
  %5839 = vmatpush1.xpose.msra.mxu0 0.0
  %5840 = vmatprep.subr.mxu0 0.0
  %5841 = vmatpush1.xpose.msra.mxu0 0.0
  %5842 = vmatprep.subr.mxu0 0.0
  %5843 = vmatpush1.xpose.msra.mxu0 0.0
  %5844 = vmatprep.subr.mxu0 0.0
  %5845 = vmatpush1.xpose.msra.mxu0 0.0
  %5846 = vmatprep.subr.mxu0 0.0
  %5847 = vmatpush1.xpose.msra.mxu0 0.0
  %5848 = vmatprep.subr.mxu0 0.0
  %5849 = vmatpush1.xpose.msra.mxu0 0.0
  %5850 = vmatprep.subr.mxu0 0.0
  %5851 = vmatpush1.xpose.msra.mxu0 0.0
  %5852 = vmatprep.subr.mxu0 0.0
  %5853 = vmatpush1.xpose.msra.mxu0 0.0
  %5854 = vmatprep.subr.mxu0 0.0
  %5855 = vmatpush1.xpose.msra.mxu0 0.0
  %5856 = vmatprep.subr.mxu0 0.0
  %5857 = vmatpush1.xpose.msra.mxu0 0.0
  %5858 = vmatprep.subr.mxu0 0.0
  %5859 = vmatpush1.xpose.msra.mxu0 0.0
  %5860 = vmatprep.subr.mxu0 0.0
  %5861 = vmatpush1.xpose.msra.mxu0 0.0
  %5862 = vmatprep.subr.mxu0 0.0
  %5863 = vmatpush1.xpose.msra.mxu0 0.0
  %5864 = vmatprep.subr.mxu0 0.0
  %5865 = vmatpush1.xpose.msra.mxu0 0.0
  %5866 = vmatprep.subr.mxu0 0.0
  %5867 = vmatpush1.xpose.msra.mxu0 0.0
  %5868 = vmatprep.subr.mxu0 0.0
  %5869 = vmatpush1.xpose.msra.mxu0 0.0
  %5870 = vmatprep.subr.mxu0 0.0
  %5871 = vmatpush1.xpose.msra.mxu0 0.0
  %5872 = vmatprep.subr.mxu0 0.0
  %5873 = vmatpush1.xpose.msra.mxu0 0.0
  %5874 = vmatprep.subr.mxu0 0.0
  %5875 = vmatpush1.xpose.msra.mxu0 0.0
  %5876 = vmatprep.subr.mxu0 0.0
  %5877 = vmatpush1.xpose.msra.mxu0 0.0
  %5878 = vmatprep.subr.mxu0 0.0
  %5879 = vmatpush1.xpose.msra.mxu0 0.0
  %5880 = vmatprep.subr.mxu0 0.0
  %5881 = vmatpush1.xpose.msra.mxu0 0.0
  %5882 = vmatprep.subr.mxu0 0.0
  %5883 = vmatpush1.xpose.msra.mxu0 0.0
  %5884 = vmatprep.subr.mxu0 0.0
  %5885 = vmatpush1.xpose.msra.mxu0 0.0
  %5886 = vmatprep.subr.mxu0 0.0
  %5887 = vmatpush1.xpose.msra.mxu0 0.0
  %5888 = vmatprep.subr.mxu0 0.0
  %5889 = vmatpush1.xpose.msra.mxu0 0.0
  %5890 = vmatprep.subr.mxu0 0.0
  %5891 = vmatpush1.xpose.msra.mxu0 0.0
  %5892 = vmatprep.mubr.f32.mxu0 0.0
  %5893 = vmatmul.mubr.f32.gmra.mrb[0].mxu0 %v5820
  %v5894 = vpop.f32.mrb[0].mxu0
  %v5895 = vadd.f32 0.0, %v5894
  %v5896 = vpop.f32.mrb[0].mxu0
  %5897 = vmatprep.mubr.f32.mxu0 0.0
  %5898 = vmatmul.mubr.f32.gmra.mrb[0].mxu0 %v5823
  %v5899 = vpop.f32.mrb[0].mxu0
  %v5900 = vadd.f32 0.0, %v5899
  %v5901 = vpop.f32.mrb[0].mxu0
  %5902 = vdwg.mxu0
  %vm5903 = vcmask 48128
  %v5904 = vsel %vm5903, %v5895, -inf
  %5905 = vmax.xlane.f32.xlu0 %v5904
  %v5906 = vpop.xlane.xlu0 %5905
  %vm5907 = vcmask 41984
  %v5908 = vsel %vm5907, %v5900, -inf
  %5909 = vmax.xlane.f32.xlu0 %v5908
  %v5910 = vpop.xlane.xlu0 %5909
  %v5911 = vsub.f32 %v5895, %v5906
  %v5912 = vsub.f32 %v5900, %v5910
  %v5913 = vmul.f32 %v5911, 1.442695
  %v5914 = vpow.pop %v5913
  %v5915 = vmul.f32 %v5912, 1.442695
  %v5916 = vpow.pop %v5915
  %v5917 = vsel %vm5903, %v5914, 0.0
  %5918 = vadd.xlane.f32.xlu0 %v5917
  %v5919 = vpop.xlane.xlu0 %5918
  %v5920 = vsel %vm5907, %v5916, 0.0
  %5921 = vadd.xlane.f32.xlu0 %v5920
  %v5922 = vpop.xlane.xlu0 %5921
  %v5923 = vrcp.pop %v5919
  %v5924 = vrcp.pop %v5922
  %v5925 = vmul.f32 %v5914, %v5923
  %v5926 = vmul.f32 %v5916, %v5924
  %v5928 = vsel %vm5903, %v5925, 0
  %v5931 = vsel %vm5903, %v5926, 0
  %v5933 = vsel %vm312, %v5816, 0
  %5935 = vmatprep.subr.mxu0 0.0
  %5936 = vmatpush1.msra.mxu0 %v5933
  %5937 = vmatprep.subr.mxu0 0.0
  %5938 = vmatpush1.msra.mxu0 0.0
  %5939 = vmatprep.subr.mxu0 0.0
  %5940 = vmatpush1.msra.mxu0 0.0
  %5941 = vmatprep.subr.mxu0 0.0
  %5942 = vmatpush1.msra.mxu0 0.0
  %5943 = vmatprep.subr.mxu0 0.0
  %5944 = vmatpush1.msra.mxu0 0.0
  %5945 = vmatprep.subr.mxu0 0.0
  %5946 = vmatpush1.msra.mxu0 0.0
  %5947 = vmatprep.subr.mxu0 0.0
  %5948 = vmatpush1.msra.mxu0 0.0
  %5949 = vmatprep.subr.mxu0 0.0
  %5950 = vmatpush1.msra.mxu0 0.0
  %5951 = vmatprep.subr.mxu0 0.0
  %5952 = vmatpush1.msra.mxu0 0.0
  %5953 = vmatprep.subr.mxu0 0.0
  %5954 = vmatpush1.msra.mxu0 0.0
  %5955 = vmatprep.subr.mxu0 0.0
  %5956 = vmatpush1.msra.mxu0 0.0
  %5957 = vmatprep.subr.mxu0 0.0
  %5958 = vmatpush1.msra.mxu0 0.0
  %5959 = vmatprep.subr.mxu0 0.0
  %5960 = vmatpush1.msra.mxu0 0.0
  %5961 = vmatprep.subr.mxu0 0.0
  %5962 = vmatpush1.msra.mxu0 0.0
  %5963 = vmatprep.subr.mxu0 0.0
  %5964 = vmatpush1.msra.mxu0 0.0
  %5965 = vmatprep.subr.mxu0 0.0
  %5966 = vmatpush1.msra.mxu0 0.0
  %5967 = vmatprep.subr.mxu0 0.0
  %5968 = vmatpush1.msra.mxu0 0.0
  %5969 = vmatprep.subr.mxu0 0.0
  %5970 = vmatpush1.msra.mxu0 0.0
  %5971 = vmatprep.subr.mxu0 0.0
  %5972 = vmatpush1.msra.mxu0 0.0
  %5973 = vmatprep.subr.mxu0 0.0
  %5974 = vmatpush1.msra.mxu0 0.0
  %5975 = vmatprep.subr.mxu0 0.0
  %5976 = vmatpush1.msra.mxu0 0.0
  %5977 = vmatprep.subr.mxu0 0.0
  %5978 = vmatpush1.msra.mxu0 0.0
  %5979 = vmatprep.subr.mxu0 0.0
  %5980 = vmatpush1.msra.mxu0 0.0
  %5981 = vmatprep.subr.mxu0 0.0
  %5982 = vmatpush1.msra.mxu0 0.0
  %5983 = vmatprep.subr.mxu0 0.0
  %5984 = vmatpush1.msra.mxu0 0.0
  %5985 = vmatprep.subr.mxu0 0.0
  %5986 = vmatpush1.msra.mxu0 0.0
  %5987 = vmatprep.subr.mxu0 0.0
  %5988 = vmatpush1.msra.mxu0 0.0
  %5989 = vmatprep.subr.mxu0 0.0
  %5990 = vmatpush1.msra.mxu0 0.0
  %5991 = vmatprep.subr.mxu0 0.0
  %5992 = vmatpush1.msra.mxu0 0.0
  %5993 = vmatprep.subr.mxu0 0.0
  %5994 = vmatpush1.msra.mxu0 0.0
  %5995 = vmatprep.subr.mxu0 0.0
  %5996 = vmatpush1.msra.mxu0 0.0
  %5997 = vmatprep.subr.mxu0 0.0
  %5998 = vmatpush1.msra.mxu0 0.0
  %5999 = vmatprep.mubr.f32.mxu0 0.0
  %6000 = vmatmul.mubr.f32.gmra.mrb[0].mxu0 %v5928
  %v6001 = vpop.f32.mrb[0].mxu0
  %v6002 = vadd.f32 0.0, %v6001
  %v6003 = vpop.f32.mrb[0].mxu0
  %6004 = vmatprep.mubr.f32.mxu0 0.0
  %6005 = vmatmul.mubr.f32.gmra.mrb[0].mxu0 %v5931
  %v6006 = vpop.f32.mrb[0].mxu0
  %v6007 = vadd.f32 0.0, %v6006
  %v6008 = vpop.f32.mrb[0].mxu0
  %6009 = vdwg.mxu0
  %6012 = vrot.lane.b32.xlu0 %v6002, 32
  %v6013 = vpop.permute.xlu0 %6012
  %6014 = vrot.lane.b32.xlu0 %v6007, 32
  %v6015 = vpop.permute.xlu0 %6014
  %v6018 = vsel %vm2105, %v5817, %v6013
  %v6019 = vsel %vm2105, %v5818, %v6015
  %v6020 = vld [vmem:[%s11] sm:$0xff]
  %v6021 = vld [vmem:[%s11 + $0x8] sm:$0xff]
  %v6022 = vld [vmem:[%s11 + $0x10] sm:$0xff]
  %v6023 = vld [vmem:[%s11 + $0x18] sm:$0xff]
  %v6024 = vld [vmem:[%s11 + $0x20] sm:$0xff]
  %v6025 = vld [vmem:[%s11 + $0x28] sm:$0xff]
  %v6026 = vld [vmem:[%s11 + $0x30] sm:$0xff]
  %v6027 = vld [vmem:[%s11 + $0x38] sm:$0xff]
  %v6028 = vld [vmem:[%s12] sm:$0x1]
  %v6030 = vlaneseq
  %v6031 = vshrl.u32 %v6030, 7
  %v6032 = vsub.s32 0, %v6031
  %v6033 = vrot.slane %v6028, %v6032
  %v6036 = vsel %vm3655, %v6018, 0
  %v6039 = vsel %vm3655, %v6019, 0
  %6041 = vmatprep.subr.mxu0 0.0
  %6042 = vmatpush1.msra.mxu0 %v6020
  %6043 = vmatprep.subr.mxu0 0.0
  %6044 = vmatpush1.msra.mxu0 %v6021
  %6045 = vmatprep.subr.mxu0 0.0
  %6046 = vmatpush1.msra.mxu0 %v6022
  %6047 = vmatprep.subr.mxu0 0.0
  %6048 = vmatpush1.msra.mxu0 %v6023
  %6049 = vmatprep.subr.mxu0 0.0
  %6050 = vmatpush1.msra.mxu0 %v6024
  %6051 = vmatprep.subr.mxu0 0.0
  %6052 = vmatpush1.msra.mxu0 %v6025
  %6053 = vmatprep.subr.mxu0 0.0
  %6054 = vmatpush1.msra.mxu0 %v6026
  %6055 = vmatprep.subr.mxu0 0.0
  %6056 = vmatpush1.msra.mxu0 %v6027
  %6057 = vmatprep.subr.mxu0 0.0
  %6058 = vmatpush1.msra.mxu0 0.0
  %6059 = vmatprep.subr.mxu0 0.0
  %6060 = vmatpush1.msra.mxu0 0.0
  %6061 = vmatprep.subr.mxu0 0.0
  %6062 = vmatpush1.msra.mxu0 0.0
  %6063 = vmatprep.subr.mxu0 0.0
  %6064 = vmatpush1.msra.mxu0 0.0
  %6065 = vmatprep.subr.mxu0 0.0
  %6066 = vmatpush1.msra.mxu0 0.0
  %6067 = vmatprep.subr.mxu0 0.0
  %6068 = vmatpush1.msra.mxu0 0.0
  %6069 = vmatprep.subr.mxu0 0.0
  %6070 = vmatpush1.msra.mxu0 0.0
  %6071 = vmatprep.subr.mxu0 0.0
  %6072 = vmatpush1.msra.mxu0 0.0
  %6073 = vmatprep.subr.mxu0 0.0
  %6074 = vmatpush1.msra.mxu0 0.0
  %6075 = vmatprep.subr.mxu0 0.0
  %6076 = vmatpush1.msra.mxu0 0.0
  %6077 = vmatprep.subr.mxu0 0.0
  %6078 = vmatpush1.msra.mxu0 0.0
  %6079 = vmatprep.subr.mxu0 0.0
  %6080 = vmatpush1.msra.mxu0 0.0
  %6081 = vmatprep.subr.mxu0 0.0
  %6082 = vmatpush1.msra.mxu0 0.0
  %6083 = vmatprep.subr.mxu0 0.0
  %6084 = vmatpush1.msra.mxu0 0.0
  %6085 = vmatprep.subr.mxu0 0.0
  %6086 = vmatpush1.msra.mxu0 0.0
  %6087 = vmatprep.subr.mxu0 0.0
  %6088 = vmatpush1.msra.mxu0 0.0
  %6089 = vmatprep.subr.mxu0 0.0
  %6090 = vmatpush1.msra.mxu0 0.0
  %6091 = vmatprep.subr.mxu0 0.0
  %6092 = vmatpush1.msra.mxu0 0.0
  %6093 = vmatprep.subr.mxu0 0.0
  %6094 = vmatpush1.msra.mxu0 0.0
  %6095 = vmatprep.subr.mxu0 0.0
  %6096 = vmatpush1.msra.mxu0 0.0
  %6097 = vmatprep.subr.mxu0 0.0
  %6098 = vmatpush1.msra.mxu0 0.0
  %6099 = vmatprep.subr.mxu0 0.0
  %6100 = vmatpush1.msra.mxu0 0.0
  %6101 = vmatprep.subr.mxu0 0.0
  %6102 = vmatpush1.msra.mxu0 0.0
  %6103 = vmatprep.subr.mxu0 0.0
  %6104 = vmatpush1.msra.mxu0 0.0
  %6105 = vmatprep.mubr.f32.mxu0 0.0
  %6106 = vmatmul.mubr.f32.gmra.mrb[0].mxu0 %v6036
  %v6107 = vpop.f32.mrb[0].mxu0
  %v6108 = vadd.f32 %v6033, %v6107
  %v6109 = vpop.f32.mrb[0].mxu0
  %6110 = vmatprep.mubr.f32.mxu0 0.0
  %6111 = vmatmul.mubr.f32.gmra.mrb[0].mxu0 %v6039
  %v6112 = vpop.f32.mrb[0].mxu0
  %v6113 = vadd.f32 %v6033, %v6112
  %v6114 = vpop.f32.mrb[0].mxu0
  %6115 = vdwg.mxu0
  %v6116 = vld [vmem:[%s13] sm:$0xff]
  %v6117 = vld [vmem:[%s13 + $0x8] sm:$0xff]
  %v6118 = vld [vmem:[%s13 + $0x10] sm:$0xff]
  %v6119 = vld [vmem:[%s13 + $0x18] sm:$0xff]
  %v6120 = vld [vmem:[%s13 + $0x20] sm:$0xff]
  %v6121 = vld [vmem:[%s13 + $0x28] sm:$0xff]
  %v6122 = vld [vmem:[%s13 + $0x30] sm:$0xff]
  %v6123 = vld [vmem:[%s13 + $0x38] sm:$0xff]
  %v6124 = vld [vmem:[#allocation8] sm:$0x1]
  %v6126 = vlaneseq
  %v6127 = vshrl.u32 %v6126, 7
  %v6128 = vsub.s32 0, %v6127
  %v6129 = vrot.slane %v6124, %v6128
  %6131 = vmatprep.subr.mxu0 0.0
  %6132 = vmatpush1.msra.mxu0 %v6116
  %6133 = vmatprep.subr.mxu0 0.0
  %6134 = vmatpush1.msra.mxu0 %v6117
  %6135 = vmatprep.subr.mxu0 0.0
  %6136 = vmatpush1.msra.mxu0 %v6118
  %6137 = vmatprep.subr.mxu0 0.0
  %6138 = vmatpush1.msra.mxu0 %v6119
  %6139 = vmatprep.subr.mxu0 0.0
  %6140 = vmatpush1.msra.mxu0 %v6120
  %6141 = vmatprep.subr.mxu0 0.0
  %6142 = vmatpush1.msra.mxu0 %v6121
  %6143 = vmatprep.subr.mxu0 0.0
  %6144 = vmatpush1.msra.mxu0 %v6122
  %6145 = vmatprep.subr.mxu0 0.0
  %6146 = vmatpush1.msra.mxu0 %v6123
  %6147 = vmatprep.subr.mxu0 0.0
  %6148 = vmatpush1.msra.mxu0 0.0
  %6149 = vmatprep.subr.mxu0 0.0
  %6150 = vmatpush1.msra.mxu0 0.0
  %6151 = vmatprep.subr.mxu0 0.0
  %6152 = vmatpush1.msra.mxu0 0.0
  %6153 = vmatprep.subr.mxu0 0.0
  %6154 = vmatpush1.msra.mxu0 0.0
  %6155 = vmatprep.subr.mxu0 0.0
  %6156 = vmatpush1.msra.mxu0 0.0
  %6157 = vmatprep.subr.mxu0 0.0
  %6158 = vmatpush1.msra.mxu0 0.0
  %6159 = vmatprep.subr.mxu0 0.0
  %6160 = vmatpush1.msra.mxu0 0.0
  %6161 = vmatprep.subr.mxu0 0.0
  %6162 = vmatpush1.msra.mxu0 0.0
  %6163 = vmatprep.subr.mxu0 0.0
  %6164 = vmatpush1.msra.mxu0 0.0
  %6165 = vmatprep.subr.mxu0 0.0
  %6166 = vmatpush1.msra.mxu0 0.0
  %6167 = vmatprep.subr.mxu0 0.0
  %6168 = vmatpush1.msra.mxu0 0.0
  %6169 = vmatprep.subr.mxu0 0.0
  %6170 = vmatpush1.msra.mxu0 0.0
  %6171 = vmatprep.subr.mxu0 0.0
  %6172 = vmatpush1.msra.mxu0 0.0
  %6173 = vmatprep.subr.mxu0 0.0
  %6174 = vmatpush1.msra.mxu0 0.0
  %6175 = vmatprep.subr.mxu0 0.0
  %6176 = vmatpush1.msra.mxu0 0.0
  %6177 = vmatprep.subr.mxu0 0.0
  %6178 = vmatpush1.msra.mxu0 0.0
  %6179 = vmatprep.subr.mxu0 0.0
  %6180 = vmatpush1.msra.mxu0 0.0
  %6181 = vmatprep.subr.mxu0 0.0
  %6182 = vmatpush1.msra.mxu0 0.0
  %6183 = vmatprep.subr.mxu0 0.0
  %6184 = vmatpush1.msra.mxu0 0.0
  %6185 = vmatprep.subr.mxu0 0.0
  %6186 = vmatpush1.msra.mxu0 0.0
  %6187 = vmatprep.subr.mxu0 0.0
  %6188 = vmatpush1.msra.mxu0 0.0
  %6189 = vmatprep.subr.mxu0 0.0
  %6190 = vmatpush1.msra.mxu0 0.0
  %6191 = vmatprep.subr.mxu0 0.0
  %6192 = vmatpush1.msra.mxu0 0.0
  %6193 = vmatprep.subr.mxu0 0.0
  %6194 = vmatpush1.msra.mxu0 0.0
  %6195 = vmatprep.mubr.f32.mxu0 0.0
  %6196 = vmatmul.mubr.f32.gmra.mrb[0].mxu0 %v6036
  %v6197 = vpop.f32.mrb[0].mxu0
  %v6198 = vadd.f32 %v6129, %v6197
  %v6199 = vpop.f32.mrb[0].mxu0
  %6200 = vmatprep.mubr.f32.mxu0 0.0
  %6201 = vmatmul.mubr.f32.gmra.mrb[0].mxu0 %v6039
  %v6202 = vpop.f32.mrb[0].mxu0
  %v6203 = vadd.f32 %v6129, %v6202
  %v6204 = vpop.f32.mrb[0].mxu0
  %6205 = vdwg.mxu0
  %v6206 = vxor.u32 %v6198, 2147483648
  %v6207 = vxor.u32 %v6203, 2147483648
  %v6208 = vmul.f32 %v6206, 1.442695
  %v6209 = vpow.pop %v6208
  %v6210 = vmul.f32 %v6207, 1.442695
  %v6211 = vpow.pop %v6210
  %v6212 = vadd.f32 %v6209, 1.0
  %v6213 = vadd.f32 %v6211, 1.0
  %v6214 = vrcp.pop %v6212
  %v6215 = vmul.f32 1.0, %v6214
  %v6216 = vrcp.pop %v6213
  %v6217 = vmul.f32 1.0, %v6216
  %v6219 = vsel %vm3655, %v6108, 0
  %v6222 = vsel %vm3655, %v6113, 0
  %6224 = vmatprep.subr.mxu0 0.0
  %6225 = vmatpush1.xpose.msra.mxu0 %v6036
  %6226 = vmatprep.subr.mxu0 0.0
  %6227 = vmatpush1.xpose.msra.mxu0 %v6039
  %6228 = vmatprep.subr.mxu0 0.0
  %6229 = vmatpush1.xpose.msra.mxu0 0.0
  %6230 = vmatprep.subr.mxu0 0.0
  %6231 = vmatpush1.xpose.msra.mxu0 0.0
  %6232 = vmatprep.subr.mxu0 0.0
  %6233 = vmatpush1.xpose.msra.mxu0 0.0
  %6234 = vmatprep.subr.mxu0 0.0
  %6235 = vmatpush1.xpose.msra.mxu0 0.0
  %6236 = vmatprep.subr.mxu0 0.0
  %6237 = vmatpush1.xpose.msra.mxu0 0.0
  %6238 = vmatprep.subr.mxu0 0.0
  %6239 = vmatpush1.xpose.msra.mxu0 0.0
  %6240 = vmatprep.subr.mxu0 0.0
  %6241 = vmatpush1.xpose.msra.mxu0 0.0
  %6242 = vmatprep.subr.mxu0 0.0
  %6243 = vmatpush1.xpose.msra.mxu0 0.0
  %6244 = vmatprep.subr.mxu0 0.0
  %6245 = vmatpush1.xpose.msra.mxu0 0.0
  %6246 = vmatprep.subr.mxu0 0.0
  %6247 = vmatpush1.xpose.msra.mxu0 0.0
  %6248 = vmatprep.subr.mxu0 0.0
  %6249 = vmatpush1.xpose.msra.mxu0 0.0
  %6250 = vmatprep.subr.mxu0 0.0
  %6251 = vmatpush1.xpose.msra.mxu0 0.0
  %6252 = vmatprep.subr.mxu0 0.0
  %6253 = vmatpush1.xpose.msra.mxu0 0.0
  %6254 = vmatprep.subr.mxu0 0.0
  %6255 = vmatpush1.xpose.msra.mxu0 0.0
  %6256 = vmatprep.subr.mxu0 0.0
  %6257 = vmatpush1.xpose.msra.mxu0 0.0
  %6258 = vmatprep.subr.mxu0 0.0
  %6259 = vmatpush1.xpose.msra.mxu0 0.0
  %6260 = vmatprep.subr.mxu0 0.0
  %6261 = vmatpush1.xpose.msra.mxu0 0.0
  %6262 = vmatprep.subr.mxu0 0.0
  %6263 = vmatpush1.xpose.msra.mxu0 0.0
  %6264 = vmatprep.subr.mxu0 0.0
  %6265 = vmatpush1.xpose.msra.mxu0 0.0
  %6266 = vmatprep.subr.mxu0 0.0
  %6267 = vmatpush1.xpose.msra.mxu0 0.0
  %6268 = vmatprep.subr.mxu0 0.0
  %6269 = vmatpush1.xpose.msra.mxu0 0.0
  %6270 = vmatprep.subr.mxu0 0.0
  %6271 = vmatpush1.xpose.msra.mxu0 0.0
  %6272 = vmatprep.subr.mxu0 0.0
  %6273 = vmatpush1.xpose.msra.mxu0 0.0
  %6274 = vmatprep.subr.mxu0 0.0
  %6275 = vmatpush1.xpose.msra.mxu0 0.0
  %6276 = vmatprep.subr.mxu0 0.0
  %6277 = vmatpush1.xpose.msra.mxu0 0.0
  %6278 = vmatprep.subr.mxu0 0.0
  %6279 = vmatpush1.xpose.msra.mxu0 0.0
  %6280 = vmatprep.subr.mxu0 0.0
  %6281 = vmatpush1.xpose.msra.mxu0 0.0
  %6282 = vmatprep.subr.mxu0 0.0
  %6283 = vmatpush1.xpose.msra.mxu0 0.0
  %6284 = vmatprep.subr.mxu0 0.0
  %6285 = vmatpush1.xpose.msra.mxu0 0.0
  %6286 = vmatprep.subr.mxu0 0.0
  %6287 = vmatpush1.xpose.msra.mxu0 0.0
  %6288 = vmatprep.mubr.f32.mxu0 0.0
  %6289 = vmatmul.mubr.f32.gmra.mrb[0].mxu0 %v6219
  %v6290 = vpop.f32.mrb[0].mxu0
  %v6291 = vadd.f32 0.0, %v6290
  %v6292 = vpop.f32.mrb[0].mxu0
  %6293 = vmatprep.mubr.f32.mxu0 0.0
  %6294 = vmatmul.mubr.f32.gmra.mrb[0].mxu0 %v6222
  %v6295 = vpop.f32.mrb[0].mxu0
  %v6296 = vadd.f32 0.0, %v6295
  %v6297 = vpop.f32.mrb[0].mxu0
  %6298 = vdwg.mxu0
  %v6299 = vlaneseq
  %v6300 = vshrl.u32 %v6299, 7
  %v6301 = vadd.s32 %v6300, 8
  %vm6302 = vcmp.lt.s32.totalorder %v71, %v6300
  %vm6303 = vcmp.lt.s32.totalorder %v71, %v6301
  %v6304 = vsel %vm6302, -1e+30, %v6291
  %v6305 = vsel %vm6303, -1e+30, %v6296
  %vm6306 = vcmask 80896
  %v6307 = vsel %vm6306, %v6304, -inf
  %6308 = vmax.xlane.f32.xlu0 %v6307
  %v6309 = vpop.xlane.xlu0 %6308
  %vm6310 = vcmask 74752
  %v6311 = vsel %vm6310, %v6305, -inf
  %6312 = vmax.xlane.f32.xlu0 %v6311
  %v6313 = vpop.xlane.xlu0 %6312
  %v6314 = vsub.f32 %v6304, %v6309
  %v6315 = vsub.f32 %v6305, %v6313
  %v6316 = vmul.f32 %v6314, 1.442695
  %v6317 = vpow.pop %v6316
  %v6318 = vmul.f32 %v6315, 1.442695
  %v6319 = vpow.pop %v6318
  %v6320 = vsel %vm6306, %v6317, 0.0
  %6321 = vadd.xlane.f32.xlu0 %v6320
  %v6322 = vpop.xlane.xlu0 %6321
  %v6323 = vsel %vm6310, %v6319, 0.0
  %6324 = vadd.xlane.f32.xlu0 %v6323
  %v6325 = vpop.xlane.xlu0 %6324
  %v6326 = vrcp.pop %v6322
  %v6327 = vrcp.pop %v6325
  %v6328 = vmul.f32 %v6317, %v6326
  %v6329 = vmul.f32 %v6319, %v6327
  %6331 = vset.pattern.permute.xlu0 0
  %6332 = vperm.xlu0 %6331, %v6215
  %v6333 = vpop.permute.xlu0 %6332
  %6336 = vset.pattern.permute.xlu0 0
  %6337 = vperm.xlu0 %6336, %v6217
  %v6338 = vpop.permute.xlu0 %6337
  %v6340 = vmul.f32 %v6328, %v6333
  %v6341 = vmul.f32 %v6329, %v6338
  %v6342 = vand.u32 2147483647, %v6340
  %v6343 = vand.u32 2147483647, %v6341
  %v6344 = vsel %vm6306, %v6342, 0.0
  %v6345 = vsel %vm6310, %v6343, 0.0
  %v6346 = vadd.f32 %v6344, %v6345
  %6347 = vadd.xlane.f32.xlu0 %v6346
  %v6348 = vpop.xlane.xlu0 %6347
  %v6349 = vrot.slane %v6348, 4
  %v6350 = vadd.f32 %v6348, %v6349
  %v6351 = vrot.slane %v6350, 2
  %v6352 = vadd.f32 %v6350, %v6351
  %v6353 = vrot.slane %v6352, 1
  %v6354 = vadd.f32 %v6352, %v6353
  %s6355 = vtos %v6354
  %s6356 = smax.f32 %s6355, 1e-12
  %v6357 = vstv %s6356
  %v6358 = vrcp.pop %v6357
  %v6359 = vmul.f32 %v6340, %v6358
  %v6360 = vmul.f32 %v6341, %v6358
  %6361 = vst.msk [vmem:[%s15] sm:$0xff] %vm6306, %v6359
  %6362 = vst.msk [vmem:[%s15 + $0x8] sm:$0x3] %vm6310, %v6360
  // Predicated region
  $region62: #{baseline_forward.1} parent=0 // pred_check
    _
  $region63: #{baseline_forward.1} parent=0 // pred_check_branch
    %6364 = sbr.rel (0) target = $region65
  $region64: #{baseline_forward.1} parent=0 // pred_region
    _
  $region65: #{baseline_forward.1} parent=0 // pred_fallthru
    _
  // Predicated region
  $region66: #{baseline_forward.1} parent=0 // pred_check
    _
  $region67: #{baseline_forward.1} parent=0 // pred_check_branch
    %6366 = sbr.rel (0) target = $region69
  $region68: #{baseline_forward.1} parent=0 // pred_region
    _
  $region69: #{baseline_forward.1} parent=0 // pred_fallthru
    _

</llo_original>
